<compile_context>
chip_gen: v7x
topology: tpu7x:2x2x1
jax: 0.10.0
libtpu: 0.0.40
codegen_flags: <defaults>
</compile_context>

<pallas_src>
import functools

import jax
import jax.numpy as jnp
from jax.experimental import pallas as pl
from jax.experimental.pallas import tpu as pltpu

LN_EPS = 1e-5  # nn.LayerNorm default


def _round_up(x, m):
    return (x + m - 1) // m * m


def _layernorm(h, gamma, beta):
    # One-pass variance (E[h^2] - mean^2); h is tanh-bounded, accum in f32.
    mean = jnp.mean(h, axis=-1, keepdims=True)
    mean_sq = jnp.mean(h * h, axis=-1, keepdims=True)
    var = mean_sq - mean * mean
    inv = jax.lax.rsqrt(var + LN_EPS)
    return (h - mean) * inv * gamma + beta


def res_dnn_kernel(x_ref, wp_ref, bp_ref,
                   wst_ref, bst_ref, gst_ref, best_ref,
                   gres_ref, beres_ref,
                   wc_ref, bc_ref, o_ref,
                   *, num_res, num_dnn, unroll):
    # x_ref:    (tm, K_in)      row tile of flattened input_ids
    # wp_ref:   (K_in, H)       prepare weight (pre-transposed), bp_ref (1, H)
    # wst_ref:  (L, H, H)       stacked DNN weights, L = num_res * num_dnn
    # bst_ref:  (L, 1, H)       stacked DNN biases
    # gst_ref / best_ref:  (L, 1, H)  stacked DNN LayerNorm gamma / beta
    # gres_ref / beres_ref:(R, 1, H)  per-Res_DNN_layer LayerNorm gamma / beta
    # wc_ref:   (H, Np)         classifier weight (lane-dense padded), bc_ref (1, Np)
    # o_ref:    (tm, Np)
    mm_dtype = wp_ref.dtype  # f32 or bf16 (weights decide the MXU input dtype)

    # prepare: Linear(input_size -> hidden_size)
    h = jnp.dot(x_ref[...].astype(mm_dtype), wp_ref[...],
                preferred_element_type=jnp.float32) + bp_ref[...]

    def dnn_layer(l, h):
        # DNN: Linear -> Dropout(eval=identity) -> Tanh -> LayerNorm
        z = jnp.dot(h.astype(mm_dtype), wst_ref[l],
                    preferred_element_type=jnp.float32) + bst_ref[l]
        z = jnp.tanh(z)
        return _layernorm(z, gst_ref[l], best_ref[l])

    def res_block(r, h):
        shortcut = h
        if unroll:
            for d in range(num_dnn):
                h = dnn_layer(r * num_dnn + d, h)
        else:
            h = jax.lax.fori_loop(r * num_dnn, (r + 1) * num_dnn, dnn_layer, h)
        h = jnp.tanh(shortcut + h)
        return _layernorm(h, gres_ref[r], beres_ref[r])

    if unroll:
        for r in range(num_res):
            h = res_block(r, h)
    else:
        # fori_loop bounds vreg live ranges for deep stacks (dynamic layer indexing).
        h = jax.lax.fori_loop(0, num_res, res_block, h)

    # classifier: Linear(hidden_size -> output_size), lane-dense padded width
    out = jnp.dot(h.astype(mm_dtype), wc_ref[...],
                  preferred_element_type=jnp.float32) + bc_ref[...]
    o_ref[...] = out.astype(o_ref.dtype)


def _vmem_limit_bytes(tm, K, H, Np, L, R, x_itemsize, w_itemsize, out_itemsize, param_bufs):
    """Explicit scoped-VMEM budget: resident params (x param_bufs) + double-buffered
    row/output tiles + f32 activation temps, with ~25% headroom."""
    weight_bytes = (K * H + L * H * H + H * Np) * w_itemsize * param_bufs
    small_bytes = ((2 * L + 2 * R + 1) * H + Np) * 4 * param_bufs
    act_bytes = 2 * tm * K * x_itemsize + 2 * tm * Np * out_itemsize
    temp_bytes = 8 * tm * H * 4
    total = int((weight_bytes + small_bytes + act_bytes + temp_bytes) * 1.25) + (4 << 20)
    return max(32 << 20, min(total, 100 << 20))


def res_dnn_forward(x, params, *, tm=512, out_dtype=None, unroll_layers=None):
    """x: [..., input_size] -> [..., output_size]. Arbitrary row counts handled via the
    ragged last tile (Pallas masks boundary reads/writes; no wrapper-side jnp.pad copy)."""
    *lead, K = x.shape
    wp, bp = params["w_prep"], params["b_prep"]
    wst, bst = params["w_stack"], params["b_stack"]
    gst, best = params["g_stack"], params["beta_stack"]
    gres, beres = params["g_res"], params["beta_res"]
    wc, bc = params["w_cls"], params["b_cls"]
    N = params["out_features"]

    H = wp.shape[1]
    Np = wc.shape[1]                      # lane-dense padded classifier width
    L = wst.shape[0]
    R = gres.shape[0]
    num_dnn = L // R
    if unroll_layers is None:
        unroll_layers = L <= 8            # static unroll only for shallow stacks

    x2d = x.reshape(-1, K)
    M = x2d.shape[0]

    # Row tile: multiple of 8 (sublane); never bigger than the problem; keep >= 2 row tiles
    # whenever possible so the PARALLEL row axis can span both v7x TensorCores.
    tm = max(8, int(tm))
    tm = min(tm, _round_up(M, 8))
    if M > 8:
        tm = min(tm, _round_up(pl.cdiv(M, 2), 8))
    tm = _round_up(tm, 8)
    grid_m = pl.cdiv(M, tm)

    out_dtype = x.dtype if out_dtype is None else out_dtype
    kernel = functools.partial(res_dnn_kernel, num_res=R, num_dnn=num_dnn,
                               unroll=unroll_layers)

    def run(single_buffer_params):
        pm = {"pipeline_mode": pl.Buffered(1)} if single_buffer_params else {}

        def const_spec(shape):
            zeros = (0,) * len(shape)
            # Constant block index -> DMAed once; Buffered(1) drops the second buffer.
            return pl.BlockSpec(shape, lambda i, _z=zeros: _z, **pm)

        in_specs = [
            pl.BlockSpec((tm, K), lambda i: (i, 0)),    # x row tile (double-buffered)
            const_spec((K, H)),                         # prepare W
            const_spec((1, H)),                         # prepare b
            const_spec((L, H, H)),                      # DNN W stack
            const_spec((L, 1, H)),                      # DNN b stack
            const_spec((L, 1, H)),                      # DNN LN gamma
            const_spec((L, 1, H)),                      # DNN LN beta
            const_spec((R, 1, H)),                      # res LN gamma
            const_spec((R, 1, H)),                      # res LN beta
            const_spec((H, Np)),                        # classifier W (lane-dense)
            const_spec((1, Np)),                        # classifier b
        ]
        vmem_limit = _vmem_limit_bytes(
            tm, K, H, Np, L, R,
            x_itemsize=x2d.dtype.itemsize,
            w_itemsize=wp.dtype.itemsize,
            out_itemsize=jnp.dtype(out_dtype).itemsize,
            param_bufs=1 if single_buffer_params else 2)

        return pl.pallas_call(
            kernel,
            out_shape=jax.ShapeDtypeStruct((M, Np), out_dtype),
            grid_spec=pltpu.PrefetchScalarGridSpec(
                num_scalar_prefetch=0,
                grid=(grid_m,),
                in_specs=in_specs,
                out_specs=pl.BlockSpec((tm, Np), lambda i: (i, 0)),
            ),
            compiler_params=pltpu.CompilerParams(
                dimension_semantics=(pltpu.PARALLEL,),   # row tiles are independent
                vmem_limit_bytes=vmem_limit),
        )(x2d, wp, bp, wst, bst, gst, best, gres, beres, wc, bc)

    try:
        out2d = run(single_buffer_params=True)
    except Exception:
        # Safety net: if Buffered(1) is rejected by this jax/libtpu build, fall back to
        # default double-buffered parameter specs (correctness identical).
        out2d = run(single_buffer_params=False)

    return out2d[:, :N].reshape(*lead, N)


def init_params(key, input_size, hidden_size, output_size, num_res, num_dnn,
                matmul_dtype=jnp.float32):
    """Parameters in kernel layout: Linear weights drawn in torch [out, in] layout, then
    pre-transposed ONCE here; per-DNN params stacked; classifier zero-padded to a lane-dense
    width; LN/bias params kept f32. matmul_dtype=bf16 enables the MXU fast path."""
    L = num_res * num_dnn
    H, N = hidden_size, output_size
    Np = _round_up(N, 128)                # lane-dense classifier output (unmasked stores)
    keys = iter(jax.random.split(key, 2 * L + 16))

    def nrm(shape, scale=0.1):
        return jax.random.normal(next(keys), shape, jnp.float32) * scale

    def linear(fan_in, fan_out):
        return nrm((fan_out, fan_in)), nrm((fan_out,))   # torch nn.Linear layout

    wp, bp = linear(input_size, H)
    dnn = [linear(H, H) for _ in range(L)]
    wc, bc = linear(H, N)
    wc_pad = jnp.zeros((H, Np), jnp.float32).at[:, :N].set(wc.T)
    bc_pad = jnp.zeros((1, Np), jnp.float32).at[:, :N].set(bc)

    return {
        "w_prep": wp.T.astype(matmul_dtype),                               # (K_in, H)
        "b_prep": bp.reshape(1, H),
        "w_stack": jnp.stack([w.T for w, _ in dnn]).astype(matmul_dtype),  # (L, H, H)
        "b_stack": jnp.stack([b for _, b in dnn]).reshape(L, 1, H),
        "g_stack": 1.0 + nrm((L, 1, H)),                                   # LN weight
        "beta_stack": nrm((L, 1, H)),                                      # LN bias
        "g_res": 1.0 + nrm((num_res, 1, H)),
        "beta_res": nrm((num_res, 1, H)),
        "w_cls": wc_pad.astype(matmul_dtype),                              # (H, Np)
        "b_cls": bc_pad,                                                   # (1, Np)
        "out_features": N,
    }


def res_dnn_reference(x, params):
    """Pure-JAX reference mirroring the PyTorch forward (eval-mode dropout)."""
    N = params["out_features"]
    wp = params["w_prep"].astype(jnp.float32)
    wst = params["w_stack"].astype(jnp.float32)
    wc = params["w_cls"].astype(jnp.float32)[:, :N]
    bc = params["b_cls"][:, :N]
    L, R = wst.shape[0], params["g_res"].shape[0]
    num_dnn = L // R

    def ln(h, g, b):
        mean = jnp.mean(h, axis=-1, keepdims=True)
        var = jnp.mean((h - mean) ** 2, axis=-1, keepdims=True)
        return (h - mean) / jnp.sqrt(var + LN_EPS) * g + b

    h = x.astype(jnp.float32) @ wp + params["b_prep"]
    for r in range(R):
        sc = h
        for d in range(num_dnn):
            l = r * num_dnn + d
            z = jnp.tanh(h @ wst[l] + params["b_stack"][l])
            h = ln(z, params["g_stack"][l], params["beta_stack"][l])
        h = jnp.tanh(sc + h)
        h = ln(h, params["g_res"][r], params["beta_res"][r])
    return h @ wc + bc


if __name__ == "__main__":
    # Match matmul precision between the kernel's f32 MXU path and the jnp reference.
    jax.config.update("jax_default_matmul_precision", "highest")

    batch, seq = 2, 8
    input_size, hidden_size, output_size = 32, 64, 32
    num_res_dnn, num_dnn = 2, 2

    key = jax.random.PRNGKey(0)
    kx, kp, kx2 = jax.random.split(key, 3)

    x = jax.random.normal(kx, (batch, seq, input_size), jnp.float32)
    params = init_params(kp, input_size, hidden_size, output_size,
                         num_res_dnn, num_dnn)
    ref = res_dnn_reference(x, params)

    # f32 path, statically unrolled layers
    out = jax.block_until_ready(res_dnn_forward(x, params))
    assert out.shape == (batch, seq, output_size)
    assert jnp.allclose(out, ref, atol=2e-3, rtol=2e-3), "f32 mismatch vs reference"

    # fori_loop path (dynamic per-layer ref indexing) must match exactly the same math
    out_loop = jax.block_until_ready(res_dnn_forward(x, params, unroll_layers=False))
    assert jnp.allclose(out_loop, ref, atol=2e-3, rtol=2e-3), "fori_loop path mismatch"

    # Ragged row count: grid = pl.cdiv, last tile masked by Pallas (no jnp.pad copy of x).
    x_big = jax.random.normal(kx2, (3, 100, input_size), jnp.float32)
    out_big = jax.block_until_ready(res_dnn_forward(x_big, params, tm=128))
    ref_big = res_dnn_reference(x_big, params)
    assert out_big.shape == (3, 100, output_size)
    assert jnp.allclose(out_big, ref_big, atol=2e-3, rtol=2e-3), "ragged-tile mismatch"

    # bf16 weights + bf16 activations (v6e/v7x MXU fast path); elementwise math stays f32.
    params_bf16 = init_params(kp, input_size, hidden_size, output_size,
                              num_res_dnn, num_dnn, matmul_dtype=jnp.bfloat16)
    out_bf16 = jax.block_until_ready(
        res_dnn_forward(x.astype(jnp.bfloat16), params_bf16, out_dtype=jnp.float32))
    assert bool(jnp.all(jnp.isfinite(out_bf16)))
    assert float(jnp.max(jnp.abs(out_bf16 - ref))) < 0.3, "bf16 variant too far off"

    print("KERNEL_OK")
</pallas_src>

<mosaic_0001>
module attributes {stable_mosaic.version = 11 : i64} {
  func.func @res_dnn_kernel(%arg0: i32, %arg1: memref<8x32xf32, #tpu.memory_space<vmem>>, %arg2: memref<32x64xf32, #tpu.memory_space<vmem>>, %arg3: memref<1x64xf32, #tpu.memory_space<vmem>>, %arg4: memref<4x64x64xf32, #tpu.memory_space<vmem>>, %arg5: memref<4x1x64xf32, #tpu.memory_space<vmem>>, %arg6: memref<4x1x64xf32, #tpu.memory_space<vmem>>, %arg7: memref<4x1x64xf32, #tpu.memory_space<vmem>>, %arg8: memref<2x1x64xf32, #tpu.memory_space<vmem>>, %arg9: memref<2x1x64xf32, #tpu.memory_space<vmem>>, %arg10: memref<64x128xf32, #tpu.memory_space<vmem>>, %arg11: memref<1x128xf32, #tpu.memory_space<vmem>>, %arg12: memref<8x128xf32, #tpu.memory_space<vmem>>) attributes {dimension_semantics = [#tpu.dimension_semantics<parallel>], iteration_bounds = array<i64: 2>, scalar_prefetch = 0 : i64, scratch_operands = 0 : i64, tpu.core_type = #tpu.core_type<tc>, window_params = [{transform_indices = @transform_0, window_bounds = array<i64: 8, 32>}, {pipeline_mode = #tpu.pipeline_mode<synchronous>, transform_indices = @transform_1, window_bounds = array<i64: 32, 64>}, {pipeline_mode = #tpu.pipeline_mode<synchronous>, transform_indices = @transform_2, window_bounds = array<i64: 1, 64>}, {pipeline_mode = #tpu.pipeline_mode<synchronous>, transform_indices = @transform_3, window_bounds = array<i64: 4, 64, 64>}, {pipeline_mode = #tpu.pipeline_mode<synchronous>, transform_indices = @transform_4, window_bounds = array<i64: 4, 1, 64>}, {pipeline_mode = #tpu.pipeline_mode<synchronous>, transform_indices = @transform_5, window_bounds = array<i64: 4, 1, 64>}, {pipeline_mode = #tpu.pipeline_mode<synchronous>, transform_indices = @transform_6, window_bounds = array<i64: 4, 1, 64>}, {pipeline_mode = #tpu.pipeline_mode<synchronous>, transform_indices = @transform_7, window_bounds = array<i64: 2, 1, 64>}, {pipeline_mode = #tpu.pipeline_mode<synchronous>, transform_indices = @transform_8, window_bounds = array<i64: 2, 1, 64>}, {pipeline_mode = #tpu.pipeline_mode<synchronous>, transform_indices = @transform_9, window_bounds = array<i64: 64, 128>}, {pipeline_mode = #tpu.pipeline_mode<synchronous>, transform_indices = @transform_10, window_bounds = array<i64: 1, 128>}, {transform_indices = @transform_11, window_bounds = array<i64: 8, 128>}]} {
    %c0 = arith.constant 0 : index
    %c0_0 = arith.constant 0 : index
    %0 = vector.load %arg1[%c0, %c0_0] : memref<8x32xf32, #tpu.memory_space<vmem>>, vector<8x32xf32>
    %c0_1 = arith.constant 0 : index
    %c0_2 = arith.constant 0 : index
    %1 = vector.load %arg2[%c0_1, %c0_2] : memref<32x64xf32, #tpu.memory_space<vmem>>, vector<32x64xf32>
    %cst = arith.constant dense<0.000000e+00> : vector<8x64xf32>
    %2 = tpu.matmul %0, %1, %cst {dimension_numbers = #tpu.dot_dimension_numbers<[1], [0], [0], [1], [0, 0, 1, 1], [], []>, precision = #tpu.contract_precision<fp32>} : vector<8x32xf32>, vector<32x64xf32>, vector<8x64xf32> -> vector<8x64xf32>
    %c0_3 = arith.constant 0 : index
    %c0_4 = arith.constant 0 : index
    %3 = vector.load %arg3[%c0_3, %c0_4] : memref<1x64xf32, #tpu.memory_space<vmem>>, vector<1x64xf32>
    %4 = vector.broadcast %3 : vector<1x64xf32> to vector<8x64xf32>
    %5 = arith.addf %2, %4 : vector<8x64xf32>
    %c0_5 = arith.constant 0 : index
    %c0_6 = arith.constant 0 : index
    %c0_7 = arith.constant 0 : index
    %6 = vector.load %arg4[%c0_5, %c0_6, %c0_7] : memref<4x64x64xf32, #tpu.memory_space<vmem>>, vector<1x64x64xf32>
    %7 = vector.shape_cast %6 : vector<1x64x64xf32> to vector<64x64xf32>
    %cst_8 = arith.constant dense<0.000000e+00> : vector<8x64xf32>
    %8 = tpu.matmul %5, %7, %cst_8 {dimension_numbers = #tpu.dot_dimension_numbers<[1], [0], [0], [1], [0, 0, 1, 1], [], []>, precision = #tpu.contract_precision<fp32>} : vector<8x64xf32>, vector<64x64xf32>, vector<8x64xf32> -> vector<8x64xf32>
    %c0_9 = arith.constant 0 : index
    %c0_10 = arith.constant 0 : index
    %c0_11 = arith.constant 0 : index
    %9 = vector.load %arg5[%c0_9, %c0_10, %c0_11] : memref<4x1x64xf32, #tpu.memory_space<vmem>>, vector<1x1x64xf32>
    %10 = vector.shape_cast %9 : vector<1x1x64xf32> to vector<1x64xf32>
    %11 = vector.broadcast %10 : vector<1x64xf32> to vector<8x64xf32>
    %12 = arith.addf %8, %11 : vector<8x64xf32>
    %13 = math.tanh %12 : vector<8x64xf32>
    %c0_12 = arith.constant 0 : index
    %c0_13 = arith.constant 0 : index
    %c0_14 = arith.constant 0 : index
    %14 = vector.load %arg6[%c0_12, %c0_13, %c0_14] : memref<4x1x64xf32, #tpu.memory_space<vmem>>, vector<1x1x64xf32>
    %15 = vector.shape_cast %14 : vector<1x1x64xf32> to vector<1x64xf32>
    %c0_15 = arith.constant 0 : index
    %c0_16 = arith.constant 0 : index
    %c0_17 = arith.constant 0 : index
    %16 = vector.load %arg7[%c0_15, %c0_16, %c0_17] : memref<4x1x64xf32, #tpu.memory_space<vmem>>, vector<1x1x64xf32>
    %17 = vector.shape_cast %16 : vector<1x1x64xf32> to vector<1x64xf32>
    %cst_18 = arith.constant dense<0.000000e+00> : vector<8xf32>
    %18 = vector.multi_reduction <add>, %13, %cst_18 [1] : vector<8x64xf32> to vector<8xf32>
    %19 = vector.shape_cast %18 : vector<8xf32> to vector<8x1xf32>
    %cst_19 = arith.constant 6.400000e+01 : f32
    %20 = vector.broadcast %cst_19 : f32 to vector<8x1xf32>
    %21 = arith.divf %19, %20 : vector<8x1xf32>
    %22 = arith.mulf %13, %13 : vector<8x64xf32>
    %cst_20 = arith.constant dense<0.000000e+00> : vector<8xf32>
    %23 = vector.multi_reduction <add>, %22, %cst_20 [1] : vector<8x64xf32> to vector<8xf32>
    %24 = vector.shape_cast %23 : vector<8xf32> to vector<8x1xf32>
    %cst_21 = arith.constant 6.400000e+01 : f32
    %25 = vector.broadcast %cst_21 : f32 to vector<8x1xf32>
    %26 = arith.divf %24, %25 : vector<8x1xf32>
    %27 = arith.mulf %21, %21 : vector<8x1xf32>
    %28 = arith.subf %26, %27 : vector<8x1xf32>
    %cst_22 = arith.constant 9.99999974E-6 : f32
    %29 = vector.broadcast %cst_22 : f32 to vector<8x1xf32>
    %30 = arith.addf %28, %29 : vector<8x1xf32>
    %31 = math.rsqrt %30 : vector<8x1xf32>
    %32 = vector.broadcast %21 : vector<8x1xf32> to vector<8x64xf32>
    %33 = arith.subf %13, %32 : vector<8x64xf32>
    %34 = vector.broadcast %31 : vector<8x1xf32> to vector<8x64xf32>
    %35 = arith.mulf %33, %34 : vector<8x64xf32>
    %36 = vector.broadcast %15 : vector<1x64xf32> to vector<8x64xf32>
    %37 = arith.mulf %35, %36 : vector<8x64xf32>
    %38 = vector.broadcast %17 : vector<1x64xf32> to vector<8x64xf32>
    %39 = arith.addf %37, %38 : vector<8x64xf32>
    %c1 = arith.constant 1 : index
    %c0_23 = arith.constant 0 : index
    %c0_24 = arith.constant 0 : index
    %40 = vector.load %arg4[%c1, %c0_23, %c0_24] : memref<4x64x64xf32, #tpu.memory_space<vmem>>, vector<1x64x64xf32>
    %41 = vector.shape_cast %40 : vector<1x64x64xf32> to vector<64x64xf32>
    %cst_25 = arith.constant dense<0.000000e+00> : vector<8x64xf32>
    %42 = tpu.matmul %39, %41, %cst_25 {dimension_numbers = #tpu.dot_dimension_numbers<[1], [0], [0], [1], [0, 0, 1, 1], [], []>, precision = #tpu.contract_precision<fp32>} : vector<8x64xf32>, vector<64x64xf32>, vector<8x64xf32> -> vector<8x64xf32>
    %c1_26 = arith.constant 1 : index
    %c0_27 = arith.constant 0 : index
    %c0_28 = arith.constant 0 : index
    %43 = vector.load %arg5[%c1_26, %c0_27, %c0_28] : memref<4x1x64xf32, #tpu.memory_space<vmem>>, vector<1x1x64xf32>
    %44 = vector.shape_cast %43 : vector<1x1x64xf32> to vector<1x64xf32>
    %45 = vector.broadcast %44 : vector<1x64xf32> to vector<8x64xf32>
    %46 = arith.addf %42, %45 : vector<8x64xf32>
    %47 = math.tanh %46 : vector<8x64xf32>
    %c1_29 = arith.constant 1 : index
    %c0_30 = arith.constant 0 : index
    %c0_31 = arith.constant 0 : index
    %48 = vector.load %arg6[%c1_29, %c0_30, %c0_31] : memref<4x1x64xf32, #tpu.memory_space<vmem>>, vector<1x1x64xf32>
    %49 = vector.shape_cast %48 : vector<1x1x64xf32> to vector<1x64xf32>
    %c1_32 = arith.constant 1 : index
    %c0_33 = arith.constant 0 : index
    %c0_34 = arith.constant 0 : index
    %50 = vector.load %arg7[%c1_32, %c0_33, %c0_34] : memref<4x1x64xf32, #tpu.memory_space<vmem>>, vector<1x1x64xf32>
    %51 = vector.shape_cast %50 : vector<1x1x64xf32> to vector<1x64xf32>
    %cst_35 = arith.constant dense<0.000000e+00> : vector<8xf32>
    %52 = vector.multi_reduction <add>, %47, %cst_35 [1] : vector<8x64xf32> to vector<8xf32>
    %53 = vector.shape_cast %52 : vector<8xf32> to vector<8x1xf32>
    %cst_36 = arith.constant 6.400000e+01 : f32
    %54 = vector.broadcast %cst_36 : f32 to vector<8x1xf32>
    %55 = arith.divf %53, %54 : vector<8x1xf32>
    %56 = arith.mulf %47, %47 : vector<8x64xf32>
    %cst_37 = arith.constant dense<0.000000e+00> : vector<8xf32>
    %57 = vector.multi_reduction <add>, %56, %cst_37 [1] : vector<8x64xf32> to vector<8xf32>
    %58 = vector.shape_cast %57 : vector<8xf32> to vector<8x1xf32>
    %cst_38 = arith.constant 6.400000e+01 : f32
    %59 = vector.broadcast %cst_38 : f32 to vector<8x1xf32>
    %60 = arith.divf %58, %59 : vector<8x1xf32>
    %61 = arith.mulf %55, %55 : vector<8x1xf32>
    %62 = arith.subf %60, %61 : vector<8x1xf32>
    %cst_39 = arith.constant 9.99999974E-6 : f32
    %63 = vector.broadcast %cst_39 : f32 to vector<8x1xf32>
    %64 = arith.addf %62, %63 : vector<8x1xf32>
    %65 = math.rsqrt %64 : vector<8x1xf32>
    %66 = vector.broadcast %55 : vector<8x1xf32> to vector<8x64xf32>
    %67 = arith.subf %47, %66 : vector<8x64xf32>
    %68 = vector.broadcast %65 : vector<8x1xf32> to vector<8x64xf32>
    %69 = arith.mulf %67, %68 : vector<8x64xf32>
    %70 = vector.broadcast %49 : vector<1x64xf32> to vector<8x64xf32>
    %71 = arith.mulf %69, %70 : vector<8x64xf32>
    %72 = vector.broadcast %51 : vector<1x64xf32> to vector<8x64xf32>
    %73 = arith.addf %71, %72 : vector<8x64xf32>
    %74 = arith.addf %5, %73 : vector<8x64xf32>
    %75 = math.tanh %74 : vector<8x64xf32>
    %c0_40 = arith.constant 0 : index
    %c0_41 = arith.constant 0 : index
    %c0_42 = arith.constant 0 : index
    %76 = vector.load %arg8[%c0_40, %c0_41, %c0_42] : memref<2x1x64xf32, #tpu.memory_space<vmem>>, vector<1x1x64xf32>
    %77 = vector.shape_cast %76 : vector<1x1x64xf32> to vector<1x64xf32>
    %c0_43 = arith.constant 0 : index
    %c0_44 = arith.constant 0 : index
    %c0_45 = arith.constant 0 : index
    %78 = vector.load %arg9[%c0_43, %c0_44, %c0_45] : memref<2x1x64xf32, #tpu.memory_space<vmem>>, vector<1x1x64xf32>
    %79 = vector.shape_cast %78 : vector<1x1x64xf32> to vector<1x64xf32>
    %cst_46 = arith.constant dense<0.000000e+00> : vector<8xf32>
    %80 = vector.multi_reduction <add>, %75, %cst_46 [1] : vector<8x64xf32> to vector<8xf32>
    %81 = vector.shape_cast %80 : vector<8xf32> to vector<8x1xf32>
    %cst_47 = arith.constant 6.400000e+01 : f32
    %82 = vector.broadcast %cst_47 : f32 to vector<8x1xf32>
    %83 = arith.divf %81, %82 : vector<8x1xf32>
    %84 = arith.mulf %75, %75 : vector<8x64xf32>
    %cst_48 = arith.constant dense<0.000000e+00> : vector<8xf32>
    %85 = vector.multi_reduction <add>, %84, %cst_48 [1] : vector<8x64xf32> to vector<8xf32>
    %86 = vector.shape_cast %85 : vector<8xf32> to vector<8x1xf32>
    %cst_49 = arith.constant 6.400000e+01 : f32
    %87 = vector.broadcast %cst_49 : f32 to vector<8x1xf32>
    %88 = arith.divf %86, %87 : vector<8x1xf32>
    %89 = arith.mulf %83, %83 : vector<8x1xf32>
    %90 = arith.subf %88, %89 : vector<8x1xf32>
    %cst_50 = arith.constant 9.99999974E-6 : f32
    %91 = vector.broadcast %cst_50 : f32 to vector<8x1xf32>
    %92 = arith.addf %90, %91 : vector<8x1xf32>
    %93 = math.rsqrt %92 : vector<8x1xf32>
    %94 = vector.broadcast %83 : vector<8x1xf32> to vector<8x64xf32>
    %95 = arith.subf %75, %94 : vector<8x64xf32>
    %96 = vector.broadcast %93 : vector<8x1xf32> to vector<8x64xf32>
    %97 = arith.mulf %95, %96 : vector<8x64xf32>
    %98 = vector.broadcast %77 : vector<1x64xf32> to vector<8x64xf32>
    %99 = arith.mulf %97, %98 : vector<8x64xf32>
    %100 = vector.broadcast %79 : vector<1x64xf32> to vector<8x64xf32>
    %101 = arith.addf %99, %100 : vector<8x64xf32>
    %c2 = arith.constant 2 : index
    %c0_51 = arith.constant 0 : index
    %c0_52 = arith.constant 0 : index
    %102 = vector.load %arg4[%c2, %c0_51, %c0_52] : memref<4x64x64xf32, #tpu.memory_space<vmem>>, vector<1x64x64xf32>
    %103 = vector.shape_cast %102 : vector<1x64x64xf32> to vector<64x64xf32>
    %cst_53 = arith.constant dense<0.000000e+00> : vector<8x64xf32>
    %104 = tpu.matmul %101, %103, %cst_53 {dimension_numbers = #tpu.dot_dimension_numbers<[1], [0], [0], [1], [0, 0, 1, 1], [], []>, precision = #tpu.contract_precision<fp32>} : vector<8x64xf32>, vector<64x64xf32>, vector<8x64xf32> -> vector<8x64xf32>
    %c2_54 = arith.constant 2 : index
    %c0_55 = arith.constant 0 : index
    %c0_56 = arith.constant 0 : index
    %105 = vector.load %arg5[%c2_54, %c0_55, %c0_56] : memref<4x1x64xf32, #tpu.memory_space<vmem>>, vector<1x1x64xf32>
    %106 = vector.shape_cast %105 : vector<1x1x64xf32> to vector<1x64xf32>
    %107 = vector.broadcast %106 : vector<1x64xf32> to vector<8x64xf32>
    %108 = arith.addf %104, %107 : vector<8x64xf32>
    %109 = math.tanh %108 : vector<8x64xf32>
    %c2_57 = arith.constant 2 : index
    %c0_58 = arith.constant 0 : index
    %c0_59 = arith.constant 0 : index
    %110 = vector.load %arg6[%c2_57, %c0_58, %c0_59] : memref<4x1x64xf32, #tpu.memory_space<vmem>>, vector<1x1x64xf32>
    %111 = vector.shape_cast %110 : vector<1x1x64xf32> to vector<1x64xf32>
    %c2_60 = arith.constant 2 : index
    %c0_61 = arith.constant 0 : index
    %c0_62 = arith.constant 0 : index
    %112 = vector.load %arg7[%c2_60, %c0_61, %c0_62] : memref<4x1x64xf32, #tpu.memory_space<vmem>>, vector<1x1x64xf32>
    %113 = vector.shape_cast %112 : vector<1x1x64xf32> to vector<1x64xf32>
    %cst_63 = arith.constant dense<0.000000e+00> : vector<8xf32>
    %114 = vector.multi_reduction <add>, %109, %cst_63 [1] : vector<8x64xf32> to vector<8xf32>
    %115 = vector.shape_cast %114 : vector<8xf32> to vector<8x1xf32>
    %cst_64 = arith.constant 6.400000e+01 : f32
    %116 = vector.broadcast %cst_64 : f32 to vector<8x1xf32>
    %117 = arith.divf %115, %116 : vector<8x1xf32>
    %118 = arith.mulf %109, %109 : vector<8x64xf32>
    %cst_65 = arith.constant dense<0.000000e+00> : vector<8xf32>
    %119 = vector.multi_reduction <add>, %118, %cst_65 [1] : vector<8x64xf32> to vector<8xf32>
    %120 = vector.shape_cast %119 : vector<8xf32> to vector<8x1xf32>
    %cst_66 = arith.constant 6.400000e+01 : f32
    %121 = vector.broadcast %cst_66 : f32 to vector<8x1xf32>
    %122 = arith.divf %120, %121 : vector<8x1xf32>
    %123 = arith.mulf %117, %117 : vector<8x1xf32>
    %124 = arith.subf %122, %123 : vector<8x1xf32>
    %cst_67 = arith.constant 9.99999974E-6 : f32
    %125 = vector.broadcast %cst_67 : f32 to vector<8x1xf32>
    %126 = arith.addf %124, %125 : vector<8x1xf32>
    %127 = math.rsqrt %126 : vector<8x1xf32>
    %128 = vector.broadcast %117 : vector<8x1xf32> to vector<8x64xf32>
    %129 = arith.subf %109, %128 : vector<8x64xf32>
    %130 = vector.broadcast %127 : vector<8x1xf32> to vector<8x64xf32>
    %131 = arith.mulf %129, %130 : vector<8x64xf32>
    %132 = vector.broadcast %111 : vector<1x64xf32> to vector<8x64xf32>
    %133 = arith.mulf %131, %132 : vector<8x64xf32>
    %134 = vector.broadcast %113 : vector<1x64xf32> to vector<8x64xf32>
    %135 = arith.addf %133, %134 : vector<8x64xf32>
    %c3 = arith.constant 3 : index
    %c0_68 = arith.constant 0 : index
    %c0_69 = arith.constant 0 : index
    %136 = vector.load %arg4[%c3, %c0_68, %c0_69] : memref<4x64x64xf32, #tpu.memory_space<vmem>>, vector<1x64x64xf32>
    %137 = vector.shape_cast %136 : vector<1x64x64xf32> to vector<64x64xf32>
    %cst_70 = arith.constant dense<0.000000e+00> : vector<8x64xf32>
    %138 = tpu.matmul %135, %137, %cst_70 {dimension_numbers = #tpu.dot_dimension_numbers<[1], [0], [0], [1], [0, 0, 1, 1], [], []>, precision = #tpu.contract_precision<fp32>} : vector<8x64xf32>, vector<64x64xf32>, vector<8x64xf32> -> vector<8x64xf32>
    %c3_71 = arith.constant 3 : index
    %c0_72 = arith.constant 0 : index
    %c0_73 = arith.constant 0 : index
    %139 = vector.load %arg5[%c3_71, %c0_72, %c0_73] : memref<4x1x64xf32, #tpu.memory_space<vmem>>, vector<1x1x64xf32>
    %140 = vector.shape_cast %139 : vector<1x1x64xf32> to vector<1x64xf32>
    %141 = vector.broadcast %140 : vector<1x64xf32> to vector<8x64xf32>
    %142 = arith.addf %138, %141 : vector<8x64xf32>
    %143 = math.tanh %142 : vector<8x64xf32>
    %c3_74 = arith.constant 3 : index
    %c0_75 = arith.constant 0 : index
    %c0_76 = arith.constant 0 : index
    %144 = vector.load %arg6[%c3_74, %c0_75, %c0_76] : memref<4x1x64xf32, #tpu.memory_space<vmem>>, vector<1x1x64xf32>
    %145 = vector.shape_cast %144 : vector<1x1x64xf32> to vector<1x64xf32>
    %c3_77 = arith.constant 3 : index
    %c0_78 = arith.constant 0 : index
    %c0_79 = arith.constant 0 : index
    %146 = vector.load %arg7[%c3_77, %c0_78, %c0_79] : memref<4x1x64xf32, #tpu.memory_space<vmem>>, vector<1x1x64xf32>
    %147 = vector.shape_cast %146 : vector<1x1x64xf32> to vector<1x64xf32>
    %cst_80 = arith.constant dense<0.000000e+00> : vector<8xf32>
    %148 = vector.multi_reduction <add>, %143, %cst_80 [1] : vector<8x64xf32> to vector<8xf32>
    %149 = vector.shape_cast %148 : vector<8xf32> to vector<8x1xf32>
    %cst_81 = arith.constant 6.400000e+01 : f32
    %150 = vector.broadcast %cst_81 : f32 to vector<8x1xf32>
    %151 = arith.divf %149, %150 : vector<8x1xf32>
    %152 = arith.mulf %143, %143 : vector<8x64xf32>
    %cst_82 = arith.constant dense<0.000000e+00> : vector<8xf32>
    %153 = vector.multi_reduction <add>, %152, %cst_82 [1] : vector<8x64xf32> to vector<8xf32>
    %154 = vector.shape_cast %153 : vector<8xf32> to vector<8x1xf32>
    %cst_83 = arith.constant 6.400000e+01 : f32
    %155 = vector.broadcast %cst_83 : f32 to vector<8x1xf32>
    %156 = arith.divf %154, %155 : vector<8x1xf32>
    %157 = arith.mulf %151, %151 : vector<8x1xf32>
    %158 = arith.subf %156, %157 : vector<8x1xf32>
    %cst_84 = arith.constant 9.99999974E-6 : f32
    %159 = vector.broadcast %cst_84 : f32 to vector<8x1xf32>
    %160 = arith.addf %158, %159 : vector<8x1xf32>
    %161 = math.rsqrt %160 : vector<8x1xf32>
    %162 = vector.broadcast %151 : vector<8x1xf32> to vector<8x64xf32>
    %163 = arith.subf %143, %162 : vector<8x64xf32>
    %164 = vector.broadcast %161 : vector<8x1xf32> to vector<8x64xf32>
    %165 = arith.mulf %163, %164 : vector<8x64xf32>
    %166 = vector.broadcast %145 : vector<1x64xf32> to vector<8x64xf32>
    %167 = arith.mulf %165, %166 : vector<8x64xf32>
    %168 = vector.broadcast %147 : vector<1x64xf32> to vector<8x64xf32>
    %169 = arith.addf %167, %168 : vector<8x64xf32>
    %170 = arith.addf %101, %169 : vector<8x64xf32>
    %171 = math.tanh %170 : vector<8x64xf32>
    %c1_85 = arith.constant 1 : index
    %c0_86 = arith.constant 0 : index
    %c0_87 = arith.constant 0 : index
    %172 = vector.load %arg8[%c1_85, %c0_86, %c0_87] : memref<2x1x64xf32, #tpu.memory_space<vmem>>, vector<1x1x64xf32>
    %173 = vector.shape_cast %172 : vector<1x1x64xf32> to vector<1x64xf32>
    %c1_88 = arith.constant 1 : index
    %c0_89 = arith.constant 0 : index
    %c0_90 = arith.constant 0 : index
    %174 = vector.load %arg9[%c1_88, %c0_89, %c0_90] : memref<2x1x64xf32, #tpu.memory_space<vmem>>, vector<1x1x64xf32>
    %175 = vector.shape_cast %174 : vector<1x1x64xf32> to vector<1x64xf32>
    %cst_91 = arith.constant dense<0.000000e+00> : vector<8xf32>
    %176 = vector.multi_reduction <add>, %171, %cst_91 [1] : vector<8x64xf32> to vector<8xf32>
    %177 = vector.shape_cast %176 : vector<8xf32> to vector<8x1xf32>
    %cst_92 = arith.constant 6.400000e+01 : f32
    %178 = vector.broadcast %cst_92 : f32 to vector<8x1xf32>
    %179 = arith.divf %177, %178 : vector<8x1xf32>
    %180 = arith.mulf %171, %171 : vector<8x64xf32>
    %cst_93 = arith.constant dense<0.000000e+00> : vector<8xf32>
    %181 = vector.multi_reduction <add>, %180, %cst_93 [1] : vector<8x64xf32> to vector<8xf32>
    %182 = vector.shape_cast %181 : vector<8xf32> to vector<8x1xf32>
    %cst_94 = arith.constant 6.400000e+01 : f32
    %183 = vector.broadcast %cst_94 : f32 to vector<8x1xf32>
    %184 = arith.divf %182, %183 : vector<8x1xf32>
    %185 = arith.mulf %179, %179 : vector<8x1xf32>
    %186 = arith.subf %184, %185 : vector<8x1xf32>
    %cst_95 = arith.constant 9.99999974E-6 : f32
    %187 = vector.broadcast %cst_95 : f32 to vector<8x1xf32>
    %188 = arith.addf %186, %187 : vector<8x1xf32>
    %189 = math.rsqrt %188 : vector<8x1xf32>
    %190 = vector.broadcast %179 : vector<8x1xf32> to vector<8x64xf32>
    %191 = arith.subf %171, %190 : vector<8x64xf32>
    %192 = vector.broadcast %189 : vector<8x1xf32> to vector<8x64xf32>
    %193 = arith.mulf %191, %192 : vector<8x64xf32>
    %194 = vector.broadcast %173 : vector<1x64xf32> to vector<8x64xf32>
    %195 = arith.mulf %193, %194 : vector<8x64xf32>
    %196 = vector.broadcast %175 : vector<1x64xf32> to vector<8x64xf32>
    %197 = arith.addf %195, %196 : vector<8x64xf32>
    %c0_96 = arith.constant 0 : index
    %c0_97 = arith.constant 0 : index
    %198 = vector.load %arg10[%c0_96, %c0_97] : memref<64x128xf32, #tpu.memory_space<vmem>>, vector<64x128xf32>
    %cst_98 = arith.constant dense<0.000000e+00> : vector<8x128xf32>
    %199 = tpu.matmul %197, %198, %cst_98 {dimension_numbers = #tpu.dot_dimension_numbers<[1], [0], [0], [1], [0, 0, 1, 1], [], []>, precision = #tpu.contract_precision<fp32>} : vector<8x64xf32>, vector<64x128xf32>, vector<8x128xf32> -> vector<8x128xf32>
    %c0_99 = arith.constant 0 : index
    %c0_100 = arith.constant 0 : index
    %200 = vector.load %arg11[%c0_99, %c0_100] : memref<1x128xf32, #tpu.memory_space<vmem>>, vector<1x128xf32>
    %201 = vector.broadcast %200 : vector<1x128xf32> to vector<8x128xf32>
    %202 = arith.addf %199, %201 : vector<8x128xf32>
    %c0_101 = arith.constant 0 : index
    %c0_102 = arith.constant 0 : index
    %203 = vector.load %arg12[%c0_101, %c0_102] : memref<8x128xf32, #tpu.memory_space<vmem>>, vector<8x128xf32>
    tpu.vector_store %arg12[%c0_101, %c0_102], %202 {strides = array<i32>} : memref<8x128xf32, #tpu.memory_space<vmem>>, vector<8x128xf32>,
    return
  }
  func.func @transform_0(%arg0: i32) -> (i32, i32) {
    %c0_i32 = arith.constant 0 : i32
    %c0_i32_0 = arith.constant 0 : i32
    return %arg0, %c0_i32 : i32, i32
  }
  func.func @transform_1(%arg0: i32) -> (i32, i32) {
    %c0_i32 = arith.constant 0 : i32
    %c0_i32_0 = arith.constant 0 : i32
    %c0_i32_1 = arith.constant 0 : i32
    return %c0_i32, %c0_i32_0 : i32, i32
  }
  func.func @transform_2(%arg0: i32) -> (i32, i32) {
    %c0_i32 = arith.constant 0 : i32
    %c0_i32_0 = arith.constant 0 : i32
    %c0_i32_1 = arith.constant 0 : i32
    return %c0_i32, %c0_i32_0 : i32, i32
  }
  func.func @transform_3(%arg0: i32) -> (i32, i32, i32) {
    %c0_i32 = arith.constant 0 : i32
    %c0_i32_0 = arith.constant 0 : i32
    %c0_i32_1 = arith.constant 0 : i32
    %c0_i32_2 = arith.constant 0 : i32
    return %c0_i32, %c0_i32_0, %c0_i32_1 : i32, i32, i32
  }
  func.func @transform_4(%arg0: i32) -> (i32, i32, i32) {
    %c0_i32 = arith.constant 0 : i32
    %c0_i32_0 = arith.constant 0 : i32
    %c0_i32_1 = arith.constant 0 : i32
    %c0_i32_2 = arith.constant 0 : i32
    return %c0_i32, %c0_i32_0, %c0_i32_1 : i32, i32, i32
  }
  func.func @transform_5(%arg0: i32) -> (i32, i32, i32) {
    %c0_i32 = arith.constant 0 : i32
    %c0_i32_0 = arith.constant 0 : i32
    %c0_i32_1 = arith.constant 0 : i32
    %c0_i32_2 = arith.constant 0 : i32
    return %c0_i32, %c0_i32_0, %c0_i32_1 : i32, i32, i32
  }
  func.func @transform_6(%arg0: i32) -> (i32, i32, i32) {
    %c0_i32 = arith.constant 0 : i32
    %c0_i32_0 = arith.constant 0 : i32
    %c0_i32_1 = arith.constant 0 : i32
    %c0_i32_2 = arith.constant 0 : i32
    return %c0_i32, %c0_i32_0, %c0_i32_1 : i32, i32, i32
  }
  func.func @transform_7(%arg0: i32) -> (i32, i32, i32) {
    %c0_i32 = arith.constant 0 : i32
    %c0_i32_0 = arith.constant 0 : i32
    %c0_i32_1 = arith.constant 0 : i32
    %c0_i32_2 = arith.constant 0 : i32
    return %c0_i32, %c0_i32_0, %c0_i32_1 : i32, i32, i32
  }
  func.func @transform_8(%arg0: i32) -> (i32, i32, i32) {
    %c0_i32 = arith.constant 0 : i32
    %c0_i32_0 = arith.constant 0 : i32
    %c0_i32_1 = arith.constant 0 : i32
    %c0_i32_2 = arith.constant 0 : i32
    return %c0_i32, %c0_i32_0, %c0_i32_1 : i32, i32, i32
  }
  func.func @transform_9(%arg0: i32) -> (i32, i32) {
    %c0_i32 = arith.constant 0 : i32
    %c0_i32_0 = arith.constant 0 : i32
    %c0_i32_1 = arith.constant 0 : i32
    return %c0_i32, %c0_i32_0 : i32, i32
  }
  func.func @transform_10(%arg0: i32) -> (i32, i32) {
    %c0_i32 = arith.constant 0 : i32
    %c0_i32_0 = arith.constant 0 : i32
    %c0_i32_1 = arith.constant 0 : i32
    return %c0_i32, %c0_i32_0 : i32, i32
  }
  func.func @transform_11(%arg0: i32) -> (i32, i32) {
    %c0_i32 = arith.constant 0 : i32
    %c0_i32_0 = arith.constant 0 : i32
    return %arg0, %c0_i32 : i32, i32
  }
}

module attributes {stable_mosaic.version = 11 : i64} {
  func.func @res_dnn_kernel(%arg0: i32, %arg1: memref<8x32xf32, #tpu.memory_space<vmem>>, %arg2: memref<32x64xf32, #tpu.memory_space<vmem>>, %arg3: memref<1x64xf32, #tpu.memory_space<vmem>>, %arg4: memref<4x64x64xf32, #tpu.memory_space<vmem>>, %arg5: memref<4x1x64xf32, #tpu.memory_space<vmem>>, %arg6: memref<4x1x64xf32, #tpu.memory_space<vmem>>, %arg7: memref<4x1x64xf32, #tpu.memory_space<vmem>>, %arg8: memref<2x1x64xf32, #tpu.memory_space<vmem>>, %arg9: memref<2x1x64xf32, #tpu.memory_space<vmem>>, %arg10: memref<64x128xf32, #tpu.memory_space<vmem>>, %arg11: memref<1x128xf32, #tpu.memory_space<vmem>>, %arg12: memref<8x128xf32, #tpu.memory_space<vmem>>) attributes {dimension_semantics = [#tpu.dimension_semantics<parallel>], iteration_bounds = array<i64: 2>, scalar_prefetch = 0 : i64, scratch_operands = 0 : i64, tpu.core_type = #tpu.core_type<tc>, window_params = [{transform_indices = @transform_0, window_bounds = array<i64: 8, 32>}, {pipeline_mode = #tpu.pipeline_mode<synchronous>, transform_indices = @transform_1, window_bounds = array<i64: 32, 64>}, {pipeline_mode = #tpu.pipeline_mode<synchronous>, transform_indices = @transform_2, window_bounds = array<i64: 1, 64>}, {pipeline_mode = #tpu.pipeline_mode<synchronous>, transform_indices = @transform_3, window_bounds = array<i64: 4, 64, 64>}, {pipeline_mode = #tpu.pipeline_mode<synchronous>, transform_indices = @transform_4, window_bounds = array<i64: 4, 1, 64>}, {pipeline_mode = #tpu.pipeline_mode<synchronous>, transform_indices = @transform_5, window_bounds = array<i64: 4, 1, 64>}, {pipeline_mode = #tpu.pipeline_mode<synchronous>, transform_indices = @transform_6, window_bounds = array<i64: 4, 1, 64>}, {pipeline_mode = #tpu.pipeline_mode<synchronous>, transform_indices = @transform_7, window_bounds = array<i64: 2, 1, 64>}, {pipeline_mode = #tpu.pipeline_mode<synchronous>, transform_indices = @transform_8, window_bounds = array<i64: 2, 1, 64>}, {pipeline_mode = #tpu.pipeline_mode<synchronous>, transform_indices = @transform_9, window_bounds = array<i64: 64, 128>}, {pipeline_mode = #tpu.pipeline_mode<synchronous>, transform_indices = @transform_10, window_bounds = array<i64: 1, 128>}, {transform_indices = @transform_11, window_bounds = array<i64: 8, 128>}]} {
    %c0 = arith.constant 0 : index
    %c0_0 = arith.constant 0 : index
    %0 = vector.load %arg1[%c0, %c0_0] : memref<8x32xf32, #tpu.memory_space<vmem>>, vector<8x32xf32>
    %c0_1 = arith.constant 0 : index
    %c0_2 = arith.constant 0 : index
    %1 = vector.load %arg2[%c0_1, %c0_2] : memref<32x64xf32, #tpu.memory_space<vmem>>, vector<32x64xf32>
    %cst = arith.constant dense<0.000000e+00> : vector<8x64xf32>
    %2 = tpu.matmul %0, %1, %cst {dimension_numbers = #tpu.dot_dimension_numbers<[1], [0], [0], [1], [0, 0, 1, 1], [], []>, precision = #tpu.contract_precision<fp32>} : vector<8x32xf32>, vector<32x64xf32>, vector<8x64xf32> -> vector<8x64xf32>
    %c0_3 = arith.constant 0 : index
    %c0_4 = arith.constant 0 : index
    %3 = vector.load %arg3[%c0_3, %c0_4] : memref<1x64xf32, #tpu.memory_space<vmem>>, vector<1x64xf32>
    %4 = vector.broadcast %3 : vector<1x64xf32> to vector<8x64xf32>
    %5 = arith.addf %2, %4 : vector<8x64xf32>
    %c0_5 = arith.constant 0 : index
    %c0_6 = arith.constant 0 : index
    %c0_7 = arith.constant 0 : index
    %6 = vector.load %arg4[%c0_5, %c0_6, %c0_7] : memref<4x64x64xf32, #tpu.memory_space<vmem>>, vector<1x64x64xf32>
    %7 = vector.shape_cast %6 : vector<1x64x64xf32> to vector<64x64xf32>
    %cst_8 = arith.constant dense<0.000000e+00> : vector<8x64xf32>
    %8 = tpu.matmul %5, %7, %cst_8 {dimension_numbers = #tpu.dot_dimension_numbers<[1], [0], [0], [1], [0, 0, 1, 1], [], []>, precision = #tpu.contract_precision<fp32>} : vector<8x64xf32>, vector<64x64xf32>, vector<8x64xf32> -> vector<8x64xf32>
    %c0_9 = arith.constant 0 : index
    %c0_10 = arith.constant 0 : index
    %c0_11 = arith.constant 0 : index
    %9 = vector.load %arg5[%c0_9, %c0_10, %c0_11] : memref<4x1x64xf32, #tpu.memory_space<vmem>>, vector<1x1x64xf32>
    %10 = vector.shape_cast %9 : vector<1x1x64xf32> to vector<1x64xf32>
    %11 = vector.broadcast %10 : vector<1x64xf32> to vector<8x64xf32>
    %12 = arith.addf %8, %11 : vector<8x64xf32>
    %13 = math.tanh %12 : vector<8x64xf32>
    %c0_12 = arith.constant 0 : index
    %c0_13 = arith.constant 0 : index
    %c0_14 = arith.constant 0 : index
    %14 = vector.load %arg6[%c0_12, %c0_13, %c0_14] : memref<4x1x64xf32, #tpu.memory_space<vmem>>, vector<1x1x64xf32>
    %15 = vector.shape_cast %14 : vector<1x1x64xf32> to vector<1x64xf32>
    %c0_15 = arith.constant 0 : index
    %c0_16 = arith.constant 0 : index
    %c0_17 = arith.constant 0 : index
    %16 = vector.load %arg7[%c0_15, %c0_16, %c0_17] : memref<4x1x64xf32, #tpu.memory_space<vmem>>, vector<1x1x64xf32>
    %17 = vector.shape_cast %16 : vector<1x1x64xf32> to vector<1x64xf32>
    %cst_18 = arith.constant dense<0.000000e+00> : vector<8xf32>
    %18 = vector.multi_reduction <add>, %13, %cst_18 [1] : vector<8x64xf32> to vector<8xf32>
    %19 = vector.shape_cast %18 : vector<8xf32> to vector<8x1xf32>
    %cst_19 = arith.constant 6.400000e+01 : f32
    %20 = vector.broadcast %cst_19 : f32 to vector<8x1xf32>
    %21 = arith.divf %19, %20 : vector<8x1xf32>
    %22 = arith.mulf %13, %13 : vector<8x64xf32>
    %cst_20 = arith.constant dense<0.000000e+00> : vector<8xf32>
    %23 = vector.multi_reduction <add>, %22, %cst_20 [1] : vector<8x64xf32> to vector<8xf32>
    %24 = vector.shape_cast %23 : vector<8xf32> to vector<8x1xf32>
    %cst_21 = arith.constant 6.400000e+01 : f32
    %25 = vector.broadcast %cst_21 : f32 to vector<8x1xf32>
    %26 = arith.divf %24, %25 : vector<8x1xf32>
    %27 = arith.mulf %21, %21 : vector<8x1xf32>
    %28 = arith.subf %26, %27 : vector<8x1xf32>
    %cst_22 = arith.constant 9.99999974E-6 : f32
    %29 = vector.broadcast %cst_22 : f32 to vector<8x1xf32>
    %30 = arith.addf %28, %29 : vector<8x1xf32>
    %31 = math.rsqrt %30 : vector<8x1xf32>
    %32 = vector.broadcast %21 : vector<8x1xf32> to vector<8x64xf32>
    %33 = arith.subf %13, %32 : vector<8x64xf32>
    %34 = vector.broadcast %31 : vector<8x1xf32> to vector<8x64xf32>
    %35 = arith.mulf %33, %34 : vector<8x64xf32>
    %36 = vector.broadcast %15 : vector<1x64xf32> to vector<8x64xf32>
    %37 = arith.mulf %35, %36 : vector<8x64xf32>
    %38 = vector.broadcast %17 : vector<1x64xf32> to vector<8x64xf32>
    %39 = arith.addf %37, %38 : vector<8x64xf32>
    %c1 = arith.constant 1 : index
    %c0_23 = arith.constant 0 : index
    %c0_24 = arith.constant 0 : index
    %40 = vector.load %arg4[%c1, %c0_23, %c0_24] : memref<4x64x64xf32, #tpu.memory_space<vmem>>, vector<1x64x64xf32>
    %41 = vector.shape_cast %40 : vector<1x64x64xf32> to vector<64x64xf32>
    %cst_25 = arith.constant dense<0.000000e+00> : vector<8x64xf32>
    %42 = tpu.matmul %39, %41, %cst_25 {dimension_numbers = #tpu.dot_dimension_numbers<[1], [0], [0], [1], [0, 0, 1, 1], [], []>, precision = #tpu.contract_precision<fp32>} : vector<8x64xf32>, vector<64x64xf32>, vector<8x64xf32> -> vector<8x64xf32>
    %c1_26 = arith.constant 1 : index
    %c0_27 = arith.constant 0 : index
    %c0_28 = arith.constant 0 : index
    %43 = vector.load %arg5[%c1_26, %c0_27, %c0_28] : memref<4x1x64xf32, #tpu.memory_space<vmem>>, vector<1x1x64xf32>
    %44 = vector.shape_cast %43 : vector<1x1x64xf32> to vector<1x64xf32>
    %45 = vector.broadcast %44 : vector<1x64xf32> to vector<8x64xf32>
    %46 = arith.addf %42, %45 : vector<8x64xf32>
    %47 = math.tanh %46 : vector<8x64xf32>
    %c1_29 = arith.constant 1 : index
    %c0_30 = arith.constant 0 : index
    %c0_31 = arith.constant 0 : index
    %48 = vector.load %arg6[%c1_29, %c0_30, %c0_31] : memref<4x1x64xf32, #tpu.memory_space<vmem>>, vector<1x1x64xf32>
    %49 = vector.shape_cast %48 : vector<1x1x64xf32> to vector<1x64xf32>
    %c1_32 = arith.constant 1 : index
    %c0_33 = arith.constant 0 : index
    %c0_34 = arith.constant 0 : index
    %50 = vector.load %arg7[%c1_32, %c0_33, %c0_34] : memref<4x1x64xf32, #tpu.memory_space<vmem>>, vector<1x1x64xf32>
    %51 = vector.shape_cast %50 : vector<1x1x64xf32> to vector<1x64xf32>
    %cst_35 = arith.constant dense<0.000000e+00> : vector<8xf32>
    %52 = vector.multi_reduction <add>, %47, %cst_35 [1] : vector<8x64xf32> to vector<8xf32>
    %53 = vector.shape_cast %52 : vector<8xf32> to vector<8x1xf32>
    %cst_36 = arith.constant 6.400000e+01 : f32
    %54 = vector.broadcast %cst_36 : f32 to vector<8x1xf32>
    %55 = arith.divf %53, %54 : vector<8x1xf32>
    %56 = arith.mulf %47, %47 : vector<8x64xf32>
    %cst_37 = arith.constant dense<0.000000e+00> : vector<8xf32>
    %57 = vector.multi_reduction <add>, %56, %cst_37 [1] : vector<8x64xf32> to vector<8xf32>
    %58 = vector.shape_cast %57 : vector<8xf32> to vector<8x1xf32>
    %cst_38 = arith.constant 6.400000e+01 : f32
    %59 = vector.broadcast %cst_38 : f32 to vector<8x1xf32>
    %60 = arith.divf %58, %59 : vector<8x1xf32>
    %61 = arith.mulf %55, %55 : vector<8x1xf32>
    %62 = arith.subf %60, %61 : vector<8x1xf32>
    %cst_39 = arith.constant 9.99999974E-6 : f32
    %63 = vector.broadcast %cst_39 : f32 to vector<8x1xf32>
    %64 = arith.addf %62, %63 : vector<8x1xf32>
    %65 = math.rsqrt %64 : vector<8x1xf32>
    %66 = vector.broadcast %55 : vector<8x1xf32> to vector<8x64xf32>
    %67 = arith.subf %47, %66 : vector<8x64xf32>
    %68 = vector.broadcast %65 : vector<8x1xf32> to vector<8x64xf32>
    %69 = arith.mulf %67, %68 : vector<8x64xf32>
    %70 = vector.broadcast %49 : vector<1x64xf32> to vector<8x64xf32>
    %71 = arith.mulf %69, %70 : vector<8x64xf32>
    %72 = vector.broadcast %51 : vector<1x64xf32> to vector<8x64xf32>
    %73 = arith.addf %71, %72 : vector<8x64xf32>
    %74 = arith.addf %5, %73 : vector<8x64xf32>
    %75 = math.tanh %74 : vector<8x64xf32>
    %c0_40 = arith.constant 0 : index
    %c0_41 = arith.constant 0 : index
    %c0_42 = arith.constant 0 : index
    %76 = vector.load %arg8[%c0_40, %c0_41, %c0_42] : memref<2x1x64xf32, #tpu.memory_space<vmem>>, vector<1x1x64xf32>
    %77 = vector.shape_cast %76 : vector<1x1x64xf32> to vector<1x64xf32>
    %c0_43 = arith.constant 0 : index
    %c0_44 = arith.constant 0 : index
    %c0_45 = arith.constant 0 : index
    %78 = vector.load %arg9[%c0_43, %c0_44, %c0_45] : memref<2x1x64xf32, #tpu.memory_space<vmem>>, vector<1x1x64xf32>
    %79 = vector.shape_cast %78 : vector<1x1x64xf32> to vector<1x64xf32>
    %cst_46 = arith.constant dense<0.000000e+00> : vector<8xf32>
    %80 = vector.multi_reduction <add>, %75, %cst_46 [1] : vector<8x64xf32> to vector<8xf32>
    %81 = vector.shape_cast %80 : vector<8xf32> to vector<8x1xf32>
    %cst_47 = arith.constant 6.400000e+01 : f32
    %82 = vector.broadcast %cst_47 : f32 to vector<8x1xf32>
    %83 = arith.divf %81, %82 : vector<8x1xf32>
    %84 = arith.mulf %75, %75 : vector<8x64xf32>
    %cst_48 = arith.constant dense<0.000000e+00> : vector<8xf32>
    %85 = vector.multi_reduction <add>, %84, %cst_48 [1] : vector<8x64xf32> to vector<8xf32>
    %86 = vector.shape_cast %85 : vector<8xf32> to vector<8x1xf32>
    %cst_49 = arith.constant 6.400000e+01 : f32
    %87 = vector.broadcast %cst_49 : f32 to vector<8x1xf32>
    %88 = arith.divf %86, %87 : vector<8x1xf32>
    %89 = arith.mulf %83, %83 : vector<8x1xf32>
    %90 = arith.subf %88, %89 : vector<8x1xf32>
    %cst_50 = arith.constant 9.99999974E-6 : f32
    %91 = vector.broadcast %cst_50 : f32 to vector<8x1xf32>
    %92 = arith.addf %90, %91 : vector<8x1xf32>
    %93 = math.rsqrt %92 : vector<8x1xf32>
    %94 = vector.broadcast %83 : vector<8x1xf32> to vector<8x64xf32>
    %95 = arith.subf %75, %94 : vector<8x64xf32>
    %96 = vector.broadcast %93 : vector<8x1xf32> to vector<8x64xf32>
    %97 = arith.mulf %95, %96 : vector<8x64xf32>
    %98 = vector.broadcast %77 : vector<1x64xf32> to vector<8x64xf32>
    %99 = arith.mulf %97, %98 : vector<8x64xf32>
    %100 = vector.broadcast %79 : vector<1x64xf32> to vector<8x64xf32>
    %101 = arith.addf %99, %100 : vector<8x64xf32>
    %c2 = arith.constant 2 : index
    %c0_51 = arith.constant 0 : index
    %c0_52 = arith.constant 0 : index
    %102 = vector.load %arg4[%c2, %c0_51, %c0_52] : memref<4x64x64xf32, #tpu.memory_space<vmem>>, vector<1x64x64xf32>
    %103 = vector.shape_cast %102 : vector<1x64x64xf32> to vector<64x64xf32>
    %cst_53 = arith.constant dense<0.000000e+00> : vector<8x64xf32>
    %104 = tpu.matmul %101, %103, %cst_53 {dimension_numbers = #tpu.dot_dimension_numbers<[1], [0], [0], [1], [0, 0, 1, 1], [], []>, precision = #tpu.contract_precision<fp32>} : vector<8x64xf32>, vector<64x64xf32>, vector<8x64xf32> -> vector<8x64xf32>
    %c2_54 = arith.constant 2 : index
    %c0_55 = arith.constant 0 : index
    %c0_56 = arith.constant 0 : index
    %105 = vector.load %arg5[%c2_54, %c0_55, %c0_56] : memref<4x1x64xf32, #tpu.memory_space<vmem>>, vector<1x1x64xf32>
    %106 = vector.shape_cast %105 : vector<1x1x64xf32> to vector<1x64xf32>
    %107 = vector.broadcast %106 : vector<1x64xf32> to vector<8x64xf32>
    %108 = arith.addf %104, %107 : vector<8x64xf32>
    %109 = math.tanh %108 : vector<8x64xf32>
    %c2_57 = arith.constant 2 : index
    %c0_58 = arith.constant 0 : index
    %c0_59 = arith.constant 0 : index
    %110 = vector.load %arg6[%c2_57, %c0_58, %c0_59] : memref<4x1x64xf32, #tpu.memory_space<vmem>>, vector<1x1x64xf32>
    %111 = vector.shape_cast %110 : vector<1x1x64xf32> to vector<1x64xf32>
    %c2_60 = arith.constant 2 : index
    %c0_61 = arith.constant 0 : index
    %c0_62 = arith.constant 0 : index
    %112 = vector.load %arg7[%c2_60, %c0_61, %c0_62] : memref<4x1x64xf32, #tpu.memory_space<vmem>>, vector<1x1x64xf32>
    %113 = vector.shape_cast %112 : vector<1x1x64xf32> to vector<1x64xf32>
    %cst_63 = arith.constant dense<0.000000e+00> : vector<8xf32>
    %114 = vector.multi_reduction <add>, %109, %cst_63 [1] : vector<8x64xf32> to vector<8xf32>
    %115 = vector.shape_cast %114 : vector<8xf32> to vector<8x1xf32>
    %cst_64 = arith.constant 6.400000e+01 : f32
    %116 = vector.broadcast %cst_64 : f32 to vector<8x1xf32>
    %117 = arith.divf %115, %116 : vector<8x1xf32>
    %118 = arith.mulf %109, %109 : vector<8x64xf32>
    %cst_65 = arith.constant dense<0.000000e+00> : vector<8xf32>
    %119 = vector.multi_reduction <add>, %118, %cst_65 [1] : vector<8x64xf32> to vector<8xf32>
    %120 = vector.shape_cast %119 : vector<8xf32> to vector<8x1xf32>
    %cst_66 = arith.constant 6.400000e+01 : f32
    %121 = vector.broadcast %cst_66 : f32 to vector<8x1xf32>
    %122 = arith.divf %120, %121 : vector<8x1xf32>
    %123 = arith.mulf %117, %117 : vector<8x1xf32>
    %124 = arith.subf %122, %123 : vector<8x1xf32>
    %cst_67 = arith.constant 9.99999974E-6 : f32
    %125 = vector.broadcast %cst_67 : f32 to vector<8x1xf32>
    %126 = arith.addf %124, %125 : vector<8x1xf32>
    %127 = math.rsqrt %126 : vector<8x1xf32>
    %128 = vector.broadcast %117 : vector<8x1xf32> to vector<8x64xf32>
    %129 = arith.subf %109, %128 : vector<8x64xf32>
    %130 = vector.broadcast %127 : vector<8x1xf32> to vector<8x64xf32>
    %131 = arith.mulf %129, %130 : vector<8x64xf32>
    %132 = vector.broadcast %111 : vector<1x64xf32> to vector<8x64xf32>
    %133 = arith.mulf %131, %132 : vector<8x64xf32>
    %134 = vector.broadcast %113 : vector<1x64xf32> to vector<8x64xf32>
    %135 = arith.addf %133, %134 : vector<8x64xf32>
    %c3 = arith.constant 3 : index
    %c0_68 = arith.constant 0 : index
    %c0_69 = arith.constant 0 : index
    %136 = vector.load %arg4[%c3, %c0_68, %c0_69] : memref<4x64x64xf32, #tpu.memory_space<vmem>>, vector<1x64x64xf32>
    %137 = vector.shape_cast %136 : vector<1x64x64xf32> to vector<64x64xf32>
    %cst_70 = arith.constant dense<0.000000e+00> : vector<8x64xf32>
    %138 = tpu.matmul %135, %137, %cst_70 {dimension_numbers = #tpu.dot_dimension_numbers<[1], [0], [0], [1], [0, 0, 1, 1], [], []>, precision = #tpu.contract_precision<fp32>} : vector<8x64xf32>, vector<64x64xf32>, vector<8x64xf32> -> vector<8x64xf32>
    %c3_71 = arith.constant 3 : index
    %c0_72 = arith.constant 0 : index
    %c0_73 = arith.constant 0 : index
    %139 = vector.load %arg5[%c3_71, %c0_72, %c0_73] : memref<4x1x64xf32, #tpu.memory_space<vmem>>, vector<1x1x64xf32>
    %140 = vector.shape_cast %139 : vector<1x1x64xf32> to vector<1x64xf32>
    %141 = vector.broadcast %140 : vector<1x64xf32> to vector<8x64xf32>
    %142 = arith.addf %138, %141 : vector<8x64xf32>
    %143 = math.tanh %142 : vector<8x64xf32>
    %c3_74 = arith.constant 3 : index
    %c0_75 = arith.constant 0 : index
    %c0_76 = arith.constant 0 : index
    %144 = vector.load %arg6[%c3_74, %c0_75, %c0_76] : memref<4x1x64xf32, #tpu.memory_space<vmem>>, vector<1x1x64xf32>
    %145 = vector.shape_cast %144 : vector<1x1x64xf32> to vector<1x64xf32>
    %c3_77 = arith.constant 3 : index
    %c0_78 = arith.constant 0 : index
    %c0_79 = arith.constant 0 : index
    %146 = vector.load %arg7[%c3_77, %c0_78, %c0_79] : memref<4x1x64xf32, #tpu.memory_space<vmem>>, vector<1x1x64xf32>
    %147 = vector.shape_cast %146 : vector<1x1x64xf32> to vector<1x64xf32>
    %cst_80 = arith.constant dense<0.000000e+00> : vector<8xf32>
    %148 = vector.multi_reduction <add>, %143, %cst_80 [1] : vector<8x64xf32> to vector<8xf32>
    %149 = vector.shape_cast %148 : vector<8xf32> to vector<8x1xf32>
    %cst_81 = arith.constant 6.400000e+01 : f32
    %150 = vector.broadcast %cst_81 : f32 to vector<8x1xf32>
    %151 = arith.divf %149, %150 : vector<8x1xf32>
    %152 = arith.mulf %143, %143 : vector<8x64xf32>
    %cst_82 = arith.constant dense<0.000000e+00> : vector<8xf32>
    %153 = vector.multi_reduction <add>, %152, %cst_82 [1] : vector<8x64xf32> to vector<8xf32>
    %154 = vector.shape_cast %153 : vector<8xf32> to vector<8x1xf32>
    %cst_83 = arith.constant 6.400000e+01 : f32
    %155 = vector.broadcast %cst_83 : f32 to vector<8x1xf32>
    %156 = arith.divf %154, %155 : vector<8x1xf32>
    %157 = arith.mulf %151, %151 : vector<8x1xf32>
    %158 = arith.subf %156, %157 : vector<8x1xf32>
    %cst_84 = arith.constant 9.99999974E-6 : f32
    %159 = vector.broadcast %cst_84 : f32 to vector<8x1xf32>
    %160 = arith.addf %158, %159 : vector<8x1xf32>
    %161 = math.rsqrt %160 : vector<8x1xf32>
    %162 = vector.broadcast %151 : vector<8x1xf32> to vector<8x64xf32>
    %163 = arith.subf %143, %162 : vector<8x64xf32>
    %164 = vector.broadcast %161 : vector<8x1xf32> to vector<8x64xf32>
    %165 = arith.mulf %163, %164 : vector<8x64xf32>
    %166 = vector.broadcast %145 : vector<1x64xf32> to vector<8x64xf32>
    %167 = arith.mulf %165, %166 : vector<8x64xf32>
    %168 = vector.broadcast %147 : vector<1x64xf32> to vector<8x64xf32>
    %169 = arith.addf %167, %168 : vector<8x64xf32>
    %170 = arith.addf %101, %169 : vector<8x64xf32>
    %171 = math.tanh %170 : vector<8x64xf32>
    %c1_85 = arith.constant 1 : index
    %c0_86 = arith.constant 0 : index
    %c0_87 = arith.constant 0 : index
    %172 = vector.load %arg8[%c1_85, %c0_86, %c0_87] : memref<2x1x64xf32, #tpu.memory_space<vmem>>, vector<1x1x64xf32>
    %173 = vector.shape_cast %172 : vector<1x1x64xf32> to vector<1x64xf32>
    %c1_88 = arith.constant 1 : index
    %c0_89 = arith.constant 0 : index
    %c0_90 = arith.constant 0 : index
    %174 = vector.load %arg9[%c1_88, %c0_89, %c0_90] : memref<2x1x64xf32, #tpu.memory_space<vmem>>, vector<1x1x64xf32>
    %175 = vector.shape_cast %174 : vector<1x1x64xf32> to vector<1x64xf32>
    %cst_91 = arith.constant dense<0.000000e+00> : vector<8xf32>
    %176 = vector.multi_reduction <add>, %171, %cst_91 [1] : vector<8x64xf32> to vector<8xf32>
    %177 = vector.shape_cast %176 : vector<8xf32> to vector<8x1xf32>
    %cst_92 = arith.constant 6.400000e+01 : f32
    %178 = vector.broadcast %cst_92 : f32 to vector<8x1xf32>
    %179 = arith.divf %177, %178 : vector<8x1xf32>
    %180 = arith.mulf %171, %171 : vector<8x64xf32>
    %cst_93 = arith.constant dense<0.000000e+00> : vector<8xf32>
    %181 = vector.multi_reduction <add>, %180, %cst_93 [1] : vector<8x64xf32> to vector<8xf32>
    %182 = vector.shape_cast %181 : vector<8xf32> to vector<8x1xf32>
    %cst_94 = arith.constant 6.400000e+01 : f32
    %183 = vector.broadcast %cst_94 : f32 to vector<8x1xf32>
    %184 = arith.divf %182, %183 : vector<8x1xf32>
    %185 = arith.mulf %179, %179 : vector<8x1xf32>
    %186 = arith.subf %184, %185 : vector<8x1xf32>
    %cst_95 = arith.constant 9.99999974E-6 : f32
    %187 = vector.broadcast %cst_95 : f32 to vector<8x1xf32>
    %188 = arith.addf %186, %187 : vector<8x1xf32>
    %189 = math.rsqrt %188 : vector<8x1xf32>
    %190 = vector.broadcast %179 : vector<8x1xf32> to vector<8x64xf32>
    %191 = arith.subf %171, %190 : vector<8x64xf32>
    %192 = vector.broadcast %189 : vector<8x1xf32> to vector<8x64xf32>
    %193 = arith.mulf %191, %192 : vector<8x64xf32>
    %194 = vector.broadcast %173 : vector<1x64xf32> to vector<8x64xf32>
    %195 = arith.mulf %193, %194 : vector<8x64xf32>
    %196 = vector.broadcast %175 : vector<1x64xf32> to vector<8x64xf32>
    %197 = arith.addf %195, %196 : vector<8x64xf32>
    %c0_96 = arith.constant 0 : index
    %c0_97 = arith.constant 0 : index
    %198 = vector.load %arg10[%c0_96, %c0_97] : memref<64x128xf32, #tpu.memory_space<vmem>>, vector<64x128xf32>
    %cst_98 = arith.constant dense<0.000000e+00> : vector<8x128xf32>
    %199 = tpu.matmul %197, %198, %cst_98 {dimension_numbers = #tpu.dot_dimension_numbers<[1], [0], [0], [1], [0, 0, 1, 1], [], []>, precision = #tpu.contract_precision<fp32>} : vector<8x64xf32>, vector<64x128xf32>, vector<8x128xf32> -> vector<8x128xf32>
    %c0_99 = arith.constant 0 : index
    %c0_100 = arith.constant 0 : index
    %200 = vector.load %arg11[%c0_99, %c0_100] : memref<1x128xf32, #tpu.memory_space<vmem>>, vector<1x128xf32>
    %201 = vector.broadcast %200 : vector<1x128xf32> to vector<8x128xf32>
    %202 = arith.addf %199, %201 : vector<8x128xf32>
    %c0_101 = arith.constant 0 : index
    %c0_102 = arith.constant 0 : index
    %203 = vector.load %arg12[%c0_101, %c0_102] : memref<8x128xf32, #tpu.memory_space<vmem>>, vector<8x128xf32>
    tpu.vector_store %arg12[%c0_101, %c0_102], %202 {strides = array<i32>} : memref<8x128xf32, #tpu.memory_space<vmem>>, vector<8x128xf32>,
    return
  }
  func.func @transform_0(%arg0: i32) -> (i32, i32) {
    %c0_i32 = arith.constant 0 : i32
    %c0_i32_0 = arith.constant 0 : i32
    return %arg0, %c0_i32 : i32, i32
  }
  func.func @transform_1(%arg0: i32) -> (i32, i32) {
    %c0_i32 = arith.constant 0 : i32
    %c0_i32_0 = arith.constant 0 : i32
    %c0_i32_1 = arith.constant 0 : i32
    return %c0_i32, %c0_i32_0 : i32, i32
  }
  func.func @transform_2(%arg0: i32) -> (i32, i32) {
    %c0_i32 = arith.constant 0 : i32
    %c0_i32_0 = arith.constant 0 : i32
    %c0_i32_1 = arith.constant 0 : i32
    return %c0_i32, %c0_i32_0 : i32, i32
  }
  func.func @transform_3(%arg0: i32) -> (i32, i32, i32) {
    %c0_i32 = arith.constant 0 : i32
    %c0_i32_0 = arith.constant 0 : i32
    %c0_i32_1 = arith.constant 0 : i32
    %c0_i32_2 = arith.constant 0 : i32
    return %c0_i32, %c0_i32_0, %c0_i32_1 : i32, i32, i32
  }
  func.func @transform_4(%arg0: i32) -> (i32, i32, i32) {
    %c0_i32 = arith.constant 0 : i32
    %c0_i32_0 = arith.constant 0 : i32
    %c0_i32_1 = arith.constant 0 : i32
    %c0_i32_2 = arith.constant 0 : i32
    return %c0_i32, %c0_i32_0, %c0_i32_1 : i32, i32, i32
  }
  func.func @transform_5(%arg0: i32) -> (i32, i32, i32) {
    %c0_i32 = arith.constant 0 : i32
    %c0_i32_0 = arith.constant 0 : i32
    %c0_i32_1 = arith.constant 0 : i32
    %c0_i32_2 = arith.constant 0 : i32
    return %c0_i32, %c0_i32_0, %c0_i32_1 : i32, i32, i32
  }
  func.func @transform_6(%arg0: i32) -> (i32, i32, i32) {
    %c0_i32 = arith.constant 0 : i32
    %c0_i32_0 = arith.constant 0 : i32
    %c0_i32_1 = arith.constant 0 : i32
    %c0_i32_2 = arith.constant 0 : i32
    return %c0_i32, %c0_i32_0, %c0_i32_1 : i32, i32, i32
  }
  func.func @transform_7(%arg0: i32) -> (i32, i32, i32) {
    %c0_i32 = arith.constant 0 : i32
    %c0_i32_0 = arith.constant 0 : i32
    %c0_i32_1 = arith.constant 0 : i32
    %c0_i32_2 = arith.constant 0 : i32
    return %c0_i32, %c0_i32_0, %c0_i32_1 : i32, i32, i32
  }
  func.func @transform_8(%arg0: i32) -> (i32, i32, i32) {
    %c0_i32 = arith.constant 0 : i32
    %c0_i32_0 = arith.constant 0 : i32
    %c0_i32_1 = arith.constant 0 : i32
    %c0_i32_2 = arith.constant 0 : i32
    return %c0_i32, %c0_i32_0, %c0_i32_1 : i32, i32, i32
  }
  func.func @transform_9(%arg0: i32) -> (i32, i32) {
    %c0_i32 = arith.constant 0 : i32
    %c0_i32_0 = arith.constant 0 : i32
    %c0_i32_1 = arith.constant 0 : i32
    return %c0_i32, %c0_i32_0 : i32, i32
  }
  func.func @transform_10(%arg0: i32) -> (i32, i32) {
    %c0_i32 = arith.constant 0 : i32
    %c0_i32_0 = arith.constant 0 : i32
    %c0_i32_1 = arith.constant 0 : i32
    return %c0_i32, %c0_i32_0 : i32, i32
  }
  func.func @transform_11(%arg0: i32) -> (i32, i32) {
    %c0_i32 = arith.constant 0 : i32
    %c0_i32_0 = arith.constant 0 : i32
    return %arg0, %c0_i32 : i32, i32
  }
}

</mosaic_0001>

<llo_original>
// kernel: tpu_custom_call.1
$region0: #{tpu_custom_call.1}
  #allocation0 [shape = 'u32[]', space=smem, size = 0x4, offset = 0x4, fixed_abs, tag = 'smem constant byte address 0x4 - core index']
  #allocation1 [shape = 'u32[144,128]{1,0:T(1,128)}', space=vmem, size = 0x12000, scoped, tag = 'internal scratch']
  %s0 = inlined_call_operand.hbm [shape: f32[16,32], index: 0, kind: input, shape index: {}]
  %s1 = inlined_call_operand.hbm [shape: f32[32,64], index: 1, kind: input, shape index: {}]
  %s2 = inlined_call_operand.vmem [shape: f32[1,64], index: 2, kind: input, shape index: {}]
  %s3 = inlined_call_operand.hbm [shape: f32[4,64,64], index: 3, kind: input, shape index: {}]
  %s4 = inlined_call_operand.vmem [shape: f32[4,1,64], index: 4, kind: input, shape index: {}]
  %s5 = inlined_call_operand.vmem [shape: f32[4,1,64], index: 5, kind: input, shape index: {}]
  %s6 = inlined_call_operand.vmem [shape: f32[4,1,64], index: 6, kind: input, shape index: {}]
  %s7 = inlined_call_operand.vmem [shape: f32[2,1,64], index: 7, kind: input, shape index: {}]
  %s8 = inlined_call_operand.vmem [shape: f32[2,1,64], index: 8, kind: input, shape index: {}]
  %s9 = inlined_call_operand.hbm [shape: f32[64,128], index: 9, kind: input, shape index: {}]
  %s10 = inlined_call_operand.vmem [shape: f32[1,128], index: 10, kind: input, shape index: {}]
  %s11 = inlined_call_operand.hbm [shape: f32[16,128], index: 11, kind: output, shape index: {}]
  %s12 = sld [smem:[#allocation0]]
  $region93: #{tpu_custom_call.1} parent=0
    _
  %s14 = ssub.s32 1, %s12
  %s15 = scalar_select 0, %s14, %s12
  $region1: #{tpu_custom_call.1} parent=0
    #allocation2 [shape = 'u8[8192]{0}', space=vmem, size = 0x2000, scoped, tag = 'input window, operand 0']
    #allocation3 [shape = 's32[2]{0}', space=sflag, size = 0x8, scoped, tag = 'scoped memory for tpu_custom_call.1']
    #allocation4 [shape = 's32[2]{0}', space=sflag, size = 0x8, scoped, tag = 'scoped memory for tpu_custom_call.1']
    #allocation5 [shape = 'u8[16384]{0}', space=vmem, size = 0x4000, scoped, tag = 'input window, operand 1, single buffered']
    #allocation6 [shape = 's32[1]{0}', space=sflag, size = 0x4, scoped, tag = 'scoped memory for tpu_custom_call.1']
    #allocation7 [shape = 'u8[131072]{0}', space=vmem, size = 0x20000, scoped, tag = 'input window, operand 3, single buffered']
    #allocation8 [shape = 'u8[32768]{0}', space=vmem, size = 0x8000, scoped, tag = 'input window, operand 9, single buffered']
    #allocation9 [shape = 's32[1]{0}', space=sflag, size = 0x4, scoped, tag = 'scoped memory for tpu_custom_call.1']
    #allocation10 [shape = 'u8[8192]{0}', space=vmem, size = 0x2000, scoped, tag = 'output window, operand 0']
    %16 = vsyncpa [#allocation3], 0
    %s17 = scalar_lea.sflag [#allocation3], 1
    %18 = vsyncpa %s17, 0
    %19 = vsyncpa [#allocation6], 0
    %20 = vsyncpa [#allocation9], 0
    %21 = vsyncpa [#allocation4], 0
    %s22 = scalar_lea.sflag [#allocation4], 1
    %23 = vsyncpa %s22, 0
    loop: start=0, step=1, limit=4
    $region2: #{tpu_custom_call.1} parent=1 // loop_pre_header
      _
    $region3: #{tpu_custom_call.1} parent=1 // loop_header
      %s25 = sphi 0, %s29
      %p26 = scmp.ge.s32.totalorder %s25, 4
      %s35 = sphi 0, %s37
      %s38 = sphi 0, %s35
      %s39 = sphi 0, %s38
      %s55 = sphi 0, %s39
      %s59 = sphi 0, %s59
      %s61 = sphi 0, %s59
      %s62 = sphi 0, %s61
      %s76 = sphi 0, %s62
      %s80 = sphi 0, %s80
      %s82 = sphi 0, %s80
      %s83 = sphi 0, %s82
      %s97 = sphi 0, %s83
      %s101 = sphi 0, %s101
      %s103 = sphi 0, %s101
      %s104 = sphi 0, %s103
      %s118 = sphi 0, %s104
      %s122 = sphi 0, %s122
      %s124 = sphi 0, %s122
      %s125 = sphi 0, %s124
      %s139 = sphi 0, %s125
      %s143 = sphi 0, %s143
      %s145 = sphi 0, %s143
      %s146 = sphi 0, %s145
      %s160 = sphi 0, %s146
      %s164 = sphi 0, %s164
      %s166 = sphi 0, %s164
      %s167 = sphi 0, %s166
      %s181 = sphi 0, %s167
      %s185 = sphi 0, %s185
      %s187 = sphi 0, %s185
      %s188 = sphi 0, %s187
      %s202 = sphi 0, %s188
      %s206 = sphi 0, %s206
      %s208 = sphi 0, %s206
      %s209 = sphi 0, %s208
      %s223 = sphi 0, %s209
      %s227 = sphi 0, %s227
      %s229 = sphi 0, %s227
      %s230 = sphi 0, %s229
      %s244 = sphi 0, %s230
      %s248 = sphi 0, %s248
      %s250 = sphi 0, %s248
      %s251 = sphi 0, %s250
      %s265 = sphi 0, %s251
      %s271 = sphi 0, %s273
      %s274 = sphi 0, %s271
      %s275 = sphi 0, %s274
      %s291 = sphi 0, %s275
    $region4: #{tpu_custom_call.1} parent=1 // loop_header_branch
      %28 = sbr.rel (%p26) target = $region8
    $region5: #{tpu_custom_call.1} parent=1 // loop_body
      %s30 = ssub.s32 %s25, 1
      %s31 = ssub.s32 %s25, 2
      %s32 = sadd.s32 %s25, 1
      %s33 = ssub.s32 %s25, %s32
      %p34 = scmp.eq.s32.totalorder %s33, 0
      %s36 = sadd.s32 %s35, 1
      %s37 = scalar_select %p34, %s35, %s36
      %p40 = pneg %p34
      %p41 = scmp.eq.s32.totalorder %s25, 1
      %p42 = por %p40, %p41
      %p43 = scmp.ne.s32.totalorder %s35, %s38
      %p44 = scmp.eq.s32.totalorder %s25, 0
      %p45 = por %p43, %p44
      %p46 = scmp.ne.s32.totalorder %s35, %s38
      %p47 = scmp.eq.s32.totalorder %s30, 1
      %p48 = por %p46, %p47
      %p49 = scmp.ne.s32.totalorder %s38, %s39
      %p50 = scmp.eq.s32.totalorder %s30, 0
      %p51 = por %p49, %p50
      %p52 = scmp.ne.s32.totalorder %s38, %s39
      %p53 = scmp.eq.s32.totalorder %s31, 1
      %p54 = por %p52, %p53
      %p56 = scmp.ne.s32.totalorder %s39, %s55
      %p57 = scmp.eq.s32.totalorder %s31, 0
      %p58 = por %p56, %p57
      %s60 = sadd.s32 %s59, 1
      %p63 = scmp.eq.s32.totalorder %s25, 1
      %p64 = scmp.ne.s32.totalorder %s59, %s61
      %p65 = scmp.eq.s32.totalorder %s25, 0
      %p66 = por %p64, %p65
      %p67 = scmp.ne.s32.totalorder %s59, %s61
      %p68 = scmp.eq.s32.totalorder %s30, 1
      %p69 = por %p67, %p68
      %p70 = scmp.ne.s32.totalorder %s61, %s62
      %p71 = scmp.eq.s32.totalorder %s30, 0
      %p72 = por %p70, %p71
      %p73 = scmp.ne.s32.totalorder %s61, %s62
      %p74 = scmp.eq.s32.totalorder %s31, 1
      %p75 = por %p73, %p74
      %p77 = scmp.ne.s32.totalorder %s62, %s76
      %p78 = scmp.eq.s32.totalorder %s31, 0
      %p79 = por %p77, %p78
      %s81 = sadd.s32 %s80, 1
      %p84 = scmp.eq.s32.totalorder %s25, 1
      %p85 = scmp.ne.s32.totalorder %s80, %s82
      %p86 = scmp.eq.s32.totalorder %s25, 0
      %p87 = por %p85, %p86
      %p88 = scmp.ne.s32.totalorder %s80, %s82
      %p89 = scmp.eq.s32.totalorder %s30, 1
      %p90 = por %p88, %p89
      %p91 = scmp.ne.s32.totalorder %s82, %s83
      %p92 = scmp.eq.s32.totalorder %s30, 0
      %p93 = por %p91, %p92
      %p94 = scmp.ne.s32.totalorder %s82, %s83
      %p95 = scmp.eq.s32.totalorder %s31, 1
      %p96 = por %p94, %p95
      %p98 = scmp.ne.s32.totalorder %s83, %s97
      %p99 = scmp.eq.s32.totalorder %s31, 0
      %p100 = por %p98, %p99
      %s102 = sadd.s32 %s101, 1
      %p105 = scmp.eq.s32.totalorder %s25, 1
      %p106 = scmp.ne.s32.totalorder %s101, %s103
      %p107 = scmp.eq.s32.totalorder %s25, 0
      %p108 = por %p106, %p107
      %p109 = scmp.ne.s32.totalorder %s101, %s103
      %p110 = scmp.eq.s32.totalorder %s30, 1
      %p111 = por %p109, %p110
      %p112 = scmp.ne.s32.totalorder %s103, %s104
      %p113 = scmp.eq.s32.totalorder %s30, 0
      %p114 = por %p112, %p113
      %p115 = scmp.ne.s32.totalorder %s103, %s104
      %p116 = scmp.eq.s32.totalorder %s31, 1
      %p117 = por %p115, %p116
      %p119 = scmp.ne.s32.totalorder %s104, %s118
      %p120 = scmp.eq.s32.totalorder %s31, 0
      %p121 = por %p119, %p120
      %s123 = sadd.s32 %s122, 1
      %p126 = scmp.eq.s32.totalorder %s25, 1
      %p127 = scmp.ne.s32.totalorder %s122, %s124
      %p128 = scmp.eq.s32.totalorder %s25, 0
      %p129 = por %p127, %p128
      %p130 = scmp.ne.s32.totalorder %s122, %s124
      %p131 = scmp.eq.s32.totalorder %s30, 1
      %p132 = por %p130, %p131
      %p133 = scmp.ne.s32.totalorder %s124, %s125
      %p134 = scmp.eq.s32.totalorder %s30, 0
      %p135 = por %p133, %p134
      %p136 = scmp.ne.s32.totalorder %s124, %s125
      %p137 = scmp.eq.s32.totalorder %s31, 1
      %p138 = por %p136, %p137
      %p140 = scmp.ne.s32.totalorder %s125, %s139
      %p141 = scmp.eq.s32.totalorder %s31, 0
      %p142 = por %p140, %p141
      %s144 = sadd.s32 %s143, 1
      %p147 = scmp.eq.s32.totalorder %s25, 1
      %p148 = scmp.ne.s32.totalorder %s143, %s145
      %p149 = scmp.eq.s32.totalorder %s25, 0
      %p150 = por %p148, %p149
      %p151 = scmp.ne.s32.totalorder %s143, %s145
      %p152 = scmp.eq.s32.totalorder %s30, 1
      %p153 = por %p151, %p152
      %p154 = scmp.ne.s32.totalorder %s145, %s146
      %p155 = scmp.eq.s32.totalorder %s30, 0
      %p156 = por %p154, %p155
      %p157 = scmp.ne.s32.totalorder %s145, %s146
      %p158 = scmp.eq.s32.totalorder %s31, 1
      %p159 = por %p157, %p158
      %p161 = scmp.ne.s32.totalorder %s146, %s160
      %p162 = scmp.eq.s32.totalorder %s31, 0
      %p163 = por %p161, %p162
      %s165 = sadd.s32 %s164, 1
      %p168 = scmp.eq.s32.totalorder %s25, 1
      %p169 = scmp.ne.s32.totalorder %s164, %s166
      %p170 = scmp.eq.s32.totalorder %s25, 0
      %p171 = por %p169, %p170
      %p172 = scmp.ne.s32.totalorder %s164, %s166
      %p173 = scmp.eq.s32.totalorder %s30, 1
      %p174 = por %p172, %p173
      %p175 = scmp.ne.s32.totalorder %s166, %s167
      %p176 = scmp.eq.s32.totalorder %s30, 0
      %p177 = por %p175, %p176
      %p178 = scmp.ne.s32.totalorder %s166, %s167
      %p179 = scmp.eq.s32.totalorder %s31, 1
      %p180 = por %p178, %p179
      %p182 = scmp.ne.s32.totalorder %s167, %s181
      %p183 = scmp.eq.s32.totalorder %s31, 0
      %p184 = por %p182, %p183
      %s186 = sadd.s32 %s185, 1
      %p189 = scmp.eq.s32.totalorder %s25, 1
      %p190 = scmp.ne.s32.totalorder %s185, %s187
      %p191 = scmp.eq.s32.totalorder %s25, 0
      %p192 = por %p190, %p191
      %p193 = scmp.ne.s32.totalorder %s185, %s187
      %p194 = scmp.eq.s32.totalorder %s30, 1
      %p195 = por %p193, %p194
      %p196 = scmp.ne.s32.totalorder %s187, %s188
      %p197 = scmp.eq.s32.totalorder %s30, 0
      %p198 = por %p196, %p197
      %p199 = scmp.ne.s32.totalorder %s187, %s188
      %p200 = scmp.eq.s32.totalorder %s31, 1
      %p201 = por %p199, %p200
      %p203 = scmp.ne.s32.totalorder %s188, %s202
      %p204 = scmp.eq.s32.totalorder %s31, 0
      %p205 = por %p203, %p204
      %s207 = sadd.s32 %s206, 1
      %p210 = scmp.eq.s32.totalorder %s25, 1
      %p211 = scmp.ne.s32.totalorder %s206, %s208
      %p212 = scmp.eq.s32.totalorder %s25, 0
      %p213 = por %p211, %p212
      %p214 = scmp.ne.s32.totalorder %s206, %s208
      %p215 = scmp.eq.s32.totalorder %s30, 1
      %p216 = por %p214, %p215
      %p217 = scmp.ne.s32.totalorder %s208, %s209
      %p218 = scmp.eq.s32.totalorder %s30, 0
      %p219 = por %p217, %p218
      %p220 = scmp.ne.s32.totalorder %s208, %s209
      %p221 = scmp.eq.s32.totalorder %s31, 1
      %p222 = por %p220, %p221
      %p224 = scmp.ne.s32.totalorder %s209, %s223
      %p225 = scmp.eq.s32.totalorder %s31, 0
      %p226 = por %p224, %p225
      %s228 = sadd.s32 %s227, 1
      %p231 = scmp.eq.s32.totalorder %s25, 1
      %p232 = scmp.ne.s32.totalorder %s227, %s229
      %p233 = scmp.eq.s32.totalorder %s25, 0
      %p234 = por %p232, %p233
      %p235 = scmp.ne.s32.totalorder %s227, %s229
      %p236 = scmp.eq.s32.totalorder %s30, 1
      %p237 = por %p235, %p236
      %p238 = scmp.ne.s32.totalorder %s229, %s230
      %p239 = scmp.eq.s32.totalorder %s30, 0
      %p240 = por %p238, %p239
      %p241 = scmp.ne.s32.totalorder %s229, %s230
      %p242 = scmp.eq.s32.totalorder %s31, 1
      %p243 = por %p241, %p242
      %p245 = scmp.ne.s32.totalorder %s230, %s244
      %p246 = scmp.eq.s32.totalorder %s31, 0
      %p247 = por %p245, %p246
      %s249 = sadd.s32 %s248, 1
      %p252 = scmp.eq.s32.totalorder %s25, 1
      %p253 = scmp.ne.s32.totalorder %s248, %s250
      %p254 = scmp.eq.s32.totalorder %s25, 0
      %p255 = por %p253, %p254
      %p256 = scmp.ne.s32.totalorder %s248, %s250
      %p257 = scmp.eq.s32.totalorder %s30, 1
      %p258 = por %p256, %p257
      %p259 = scmp.ne.s32.totalorder %s250, %s251
      %p260 = scmp.eq.s32.totalorder %s30, 0
      %p261 = por %p259, %p260
      %p262 = scmp.ne.s32.totalorder %s250, %s251
      %p263 = scmp.eq.s32.totalorder %s31, 1
      %p264 = por %p262, %p263
      %p266 = scmp.ne.s32.totalorder %s251, %s265
      %p267 = scmp.eq.s32.totalorder %s31, 0
      %p268 = por %p266, %p267
      %s269 = ssub.s32 %s25, %s32
      %p270 = scmp.eq.s32.totalorder %s269, 0
      %s272 = sadd.s32 %s271, 1
      %s273 = scalar_select %p270, %s271, %s272
      %p276 = pneg %p270
      %p277 = scmp.eq.s32.totalorder %s25, 1
      %p278 = por %p276, %p277
      %p279 = scmp.ne.s32.totalorder %s271, %s274
      %p280 = scmp.eq.s32.totalorder %s25, 0
      %p281 = por %p279, %p280
      %p282 = scmp.ne.s32.totalorder %s271, %s274
      %p283 = scmp.eq.s32.totalorder %s30, 1
      %p284 = por %p282, %p283
      %p285 = scmp.ne.s32.totalorder %s274, %s275
      %p286 = scmp.eq.s32.totalorder %s30, 0
      %p287 = por %p285, %p286
      %p288 = scmp.ne.s32.totalorder %s274, %s275
      %p289 = scmp.eq.s32.totalorder %s31, 1
      %p290 = por %p288, %p289
      %p292 = scmp.ne.s32.totalorder %s275, %s291
      %p293 = scmp.eq.s32.totalorder %s31, 0
      %p294 = por %p292, %p293
      %p295 = scmp.le.s32.totalorder 1, %s25
      %p296 = scmp.lt.s32.totalorder %s25, 3
      %p297 = pnand %p295, %p296
      %p298 = pneg %p297
      // Predicated region
      $region9: #{tpu_custom_call.1} parent=5 // pred_check
        _
      $region10: #{tpu_custom_call.1} parent=5 // pred_check_branch
        %300 = sbr.rel (%p297) target = $region12
      $region11: #{tpu_custom_call.1} parent=5 // pred_region
        %s301 = ssub.s32 %s25, 1
        // Predicated region
        $region13: #{tpu_custom_call.1} parent=11 // pred_check
          %p302 = pneg %p72
        $region14: #{tpu_custom_call.1} parent=11 // pred_check_branch
          %304 = sbr.rel (%p302) target = $region16
        $region15: #{tpu_custom_call.1} parent=11 // pred_region
          %s306 = ssub.s32 512, 512
          %307 = vsyncadd [#allocation6], %s306
          %s308 = sshll.u32 [#allocation5], 4
          %s309 = int_to_ptr.vmem [resolvable:$true] %s308
          %314 = dma.hbm_to_vmem [thread:$0]  %s1, 512, %s309, [#allocation6], 128, 128, 8
        $region16: #{tpu_custom_call.1} parent=11 // pred_fallthru
          _
        // Predicated region
        $region17: #{tpu_custom_call.1} parent=11 // pred_check
          %p315 = pneg %p93
        $region18: #{tpu_custom_call.1} parent=11 // pred_check_branch
          %317 = sbr.rel (%p315) target = $region20
        $region19: #{tpu_custom_call.1} parent=11 // pred_region
          _
        $region20: #{tpu_custom_call.1} parent=11 // pred_fallthru
          _
        // Predicated region
        $region21: #{tpu_custom_call.1} parent=11 // pred_check
          %p318 = pneg %p114
        $region22: #{tpu_custom_call.1} parent=11 // pred_check_branch
          %320 = sbr.rel (%p318) target = $region24
        $region23: #{tpu_custom_call.1} parent=11 // pred_region
          %s322 = ssub.s32 4096, 4096
          %323 = vsyncadd [#allocation6], %s322
          %s324 = sshll.u32 [#allocation7], 4
          %s325 = int_to_ptr.vmem [resolvable:$true] %s324
          %330 = dma.hbm_to_vmem [thread:$0]  %s3, 4096, %s325, [#allocation6], 128, 128, 8
        $region24: #{tpu_custom_call.1} parent=11 // pred_fallthru
          _
        // Predicated region
        $region25: #{tpu_custom_call.1} parent=11 // pred_check
          %p331 = pneg %p135
        $region26: #{tpu_custom_call.1} parent=11 // pred_check_branch
          %333 = sbr.rel (%p331) target = $region28
        $region27: #{tpu_custom_call.1} parent=11 // pred_region
          _
        $region28: #{tpu_custom_call.1} parent=11 // pred_fallthru
          _
        // Predicated region
        $region29: #{tpu_custom_call.1} parent=11 // pred_check
          %p334 = pneg %p156
        $region30: #{tpu_custom_call.1} parent=11 // pred_check_branch
          %336 = sbr.rel (%p334) target = $region32
        $region31: #{tpu_custom_call.1} parent=11 // pred_region
          _
        $region32: #{tpu_custom_call.1} parent=11 // pred_fallthru
          _
        // Predicated region
        $region33: #{tpu_custom_call.1} parent=11 // pred_check
          %p337 = pneg %p177
        $region34: #{tpu_custom_call.1} parent=11 // pred_check_branch
          %339 = sbr.rel (%p337) target = $region36
        $region35: #{tpu_custom_call.1} parent=11 // pred_region
          _
        $region36: #{tpu_custom_call.1} parent=11 // pred_fallthru
          _
        // Predicated region
        $region37: #{tpu_custom_call.1} parent=11 // pred_check
          %p340 = pneg %p198
        $region38: #{tpu_custom_call.1} parent=11 // pred_check_branch
          %342 = sbr.rel (%p340) target = $region40
        $region39: #{tpu_custom_call.1} parent=11 // pred_region
          _
        $region40: #{tpu_custom_call.1} parent=11 // pred_fallthru
          _
        // Predicated region
        $region41: #{tpu_custom_call.1} parent=11 // pred_check
          %p343 = pneg %p219
        $region42: #{tpu_custom_call.1} parent=11 // pred_check_branch
          %345 = sbr.rel (%p343) target = $region44
        $region43: #{tpu_custom_call.1} parent=11 // pred_region
          _
        $region44: #{tpu_custom_call.1} parent=11 // pred_fallthru
          _
        // Predicated region
        $region45: #{tpu_custom_call.1} parent=11 // pred_check
          %p346 = pneg %p240
        $region46: #{tpu_custom_call.1} parent=11 // pred_check_branch
          %348 = sbr.rel (%p346) target = $region48
        $region47: #{tpu_custom_call.1} parent=11 // pred_region
          %s350 = ssub.s32 1024, 1024
          %351 = vsyncadd [#allocation9], %s350
          %s352 = sshll.u32 [#allocation8], 4
          %s353 = int_to_ptr.vmem [resolvable:$true] %s352
          %358 = dma.hbm_to_vmem [thread:$0]  %s9, 1024, %s353, [#allocation9], 128, 128, 8
        $region48: #{tpu_custom_call.1} parent=11 // pred_fallthru
          _
        // Predicated region
        $region49: #{tpu_custom_call.1} parent=11 // pred_check
          %p359 = pneg %p261
        $region50: #{tpu_custom_call.1} parent=11 // pred_check_branch
          %361 = sbr.rel (%p359) target = $region52
        $region51: #{tpu_custom_call.1} parent=11 // pred_region
          _
        $region52: #{tpu_custom_call.1} parent=11 // pred_fallthru
          _
      $region12: #{tpu_custom_call.1} parent=5 // pred_fallthru
        _
      %p362 = scmp.lt.s32.totalorder %s25, 2
      // Predicated region
      $region53: #{tpu_custom_call.1} parent=5 // pred_check
        %p363 = pneg %p362
      $region54: #{tpu_custom_call.1} parent=5 // pred_check_branch
        %365 = sbr.rel (%p363) target = $region56
      $region55: #{tpu_custom_call.1} parent=5 // pred_region
        // Predicated region
        $region57: #{tpu_custom_call.1} parent=55 // pred_check
          %p366 = pneg %p45
        $region58: #{tpu_custom_call.1} parent=55 // pred_check_branch
          %368 = sbr.rel (%p366) target = $region60
        $region59: #{tpu_custom_call.1} parent=55 // pred_region
          %s369 = sand.u32 %s35, 1
          %s370 = scalar_lea.sflag [#allocation3], %s369
          %s371 = sand.u32 %s35, 1
          %s372 = smul.addr %s371, 8
          %s373 = scalar_lea.vmem [#allocation2], %s372
          %s375 = ssub.s32 128, 128
          %376 = vsyncadd %s370, %s375
          %s377 = smul.addr %s25, 128
          %s378 = scalar_lea.hbm %s0, %s377
          %s380 = sshll.u32 %s373, 4
          %s381 = int_to_ptr.vmem [resolvable:$true] %s380
          %383 = dma.hbm_to_vmem [thread:$0]  %s378, 128, %s381, %s370
        $region60: #{tpu_custom_call.1} parent=55 // pred_fallthru
          _
      $region56: #{tpu_custom_call.1} parent=5 // pred_fallthru
        _
      %p384 = scmp.le.s32.totalorder 1, %s25
      %p385 = scmp.lt.s32.totalorder %s25, 3
      %p386 = pnand %p384, %p385
      %p387 = pneg %p386
      // Predicated region
      $region61: #{tpu_custom_call.1} parent=5 // pred_check
        _
      $region62: #{tpu_custom_call.1} parent=5 // pred_check_branch
        %389 = sbr.rel (%p386) target = $region64
      $region63: #{tpu_custom_call.1} parent=5 // pred_region
        %s390 = ssub.s32 %s25, 1
        %s391 = sand.u32 %s38, 1
        %s392 = scalar_lea.sflag [#allocation3], %s391
        %s393 = sand.u32 %s38, 1
        %s394 = smul.addr %s393, 8
        %s395 = scalar_lea.vmem [#allocation2], %s394
        // Predicated region
        $region65: #{tpu_custom_call.1} parent=63 // pred_check
          %p396 = pneg %p51
        $region66: #{tpu_custom_call.1} parent=63 // pred_check_branch
          %398 = sbr.rel (%p396) target = $region68
        $region67: #{tpu_custom_call.1} parent=63 // pred_region
          %399 = dma.done %s392, 128
        $region68: #{tpu_custom_call.1} parent=63 // pred_fallthru
          _
        // Predicated region
        $region69: #{tpu_custom_call.1} parent=63 // pred_check
          %p400 = pneg %p72
        $region70: #{tpu_custom_call.1} parent=63 // pred_check_branch
          %402 = sbr.rel (%p400) target = $region72
        $region71: #{tpu_custom_call.1} parent=63 // pred_region
          %403 = dma.done [#allocation6], 512
        $region72: #{tpu_custom_call.1} parent=63 // pred_fallthru
          _
        // Predicated region
        $region73: #{tpu_custom_call.1} parent=63 // pred_check
          %p404 = pneg %p114
        $region74: #{tpu_custom_call.1} parent=63 // pred_check_branch
          %406 = sbr.rel (%p404) target = $region76
        $region75: #{tpu_custom_call.1} parent=63 // pred_region
          %407 = dma.done [#allocation6], 4096
        $region76: #{tpu_custom_call.1} parent=63 // pred_fallthru
          _
        // Predicated region
        $region77: #{tpu_custom_call.1} parent=63 // pred_check
          %p408 = pneg %p240
        $region78: #{tpu_custom_call.1} parent=63 // pred_check_branch
          %410 = sbr.rel (%p408) target = $region80
        $region79: #{tpu_custom_call.1} parent=63 // pred_region
          %411 = dma.done [#allocation9], 1024
        $region80: #{tpu_custom_call.1} parent=63 // pred_fallthru
          _
        %s412 = sand.u32 %s38, 1
        %s413 = scalar_lea.sflag [#allocation3], %s412
        %s414 = sand.u32 %s38, 1
        %s415 = smul.addr %s414, 8
        %s416 = scalar_lea.vmem [#allocation2], %s415
        %p417 = pneg %p51
        %p418 = pneg %p48
        %p419 = pneg %p72
        %p420 = pneg %p69
        %p421 = pneg %p93
        %p422 = pneg %p90
        %p423 = pneg %p114
        %p424 = pneg %p111
        %p425 = pneg %p135
        %p426 = pneg %p132
        %p427 = pneg %p156
        %p428 = pneg %p153
        %p429 = pneg %p177
        %p430 = pneg %p174
        %p431 = pneg %p198
        %p432 = pneg %p195
        %p433 = pneg %p219
        %p434 = pneg %p216
        %p435 = pneg %p240
        %p436 = pneg %p237
        %p437 = pneg %p261
        %p438 = pneg %p258
        %p439 = pneg %p287
        %p440 = pneg %p284
        %s441 = sand.u32 %s274, 1
        %s442 = scalar_lea.sflag [#allocation4], %s441
        %s443 = sand.u32 %s274, 1
        %s444 = smul.addr %s443, 8
        %s445 = scalar_lea.vmem [#allocation10], %s444
        %v446 = vld [vmem:[%s395] sm:$0xff]
        %v447 = vld [vmem:[#allocation5] sm:$0xff]
        %v448 = vld [vmem:[#allocation5 + $0x8] sm:$0xff]
        %v449 = vld [vmem:[#allocation5 + $0x10] sm:$0xff]
        %v450 = vld [vmem:[#allocation5 + $0x18] sm:$0xff]
        %v451 = vld [vmem:[%s2] sm:$0x1]
        %v453 = vlaneseq
        %v454 = vshrl.u32 %v453, 7
        %v455 = vsub.s32 0, %v454
        %v456 = vrot.slane %v451, %v455
        %vm458 = vcmask 261120
        %v460 = vsel %vm458, %v446, 0
        %462 = vmatprep.subr.mxu0 0.0
        %v463 = vand.u32 %v447, 4294901760
        %464 = vmatpush1.msra.mxu0 %v463
        %465 = vmatprep.subr.mxu0 0.0
        %v466 = vand.u32 %v448, 4294901760
        %467 = vmatpush1.msra.mxu0 %v466
        %468 = vmatprep.subr.mxu0 0.0
        %v469 = vand.u32 %v449, 4294901760
        %470 = vmatpush1.msra.mxu0 %v469
        %471 = vmatprep.subr.mxu0 0.0
        %v472 = vand.u32 %v450, 4294901760
        %473 = vmatpush1.msra.mxu0 %v472
        %474 = vmatprep.subr.mxu0 0.0
        %475 = vmatpush1.msra.mxu0 0.0
        %476 = vmatprep.subr.mxu0 0.0
        %477 = vmatpush1.msra.mxu0 0.0
        %478 = vmatprep.subr.mxu0 0.0
        %479 = vmatpush1.msra.mxu0 0.0
        %480 = vmatprep.subr.mxu0 0.0
        %481 = vmatpush1.msra.mxu0 0.0
        %482 = vmatprep.subr.mxu0 0.0
        %483 = vmatpush1.msra.mxu0 0.0
        %484 = vmatprep.subr.mxu0 0.0
        %485 = vmatpush1.msra.mxu0 0.0
        %486 = vmatprep.subr.mxu0 0.0
        %487 = vmatpush1.msra.mxu0 0.0
        %488 = vmatprep.subr.mxu0 0.0
        %489 = vmatpush1.msra.mxu0 0.0
        %490 = vmatprep.subr.mxu0 0.0
        %491 = vmatpush1.msra.mxu0 0.0
        %492 = vmatprep.subr.mxu0 0.0
        %493 = vmatpush1.msra.mxu0 0.0
        %494 = vmatprep.subr.mxu0 0.0
        %495 = vmatpush1.msra.mxu0 0.0
        %496 = vmatprep.subr.mxu0 0.0
        %497 = vmatpush1.msra.mxu0 0.0
        %498 = vmatprep.subr.mxu0 0.0
        %499 = vmatpush1.msra.mxu0 0.0
        %500 = vmatprep.subr.mxu0 0.0
        %501 = vmatpush1.msra.mxu0 0.0
        %502 = vmatprep.subr.mxu0 0.0
        %503 = vmatpush1.msra.mxu0 0.0
        %504 = vmatprep.subr.mxu0 0.0
        %505 = vmatpush1.msra.mxu0 0.0
        %506 = vmatprep.subr.mxu0 0.0
        %507 = vmatpush1.msra.mxu0 0.0
        %508 = vmatprep.subr.mxu0 0.0
        %509 = vmatpush1.msra.mxu0 0.0
        %510 = vmatprep.subr.mxu0 0.0
        %511 = vmatpush1.msra.mxu0 0.0
        %512 = vmatprep.subr.mxu0 0.0
        %513 = vmatpush1.msra.mxu0 0.0
        %514 = vmatprep.subr.mxu0 0.0
        %515 = vmatpush1.msra.mxu0 0.0
        %516 = vmatprep.subr.mxu0 0.0
        %517 = vmatpush1.msra.mxu0 0.0
        %518 = vmatprep.subr.mxu0 0.0
        %519 = vmatpush1.msra.mxu0 0.0
        %520 = vmatprep.subr.mxu0 0.0
        %521 = vmatpush1.msra.mxu0 0.0
        %522 = vmatprep.subr.mxu0 0.0
        %523 = vmatpush1.msra.mxu0 0.0
        %524 = vmatprep.subr.mxu0 0.0
        %525 = vmatpush1.msra.mxu0 0.0
        %526 = vmatprep.subr.mxu0 0.0
        %527 = vmatpush1.msra.mxu0 0.0
        %528 = vmatprep.subr.mxu0 0.0
        %529 = vmatpush1.msra.mxu0 0.0
        %530 = vmatprep.mubr.f32.mxu0 0.0
        %v531 = vand.u32 %v460, 4294901760
        %v532 = vsub.f32 %v460, %v531
        %v533 = vand.u32 %v532, 4294901760
        %v534 = vsub.f32 %v532, %v533
        %v535 = vand.u32 %v534, 4294901760
        %536 = vmatmul.mubr.f32.gmra.mrb[0].mxu0 %v535
        %v537 = vpop.f32.mrb[0].mxu0
        %v538 = vadd.f32 %v456, %v537
        %v539 = vpop.f32.mrb[0].mxu0
        %540 = vdwg.mxu0
        %541 = vmatprep.subr.mxu0 0.0
        %v542 = vand.u32 %v447, 4294901760
        %v543 = vsub.f32 %v447, %v542
        %v544 = vand.u32 %v543, 4294901760
        %v545 = vsub.f32 %v543, %v544
        %v546 = vand.u32 %v545, 4294901760
        %547 = vmatpush1.msra.mxu0 %v546
        %548 = vmatprep.subr.mxu0 0.0
        %v549 = vand.u32 %v448, 4294901760
        %v550 = vsub.f32 %v448, %v549
        %v551 = vand.u32 %v550, 4294901760
        %v552 = vsub.f32 %v550, %v551
        %v553 = vand.u32 %v552, 4294901760
        %554 = vmatpush1.msra.mxu0 %v553
        %555 = vmatprep.subr.mxu0 0.0
        %v556 = vand.u32 %v449, 4294901760
        %v557 = vsub.f32 %v449, %v556
        %v558 = vand.u32 %v557, 4294901760
        %v559 = vsub.f32 %v557, %v558
        %v560 = vand.u32 %v559, 4294901760
        %561 = vmatpush1.msra.mxu0 %v560
        %562 = vmatprep.subr.mxu0 0.0
        %v563 = vand.u32 %v450, 4294901760
        %v564 = vsub.f32 %v450, %v563
        %v565 = vand.u32 %v564, 4294901760
        %v566 = vsub.f32 %v564, %v565
        %v567 = vand.u32 %v566, 4294901760
        %568 = vmatpush1.msra.mxu0 %v567
        %569 = vmatprep.subr.mxu0 0.0
        %570 = vmatpush1.msra.mxu0 0.0
        %571 = vmatprep.subr.mxu0 0.0
        %572 = vmatpush1.msra.mxu0 0.0
        %573 = vmatprep.subr.mxu0 0.0
        %574 = vmatpush1.msra.mxu0 0.0
        %575 = vmatprep.subr.mxu0 0.0
        %576 = vmatpush1.msra.mxu0 0.0
        %577 = vmatprep.subr.mxu0 0.0
        %578 = vmatpush1.msra.mxu0 0.0
        %579 = vmatprep.subr.mxu0 0.0
        %580 = vmatpush1.msra.mxu0 0.0
        %581 = vmatprep.subr.mxu0 0.0
        %582 = vmatpush1.msra.mxu0 0.0
        %583 = vmatprep.subr.mxu0 0.0
        %584 = vmatpush1.msra.mxu0 0.0
        %585 = vmatprep.subr.mxu0 0.0
        %586 = vmatpush1.msra.mxu0 0.0
        %587 = vmatprep.subr.mxu0 0.0
        %588 = vmatpush1.msra.mxu0 0.0
        %589 = vmatprep.subr.mxu0 0.0
        %590 = vmatpush1.msra.mxu0 0.0
        %591 = vmatprep.subr.mxu0 0.0
        %592 = vmatpush1.msra.mxu0 0.0
        %593 = vmatprep.subr.mxu0 0.0
        %594 = vmatpush1.msra.mxu0 0.0
        %595 = vmatprep.subr.mxu0 0.0
        %596 = vmatpush1.msra.mxu0 0.0
        %597 = vmatprep.subr.mxu0 0.0
        %598 = vmatpush1.msra.mxu0 0.0
        %599 = vmatprep.subr.mxu0 0.0
        %600 = vmatpush1.msra.mxu0 0.0
        %601 = vmatprep.subr.mxu0 0.0
        %602 = vmatpush1.msra.mxu0 0.0
        %603 = vmatprep.subr.mxu0 0.0
        %604 = vmatpush1.msra.mxu0 0.0
        %605 = vmatprep.subr.mxu0 0.0
        %606 = vmatpush1.msra.mxu0 0.0
        %607 = vmatprep.subr.mxu0 0.0
        %608 = vmatpush1.msra.mxu0 0.0
        %609 = vmatprep.subr.mxu0 0.0
        %610 = vmatpush1.msra.mxu0 0.0
        %611 = vmatprep.subr.mxu0 0.0
        %612 = vmatpush1.msra.mxu0 0.0
        %613 = vmatprep.subr.mxu0 0.0
        %614 = vmatpush1.msra.mxu0 0.0
        %615 = vmatprep.subr.mxu0 0.0
        %616 = vmatpush1.msra.mxu0 0.0
        %617 = vmatprep.subr.mxu0 0.0
        %618 = vmatpush1.msra.mxu0 0.0
        %619 = vmatprep.subr.mxu0 0.0
        %620 = vmatpush1.msra.mxu0 0.0
        %621 = vmatprep.subr.mxu0 0.0
        %622 = vmatpush1.msra.mxu0 0.0
        %623 = vmatprep.subr.mxu0 0.0
        %624 = vmatpush1.msra.mxu0 0.0
        %625 = vmatprep.mubr.f32.mxu0 0.0
        %v626 = vand.u32 %v460, 4294901760
        %627 = vmatmul.mubr.f32.gmra.mrb[0].mxu0 %v626
        %v628 = vpop.f32.mrb[0].mxu0
        %v629 = vadd.f32 %v538, %v628
        %v630 = vpop.f32.mrb[0].mxu0
        %631 = vdwg.mxu0
        %632 = vmatprep.subr.mxu0 0.0
        %v633 = vand.u32 %v447, 4294901760
        %v634 = vsub.f32 %v447, %v633
        %635 = vmatpush1.msra.mxu0 %v634
        %636 = vmatprep.subr.mxu0 0.0
        %v637 = vand.u32 %v448, 4294901760
        %v638 = vsub.f32 %v448, %v637
        %639 = vmatpush1.msra.mxu0 %v638
        %640 = vmatprep.subr.mxu0 0.0
        %v641 = vand.u32 %v449, 4294901760
        %v642 = vsub.f32 %v449, %v641
        %643 = vmatpush1.msra.mxu0 %v642
        %644 = vmatprep.subr.mxu0 0.0
        %v645 = vand.u32 %v450, 4294901760
        %v646 = vsub.f32 %v450, %v645
        %647 = vmatpush1.msra.mxu0 %v646
        %648 = vmatprep.subr.mxu0 0.0
        %649 = vmatpush1.msra.mxu0 0.0
        %650 = vmatprep.subr.mxu0 0.0
        %651 = vmatpush1.msra.mxu0 0.0
        %652 = vmatprep.subr.mxu0 0.0
        %653 = vmatpush1.msra.mxu0 0.0
        %654 = vmatprep.subr.mxu0 0.0
        %655 = vmatpush1.msra.mxu0 0.0
        %656 = vmatprep.subr.mxu0 0.0
        %657 = vmatpush1.msra.mxu0 0.0
        %658 = vmatprep.subr.mxu0 0.0
        %659 = vmatpush1.msra.mxu0 0.0
        %660 = vmatprep.subr.mxu0 0.0
        %661 = vmatpush1.msra.mxu0 0.0
        %662 = vmatprep.subr.mxu0 0.0
        %663 = vmatpush1.msra.mxu0 0.0
        %664 = vmatprep.subr.mxu0 0.0
        %665 = vmatpush1.msra.mxu0 0.0
        %666 = vmatprep.subr.mxu0 0.0
        %667 = vmatpush1.msra.mxu0 0.0
        %668 = vmatprep.subr.mxu0 0.0
        %669 = vmatpush1.msra.mxu0 0.0
        %670 = vmatprep.subr.mxu0 0.0
        %671 = vmatpush1.msra.mxu0 0.0
        %672 = vmatprep.subr.mxu0 0.0
        %673 = vmatpush1.msra.mxu0 0.0
        %674 = vmatprep.subr.mxu0 0.0
        %675 = vmatpush1.msra.mxu0 0.0
        %676 = vmatprep.subr.mxu0 0.0
        %677 = vmatpush1.msra.mxu0 0.0
        %678 = vmatprep.subr.mxu0 0.0
        %679 = vmatpush1.msra.mxu0 0.0
        %680 = vmatprep.subr.mxu0 0.0
        %681 = vmatpush1.msra.mxu0 0.0
        %682 = vmatprep.subr.mxu0 0.0
        %683 = vmatpush1.msra.mxu0 0.0
        %684 = vmatprep.subr.mxu0 0.0
        %685 = vmatpush1.msra.mxu0 0.0
        %686 = vmatprep.subr.mxu0 0.0
        %687 = vmatpush1.msra.mxu0 0.0
        %688 = vmatprep.subr.mxu0 0.0
        %689 = vmatpush1.msra.mxu0 0.0
        %690 = vmatprep.subr.mxu0 0.0
        %691 = vmatpush1.msra.mxu0 0.0
        %692 = vmatprep.subr.mxu0 0.0
        %693 = vmatpush1.msra.mxu0 0.0
        %694 = vmatprep.subr.mxu0 0.0
        %695 = vmatpush1.msra.mxu0 0.0
        %696 = vmatprep.subr.mxu0 0.0
        %697 = vmatpush1.msra.mxu0 0.0
        %698 = vmatprep.subr.mxu0 0.0
        %699 = vmatpush1.msra.mxu0 0.0
        %700 = vmatprep.subr.mxu0 0.0
        %701 = vmatpush1.msra.mxu0 0.0
        %702 = vmatprep.subr.mxu0 0.0
        %703 = vmatpush1.msra.mxu0 0.0
        %704 = vmatprep.mubr.f32.mxu0 0.0
        %v705 = vand.u32 %v460, 4294901760
        %v706 = vsub.f32 %v460, %v705
        %707 = vmatmul.mubr.f32.gmra.mrb[0].mxu0 %v706
        %v708 = vpop.f32.mrb[0].mxu0
        %v709 = vadd.f32 %v629, %v708
        %v710 = vpop.f32.mrb[0].mxu0
        %711 = vdwg.mxu0
        %712 = vmatprep.subr.mxu0 0.0
        %v713 = vand.u32 %v447, 4294901760
        %714 = vmatpush1.msra.mxu0 %v713
        %715 = vmatprep.subr.mxu0 0.0
        %v716 = vand.u32 %v448, 4294901760
        %717 = vmatpush1.msra.mxu0 %v716
        %718 = vmatprep.subr.mxu0 0.0
        %v719 = vand.u32 %v449, 4294901760
        %720 = vmatpush1.msra.mxu0 %v719
        %721 = vmatprep.subr.mxu0 0.0
        %v722 = vand.u32 %v450, 4294901760
        %723 = vmatpush1.msra.mxu0 %v722
        %724 = vmatprep.subr.mxu0 0.0
        %725 = vmatpush1.msra.mxu0 0.0
        %726 = vmatprep.subr.mxu0 0.0
        %727 = vmatpush1.msra.mxu0 0.0
        %728 = vmatprep.subr.mxu0 0.0
        %729 = vmatpush1.msra.mxu0 0.0
        %730 = vmatprep.subr.mxu0 0.0
        %731 = vmatpush1.msra.mxu0 0.0
        %732 = vmatprep.subr.mxu0 0.0
        %733 = vmatpush1.msra.mxu0 0.0
        %734 = vmatprep.subr.mxu0 0.0
        %735 = vmatpush1.msra.mxu0 0.0
        %736 = vmatprep.subr.mxu0 0.0
        %737 = vmatpush1.msra.mxu0 0.0
        %738 = vmatprep.subr.mxu0 0.0
        %739 = vmatpush1.msra.mxu0 0.0
        %740 = vmatprep.subr.mxu0 0.0
        %741 = vmatpush1.msra.mxu0 0.0
        %742 = vmatprep.subr.mxu0 0.0
        %743 = vmatpush1.msra.mxu0 0.0
        %744 = vmatprep.subr.mxu0 0.0
        %745 = vmatpush1.msra.mxu0 0.0
        %746 = vmatprep.subr.mxu0 0.0
        %747 = vmatpush1.msra.mxu0 0.0
        %748 = vmatprep.subr.mxu0 0.0
        %749 = vmatpush1.msra.mxu0 0.0
        %750 = vmatprep.subr.mxu0 0.0
        %751 = vmatpush1.msra.mxu0 0.0
        %752 = vmatprep.subr.mxu0 0.0
        %753 = vmatpush1.msra.mxu0 0.0
        %754 = vmatprep.subr.mxu0 0.0
        %755 = vmatpush1.msra.mxu0 0.0
        %756 = vmatprep.subr.mxu0 0.0
        %757 = vmatpush1.msra.mxu0 0.0
        %758 = vmatprep.subr.mxu0 0.0
        %759 = vmatpush1.msra.mxu0 0.0
        %760 = vmatprep.subr.mxu0 0.0
        %761 = vmatpush1.msra.mxu0 0.0
        %762 = vmatprep.subr.mxu0 0.0
        %763 = vmatpush1.msra.mxu0 0.0
        %764 = vmatprep.subr.mxu0 0.0
        %765 = vmatpush1.msra.mxu0 0.0
        %766 = vmatprep.subr.mxu0 0.0
        %767 = vmatpush1.msra.mxu0 0.0
        %768 = vmatprep.subr.mxu0 0.0
        %769 = vmatpush1.msra.mxu0 0.0
        %770 = vmatprep.subr.mxu0 0.0
        %771 = vmatpush1.msra.mxu0 0.0
        %772 = vmatprep.subr.mxu0 0.0
        %773 = vmatpush1.msra.mxu0 0.0
        %774 = vmatprep.subr.mxu0 0.0
        %775 = vmatpush1.msra.mxu0 0.0
        %776 = vmatprep.subr.mxu0 0.0
        %777 = vmatpush1.msra.mxu0 0.0
        %778 = vmatprep.subr.mxu0 0.0
        %779 = vmatpush1.msra.mxu0 0.0
        %780 = vmatprep.mubr.f32.mxu0 0.0
        %v781 = vand.u32 %v460, 4294901760
        %v782 = vsub.f32 %v460, %v781
        %v783 = vand.u32 %v782, 4294901760
        %784 = vmatmul.mubr.f32.gmra.mrb[0].mxu0 %v783
        %v785 = vpop.f32.mrb[0].mxu0
        %v786 = vadd.f32 %v709, %v785
        %v787 = vpop.f32.mrb[0].mxu0
        %788 = vdwg.mxu0
        %789 = vmatprep.subr.mxu0 0.0
        %v790 = vand.u32 %v447, 4294901760
        %v791 = vsub.f32 %v447, %v790
        %v792 = vand.u32 %v791, 4294901760
        %793 = vmatpush1.msra.mxu0 %v792
        %794 = vmatprep.subr.mxu0 0.0
        %v795 = vand.u32 %v448, 4294901760
        %v796 = vsub.f32 %v448, %v795
        %v797 = vand.u32 %v796, 4294901760
        %798 = vmatpush1.msra.mxu0 %v797
        %799 = vmatprep.subr.mxu0 0.0
        %v800 = vand.u32 %v449, 4294901760
        %v801 = vsub.f32 %v449, %v800
        %v802 = vand.u32 %v801, 4294901760
        %803 = vmatpush1.msra.mxu0 %v802
        %804 = vmatprep.subr.mxu0 0.0
        %v805 = vand.u32 %v450, 4294901760
        %v806 = vsub.f32 %v450, %v805
        %v807 = vand.u32 %v806, 4294901760
        %808 = vmatpush1.msra.mxu0 %v807
        %809 = vmatprep.subr.mxu0 0.0
        %810 = vmatpush1.msra.mxu0 0.0
        %811 = vmatprep.subr.mxu0 0.0
        %812 = vmatpush1.msra.mxu0 0.0
        %813 = vmatprep.subr.mxu0 0.0
        %814 = vmatpush1.msra.mxu0 0.0
        %815 = vmatprep.subr.mxu0 0.0
        %816 = vmatpush1.msra.mxu0 0.0
        %817 = vmatprep.subr.mxu0 0.0
        %818 = vmatpush1.msra.mxu0 0.0
        %819 = vmatprep.subr.mxu0 0.0
        %820 = vmatpush1.msra.mxu0 0.0
        %821 = vmatprep.subr.mxu0 0.0
        %822 = vmatpush1.msra.mxu0 0.0
        %823 = vmatprep.subr.mxu0 0.0
        %824 = vmatpush1.msra.mxu0 0.0
        %825 = vmatprep.subr.mxu0 0.0
        %826 = vmatpush1.msra.mxu0 0.0
        %827 = vmatprep.subr.mxu0 0.0
        %828 = vmatpush1.msra.mxu0 0.0
        %829 = vmatprep.subr.mxu0 0.0
        %830 = vmatpush1.msra.mxu0 0.0
        %831 = vmatprep.subr.mxu0 0.0
        %832 = vmatpush1.msra.mxu0 0.0
        %833 = vmatprep.subr.mxu0 0.0
        %834 = vmatpush1.msra.mxu0 0.0
        %835 = vmatprep.subr.mxu0 0.0
        %836 = vmatpush1.msra.mxu0 0.0
        %837 = vmatprep.subr.mxu0 0.0
        %838 = vmatpush1.msra.mxu0 0.0
        %839 = vmatprep.subr.mxu0 0.0
        %840 = vmatpush1.msra.mxu0 0.0
        %841 = vmatprep.subr.mxu0 0.0
        %842 = vmatpush1.msra.mxu0 0.0
        %843 = vmatprep.subr.mxu0 0.0
        %844 = vmatpush1.msra.mxu0 0.0
        %845 = vmatprep.subr.mxu0 0.0
        %846 = vmatpush1.msra.mxu0 0.0
        %847 = vmatprep.subr.mxu0 0.0
        %848 = vmatpush1.msra.mxu0 0.0
        %849 = vmatprep.subr.mxu0 0.0
        %850 = vmatpush1.msra.mxu0 0.0
        %851 = vmatprep.subr.mxu0 0.0
        %852 = vmatpush1.msra.mxu0 0.0
        %853 = vmatprep.subr.mxu0 0.0
        %854 = vmatpush1.msra.mxu0 0.0
        %855 = vmatprep.subr.mxu0 0.0
        %856 = vmatpush1.msra.mxu0 0.0
        %857 = vmatprep.subr.mxu0 0.0
        %858 = vmatpush1.msra.mxu0 0.0
        %859 = vmatprep.subr.mxu0 0.0
        %860 = vmatpush1.msra.mxu0 0.0
        %861 = vmatprep.subr.mxu0 0.0
        %862 = vmatpush1.msra.mxu0 0.0
        %863 = vmatprep.subr.mxu0 0.0
        %864 = vmatpush1.msra.mxu0 0.0
        %865 = vmatprep.mubr.f32.mxu0 0.0
        %v866 = vand.u32 %v460, 4294901760
        %867 = vmatmul.mubr.f32.gmra.mrb[0].mxu0 %v866
        %v868 = vpop.f32.mrb[0].mxu0
        %v869 = vadd.f32 %v786, %v868
        %v870 = vpop.f32.mrb[0].mxu0
        %871 = vdwg.mxu0
        %872 = vmatprep.subr.mxu0 0.0
        %v873 = vand.u32 %v447, 4294901760
        %874 = vmatpush1.msra.mxu0 %v873
        %875 = vmatprep.subr.mxu0 0.0
        %v876 = vand.u32 %v448, 4294901760
        %877 = vmatpush1.msra.mxu0 %v876
        %878 = vmatprep.subr.mxu0 0.0
        %v879 = vand.u32 %v449, 4294901760
        %880 = vmatpush1.msra.mxu0 %v879
        %881 = vmatprep.subr.mxu0 0.0
        %v882 = vand.u32 %v450, 4294901760
        %883 = vmatpush1.msra.mxu0 %v882
        %884 = vmatprep.subr.mxu0 0.0
        %885 = vmatpush1.msra.mxu0 0.0
        %886 = vmatprep.subr.mxu0 0.0
        %887 = vmatpush1.msra.mxu0 0.0
        %888 = vmatprep.subr.mxu0 0.0
        %889 = vmatpush1.msra.mxu0 0.0
        %890 = vmatprep.subr.mxu0 0.0
        %891 = vmatpush1.msra.mxu0 0.0
        %892 = vmatprep.subr.mxu0 0.0
        %893 = vmatpush1.msra.mxu0 0.0
        %894 = vmatprep.subr.mxu0 0.0
        %895 = vmatpush1.msra.mxu0 0.0
        %896 = vmatprep.subr.mxu0 0.0
        %897 = vmatpush1.msra.mxu0 0.0
        %898 = vmatprep.subr.mxu0 0.0
        %899 = vmatpush1.msra.mxu0 0.0
        %900 = vmatprep.subr.mxu0 0.0
        %901 = vmatpush1.msra.mxu0 0.0
        %902 = vmatprep.subr.mxu0 0.0
        %903 = vmatpush1.msra.mxu0 0.0
        %904 = vmatprep.subr.mxu0 0.0
        %905 = vmatpush1.msra.mxu0 0.0
        %906 = vmatprep.subr.mxu0 0.0
        %907 = vmatpush1.msra.mxu0 0.0
        %908 = vmatprep.subr.mxu0 0.0
        %909 = vmatpush1.msra.mxu0 0.0
        %910 = vmatprep.subr.mxu0 0.0
        %911 = vmatpush1.msra.mxu0 0.0
        %912 = vmatprep.subr.mxu0 0.0
        %913 = vmatpush1.msra.mxu0 0.0
        %914 = vmatprep.subr.mxu0 0.0
        %915 = vmatpush1.msra.mxu0 0.0
        %916 = vmatprep.subr.mxu0 0.0
        %917 = vmatpush1.msra.mxu0 0.0
        %918 = vmatprep.subr.mxu0 0.0
        %919 = vmatpush1.msra.mxu0 0.0
        %920 = vmatprep.subr.mxu0 0.0
        %921 = vmatpush1.msra.mxu0 0.0
        %922 = vmatprep.subr.mxu0 0.0
        %923 = vmatpush1.msra.mxu0 0.0
        %924 = vmatprep.subr.mxu0 0.0
        %925 = vmatpush1.msra.mxu0 0.0
        %926 = vmatprep.subr.mxu0 0.0
        %927 = vmatpush1.msra.mxu0 0.0
        %928 = vmatprep.subr.mxu0 0.0
        %929 = vmatpush1.msra.mxu0 0.0
        %930 = vmatprep.subr.mxu0 0.0
        %931 = vmatpush1.msra.mxu0 0.0
        %932 = vmatprep.subr.mxu0 0.0
        %933 = vmatpush1.msra.mxu0 0.0
        %934 = vmatprep.subr.mxu0 0.0
        %935 = vmatpush1.msra.mxu0 0.0
        %936 = vmatprep.subr.mxu0 0.0
        %937 = vmatpush1.msra.mxu0 0.0
        %938 = vmatprep.subr.mxu0 0.0
        %939 = vmatpush1.msra.mxu0 0.0
        %940 = vmatprep.mubr.f32.mxu0 0.0
        %v941 = vand.u32 %v460, 4294901760
        %942 = vmatmul.mubr.f32.gmra.mrb[0].mxu0 %v941
        %v943 = vpop.f32.mrb[0].mxu0
        %v944 = vadd.f32 %v869, %v943
        %v945 = vpop.f32.mrb[0].mxu0
        %946 = vdwg.mxu0
        %v947 = vld [vmem:[#allocation7] sm:$0xff]
        %v948 = vld [vmem:[#allocation7 + $0x8] sm:$0xff]
        %v949 = vld [vmem:[#allocation7 + $0x10] sm:$0xff]
        %v950 = vld [vmem:[#allocation7 + $0x18] sm:$0xff]
        %v951 = vld [vmem:[#allocation7 + $0x20] sm:$0xff]
        %v952 = vld [vmem:[#allocation7 + $0x28] sm:$0xff]
        %v953 = vld [vmem:[#allocation7 + $0x30] sm:$0xff]
        %v954 = vld [vmem:[#allocation7 + $0x38] sm:$0xff]
        %v955 = vld [vmem:[%s4] sm:$0x1]
        %v957 = vlaneseq
        %v958 = vshrl.u32 %v957, 7
        %v959 = vsub.s32 0, %v958
        %v960 = vrot.slane %v955, %v959
        %vm962 = vcmask 523264
        %v964 = vsel %vm962, %v944, 0
        %966 = vmatprep.subr.mxu0 0.0
        %v967 = vand.u32 %v947, 4294901760
        %968 = vmatpush1.msra.mxu0 %v967
        %969 = vmatprep.subr.mxu0 0.0
        %v970 = vand.u32 %v948, 4294901760
        %971 = vmatpush1.msra.mxu0 %v970
        %972 = vmatprep.subr.mxu0 0.0
        %v973 = vand.u32 %v949, 4294901760
        %974 = vmatpush1.msra.mxu0 %v973
        %975 = vmatprep.subr.mxu0 0.0
        %v976 = vand.u32 %v950, 4294901760
        %977 = vmatpush1.msra.mxu0 %v976
        %978 = vmatprep.subr.mxu0 0.0
        %v979 = vand.u32 %v951, 4294901760
        %980 = vmatpush1.msra.mxu0 %v979
        %981 = vmatprep.subr.mxu0 0.0
        %v982 = vand.u32 %v952, 4294901760
        %983 = vmatpush1.msra.mxu0 %v982
        %984 = vmatprep.subr.mxu0 0.0
        %v985 = vand.u32 %v953, 4294901760
        %986 = vmatpush1.msra.mxu0 %v985
        %987 = vmatprep.subr.mxu0 0.0
        %v988 = vand.u32 %v954, 4294901760
        %989 = vmatpush1.msra.mxu0 %v988
        %990 = vmatprep.subr.mxu0 0.0
        %991 = vmatpush1.msra.mxu0 0.0
        %992 = vmatprep.subr.mxu0 0.0
        %993 = vmatpush1.msra.mxu0 0.0
        %994 = vmatprep.subr.mxu0 0.0
        %995 = vmatpush1.msra.mxu0 0.0
        %996 = vmatprep.subr.mxu0 0.0
        %997 = vmatpush1.msra.mxu0 0.0
        %998 = vmatprep.subr.mxu0 0.0
        %999 = vmatpush1.msra.mxu0 0.0
        %1000 = vmatprep.subr.mxu0 0.0
        %1001 = vmatpush1.msra.mxu0 0.0
        %1002 = vmatprep.subr.mxu0 0.0
        %1003 = vmatpush1.msra.mxu0 0.0
        %1004 = vmatprep.subr.mxu0 0.0
        %1005 = vmatpush1.msra.mxu0 0.0
        %1006 = vmatprep.subr.mxu0 0.0
        %1007 = vmatpush1.msra.mxu0 0.0
        %1008 = vmatprep.subr.mxu0 0.0
        %1009 = vmatpush1.msra.mxu0 0.0
        %1010 = vmatprep.subr.mxu0 0.0
        %1011 = vmatpush1.msra.mxu0 0.0
        %1012 = vmatprep.subr.mxu0 0.0
        %1013 = vmatpush1.msra.mxu0 0.0
        %1014 = vmatprep.subr.mxu0 0.0
        %1015 = vmatpush1.msra.mxu0 0.0
        %1016 = vmatprep.subr.mxu0 0.0
        %1017 = vmatpush1.msra.mxu0 0.0
        %1018 = vmatprep.subr.mxu0 0.0
        %1019 = vmatpush1.msra.mxu0 0.0
        %1020 = vmatprep.subr.mxu0 0.0
        %1021 = vmatpush1.msra.mxu0 0.0
        %1022 = vmatprep.subr.mxu0 0.0
        %1023 = vmatpush1.msra.mxu0 0.0
        %1024 = vmatprep.subr.mxu0 0.0
        %1025 = vmatpush1.msra.mxu0 0.0
        %1026 = vmatprep.subr.mxu0 0.0
        %1027 = vmatpush1.msra.mxu0 0.0
        %1028 = vmatprep.subr.mxu0 0.0
        %1029 = vmatpush1.msra.mxu0 0.0
        %1030 = vmatprep.subr.mxu0 0.0
        %1031 = vmatpush1.msra.mxu0 0.0
        %1032 = vmatprep.subr.mxu0 0.0
        %1033 = vmatpush1.msra.mxu0 0.0
        %1034 = vmatprep.subr.mxu0 0.0
        %1035 = vmatpush1.msra.mxu0 0.0
        %1036 = vmatprep.subr.mxu0 0.0
        %1037 = vmatpush1.msra.mxu0 0.0
        %1038 = vmatprep.mubr.f32.mxu0 0.0
        %v1039 = vand.u32 %v964, 4294901760
        %v1040 = vsub.f32 %v964, %v1039
        %v1041 = vand.u32 %v1040, 4294901760
        %v1042 = vsub.f32 %v1040, %v1041
        %v1043 = vand.u32 %v1042, 4294901760
        %1044 = vmatmul.mubr.f32.gmra.mrb[0].mxu0 %v1043
        %v1045 = vpop.f32.mrb[0].mxu0
        %v1046 = vadd.f32 %v960, %v1045
        %v1047 = vpop.f32.mrb[0].mxu0
        %1048 = vdwg.mxu0
        %1049 = vmatprep.subr.mxu0 0.0
        %v1050 = vand.u32 %v947, 4294901760
        %v1051 = vsub.f32 %v947, %v1050
        %v1052 = vand.u32 %v1051, 4294901760
        %v1053 = vsub.f32 %v1051, %v1052
        %v1054 = vand.u32 %v1053, 4294901760
        %1055 = vmatpush1.msra.mxu0 %v1054
        %1056 = vmatprep.subr.mxu0 0.0
        %v1057 = vand.u32 %v948, 4294901760
        %v1058 = vsub.f32 %v948, %v1057
        %v1059 = vand.u32 %v1058, 4294901760
        %v1060 = vsub.f32 %v1058, %v1059
        %v1061 = vand.u32 %v1060, 4294901760
        %1062 = vmatpush1.msra.mxu0 %v1061
        %1063 = vmatprep.subr.mxu0 0.0
        %v1064 = vand.u32 %v949, 4294901760
        %v1065 = vsub.f32 %v949, %v1064
        %v1066 = vand.u32 %v1065, 4294901760
        %v1067 = vsub.f32 %v1065, %v1066
        %v1068 = vand.u32 %v1067, 4294901760
        %1069 = vmatpush1.msra.mxu0 %v1068
        %1070 = vmatprep.subr.mxu0 0.0
        %v1071 = vand.u32 %v950, 4294901760
        %v1072 = vsub.f32 %v950, %v1071
        %v1073 = vand.u32 %v1072, 4294901760
        %v1074 = vsub.f32 %v1072, %v1073
        %v1075 = vand.u32 %v1074, 4294901760
        %1076 = vmatpush1.msra.mxu0 %v1075
        %1077 = vmatprep.subr.mxu0 0.0
        %v1078 = vand.u32 %v951, 4294901760
        %v1079 = vsub.f32 %v951, %v1078
        %v1080 = vand.u32 %v1079, 4294901760
        %v1081 = vsub.f32 %v1079, %v1080
        %v1082 = vand.u32 %v1081, 4294901760
        %1083 = vmatpush1.msra.mxu0 %v1082
        %1084 = vmatprep.subr.mxu0 0.0
        %v1085 = vand.u32 %v952, 4294901760
        %v1086 = vsub.f32 %v952, %v1085
        %v1087 = vand.u32 %v1086, 4294901760
        %v1088 = vsub.f32 %v1086, %v1087
        %v1089 = vand.u32 %v1088, 4294901760
        %1090 = vmatpush1.msra.mxu0 %v1089
        %1091 = vmatprep.subr.mxu0 0.0
        %v1092 = vand.u32 %v953, 4294901760
        %v1093 = vsub.f32 %v953, %v1092
        %v1094 = vand.u32 %v1093, 4294901760
        %v1095 = vsub.f32 %v1093, %v1094
        %v1096 = vand.u32 %v1095, 4294901760
        %1097 = vmatpush1.msra.mxu0 %v1096
        %1098 = vmatprep.subr.mxu0 0.0
        %v1099 = vand.u32 %v954, 4294901760
        %v1100 = vsub.f32 %v954, %v1099
        %v1101 = vand.u32 %v1100, 4294901760
        %v1102 = vsub.f32 %v1100, %v1101
        %v1103 = vand.u32 %v1102, 4294901760
        %1104 = vmatpush1.msra.mxu0 %v1103
        %1105 = vmatprep.subr.mxu0 0.0
        %1106 = vmatpush1.msra.mxu0 0.0
        %1107 = vmatprep.subr.mxu0 0.0
        %1108 = vmatpush1.msra.mxu0 0.0
        %1109 = vmatprep.subr.mxu0 0.0
        %1110 = vmatpush1.msra.mxu0 0.0
        %1111 = vmatprep.subr.mxu0 0.0
        %1112 = vmatpush1.msra.mxu0 0.0
        %1113 = vmatprep.subr.mxu0 0.0
        %1114 = vmatpush1.msra.mxu0 0.0
        %1115 = vmatprep.subr.mxu0 0.0
        %1116 = vmatpush1.msra.mxu0 0.0
        %1117 = vmatprep.subr.mxu0 0.0
        %1118 = vmatpush1.msra.mxu0 0.0
        %1119 = vmatprep.subr.mxu0 0.0
        %1120 = vmatpush1.msra.mxu0 0.0
        %1121 = vmatprep.subr.mxu0 0.0
        %1122 = vmatpush1.msra.mxu0 0.0
        %1123 = vmatprep.subr.mxu0 0.0
        %1124 = vmatpush1.msra.mxu0 0.0
        %1125 = vmatprep.subr.mxu0 0.0
        %1126 = vmatpush1.msra.mxu0 0.0
        %1127 = vmatprep.subr.mxu0 0.0
        %1128 = vmatpush1.msra.mxu0 0.0
        %1129 = vmatprep.subr.mxu0 0.0
        %1130 = vmatpush1.msra.mxu0 0.0
        %1131 = vmatprep.subr.mxu0 0.0
        %1132 = vmatpush1.msra.mxu0 0.0
        %1133 = vmatprep.subr.mxu0 0.0
        %1134 = vmatpush1.msra.mxu0 0.0
        %1135 = vmatprep.subr.mxu0 0.0
        %1136 = vmatpush1.msra.mxu0 0.0
        %1137 = vmatprep.subr.mxu0 0.0
        %1138 = vmatpush1.msra.mxu0 0.0
        %1139 = vmatprep.subr.mxu0 0.0
        %1140 = vmatpush1.msra.mxu0 0.0
        %1141 = vmatprep.subr.mxu0 0.0
        %1142 = vmatpush1.msra.mxu0 0.0
        %1143 = vmatprep.subr.mxu0 0.0
        %1144 = vmatpush1.msra.mxu0 0.0
        %1145 = vmatprep.subr.mxu0 0.0
        %1146 = vmatpush1.msra.mxu0 0.0
        %1147 = vmatprep.subr.mxu0 0.0
        %1148 = vmatpush1.msra.mxu0 0.0
        %1149 = vmatprep.subr.mxu0 0.0
        %1150 = vmatpush1.msra.mxu0 0.0
        %1151 = vmatprep.subr.mxu0 0.0
        %1152 = vmatpush1.msra.mxu0 0.0
        %1153 = vmatprep.mubr.f32.mxu0 0.0
        %v1154 = vand.u32 %v964, 4294901760
        %1155 = vmatmul.mubr.f32.gmra.mrb[0].mxu0 %v1154
        %v1156 = vpop.f32.mrb[0].mxu0
        %v1157 = vadd.f32 %v1046, %v1156
        %v1158 = vpop.f32.mrb[0].mxu0
        %1159 = vdwg.mxu0
        %1160 = vmatprep.subr.mxu0 0.0
        %v1161 = vand.u32 %v947, 4294901760
        %v1162 = vsub.f32 %v947, %v1161
        %1163 = vmatpush1.msra.mxu0 %v1162
        %1164 = vmatprep.subr.mxu0 0.0
        %v1165 = vand.u32 %v948, 4294901760
        %v1166 = vsub.f32 %v948, %v1165
        %1167 = vmatpush1.msra.mxu0 %v1166
        %1168 = vmatprep.subr.mxu0 0.0
        %v1169 = vand.u32 %v949, 4294901760
        %v1170 = vsub.f32 %v949, %v1169
        %1171 = vmatpush1.msra.mxu0 %v1170
        %1172 = vmatprep.subr.mxu0 0.0
        %v1173 = vand.u32 %v950, 4294901760
        %v1174 = vsub.f32 %v950, %v1173
        %1175 = vmatpush1.msra.mxu0 %v1174
        %1176 = vmatprep.subr.mxu0 0.0
        %v1177 = vand.u32 %v951, 4294901760
        %v1178 = vsub.f32 %v951, %v1177
        %1179 = vmatpush1.msra.mxu0 %v1178
        %1180 = vmatprep.subr.mxu0 0.0
        %v1181 = vand.u32 %v952, 4294901760
        %v1182 = vsub.f32 %v952, %v1181
        %1183 = vmatpush1.msra.mxu0 %v1182
        %1184 = vmatprep.subr.mxu0 0.0
        %v1185 = vand.u32 %v953, 4294901760
        %v1186 = vsub.f32 %v953, %v1185
        %1187 = vmatpush1.msra.mxu0 %v1186
        %1188 = vmatprep.subr.mxu0 0.0
        %v1189 = vand.u32 %v954, 4294901760
        %v1190 = vsub.f32 %v954, %v1189
        %1191 = vmatpush1.msra.mxu0 %v1190
        %1192 = vmatprep.subr.mxu0 0.0
        %1193 = vmatpush1.msra.mxu0 0.0
        %1194 = vmatprep.subr.mxu0 0.0
        %1195 = vmatpush1.msra.mxu0 0.0
        %1196 = vmatprep.subr.mxu0 0.0
        %1197 = vmatpush1.msra.mxu0 0.0
        %1198 = vmatprep.subr.mxu0 0.0
        %1199 = vmatpush1.msra.mxu0 0.0
        %1200 = vmatprep.subr.mxu0 0.0
        %1201 = vmatpush1.msra.mxu0 0.0
        %1202 = vmatprep.subr.mxu0 0.0
        %1203 = vmatpush1.msra.mxu0 0.0
        %1204 = vmatprep.subr.mxu0 0.0
        %1205 = vmatpush1.msra.mxu0 0.0
        %1206 = vmatprep.subr.mxu0 0.0
        %1207 = vmatpush1.msra.mxu0 0.0
        %1208 = vmatprep.subr.mxu0 0.0
        %1209 = vmatpush1.msra.mxu0 0.0
        %1210 = vmatprep.subr.mxu0 0.0
        %1211 = vmatpush1.msra.mxu0 0.0
        %1212 = vmatprep.subr.mxu0 0.0
        %1213 = vmatpush1.msra.mxu0 0.0
        %1214 = vmatprep.subr.mxu0 0.0
        %1215 = vmatpush1.msra.mxu0 0.0
        %1216 = vmatprep.subr.mxu0 0.0
        %1217 = vmatpush1.msra.mxu0 0.0
        %1218 = vmatprep.subr.mxu0 0.0
        %1219 = vmatpush1.msra.mxu0 0.0
        %1220 = vmatprep.subr.mxu0 0.0
        %1221 = vmatpush1.msra.mxu0 0.0
        %1222 = vmatprep.subr.mxu0 0.0
        %1223 = vmatpush1.msra.mxu0 0.0
        %1224 = vmatprep.subr.mxu0 0.0
        %1225 = vmatpush1.msra.mxu0 0.0
        %1226 = vmatprep.subr.mxu0 0.0
        %1227 = vmatpush1.msra.mxu0 0.0
        %1228 = vmatprep.subr.mxu0 0.0
        %1229 = vmatpush1.msra.mxu0 0.0
        %1230 = vmatprep.subr.mxu0 0.0
        %1231 = vmatpush1.msra.mxu0 0.0
        %1232 = vmatprep.subr.mxu0 0.0
        %1233 = vmatpush1.msra.mxu0 0.0
        %1234 = vmatprep.subr.mxu0 0.0
        %1235 = vmatpush1.msra.mxu0 0.0
        %1236 = vmatprep.subr.mxu0 0.0
        %1237 = vmatpush1.msra.mxu0 0.0
        %1238 = vmatprep.subr.mxu0 0.0
        %1239 = vmatpush1.msra.mxu0 0.0
        %1240 = vmatprep.mubr.f32.mxu0 0.0
        %v1241 = vand.u32 %v964, 4294901760
        %v1242 = vsub.f32 %v964, %v1241
        %1243 = vmatmul.mubr.f32.gmra.mrb[0].mxu0 %v1242
        %v1244 = vpop.f32.mrb[0].mxu0
        %v1245 = vadd.f32 %v1157, %v1244
        %v1246 = vpop.f32.mrb[0].mxu0
        %1247 = vdwg.mxu0
        %1248 = vmatprep.subr.mxu0 0.0
        %v1249 = vand.u32 %v947, 4294901760
        %1250 = vmatpush1.msra.mxu0 %v1249
        %1251 = vmatprep.subr.mxu0 0.0
        %v1252 = vand.u32 %v948, 4294901760
        %1253 = vmatpush1.msra.mxu0 %v1252
        %1254 = vmatprep.subr.mxu0 0.0
        %v1255 = vand.u32 %v949, 4294901760
        %1256 = vmatpush1.msra.mxu0 %v1255
        %1257 = vmatprep.subr.mxu0 0.0
        %v1258 = vand.u32 %v950, 4294901760
        %1259 = vmatpush1.msra.mxu0 %v1258
        %1260 = vmatprep.subr.mxu0 0.0
        %v1261 = vand.u32 %v951, 4294901760
        %1262 = vmatpush1.msra.mxu0 %v1261
        %1263 = vmatprep.subr.mxu0 0.0
        %v1264 = vand.u32 %v952, 4294901760
        %1265 = vmatpush1.msra.mxu0 %v1264
        %1266 = vmatprep.subr.mxu0 0.0
        %v1267 = vand.u32 %v953, 4294901760
        %1268 = vmatpush1.msra.mxu0 %v1267
        %1269 = vmatprep.subr.mxu0 0.0
        %v1270 = vand.u32 %v954, 4294901760
        %1271 = vmatpush1.msra.mxu0 %v1270
        %1272 = vmatprep.subr.mxu0 0.0
        %1273 = vmatpush1.msra.mxu0 0.0
        %1274 = vmatprep.subr.mxu0 0.0
        %1275 = vmatpush1.msra.mxu0 0.0
        %1276 = vmatprep.subr.mxu0 0.0
        %1277 = vmatpush1.msra.mxu0 0.0
        %1278 = vmatprep.subr.mxu0 0.0
        %1279 = vmatpush1.msra.mxu0 0.0
        %1280 = vmatprep.subr.mxu0 0.0
        %1281 = vmatpush1.msra.mxu0 0.0
        %1282 = vmatprep.subr.mxu0 0.0
        %1283 = vmatpush1.msra.mxu0 0.0
        %1284 = vmatprep.subr.mxu0 0.0
        %1285 = vmatpush1.msra.mxu0 0.0
        %1286 = vmatprep.subr.mxu0 0.0
        %1287 = vmatpush1.msra.mxu0 0.0
        %1288 = vmatprep.subr.mxu0 0.0
        %1289 = vmatpush1.msra.mxu0 0.0
        %1290 = vmatprep.subr.mxu0 0.0
        %1291 = vmatpush1.msra.mxu0 0.0
        %1292 = vmatprep.subr.mxu0 0.0
        %1293 = vmatpush1.msra.mxu0 0.0
        %1294 = vmatprep.subr.mxu0 0.0
        %1295 = vmatpush1.msra.mxu0 0.0
        %1296 = vmatprep.subr.mxu0 0.0
        %1297 = vmatpush1.msra.mxu0 0.0
        %1298 = vmatprep.subr.mxu0 0.0
        %1299 = vmatpush1.msra.mxu0 0.0
        %1300 = vmatprep.subr.mxu0 0.0
        %1301 = vmatpush1.msra.mxu0 0.0
        %1302 = vmatprep.subr.mxu0 0.0
        %1303 = vmatpush1.msra.mxu0 0.0
        %1304 = vmatprep.subr.mxu0 0.0
        %1305 = vmatpush1.msra.mxu0 0.0
        %1306 = vmatprep.subr.mxu0 0.0
        %1307 = vmatpush1.msra.mxu0 0.0
        %1308 = vmatprep.subr.mxu0 0.0
        %1309 = vmatpush1.msra.mxu0 0.0
        %1310 = vmatprep.subr.mxu0 0.0
        %1311 = vmatpush1.msra.mxu0 0.0
        %1312 = vmatprep.subr.mxu0 0.0
        %1313 = vmatpush1.msra.mxu0 0.0
        %1314 = vmatprep.subr.mxu0 0.0
        %1315 = vmatpush1.msra.mxu0 0.0
        %1316 = vmatprep.subr.mxu0 0.0
        %1317 = vmatpush1.msra.mxu0 0.0
        %1318 = vmatprep.subr.mxu0 0.0
        %1319 = vmatpush1.msra.mxu0 0.0
        %1320 = vmatprep.mubr.f32.mxu0 0.0
        %v1321 = vand.u32 %v964, 4294901760
        %v1322 = vsub.f32 %v964, %v1321
        %v1323 = vand.u32 %v1322, 4294901760
        %1324 = vmatmul.mubr.f32.gmra.mrb[0].mxu0 %v1323
        %v1325 = vpop.f32.mrb[0].mxu0
        %v1326 = vadd.f32 %v1245, %v1325
        %v1327 = vpop.f32.mrb[0].mxu0
        %1328 = vdwg.mxu0
        %1329 = vmatprep.subr.mxu0 0.0
        %v1330 = vand.u32 %v947, 4294901760
        %v1331 = vsub.f32 %v947, %v1330
        %v1332 = vand.u32 %v1331, 4294901760
        %1333 = vmatpush1.msra.mxu0 %v1332
        %1334 = vmatprep.subr.mxu0 0.0
        %v1335 = vand.u32 %v948, 4294901760
        %v1336 = vsub.f32 %v948, %v1335
        %v1337 = vand.u32 %v1336, 4294901760
        %1338 = vmatpush1.msra.mxu0 %v1337
        %1339 = vmatprep.subr.mxu0 0.0
        %v1340 = vand.u32 %v949, 4294901760
        %v1341 = vsub.f32 %v949, %v1340
        %v1342 = vand.u32 %v1341, 4294901760
        %1343 = vmatpush1.msra.mxu0 %v1342
        %1344 = vmatprep.subr.mxu0 0.0
        %v1345 = vand.u32 %v950, 4294901760
        %v1346 = vsub.f32 %v950, %v1345
        %v1347 = vand.u32 %v1346, 4294901760
        %1348 = vmatpush1.msra.mxu0 %v1347
        %1349 = vmatprep.subr.mxu0 0.0
        %v1350 = vand.u32 %v951, 4294901760
        %v1351 = vsub.f32 %v951, %v1350
        %v1352 = vand.u32 %v1351, 4294901760
        %1353 = vmatpush1.msra.mxu0 %v1352
        %1354 = vmatprep.subr.mxu0 0.0
        %v1355 = vand.u32 %v952, 4294901760
        %v1356 = vsub.f32 %v952, %v1355
        %v1357 = vand.u32 %v1356, 4294901760
        %1358 = vmatpush1.msra.mxu0 %v1357
        %1359 = vmatprep.subr.mxu0 0.0
        %v1360 = vand.u32 %v953, 4294901760
        %v1361 = vsub.f32 %v953, %v1360
        %v1362 = vand.u32 %v1361, 4294901760
        %1363 = vmatpush1.msra.mxu0 %v1362
        %1364 = vmatprep.subr.mxu0 0.0
        %v1365 = vand.u32 %v954, 4294901760
        %v1366 = vsub.f32 %v954, %v1365
        %v1367 = vand.u32 %v1366, 4294901760
        %1368 = vmatpush1.msra.mxu0 %v1367
        %1369 = vmatprep.subr.mxu0 0.0
        %1370 = vmatpush1.msra.mxu0 0.0
        %1371 = vmatprep.subr.mxu0 0.0
        %1372 = vmatpush1.msra.mxu0 0.0
        %1373 = vmatprep.subr.mxu0 0.0
        %1374 = vmatpush1.msra.mxu0 0.0
        %1375 = vmatprep.subr.mxu0 0.0
        %1376 = vmatpush1.msra.mxu0 0.0
        %1377 = vmatprep.subr.mxu0 0.0
        %1378 = vmatpush1.msra.mxu0 0.0
        %1379 = vmatprep.subr.mxu0 0.0
        %1380 = vmatpush1.msra.mxu0 0.0
        %1381 = vmatprep.subr.mxu0 0.0
        %1382 = vmatpush1.msra.mxu0 0.0
        %1383 = vmatprep.subr.mxu0 0.0
        %1384 = vmatpush1.msra.mxu0 0.0
        %1385 = vmatprep.subr.mxu0 0.0
        %1386 = vmatpush1.msra.mxu0 0.0
        %1387 = vmatprep.subr.mxu0 0.0
        %1388 = vmatpush1.msra.mxu0 0.0
        %1389 = vmatprep.subr.mxu0 0.0
        %1390 = vmatpush1.msra.mxu0 0.0
        %1391 = vmatprep.subr.mxu0 0.0
        %1392 = vmatpush1.msra.mxu0 0.0
        %1393 = vmatprep.subr.mxu0 0.0
        %1394 = vmatpush1.msra.mxu0 0.0
        %1395 = vmatprep.subr.mxu0 0.0
        %1396 = vmatpush1.msra.mxu0 0.0
        %1397 = vmatprep.subr.mxu0 0.0
        %1398 = vmatpush1.msra.mxu0 0.0
        %1399 = vmatprep.subr.mxu0 0.0
        %1400 = vmatpush1.msra.mxu0 0.0
        %1401 = vmatprep.subr.mxu0 0.0
        %1402 = vmatpush1.msra.mxu0 0.0
        %1403 = vmatprep.subr.mxu0 0.0
        %1404 = vmatpush1.msra.mxu0 0.0
        %1405 = vmatprep.subr.mxu0 0.0
        %1406 = vmatpush1.msra.mxu0 0.0
        %1407 = vmatprep.subr.mxu0 0.0
        %1408 = vmatpush1.msra.mxu0 0.0
        %1409 = vmatprep.subr.mxu0 0.0
        %1410 = vmatpush1.msra.mxu0 0.0
        %1411 = vmatprep.subr.mxu0 0.0
        %1412 = vmatpush1.msra.mxu0 0.0
        %1413 = vmatprep.subr.mxu0 0.0
        %1414 = vmatpush1.msra.mxu0 0.0
        %1415 = vmatprep.subr.mxu0 0.0
        %1416 = vmatpush1.msra.mxu0 0.0
        %1417 = vmatprep.mubr.f32.mxu0 0.0
        %v1418 = vand.u32 %v964, 4294901760
        %1419 = vmatmul.mubr.f32.gmra.mrb[0].mxu0 %v1418
        %v1420 = vpop.f32.mrb[0].mxu0
        %v1421 = vadd.f32 %v1326, %v1420
        %v1422 = vpop.f32.mrb[0].mxu0
        %1423 = vdwg.mxu0
        %1424 = vmatprep.subr.mxu0 0.0
        %v1425 = vand.u32 %v947, 4294901760
        %1426 = vmatpush1.msra.mxu0 %v1425
        %1427 = vmatprep.subr.mxu0 0.0
        %v1428 = vand.u32 %v948, 4294901760
        %1429 = vmatpush1.msra.mxu0 %v1428
        %1430 = vmatprep.subr.mxu0 0.0
        %v1431 = vand.u32 %v949, 4294901760
        %1432 = vmatpush1.msra.mxu0 %v1431
        %1433 = vmatprep.subr.mxu0 0.0
        %v1434 = vand.u32 %v950, 4294901760
        %1435 = vmatpush1.msra.mxu0 %v1434
        %1436 = vmatprep.subr.mxu0 0.0
        %v1437 = vand.u32 %v951, 4294901760
        %1438 = vmatpush1.msra.mxu0 %v1437
        %1439 = vmatprep.subr.mxu0 0.0
        %v1440 = vand.u32 %v952, 4294901760
        %1441 = vmatpush1.msra.mxu0 %v1440
        %1442 = vmatprep.subr.mxu0 0.0
        %v1443 = vand.u32 %v953, 4294901760
        %1444 = vmatpush1.msra.mxu0 %v1443
        %1445 = vmatprep.subr.mxu0 0.0
        %v1446 = vand.u32 %v954, 4294901760
        %1447 = vmatpush1.msra.mxu0 %v1446
        %1448 = vmatprep.subr.mxu0 0.0
        %1449 = vmatpush1.msra.mxu0 0.0
        %1450 = vmatprep.subr.mxu0 0.0
        %1451 = vmatpush1.msra.mxu0 0.0
        %1452 = vmatprep.subr.mxu0 0.0
        %1453 = vmatpush1.msra.mxu0 0.0
        %1454 = vmatprep.subr.mxu0 0.0
        %1455 = vmatpush1.msra.mxu0 0.0
        %1456 = vmatprep.subr.mxu0 0.0
        %1457 = vmatpush1.msra.mxu0 0.0
        %1458 = vmatprep.subr.mxu0 0.0
        %1459 = vmatpush1.msra.mxu0 0.0
        %1460 = vmatprep.subr.mxu0 0.0
        %1461 = vmatpush1.msra.mxu0 0.0
        %1462 = vmatprep.subr.mxu0 0.0
        %1463 = vmatpush1.msra.mxu0 0.0
        %1464 = vmatprep.subr.mxu0 0.0
        %1465 = vmatpush1.msra.mxu0 0.0
        %1466 = vmatprep.subr.mxu0 0.0
        %1467 = vmatpush1.msra.mxu0 0.0
        %1468 = vmatprep.subr.mxu0 0.0
        %1469 = vmatpush1.msra.mxu0 0.0
        %1470 = vmatprep.subr.mxu0 0.0
        %1471 = vmatpush1.msra.mxu0 0.0
        %1472 = vmatprep.subr.mxu0 0.0
        %1473 = vmatpush1.msra.mxu0 0.0
        %1474 = vmatprep.subr.mxu0 0.0
        %1475 = vmatpush1.msra.mxu0 0.0
        %1476 = vmatprep.subr.mxu0 0.0
        %1477 = vmatpush1.msra.mxu0 0.0
        %1478 = vmatprep.subr.mxu0 0.0
        %1479 = vmatpush1.msra.mxu0 0.0
        %1480 = vmatprep.subr.mxu0 0.0
        %1481 = vmatpush1.msra.mxu0 0.0
        %1482 = vmatprep.subr.mxu0 0.0
        %1483 = vmatpush1.msra.mxu0 0.0
        %1484 = vmatprep.subr.mxu0 0.0
        %1485 = vmatpush1.msra.mxu0 0.0
        %1486 = vmatprep.subr.mxu0 0.0
        %1487 = vmatpush1.msra.mxu0 0.0
        %1488 = vmatprep.subr.mxu0 0.0
        %1489 = vmatpush1.msra.mxu0 0.0
        %1490 = vmatprep.subr.mxu0 0.0
        %1491 = vmatpush1.msra.mxu0 0.0
        %1492 = vmatprep.subr.mxu0 0.0
        %1493 = vmatpush1.msra.mxu0 0.0
        %1494 = vmatprep.subr.mxu0 0.0
        %1495 = vmatpush1.msra.mxu0 0.0
        %1496 = vmatprep.mubr.f32.mxu0 0.0
        %v1497 = vand.u32 %v964, 4294901760
        %1498 = vmatmul.mubr.f32.gmra.mrb[0].mxu0 %v1497
        %v1499 = vpop.f32.mrb[0].mxu0
        %v1500 = vadd.f32 %v1421, %v1499
        %v1501 = vpop.f32.mrb[0].mxu0
        %1502 = vdwg.mxu0
        %v1503 = vtanh.pop %v1500
        %v1504 = vld [vmem:[%s5] sm:$0x1]
        %v1505 = vld [vmem:[%s6] sm:$0x1]
        %v1506 = vsel %vm962, %v1503, 0.0
        %1507 = vadd.xlane.f32.xlu0 %v1506
        %v1508 = vpop.xlane.xlu0 %1507
        %v1509 = vrcp.pop 64.0
        %v1510 = vmul.f32 %v1508, %v1509
        %v1511 = vmul.f32 %v1503, %v1503
        %v1512 = vsel %vm962, %v1511, 0.0
        %1513 = vadd.xlane.f32.xlu0 %v1512
        %v1514 = vpop.xlane.xlu0 %1513
        %v1515 = vmul.f32 %v1514, %v1509
        %v1516 = vmul.f32 %v1510, %v1510
        %v1517 = vsub.f32 %v1515, %v1516
        %v1518 = vadd.f32 %v1517, 1e-05
        %v1519 = vrsqrt.pop %v1518
        %v1520 = vsub.f32 %v1503, %v1510
        %v1521 = vmul.f32 %v1520, %v1519
        %v1523 = vlaneseq
        %v1524 = vshrl.u32 %v1523, 7
        %v1525 = vsub.s32 0, %v1524
        %v1526 = vrot.slane %v1504, %v1525
        %v1528 = vmul.f32 %v1521, %v1526
        %v1530 = vlaneseq
        %v1531 = vshrl.u32 %v1530, 7
        %v1532 = vsub.s32 0, %v1531
        %v1533 = vrot.slane %v1505, %v1532
        %v1535 = vadd.f32 %v1528, %v1533
        %s1536 = scalar_lea.vmem [#allocation7], 64
        %v1537 = vld [vmem:[%s1536] sm:$0xff]
        %v1538 = vld [vmem:[%s1536 + $0x8] sm:$0xff]
        %v1539 = vld [vmem:[%s1536 + $0x10] sm:$0xff]
        %v1540 = vld [vmem:[%s1536 + $0x18] sm:$0xff]
        %v1541 = vld [vmem:[%s1536 + $0x20] sm:$0xff]
        %v1542 = vld [vmem:[%s1536 + $0x28] sm:$0xff]
        %v1543 = vld [vmem:[%s1536 + $0x30] sm:$0xff]
        %v1544 = vld [vmem:[%s1536 + $0x38] sm:$0xff]
        %s1545 = scalar_lea.vmem %s4, 1
        %v1546 = vld [vmem:[%s1545] sm:$0x1]
        %v1548 = vlaneseq
        %v1549 = vshrl.u32 %v1548, 7
        %v1550 = vsub.s32 0, %v1549
        %v1551 = vrot.slane %v1546, %v1550
        %v1554 = vsel %vm962, %v1535, 0
        %1556 = vmatprep.subr.mxu0 0.0
        %v1557 = vand.u32 %v1537, 4294901760
        %1558 = vmatpush1.msra.mxu0 %v1557
        %1559 = vmatprep.subr.mxu0 0.0
        %v1560 = vand.u32 %v1538, 4294901760
        %1561 = vmatpush1.msra.mxu0 %v1560
        %1562 = vmatprep.subr.mxu0 0.0
        %v1563 = vand.u32 %v1539, 4294901760
        %1564 = vmatpush1.msra.mxu0 %v1563
        %1565 = vmatprep.subr.mxu0 0.0
        %v1566 = vand.u32 %v1540, 4294901760
        %1567 = vmatpush1.msra.mxu0 %v1566
        %1568 = vmatprep.subr.mxu0 0.0
        %v1569 = vand.u32 %v1541, 4294901760
        %1570 = vmatpush1.msra.mxu0 %v1569
        %1571 = vmatprep.subr.mxu0 0.0
        %v1572 = vand.u32 %v1542, 4294901760
        %1573 = vmatpush1.msra.mxu0 %v1572
        %1574 = vmatprep.subr.mxu0 0.0
        %v1575 = vand.u32 %v1543, 4294901760
        %1576 = vmatpush1.msra.mxu0 %v1575
        %1577 = vmatprep.subr.mxu0 0.0
        %v1578 = vand.u32 %v1544, 4294901760
        %1579 = vmatpush1.msra.mxu0 %v1578
        %1580 = vmatprep.subr.mxu0 0.0
        %1581 = vmatpush1.msra.mxu0 0.0
        %1582 = vmatprep.subr.mxu0 0.0
        %1583 = vmatpush1.msra.mxu0 0.0
        %1584 = vmatprep.subr.mxu0 0.0
        %1585 = vmatpush1.msra.mxu0 0.0
        %1586 = vmatprep.subr.mxu0 0.0
        %1587 = vmatpush1.msra.mxu0 0.0
        %1588 = vmatprep.subr.mxu0 0.0
        %1589 = vmatpush1.msra.mxu0 0.0
        %1590 = vmatprep.subr.mxu0 0.0
        %1591 = vmatpush1.msra.mxu0 0.0
        %1592 = vmatprep.subr.mxu0 0.0
        %1593 = vmatpush1.msra.mxu0 0.0
        %1594 = vmatprep.subr.mxu0 0.0
        %1595 = vmatpush1.msra.mxu0 0.0
        %1596 = vmatprep.subr.mxu0 0.0
        %1597 = vmatpush1.msra.mxu0 0.0
        %1598 = vmatprep.subr.mxu0 0.0
        %1599 = vmatpush1.msra.mxu0 0.0
        %1600 = vmatprep.subr.mxu0 0.0
        %1601 = vmatpush1.msra.mxu0 0.0
        %1602 = vmatprep.subr.mxu0 0.0
        %1603 = vmatpush1.msra.mxu0 0.0
        %1604 = vmatprep.subr.mxu0 0.0
        %1605 = vmatpush1.msra.mxu0 0.0
        %1606 = vmatprep.subr.mxu0 0.0
        %1607 = vmatpush1.msra.mxu0 0.0
        %1608 = vmatprep.subr.mxu0 0.0
        %1609 = vmatpush1.msra.mxu0 0.0
        %1610 = vmatprep.subr.mxu0 0.0
        %1611 = vmatpush1.msra.mxu0 0.0
        %1612 = vmatprep.subr.mxu0 0.0
        %1613 = vmatpush1.msra.mxu0 0.0
        %1614 = vmatprep.subr.mxu0 0.0
        %1615 = vmatpush1.msra.mxu0 0.0
        %1616 = vmatprep.subr.mxu0 0.0
        %1617 = vmatpush1.msra.mxu0 0.0
        %1618 = vmatprep.subr.mxu0 0.0
        %1619 = vmatpush1.msra.mxu0 0.0
        %1620 = vmatprep.subr.mxu0 0.0
        %1621 = vmatpush1.msra.mxu0 0.0
        %1622 = vmatprep.subr.mxu0 0.0
        %1623 = vmatpush1.msra.mxu0 0.0
        %1624 = vmatprep.subr.mxu0 0.0
        %1625 = vmatpush1.msra.mxu0 0.0
        %1626 = vmatprep.subr.mxu0 0.0
        %1627 = vmatpush1.msra.mxu0 0.0
        %1628 = vmatprep.mubr.f32.mxu0 0.0
        %v1629 = vand.u32 %v1554, 4294901760
        %v1630 = vsub.f32 %v1554, %v1629
        %v1631 = vand.u32 %v1630, 4294901760
        %v1632 = vsub.f32 %v1630, %v1631
        %v1633 = vand.u32 %v1632, 4294901760
        %1634 = vmatmul.mubr.f32.gmra.mrb[0].mxu0 %v1633
        %v1635 = vpop.f32.mrb[0].mxu0
        %v1636 = vadd.f32 %v1551, %v1635
        %v1637 = vpop.f32.mrb[0].mxu0
        %1638 = vdwg.mxu0
        %1639 = vmatprep.subr.mxu0 0.0
        %v1640 = vand.u32 %v1537, 4294901760
        %v1641 = vsub.f32 %v1537, %v1640
        %v1642 = vand.u32 %v1641, 4294901760
        %v1643 = vsub.f32 %v1641, %v1642
        %v1644 = vand.u32 %v1643, 4294901760
        %1645 = vmatpush1.msra.mxu0 %v1644
        %1646 = vmatprep.subr.mxu0 0.0
        %v1647 = vand.u32 %v1538, 4294901760
        %v1648 = vsub.f32 %v1538, %v1647
        %v1649 = vand.u32 %v1648, 4294901760
        %v1650 = vsub.f32 %v1648, %v1649
        %v1651 = vand.u32 %v1650, 4294901760
        %1652 = vmatpush1.msra.mxu0 %v1651
        %1653 = vmatprep.subr.mxu0 0.0
        %v1654 = vand.u32 %v1539, 4294901760
        %v1655 = vsub.f32 %v1539, %v1654
        %v1656 = vand.u32 %v1655, 4294901760
        %v1657 = vsub.f32 %v1655, %v1656
        %v1658 = vand.u32 %v1657, 4294901760
        %1659 = vmatpush1.msra.mxu0 %v1658
        %1660 = vmatprep.subr.mxu0 0.0
        %v1661 = vand.u32 %v1540, 4294901760
        %v1662 = vsub.f32 %v1540, %v1661
        %v1663 = vand.u32 %v1662, 4294901760
        %v1664 = vsub.f32 %v1662, %v1663
        %v1665 = vand.u32 %v1664, 4294901760
        %1666 = vmatpush1.msra.mxu0 %v1665
        %1667 = vmatprep.subr.mxu0 0.0
        %v1668 = vand.u32 %v1541, 4294901760
        %v1669 = vsub.f32 %v1541, %v1668
        %v1670 = vand.u32 %v1669, 4294901760
        %v1671 = vsub.f32 %v1669, %v1670
        %v1672 = vand.u32 %v1671, 4294901760
        %1673 = vmatpush1.msra.mxu0 %v1672
        %1674 = vmatprep.subr.mxu0 0.0
        %v1675 = vand.u32 %v1542, 4294901760
        %v1676 = vsub.f32 %v1542, %v1675
        %v1677 = vand.u32 %v1676, 4294901760
        %v1678 = vsub.f32 %v1676, %v1677
        %v1679 = vand.u32 %v1678, 4294901760
        %1680 = vmatpush1.msra.mxu0 %v1679
        %1681 = vmatprep.subr.mxu0 0.0
        %v1682 = vand.u32 %v1543, 4294901760
        %v1683 = vsub.f32 %v1543, %v1682
        %v1684 = vand.u32 %v1683, 4294901760
        %v1685 = vsub.f32 %v1683, %v1684
        %v1686 = vand.u32 %v1685, 4294901760
        %1687 = vmatpush1.msra.mxu0 %v1686
        %1688 = vmatprep.subr.mxu0 0.0
        %v1689 = vand.u32 %v1544, 4294901760
        %v1690 = vsub.f32 %v1544, %v1689
        %v1691 = vand.u32 %v1690, 4294901760
        %v1692 = vsub.f32 %v1690, %v1691
        %v1693 = vand.u32 %v1692, 4294901760
        %1694 = vmatpush1.msra.mxu0 %v1693
        %1695 = vmatprep.subr.mxu0 0.0
        %1696 = vmatpush1.msra.mxu0 0.0
        %1697 = vmatprep.subr.mxu0 0.0
        %1698 = vmatpush1.msra.mxu0 0.0
        %1699 = vmatprep.subr.mxu0 0.0
        %1700 = vmatpush1.msra.mxu0 0.0
        %1701 = vmatprep.subr.mxu0 0.0
        %1702 = vmatpush1.msra.mxu0 0.0
        %1703 = vmatprep.subr.mxu0 0.0
        %1704 = vmatpush1.msra.mxu0 0.0
        %1705 = vmatprep.subr.mxu0 0.0
        %1706 = vmatpush1.msra.mxu0 0.0
        %1707 = vmatprep.subr.mxu0 0.0
        %1708 = vmatpush1.msra.mxu0 0.0
        %1709 = vmatprep.subr.mxu0 0.0
        %1710 = vmatpush1.msra.mxu0 0.0
        %1711 = vmatprep.subr.mxu0 0.0
        %1712 = vmatpush1.msra.mxu0 0.0
        %1713 = vmatprep.subr.mxu0 0.0
        %1714 = vmatpush1.msra.mxu0 0.0
        %1715 = vmatprep.subr.mxu0 0.0
        %1716 = vmatpush1.msra.mxu0 0.0
        %1717 = vmatprep.subr.mxu0 0.0
        %1718 = vmatpush1.msra.mxu0 0.0
        %1719 = vmatprep.subr.mxu0 0.0
        %1720 = vmatpush1.msra.mxu0 0.0
        %1721 = vmatprep.subr.mxu0 0.0
        %1722 = vmatpush1.msra.mxu0 0.0
        %1723 = vmatprep.subr.mxu0 0.0
        %1724 = vmatpush1.msra.mxu0 0.0
        %1725 = vmatprep.subr.mxu0 0.0
        %1726 = vmatpush1.msra.mxu0 0.0
        %1727 = vmatprep.subr.mxu0 0.0
        %1728 = vmatpush1.msra.mxu0 0.0
        %1729 = vmatprep.subr.mxu0 0.0
        %1730 = vmatpush1.msra.mxu0 0.0
        %1731 = vmatprep.subr.mxu0 0.0
        %1732 = vmatpush1.msra.mxu0 0.0
        %1733 = vmatprep.subr.mxu0 0.0
        %1734 = vmatpush1.msra.mxu0 0.0
        %1735 = vmatprep.subr.mxu0 0.0
        %1736 = vmatpush1.msra.mxu0 0.0
        %1737 = vmatprep.subr.mxu0 0.0
        %1738 = vmatpush1.msra.mxu0 0.0
        %1739 = vmatprep.subr.mxu0 0.0
        %1740 = vmatpush1.msra.mxu0 0.0
        %1741 = vmatprep.subr.mxu0 0.0
        %1742 = vmatpush1.msra.mxu0 0.0
        %1743 = vmatprep.mubr.f32.mxu0 0.0
        %v1744 = vand.u32 %v1554, 4294901760
        %1745 = vmatmul.mubr.f32.gmra.mrb[0].mxu0 %v1744
        %v1746 = vpop.f32.mrb[0].mxu0
        %v1747 = vadd.f32 %v1636, %v1746
        %v1748 = vpop.f32.mrb[0].mxu0
        %1749 = vdwg.mxu0
        %1750 = vmatprep.subr.mxu0 0.0
        %v1751 = vand.u32 %v1537, 4294901760
        %v1752 = vsub.f32 %v1537, %v1751
        %1753 = vmatpush1.msra.mxu0 %v1752
        %1754 = vmatprep.subr.mxu0 0.0
        %v1755 = vand.u32 %v1538, 4294901760
        %v1756 = vsub.f32 %v1538, %v1755
        %1757 = vmatpush1.msra.mxu0 %v1756
        %1758 = vmatprep.subr.mxu0 0.0
        %v1759 = vand.u32 %v1539, 4294901760
        %v1760 = vsub.f32 %v1539, %v1759
        %1761 = vmatpush1.msra.mxu0 %v1760
        %1762 = vmatprep.subr.mxu0 0.0
        %v1763 = vand.u32 %v1540, 4294901760
        %v1764 = vsub.f32 %v1540, %v1763
        %1765 = vmatpush1.msra.mxu0 %v1764
        %1766 = vmatprep.subr.mxu0 0.0
        %v1767 = vand.u32 %v1541, 4294901760
        %v1768 = vsub.f32 %v1541, %v1767
        %1769 = vmatpush1.msra.mxu0 %v1768
        %1770 = vmatprep.subr.mxu0 0.0
        %v1771 = vand.u32 %v1542, 4294901760
        %v1772 = vsub.f32 %v1542, %v1771
        %1773 = vmatpush1.msra.mxu0 %v1772
        %1774 = vmatprep.subr.mxu0 0.0
        %v1775 = vand.u32 %v1543, 4294901760
        %v1776 = vsub.f32 %v1543, %v1775
        %1777 = vmatpush1.msra.mxu0 %v1776
        %1778 = vmatprep.subr.mxu0 0.0
        %v1779 = vand.u32 %v1544, 4294901760
        %v1780 = vsub.f32 %v1544, %v1779
        %1781 = vmatpush1.msra.mxu0 %v1780
        %1782 = vmatprep.subr.mxu0 0.0
        %1783 = vmatpush1.msra.mxu0 0.0
        %1784 = vmatprep.subr.mxu0 0.0
        %1785 = vmatpush1.msra.mxu0 0.0
        %1786 = vmatprep.subr.mxu0 0.0
        %1787 = vmatpush1.msra.mxu0 0.0
        %1788 = vmatprep.subr.mxu0 0.0
        %1789 = vmatpush1.msra.mxu0 0.0
        %1790 = vmatprep.subr.mxu0 0.0
        %1791 = vmatpush1.msra.mxu0 0.0
        %1792 = vmatprep.subr.mxu0 0.0
        %1793 = vmatpush1.msra.mxu0 0.0
        %1794 = vmatprep.subr.mxu0 0.0
        %1795 = vmatpush1.msra.mxu0 0.0
        %1796 = vmatprep.subr.mxu0 0.0
        %1797 = vmatpush1.msra.mxu0 0.0
        %1798 = vmatprep.subr.mxu0 0.0
        %1799 = vmatpush1.msra.mxu0 0.0
        %1800 = vmatprep.subr.mxu0 0.0
        %1801 = vmatpush1.msra.mxu0 0.0
        %1802 = vmatprep.subr.mxu0 0.0
        %1803 = vmatpush1.msra.mxu0 0.0
        %1804 = vmatprep.subr.mxu0 0.0
        %1805 = vmatpush1.msra.mxu0 0.0
        %1806 = vmatprep.subr.mxu0 0.0
        %1807 = vmatpush1.msra.mxu0 0.0
        %1808 = vmatprep.subr.mxu0 0.0
        %1809 = vmatpush1.msra.mxu0 0.0
        %1810 = vmatprep.subr.mxu0 0.0
        %1811 = vmatpush1.msra.mxu0 0.0
        %1812 = vmatprep.subr.mxu0 0.0
        %1813 = vmatpush1.msra.mxu0 0.0
        %1814 = vmatprep.subr.mxu0 0.0
        %1815 = vmatpush1.msra.mxu0 0.0
        %1816 = vmatprep.subr.mxu0 0.0
        %1817 = vmatpush1.msra.mxu0 0.0
        %1818 = vmatprep.subr.mxu0 0.0
        %1819 = vmatpush1.msra.mxu0 0.0
        %1820 = vmatprep.subr.mxu0 0.0
        %1821 = vmatpush1.msra.mxu0 0.0
        %1822 = vmatprep.subr.mxu0 0.0
        %1823 = vmatpush1.msra.mxu0 0.0
        %1824 = vmatprep.subr.mxu0 0.0
        %1825 = vmatpush1.msra.mxu0 0.0
        %1826 = vmatprep.subr.mxu0 0.0
        %1827 = vmatpush1.msra.mxu0 0.0
        %1828 = vmatprep.subr.mxu0 0.0
        %1829 = vmatpush1.msra.mxu0 0.0
        %1830 = vmatprep.mubr.f32.mxu0 0.0
        %v1831 = vand.u32 %v1554, 4294901760
        %v1832 = vsub.f32 %v1554, %v1831
        %1833 = vmatmul.mubr.f32.gmra.mrb[0].mxu0 %v1832
        %v1834 = vpop.f32.mrb[0].mxu0
        %v1835 = vadd.f32 %v1747, %v1834
        %v1836 = vpop.f32.mrb[0].mxu0
        %1837 = vdwg.mxu0
        %1838 = vmatprep.subr.mxu0 0.0
        %v1839 = vand.u32 %v1537, 4294901760
        %1840 = vmatpush1.msra.mxu0 %v1839
        %1841 = vmatprep.subr.mxu0 0.0
        %v1842 = vand.u32 %v1538, 4294901760
        %1843 = vmatpush1.msra.mxu0 %v1842
        %1844 = vmatprep.subr.mxu0 0.0
        %v1845 = vand.u32 %v1539, 4294901760
        %1846 = vmatpush1.msra.mxu0 %v1845
        %1847 = vmatprep.subr.mxu0 0.0
        %v1848 = vand.u32 %v1540, 4294901760
        %1849 = vmatpush1.msra.mxu0 %v1848
        %1850 = vmatprep.subr.mxu0 0.0
        %v1851 = vand.u32 %v1541, 4294901760
        %1852 = vmatpush1.msra.mxu0 %v1851
        %1853 = vmatprep.subr.mxu0 0.0
        %v1854 = vand.u32 %v1542, 4294901760
        %1855 = vmatpush1.msra.mxu0 %v1854
        %1856 = vmatprep.subr.mxu0 0.0
        %v1857 = vand.u32 %v1543, 4294901760
        %1858 = vmatpush1.msra.mxu0 %v1857
        %1859 = vmatprep.subr.mxu0 0.0
        %v1860 = vand.u32 %v1544, 4294901760
        %1861 = vmatpush1.msra.mxu0 %v1860
        %1862 = vmatprep.subr.mxu0 0.0
        %1863 = vmatpush1.msra.mxu0 0.0
        %1864 = vmatprep.subr.mxu0 0.0
        %1865 = vmatpush1.msra.mxu0 0.0
        %1866 = vmatprep.subr.mxu0 0.0
        %1867 = vmatpush1.msra.mxu0 0.0
        %1868 = vmatprep.subr.mxu0 0.0
        %1869 = vmatpush1.msra.mxu0 0.0
        %1870 = vmatprep.subr.mxu0 0.0
        %1871 = vmatpush1.msra.mxu0 0.0
        %1872 = vmatprep.subr.mxu0 0.0
        %1873 = vmatpush1.msra.mxu0 0.0
        %1874 = vmatprep.subr.mxu0 0.0
        %1875 = vmatpush1.msra.mxu0 0.0
        %1876 = vmatprep.subr.mxu0 0.0
        %1877 = vmatpush1.msra.mxu0 0.0
        %1878 = vmatprep.subr.mxu0 0.0
        %1879 = vmatpush1.msra.mxu0 0.0
        %1880 = vmatprep.subr.mxu0 0.0
        %1881 = vmatpush1.msra.mxu0 0.0
        %1882 = vmatprep.subr.mxu0 0.0
        %1883 = vmatpush1.msra.mxu0 0.0
        %1884 = vmatprep.subr.mxu0 0.0
        %1885 = vmatpush1.msra.mxu0 0.0
        %1886 = vmatprep.subr.mxu0 0.0
        %1887 = vmatpush1.msra.mxu0 0.0
        %1888 = vmatprep.subr.mxu0 0.0
        %1889 = vmatpush1.msra.mxu0 0.0
        %1890 = vmatprep.subr.mxu0 0.0
        %1891 = vmatpush1.msra.mxu0 0.0
        %1892 = vmatprep.subr.mxu0 0.0
        %1893 = vmatpush1.msra.mxu0 0.0
        %1894 = vmatprep.subr.mxu0 0.0
        %1895 = vmatpush1.msra.mxu0 0.0
        %1896 = vmatprep.subr.mxu0 0.0
        %1897 = vmatpush1.msra.mxu0 0.0
        %1898 = vmatprep.subr.mxu0 0.0
        %1899 = vmatpush1.msra.mxu0 0.0
        %1900 = vmatprep.subr.mxu0 0.0
        %1901 = vmatpush1.msra.mxu0 0.0
        %1902 = vmatprep.subr.mxu0 0.0
        %1903 = vmatpush1.msra.mxu0 0.0
        %1904 = vmatprep.subr.mxu0 0.0
        %1905 = vmatpush1.msra.mxu0 0.0
        %1906 = vmatprep.subr.mxu0 0.0
        %1907 = vmatpush1.msra.mxu0 0.0
        %1908 = vmatprep.subr.mxu0 0.0
        %1909 = vmatpush1.msra.mxu0 0.0
        %1910 = vmatprep.mubr.f32.mxu0 0.0
        %v1911 = vand.u32 %v1554, 4294901760
        %v1912 = vsub.f32 %v1554, %v1911
        %v1913 = vand.u32 %v1912, 4294901760
        %1914 = vmatmul.mubr.f32.gmra.mrb[0].mxu0 %v1913
        %v1915 = vpop.f32.mrb[0].mxu0
        %v1916 = vadd.f32 %v1835, %v1915
        %v1917 = vpop.f32.mrb[0].mxu0
        %1918 = vdwg.mxu0
        %1919 = vmatprep.subr.mxu0 0.0
        %v1920 = vand.u32 %v1537, 4294901760
        %v1921 = vsub.f32 %v1537, %v1920
        %v1922 = vand.u32 %v1921, 4294901760
        %1923 = vmatpush1.msra.mxu0 %v1922
        %1924 = vmatprep.subr.mxu0 0.0
        %v1925 = vand.u32 %v1538, 4294901760
        %v1926 = vsub.f32 %v1538, %v1925
        %v1927 = vand.u32 %v1926, 4294901760
        %1928 = vmatpush1.msra.mxu0 %v1927
        %1929 = vmatprep.subr.mxu0 0.0
        %v1930 = vand.u32 %v1539, 4294901760
        %v1931 = vsub.f32 %v1539, %v1930
        %v1932 = vand.u32 %v1931, 4294901760
        %1933 = vmatpush1.msra.mxu0 %v1932
        %1934 = vmatprep.subr.mxu0 0.0
        %v1935 = vand.u32 %v1540, 4294901760
        %v1936 = vsub.f32 %v1540, %v1935
        %v1937 = vand.u32 %v1936, 4294901760
        %1938 = vmatpush1.msra.mxu0 %v1937
        %1939 = vmatprep.subr.mxu0 0.0
        %v1940 = vand.u32 %v1541, 4294901760
        %v1941 = vsub.f32 %v1541, %v1940
        %v1942 = vand.u32 %v1941, 4294901760
        %1943 = vmatpush1.msra.mxu0 %v1942
        %1944 = vmatprep.subr.mxu0 0.0
        %v1945 = vand.u32 %v1542, 4294901760
        %v1946 = vsub.f32 %v1542, %v1945
        %v1947 = vand.u32 %v1946, 4294901760
        %1948 = vmatpush1.msra.mxu0 %v1947
        %1949 = vmatprep.subr.mxu0 0.0
        %v1950 = vand.u32 %v1543, 4294901760
        %v1951 = vsub.f32 %v1543, %v1950
        %v1952 = vand.u32 %v1951, 4294901760
        %1953 = vmatpush1.msra.mxu0 %v1952
        %1954 = vmatprep.subr.mxu0 0.0
        %v1955 = vand.u32 %v1544, 4294901760
        %v1956 = vsub.f32 %v1544, %v1955
        %v1957 = vand.u32 %v1956, 4294901760
        %1958 = vmatpush1.msra.mxu0 %v1957
        %1959 = vmatprep.subr.mxu0 0.0
        %1960 = vmatpush1.msra.mxu0 0.0
        %1961 = vmatprep.subr.mxu0 0.0
        %1962 = vmatpush1.msra.mxu0 0.0
        %1963 = vmatprep.subr.mxu0 0.0
        %1964 = vmatpush1.msra.mxu0 0.0
        %1965 = vmatprep.subr.mxu0 0.0
        %1966 = vmatpush1.msra.mxu0 0.0
        %1967 = vmatprep.subr.mxu0 0.0
        %1968 = vmatpush1.msra.mxu0 0.0
        %1969 = vmatprep.subr.mxu0 0.0
        %1970 = vmatpush1.msra.mxu0 0.0
        %1971 = vmatprep.subr.mxu0 0.0
        %1972 = vmatpush1.msra.mxu0 0.0
        %1973 = vmatprep.subr.mxu0 0.0
        %1974 = vmatpush1.msra.mxu0 0.0
        %1975 = vmatprep.subr.mxu0 0.0
        %1976 = vmatpush1.msra.mxu0 0.0
        %1977 = vmatprep.subr.mxu0 0.0
        %1978 = vmatpush1.msra.mxu0 0.0
        %1979 = vmatprep.subr.mxu0 0.0
        %1980 = vmatpush1.msra.mxu0 0.0
        %1981 = vmatprep.subr.mxu0 0.0
        %1982 = vmatpush1.msra.mxu0 0.0
        %1983 = vmatprep.subr.mxu0 0.0
        %1984 = vmatpush1.msra.mxu0 0.0
        %1985 = vmatprep.subr.mxu0 0.0
        %1986 = vmatpush1.msra.mxu0 0.0
        %1987 = vmatprep.subr.mxu0 0.0
        %1988 = vmatpush1.msra.mxu0 0.0
        %1989 = vmatprep.subr.mxu0 0.0
        %1990 = vmatpush1.msra.mxu0 0.0
        %1991 = vmatprep.subr.mxu0 0.0
        %1992 = vmatpush1.msra.mxu0 0.0
        %1993 = vmatprep.subr.mxu0 0.0
        %1994 = vmatpush1.msra.mxu0 0.0
        %1995 = vmatprep.subr.mxu0 0.0
        %1996 = vmatpush1.msra.mxu0 0.0
        %1997 = vmatprep.subr.mxu0 0.0
        %1998 = vmatpush1.msra.mxu0 0.0
        %1999 = vmatprep.subr.mxu0 0.0
        %2000 = vmatpush1.msra.mxu0 0.0
        %2001 = vmatprep.subr.mxu0 0.0
        %2002 = vmatpush1.msra.mxu0 0.0
        %2003 = vmatprep.subr.mxu0 0.0
        %2004 = vmatpush1.msra.mxu0 0.0
        %2005 = vmatprep.subr.mxu0 0.0
        %2006 = vmatpush1.msra.mxu0 0.0
        %2007 = vmatprep.mubr.f32.mxu0 0.0
        %v2008 = vand.u32 %v1554, 4294901760
        %2009 = vmatmul.mubr.f32.gmra.mrb[0].mxu0 %v2008
        %v2010 = vpop.f32.mrb[0].mxu0
        %v2011 = vadd.f32 %v1916, %v2010
        %v2012 = vpop.f32.mrb[0].mxu0
        %2013 = vdwg.mxu0
        %2014 = vmatprep.subr.mxu0 0.0
        %v2015 = vand.u32 %v1537, 4294901760
        %2016 = vmatpush1.msra.mxu0 %v2015
        %2017 = vmatprep.subr.mxu0 0.0
        %v2018 = vand.u32 %v1538, 4294901760
        %2019 = vmatpush1.msra.mxu0 %v2018
        %2020 = vmatprep.subr.mxu0 0.0
        %v2021 = vand.u32 %v1539, 4294901760
        %2022 = vmatpush1.msra.mxu0 %v2021
        %2023 = vmatprep.subr.mxu0 0.0
        %v2024 = vand.u32 %v1540, 4294901760
        %2025 = vmatpush1.msra.mxu0 %v2024
        %2026 = vmatprep.subr.mxu0 0.0
        %v2027 = vand.u32 %v1541, 4294901760
        %2028 = vmatpush1.msra.mxu0 %v2027
        %2029 = vmatprep.subr.mxu0 0.0
        %v2030 = vand.u32 %v1542, 4294901760
        %2031 = vmatpush1.msra.mxu0 %v2030
        %2032 = vmatprep.subr.mxu0 0.0
        %v2033 = vand.u32 %v1543, 4294901760
        %2034 = vmatpush1.msra.mxu0 %v2033
        %2035 = vmatprep.subr.mxu0 0.0
        %v2036 = vand.u32 %v1544, 4294901760
        %2037 = vmatpush1.msra.mxu0 %v2036
        %2038 = vmatprep.subr.mxu0 0.0
        %2039 = vmatpush1.msra.mxu0 0.0
        %2040 = vmatprep.subr.mxu0 0.0
        %2041 = vmatpush1.msra.mxu0 0.0
        %2042 = vmatprep.subr.mxu0 0.0
        %2043 = vmatpush1.msra.mxu0 0.0
        %2044 = vmatprep.subr.mxu0 0.0
        %2045 = vmatpush1.msra.mxu0 0.0
        %2046 = vmatprep.subr.mxu0 0.0
        %2047 = vmatpush1.msra.mxu0 0.0
        %2048 = vmatprep.subr.mxu0 0.0
        %2049 = vmatpush1.msra.mxu0 0.0
        %2050 = vmatprep.subr.mxu0 0.0
        %2051 = vmatpush1.msra.mxu0 0.0
        %2052 = vmatprep.subr.mxu0 0.0
        %2053 = vmatpush1.msra.mxu0 0.0
        %2054 = vmatprep.subr.mxu0 0.0
        %2055 = vmatpush1.msra.mxu0 0.0
        %2056 = vmatprep.subr.mxu0 0.0
        %2057 = vmatpush1.msra.mxu0 0.0
        %2058 = vmatprep.subr.mxu0 0.0
        %2059 = vmatpush1.msra.mxu0 0.0
        %2060 = vmatprep.subr.mxu0 0.0
        %2061 = vmatpush1.msra.mxu0 0.0
        %2062 = vmatprep.subr.mxu0 0.0
        %2063 = vmatpush1.msra.mxu0 0.0
        %2064 = vmatprep.subr.mxu0 0.0
        %2065 = vmatpush1.msra.mxu0 0.0
        %2066 = vmatprep.subr.mxu0 0.0
        %2067 = vmatpush1.msra.mxu0 0.0
        %2068 = vmatprep.subr.mxu0 0.0
        %2069 = vmatpush1.msra.mxu0 0.0
        %2070 = vmatprep.subr.mxu0 0.0
        %2071 = vmatpush1.msra.mxu0 0.0
        %2072 = vmatprep.subr.mxu0 0.0
        %2073 = vmatpush1.msra.mxu0 0.0
        %2074 = vmatprep.subr.mxu0 0.0
        %2075 = vmatpush1.msra.mxu0 0.0
        %2076 = vmatprep.subr.mxu0 0.0
        %2077 = vmatpush1.msra.mxu0 0.0
        %2078 = vmatprep.subr.mxu0 0.0
        %2079 = vmatpush1.msra.mxu0 0.0
        %2080 = vmatprep.subr.mxu0 0.0
        %2081 = vmatpush1.msra.mxu0 0.0
        %2082 = vmatprep.subr.mxu0 0.0
        %2083 = vmatpush1.msra.mxu0 0.0
        %2084 = vmatprep.subr.mxu0 0.0
        %2085 = vmatpush1.msra.mxu0 0.0
        %2086 = vmatprep.mubr.f32.mxu0 0.0
        %v2087 = vand.u32 %v1554, 4294901760
        %2088 = vmatmul.mubr.f32.gmra.mrb[0].mxu0 %v2087
        %v2089 = vpop.f32.mrb[0].mxu0
        %v2090 = vadd.f32 %v2011, %v2089
        %v2091 = vpop.f32.mrb[0].mxu0
        %2092 = vdwg.mxu0
        %v2093 = vtanh.pop %v2090
        %s2094 = scalar_lea.vmem %s5, 1
        %v2095 = vld [vmem:[%s2094] sm:$0x1]
        %s2096 = scalar_lea.vmem %s6, 1
        %v2097 = vld [vmem:[%s2096] sm:$0x1]
        %v2098 = vsel %vm962, %v2093, 0.0
        %2099 = vadd.xlane.f32.xlu0 %v2098
        %v2100 = vpop.xlane.xlu0 %2099
        %v2101 = vmul.f32 %v2100, %v1509
        %v2102 = vmul.f32 %v2093, %v2093
        %v2103 = vsel %vm962, %v2102, 0.0
        %2104 = vadd.xlane.f32.xlu0 %v2103
        %v2105 = vpop.xlane.xlu0 %2104
        %v2106 = vmul.f32 %v2105, %v1509
        %v2107 = vmul.f32 %v2101, %v2101
        %v2108 = vsub.f32 %v2106, %v2107
        %v2109 = vadd.f32 %v2108, 1e-05
        %v2110 = vrsqrt.pop %v2109
        %v2111 = vsub.f32 %v2093, %v2101
        %v2112 = vmul.f32 %v2111, %v2110
        %v2114 = vlaneseq
        %v2115 = vshrl.u32 %v2114, 7
        %v2116 = vsub.s32 0, %v2115
        %v2117 = vrot.slane %v2095, %v2116
        %v2119 = vmul.f32 %v2112, %v2117
        %v2121 = vlaneseq
        %v2122 = vshrl.u32 %v2121, 7
        %v2123 = vsub.s32 0, %v2122
        %v2124 = vrot.slane %v2097, %v2123
        %v2126 = vadd.f32 %v2119, %v2124
        %v2127 = vadd.f32 %v944, %v2126
        %v2128 = vtanh.pop %v2127
        %v2129 = vld [vmem:[%s7] sm:$0x1]
        %v2130 = vld [vmem:[%s8] sm:$0x1]
        %v2131 = vsel %vm962, %v2128, 0.0
        %2132 = vadd.xlane.f32.xlu0 %v2131
        %v2133 = vpop.xlane.xlu0 %2132
        %v2134 = vmul.f32 %v2133, %v1509
        %v2135 = vmul.f32 %v2128, %v2128
        %v2136 = vsel %vm962, %v2135, 0.0
        %2137 = vadd.xlane.f32.xlu0 %v2136
        %v2138 = vpop.xlane.xlu0 %2137
        %v2139 = vmul.f32 %v2138, %v1509
        %v2140 = vmul.f32 %v2134, %v2134
        %v2141 = vsub.f32 %v2139, %v2140
        %v2142 = vadd.f32 %v2141, 1e-05
        %v2143 = vrsqrt.pop %v2142
        %v2144 = vsub.f32 %v2128, %v2134
        %v2145 = vmul.f32 %v2144, %v2143
        %v2147 = vlaneseq
        %v2148 = vshrl.u32 %v2147, 7
        %v2149 = vsub.s32 0, %v2148
        %v2150 = vrot.slane %v2129, %v2149
        %v2152 = vmul.f32 %v2145, %v2150
        %v2154 = vlaneseq
        %v2155 = vshrl.u32 %v2154, 7
        %v2156 = vsub.s32 0, %v2155
        %v2157 = vrot.slane %v2130, %v2156
        %v2159 = vadd.f32 %v2152, %v2157
        %s2160 = scalar_lea.vmem [#allocation7], 128
        %v2161 = vld [vmem:[%s2160] sm:$0xff]
        %v2162 = vld [vmem:[%s2160 + $0x8] sm:$0xff]
        %v2163 = vld [vmem:[%s2160 + $0x10] sm:$0xff]
        %v2164 = vld [vmem:[%s2160 + $0x18] sm:$0xff]
        %v2165 = vld [vmem:[%s2160 + $0x20] sm:$0xff]
        %v2166 = vld [vmem:[%s2160 + $0x28] sm:$0xff]
        %v2167 = vld [vmem:[%s2160 + $0x30] sm:$0xff]
        %v2168 = vld [vmem:[%s2160 + $0x38] sm:$0xff]
        %s2169 = scalar_lea.vmem %s4, 2
        %v2170 = vld [vmem:[%s2169] sm:$0x1]
        %v2172 = vlaneseq
        %v2173 = vshrl.u32 %v2172, 7
        %v2174 = vsub.s32 0, %v2173
        %v2175 = vrot.slane %v2170, %v2174
        %v2178 = vsel %vm962, %v2159, 0
        %2180 = vmatprep.subr.mxu0 0.0
        %v2181 = vand.u32 %v2161, 4294901760
        %2182 = vmatpush1.msra.mxu0 %v2181
        %2183 = vmatprep.subr.mxu0 0.0
        %v2184 = vand.u32 %v2162, 4294901760
        %2185 = vmatpush1.msra.mxu0 %v2184
        %2186 = vmatprep.subr.mxu0 0.0
        %v2187 = vand.u32 %v2163, 4294901760
        %2188 = vmatpush1.msra.mxu0 %v2187
        %2189 = vmatprep.subr.mxu0 0.0
        %v2190 = vand.u32 %v2164, 4294901760
        %2191 = vmatpush1.msra.mxu0 %v2190
        %2192 = vmatprep.subr.mxu0 0.0
        %v2193 = vand.u32 %v2165, 4294901760
        %2194 = vmatpush1.msra.mxu0 %v2193
        %2195 = vmatprep.subr.mxu0 0.0
        %v2196 = vand.u32 %v2166, 4294901760
        %2197 = vmatpush1.msra.mxu0 %v2196
        %2198 = vmatprep.subr.mxu0 0.0
        %v2199 = vand.u32 %v2167, 4294901760
        %2200 = vmatpush1.msra.mxu0 %v2199
        %2201 = vmatprep.subr.mxu0 0.0
        %v2202 = vand.u32 %v2168, 4294901760
        %2203 = vmatpush1.msra.mxu0 %v2202
        %2204 = vmatprep.subr.mxu0 0.0
        %2205 = vmatpush1.msra.mxu0 0.0
        %2206 = vmatprep.subr.mxu0 0.0
        %2207 = vmatpush1.msra.mxu0 0.0
        %2208 = vmatprep.subr.mxu0 0.0
        %2209 = vmatpush1.msra.mxu0 0.0
        %2210 = vmatprep.subr.mxu0 0.0
        %2211 = vmatpush1.msra.mxu0 0.0
        %2212 = vmatprep.subr.mxu0 0.0
        %2213 = vmatpush1.msra.mxu0 0.0
        %2214 = vmatprep.subr.mxu0 0.0
        %2215 = vmatpush1.msra.mxu0 0.0
        %2216 = vmatprep.subr.mxu0 0.0
        %2217 = vmatpush1.msra.mxu0 0.0
        %2218 = vmatprep.subr.mxu0 0.0
        %2219 = vmatpush1.msra.mxu0 0.0
        %2220 = vmatprep.subr.mxu0 0.0
        %2221 = vmatpush1.msra.mxu0 0.0
        %2222 = vmatprep.subr.mxu0 0.0
        %2223 = vmatpush1.msra.mxu0 0.0
        %2224 = vmatprep.subr.mxu0 0.0
        %2225 = vmatpush1.msra.mxu0 0.0
        %2226 = vmatprep.subr.mxu0 0.0
        %2227 = vmatpush1.msra.mxu0 0.0
        %2228 = vmatprep.subr.mxu0 0.0
        %2229 = vmatpush1.msra.mxu0 0.0
        %2230 = vmatprep.subr.mxu0 0.0
        %2231 = vmatpush1.msra.mxu0 0.0
        %2232 = vmatprep.subr.mxu0 0.0
        %2233 = vmatpush1.msra.mxu0 0.0
        %2234 = vmatprep.subr.mxu0 0.0
        %2235 = vmatpush1.msra.mxu0 0.0
        %2236 = vmatprep.subr.mxu0 0.0
        %2237 = vmatpush1.msra.mxu0 0.0
        %2238 = vmatprep.subr.mxu0 0.0
        %2239 = vmatpush1.msra.mxu0 0.0
        %2240 = vmatprep.subr.mxu0 0.0
        %2241 = vmatpush1.msra.mxu0 0.0
        %2242 = vmatprep.subr.mxu0 0.0
        %2243 = vmatpush1.msra.mxu0 0.0
        %2244 = vmatprep.subr.mxu0 0.0
        %2245 = vmatpush1.msra.mxu0 0.0
        %2246 = vmatprep.subr.mxu0 0.0
        %2247 = vmatpush1.msra.mxu0 0.0
        %2248 = vmatprep.subr.mxu0 0.0
        %2249 = vmatpush1.msra.mxu0 0.0
        %2250 = vmatprep.subr.mxu0 0.0
        %2251 = vmatpush1.msra.mxu0 0.0
        %2252 = vmatprep.mubr.f32.mxu0 0.0
        %v2253 = vand.u32 %v2178, 4294901760
        %v2254 = vsub.f32 %v2178, %v2253
        %v2255 = vand.u32 %v2254, 4294901760
        %v2256 = vsub.f32 %v2254, %v2255
        %v2257 = vand.u32 %v2256, 4294901760
        %2258 = vmatmul.mubr.f32.gmra.mrb[0].mxu0 %v2257
        %v2259 = vpop.f32.mrb[0].mxu0
        %v2260 = vadd.f32 %v2175, %v2259
        %v2261 = vpop.f32.mrb[0].mxu0
        %2262 = vdwg.mxu0
        %2263 = vmatprep.subr.mxu0 0.0
        %v2264 = vand.u32 %v2161, 4294901760
        %v2265 = vsub.f32 %v2161, %v2264
        %v2266 = vand.u32 %v2265, 4294901760
        %v2267 = vsub.f32 %v2265, %v2266
        %v2268 = vand.u32 %v2267, 4294901760
        %2269 = vmatpush1.msra.mxu0 %v2268
        %2270 = vmatprep.subr.mxu0 0.0
        %v2271 = vand.u32 %v2162, 4294901760
        %v2272 = vsub.f32 %v2162, %v2271
        %v2273 = vand.u32 %v2272, 4294901760
        %v2274 = vsub.f32 %v2272, %v2273
        %v2275 = vand.u32 %v2274, 4294901760
        %2276 = vmatpush1.msra.mxu0 %v2275
        %2277 = vmatprep.subr.mxu0 0.0
        %v2278 = vand.u32 %v2163, 4294901760
        %v2279 = vsub.f32 %v2163, %v2278
        %v2280 = vand.u32 %v2279, 4294901760
        %v2281 = vsub.f32 %v2279, %v2280
        %v2282 = vand.u32 %v2281, 4294901760
        %2283 = vmatpush1.msra.mxu0 %v2282
        %2284 = vmatprep.subr.mxu0 0.0
        %v2285 = vand.u32 %v2164, 4294901760
        %v2286 = vsub.f32 %v2164, %v2285
        %v2287 = vand.u32 %v2286, 4294901760
        %v2288 = vsub.f32 %v2286, %v2287
        %v2289 = vand.u32 %v2288, 4294901760
        %2290 = vmatpush1.msra.mxu0 %v2289
        %2291 = vmatprep.subr.mxu0 0.0
        %v2292 = vand.u32 %v2165, 4294901760
        %v2293 = vsub.f32 %v2165, %v2292
        %v2294 = vand.u32 %v2293, 4294901760
        %v2295 = vsub.f32 %v2293, %v2294
        %v2296 = vand.u32 %v2295, 4294901760
        %2297 = vmatpush1.msra.mxu0 %v2296
        %2298 = vmatprep.subr.mxu0 0.0
        %v2299 = vand.u32 %v2166, 4294901760
        %v2300 = vsub.f32 %v2166, %v2299
        %v2301 = vand.u32 %v2300, 4294901760
        %v2302 = vsub.f32 %v2300, %v2301
        %v2303 = vand.u32 %v2302, 4294901760
        %2304 = vmatpush1.msra.mxu0 %v2303
        %2305 = vmatprep.subr.mxu0 0.0
        %v2306 = vand.u32 %v2167, 4294901760
        %v2307 = vsub.f32 %v2167, %v2306
        %v2308 = vand.u32 %v2307, 4294901760
        %v2309 = vsub.f32 %v2307, %v2308
        %v2310 = vand.u32 %v2309, 4294901760
        %2311 = vmatpush1.msra.mxu0 %v2310
        %2312 = vmatprep.subr.mxu0 0.0
        %v2313 = vand.u32 %v2168, 4294901760
        %v2314 = vsub.f32 %v2168, %v2313
        %v2315 = vand.u32 %v2314, 4294901760
        %v2316 = vsub.f32 %v2314, %v2315
        %v2317 = vand.u32 %v2316, 4294901760
        %2318 = vmatpush1.msra.mxu0 %v2317
        %2319 = vmatprep.subr.mxu0 0.0
        %2320 = vmatpush1.msra.mxu0 0.0
        %2321 = vmatprep.subr.mxu0 0.0
        %2322 = vmatpush1.msra.mxu0 0.0
        %2323 = vmatprep.subr.mxu0 0.0
        %2324 = vmatpush1.msra.mxu0 0.0
        %2325 = vmatprep.subr.mxu0 0.0
        %2326 = vmatpush1.msra.mxu0 0.0
        %2327 = vmatprep.subr.mxu0 0.0
        %2328 = vmatpush1.msra.mxu0 0.0
        %2329 = vmatprep.subr.mxu0 0.0
        %2330 = vmatpush1.msra.mxu0 0.0
        %2331 = vmatprep.subr.mxu0 0.0
        %2332 = vmatpush1.msra.mxu0 0.0
        %2333 = vmatprep.subr.mxu0 0.0
        %2334 = vmatpush1.msra.mxu0 0.0
        %2335 = vmatprep.subr.mxu0 0.0
        %2336 = vmatpush1.msra.mxu0 0.0
        %2337 = vmatprep.subr.mxu0 0.0
        %2338 = vmatpush1.msra.mxu0 0.0
        %2339 = vmatprep.subr.mxu0 0.0
        %2340 = vmatpush1.msra.mxu0 0.0
        %2341 = vmatprep.subr.mxu0 0.0
        %2342 = vmatpush1.msra.mxu0 0.0
        %2343 = vmatprep.subr.mxu0 0.0
        %2344 = vmatpush1.msra.mxu0 0.0
        %2345 = vmatprep.subr.mxu0 0.0
        %2346 = vmatpush1.msra.mxu0 0.0
        %2347 = vmatprep.subr.mxu0 0.0
        %2348 = vmatpush1.msra.mxu0 0.0
        %2349 = vmatprep.subr.mxu0 0.0
        %2350 = vmatpush1.msra.mxu0 0.0
        %2351 = vmatprep.subr.mxu0 0.0
        %2352 = vmatpush1.msra.mxu0 0.0
        %2353 = vmatprep.subr.mxu0 0.0
        %2354 = vmatpush1.msra.mxu0 0.0
        %2355 = vmatprep.subr.mxu0 0.0
        %2356 = vmatpush1.msra.mxu0 0.0
        %2357 = vmatprep.subr.mxu0 0.0
        %2358 = vmatpush1.msra.mxu0 0.0
        %2359 = vmatprep.subr.mxu0 0.0
        %2360 = vmatpush1.msra.mxu0 0.0
        %2361 = vmatprep.subr.mxu0 0.0
        %2362 = vmatpush1.msra.mxu0 0.0
        %2363 = vmatprep.subr.mxu0 0.0
        %2364 = vmatpush1.msra.mxu0 0.0
        %2365 = vmatprep.subr.mxu0 0.0
        %2366 = vmatpush1.msra.mxu0 0.0
        %2367 = vmatprep.mubr.f32.mxu0 0.0
        %v2368 = vand.u32 %v2178, 4294901760
        %2369 = vmatmul.mubr.f32.gmra.mrb[0].mxu0 %v2368
        %v2370 = vpop.f32.mrb[0].mxu0
        %v2371 = vadd.f32 %v2260, %v2370
        %v2372 = vpop.f32.mrb[0].mxu0
        %2373 = vdwg.mxu0
        %2374 = vmatprep.subr.mxu0 0.0
        %v2375 = vand.u32 %v2161, 4294901760
        %v2376 = vsub.f32 %v2161, %v2375
        %2377 = vmatpush1.msra.mxu0 %v2376
        %2378 = vmatprep.subr.mxu0 0.0
        %v2379 = vand.u32 %v2162, 4294901760
        %v2380 = vsub.f32 %v2162, %v2379
        %2381 = vmatpush1.msra.mxu0 %v2380
        %2382 = vmatprep.subr.mxu0 0.0
        %v2383 = vand.u32 %v2163, 4294901760
        %v2384 = vsub.f32 %v2163, %v2383
        %2385 = vmatpush1.msra.mxu0 %v2384
        %2386 = vmatprep.subr.mxu0 0.0
        %v2387 = vand.u32 %v2164, 4294901760
        %v2388 = vsub.f32 %v2164, %v2387
        %2389 = vmatpush1.msra.mxu0 %v2388
        %2390 = vmatprep.subr.mxu0 0.0
        %v2391 = vand.u32 %v2165, 4294901760
        %v2392 = vsub.f32 %v2165, %v2391
        %2393 = vmatpush1.msra.mxu0 %v2392
        %2394 = vmatprep.subr.mxu0 0.0
        %v2395 = vand.u32 %v2166, 4294901760
        %v2396 = vsub.f32 %v2166, %v2395
        %2397 = vmatpush1.msra.mxu0 %v2396
        %2398 = vmatprep.subr.mxu0 0.0
        %v2399 = vand.u32 %v2167, 4294901760
        %v2400 = vsub.f32 %v2167, %v2399
        %2401 = vmatpush1.msra.mxu0 %v2400
        %2402 = vmatprep.subr.mxu0 0.0
        %v2403 = vand.u32 %v2168, 4294901760
        %v2404 = vsub.f32 %v2168, %v2403
        %2405 = vmatpush1.msra.mxu0 %v2404
        %2406 = vmatprep.subr.mxu0 0.0
        %2407 = vmatpush1.msra.mxu0 0.0
        %2408 = vmatprep.subr.mxu0 0.0
        %2409 = vmatpush1.msra.mxu0 0.0
        %2410 = vmatprep.subr.mxu0 0.0
        %2411 = vmatpush1.msra.mxu0 0.0
        %2412 = vmatprep.subr.mxu0 0.0
        %2413 = vmatpush1.msra.mxu0 0.0
        %2414 = vmatprep.subr.mxu0 0.0
        %2415 = vmatpush1.msra.mxu0 0.0
        %2416 = vmatprep.subr.mxu0 0.0
        %2417 = vmatpush1.msra.mxu0 0.0
        %2418 = vmatprep.subr.mxu0 0.0
        %2419 = vmatpush1.msra.mxu0 0.0
        %2420 = vmatprep.subr.mxu0 0.0
        %2421 = vmatpush1.msra.mxu0 0.0
        %2422 = vmatprep.subr.mxu0 0.0
        %2423 = vmatpush1.msra.mxu0 0.0
        %2424 = vmatprep.subr.mxu0 0.0
        %2425 = vmatpush1.msra.mxu0 0.0
        %2426 = vmatprep.subr.mxu0 0.0
        %2427 = vmatpush1.msra.mxu0 0.0
        %2428 = vmatprep.subr.mxu0 0.0
        %2429 = vmatpush1.msra.mxu0 0.0
        %2430 = vmatprep.subr.mxu0 0.0
        %2431 = vmatpush1.msra.mxu0 0.0
        %2432 = vmatprep.subr.mxu0 0.0
        %2433 = vmatpush1.msra.mxu0 0.0
        %2434 = vmatprep.subr.mxu0 0.0
        %2435 = vmatpush1.msra.mxu0 0.0
        %2436 = vmatprep.subr.mxu0 0.0
        %2437 = vmatpush1.msra.mxu0 0.0
        %2438 = vmatprep.subr.mxu0 0.0
        %2439 = vmatpush1.msra.mxu0 0.0
        %2440 = vmatprep.subr.mxu0 0.0
        %2441 = vmatpush1.msra.mxu0 0.0
        %2442 = vmatprep.subr.mxu0 0.0
        %2443 = vmatpush1.msra.mxu0 0.0
        %2444 = vmatprep.subr.mxu0 0.0
        %2445 = vmatpush1.msra.mxu0 0.0
        %2446 = vmatprep.subr.mxu0 0.0
        %2447 = vmatpush1.msra.mxu0 0.0
        %2448 = vmatprep.subr.mxu0 0.0
        %2449 = vmatpush1.msra.mxu0 0.0
        %2450 = vmatprep.subr.mxu0 0.0
        %2451 = vmatpush1.msra.mxu0 0.0
        %2452 = vmatprep.subr.mxu0 0.0
        %2453 = vmatpush1.msra.mxu0 0.0
        %2454 = vmatprep.mubr.f32.mxu0 0.0
        %v2455 = vand.u32 %v2178, 4294901760
        %v2456 = vsub.f32 %v2178, %v2455
        %2457 = vmatmul.mubr.f32.gmra.mrb[0].mxu0 %v2456
        %v2458 = vpop.f32.mrb[0].mxu0
        %v2459 = vadd.f32 %v2371, %v2458
        %v2460 = vpop.f32.mrb[0].mxu0
        %2461 = vdwg.mxu0
        %2462 = vmatprep.subr.mxu0 0.0
        %v2463 = vand.u32 %v2161, 4294901760
        %2464 = vmatpush1.msra.mxu0 %v2463
        %2465 = vmatprep.subr.mxu0 0.0
        %v2466 = vand.u32 %v2162, 4294901760
        %2467 = vmatpush1.msra.mxu0 %v2466
        %2468 = vmatprep.subr.mxu0 0.0
        %v2469 = vand.u32 %v2163, 4294901760
        %2470 = vmatpush1.msra.mxu0 %v2469
        %2471 = vmatprep.subr.mxu0 0.0
        %v2472 = vand.u32 %v2164, 4294901760
        %2473 = vmatpush1.msra.mxu0 %v2472
        %2474 = vmatprep.subr.mxu0 0.0
        %v2475 = vand.u32 %v2165, 4294901760
        %2476 = vmatpush1.msra.mxu0 %v2475
        %2477 = vmatprep.subr.mxu0 0.0
        %v2478 = vand.u32 %v2166, 4294901760
        %2479 = vmatpush1.msra.mxu0 %v2478
        %2480 = vmatprep.subr.mxu0 0.0
        %v2481 = vand.u32 %v2167, 4294901760
        %2482 = vmatpush1.msra.mxu0 %v2481
        %2483 = vmatprep.subr.mxu0 0.0
        %v2484 = vand.u32 %v2168, 4294901760
        %2485 = vmatpush1.msra.mxu0 %v2484
        %2486 = vmatprep.subr.mxu0 0.0
        %2487 = vmatpush1.msra.mxu0 0.0
        %2488 = vmatprep.subr.mxu0 0.0
        %2489 = vmatpush1.msra.mxu0 0.0
        %2490 = vmatprep.subr.mxu0 0.0
        %2491 = vmatpush1.msra.mxu0 0.0
        %2492 = vmatprep.subr.mxu0 0.0
        %2493 = vmatpush1.msra.mxu0 0.0
        %2494 = vmatprep.subr.mxu0 0.0
        %2495 = vmatpush1.msra.mxu0 0.0
        %2496 = vmatprep.subr.mxu0 0.0
        %2497 = vmatpush1.msra.mxu0 0.0
        %2498 = vmatprep.subr.mxu0 0.0
        %2499 = vmatpush1.msra.mxu0 0.0
        %2500 = vmatprep.subr.mxu0 0.0
        %2501 = vmatpush1.msra.mxu0 0.0
        %2502 = vmatprep.subr.mxu0 0.0
        %2503 = vmatpush1.msra.mxu0 0.0
        %2504 = vmatprep.subr.mxu0 0.0
        %2505 = vmatpush1.msra.mxu0 0.0
        %2506 = vmatprep.subr.mxu0 0.0
        %2507 = vmatpush1.msra.mxu0 0.0
        %2508 = vmatprep.subr.mxu0 0.0
        %2509 = vmatpush1.msra.mxu0 0.0
        %2510 = vmatprep.subr.mxu0 0.0
        %2511 = vmatpush1.msra.mxu0 0.0
        %2512 = vmatprep.subr.mxu0 0.0
        %2513 = vmatpush1.msra.mxu0 0.0
        %2514 = vmatprep.subr.mxu0 0.0
        %2515 = vmatpush1.msra.mxu0 0.0
        %2516 = vmatprep.subr.mxu0 0.0
        %2517 = vmatpush1.msra.mxu0 0.0
        %2518 = vmatprep.subr.mxu0 0.0
        %2519 = vmatpush1.msra.mxu0 0.0
        %2520 = vmatprep.subr.mxu0 0.0
        %2521 = vmatpush1.msra.mxu0 0.0
        %2522 = vmatprep.subr.mxu0 0.0
        %2523 = vmatpush1.msra.mxu0 0.0
        %2524 = vmatprep.subr.mxu0 0.0
        %2525 = vmatpush1.msra.mxu0 0.0
        %2526 = vmatprep.subr.mxu0 0.0
        %2527 = vmatpush1.msra.mxu0 0.0
        %2528 = vmatprep.subr.mxu0 0.0
        %2529 = vmatpush1.msra.mxu0 0.0
        %2530 = vmatprep.subr.mxu0 0.0
        %2531 = vmatpush1.msra.mxu0 0.0
        %2532 = vmatprep.subr.mxu0 0.0
        %2533 = vmatpush1.msra.mxu0 0.0
        %2534 = vmatprep.mubr.f32.mxu0 0.0
        %v2535 = vand.u32 %v2178, 4294901760
        %v2536 = vsub.f32 %v2178, %v2535
        %v2537 = vand.u32 %v2536, 4294901760
        %2538 = vmatmul.mubr.f32.gmra.mrb[0].mxu0 %v2537
        %v2539 = vpop.f32.mrb[0].mxu0
        %v2540 = vadd.f32 %v2459, %v2539
        %v2541 = vpop.f32.mrb[0].mxu0
        %2542 = vdwg.mxu0
        %2543 = vmatprep.subr.mxu0 0.0
        %v2544 = vand.u32 %v2161, 4294901760
        %v2545 = vsub.f32 %v2161, %v2544
        %v2546 = vand.u32 %v2545, 4294901760
        %2547 = vmatpush1.msra.mxu0 %v2546
        %2548 = vmatprep.subr.mxu0 0.0
        %v2549 = vand.u32 %v2162, 4294901760
        %v2550 = vsub.f32 %v2162, %v2549
        %v2551 = vand.u32 %v2550, 4294901760
        %2552 = vmatpush1.msra.mxu0 %v2551
        %2553 = vmatprep.subr.mxu0 0.0
        %v2554 = vand.u32 %v2163, 4294901760
        %v2555 = vsub.f32 %v2163, %v2554
        %v2556 = vand.u32 %v2555, 4294901760
        %2557 = vmatpush1.msra.mxu0 %v2556
        %2558 = vmatprep.subr.mxu0 0.0
        %v2559 = vand.u32 %v2164, 4294901760
        %v2560 = vsub.f32 %v2164, %v2559
        %v2561 = vand.u32 %v2560, 4294901760
        %2562 = vmatpush1.msra.mxu0 %v2561
        %2563 = vmatprep.subr.mxu0 0.0
        %v2564 = vand.u32 %v2165, 4294901760
        %v2565 = vsub.f32 %v2165, %v2564
        %v2566 = vand.u32 %v2565, 4294901760
        %2567 = vmatpush1.msra.mxu0 %v2566
        %2568 = vmatprep.subr.mxu0 0.0
        %v2569 = vand.u32 %v2166, 4294901760
        %v2570 = vsub.f32 %v2166, %v2569
        %v2571 = vand.u32 %v2570, 4294901760
        %2572 = vmatpush1.msra.mxu0 %v2571
        %2573 = vmatprep.subr.mxu0 0.0
        %v2574 = vand.u32 %v2167, 4294901760
        %v2575 = vsub.f32 %v2167, %v2574
        %v2576 = vand.u32 %v2575, 4294901760
        %2577 = vmatpush1.msra.mxu0 %v2576
        %2578 = vmatprep.subr.mxu0 0.0
        %v2579 = vand.u32 %v2168, 4294901760
        %v2580 = vsub.f32 %v2168, %v2579
        %v2581 = vand.u32 %v2580, 4294901760
        %2582 = vmatpush1.msra.mxu0 %v2581
        %2583 = vmatprep.subr.mxu0 0.0
        %2584 = vmatpush1.msra.mxu0 0.0
        %2585 = vmatprep.subr.mxu0 0.0
        %2586 = vmatpush1.msra.mxu0 0.0
        %2587 = vmatprep.subr.mxu0 0.0
        %2588 = vmatpush1.msra.mxu0 0.0
        %2589 = vmatprep.subr.mxu0 0.0
        %2590 = vmatpush1.msra.mxu0 0.0
        %2591 = vmatprep.subr.mxu0 0.0
        %2592 = vmatpush1.msra.mxu0 0.0
        %2593 = vmatprep.subr.mxu0 0.0
        %2594 = vmatpush1.msra.mxu0 0.0
        %2595 = vmatprep.subr.mxu0 0.0
        %2596 = vmatpush1.msra.mxu0 0.0
        %2597 = vmatprep.subr.mxu0 0.0
        %2598 = vmatpush1.msra.mxu0 0.0
        %2599 = vmatprep.subr.mxu0 0.0
        %2600 = vmatpush1.msra.mxu0 0.0
        %2601 = vmatprep.subr.mxu0 0.0
        %2602 = vmatpush1.msra.mxu0 0.0
        %2603 = vmatprep.subr.mxu0 0.0
        %2604 = vmatpush1.msra.mxu0 0.0
        %2605 = vmatprep.subr.mxu0 0.0
        %2606 = vmatpush1.msra.mxu0 0.0
        %2607 = vmatprep.subr.mxu0 0.0
        %2608 = vmatpush1.msra.mxu0 0.0
        %2609 = vmatprep.subr.mxu0 0.0
        %2610 = vmatpush1.msra.mxu0 0.0
        %2611 = vmatprep.subr.mxu0 0.0
        %2612 = vmatpush1.msra.mxu0 0.0
        %2613 = vmatprep.subr.mxu0 0.0
        %2614 = vmatpush1.msra.mxu0 0.0
        %2615 = vmatprep.subr.mxu0 0.0
        %2616 = vmatpush1.msra.mxu0 0.0
        %2617 = vmatprep.subr.mxu0 0.0
        %2618 = vmatpush1.msra.mxu0 0.0
        %2619 = vmatprep.subr.mxu0 0.0
        %2620 = vmatpush1.msra.mxu0 0.0
        %2621 = vmatprep.subr.mxu0 0.0
        %2622 = vmatpush1.msra.mxu0 0.0
        %2623 = vmatprep.subr.mxu0 0.0
        %2624 = vmatpush1.msra.mxu0 0.0
        %2625 = vmatprep.subr.mxu0 0.0
        %2626 = vmatpush1.msra.mxu0 0.0
        %2627 = vmatprep.subr.mxu0 0.0
        %2628 = vmatpush1.msra.mxu0 0.0
        %2629 = vmatprep.subr.mxu0 0.0
        %2630 = vmatpush1.msra.mxu0 0.0
        %2631 = vmatprep.mubr.f32.mxu0 0.0
        %v2632 = vand.u32 %v2178, 4294901760
        %2633 = vmatmul.mubr.f32.gmra.mrb[0].mxu0 %v2632
        %v2634 = vpop.f32.mrb[0].mxu0
        %v2635 = vadd.f32 %v2540, %v2634
        %v2636 = vpop.f32.mrb[0].mxu0
        %2637 = vdwg.mxu0
        %2638 = vmatprep.subr.mxu0 0.0
        %v2639 = vand.u32 %v2161, 4294901760
        %2640 = vmatpush1.msra.mxu0 %v2639
        %2641 = vmatprep.subr.mxu0 0.0
        %v2642 = vand.u32 %v2162, 4294901760
        %2643 = vmatpush1.msra.mxu0 %v2642
        %2644 = vmatprep.subr.mxu0 0.0
        %v2645 = vand.u32 %v2163, 4294901760
        %2646 = vmatpush1.msra.mxu0 %v2645
        %2647 = vmatprep.subr.mxu0 0.0
        %v2648 = vand.u32 %v2164, 4294901760
        %2649 = vmatpush1.msra.mxu0 %v2648
        %2650 = vmatprep.subr.mxu0 0.0
        %v2651 = vand.u32 %v2165, 4294901760
        %2652 = vmatpush1.msra.mxu0 %v2651
        %2653 = vmatprep.subr.mxu0 0.0
        %v2654 = vand.u32 %v2166, 4294901760
        %2655 = vmatpush1.msra.mxu0 %v2654
        %2656 = vmatprep.subr.mxu0 0.0
        %v2657 = vand.u32 %v2167, 4294901760
        %2658 = vmatpush1.msra.mxu0 %v2657
        %2659 = vmatprep.subr.mxu0 0.0
        %v2660 = vand.u32 %v2168, 4294901760
        %2661 = vmatpush1.msra.mxu0 %v2660
        %2662 = vmatprep.subr.mxu0 0.0
        %2663 = vmatpush1.msra.mxu0 0.0
        %2664 = vmatprep.subr.mxu0 0.0
        %2665 = vmatpush1.msra.mxu0 0.0
        %2666 = vmatprep.subr.mxu0 0.0
        %2667 = vmatpush1.msra.mxu0 0.0
        %2668 = vmatprep.subr.mxu0 0.0
        %2669 = vmatpush1.msra.mxu0 0.0
        %2670 = vmatprep.subr.mxu0 0.0
        %2671 = vmatpush1.msra.mxu0 0.0
        %2672 = vmatprep.subr.mxu0 0.0
        %2673 = vmatpush1.msra.mxu0 0.0
        %2674 = vmatprep.subr.mxu0 0.0
        %2675 = vmatpush1.msra.mxu0 0.0
        %2676 = vmatprep.subr.mxu0 0.0
        %2677 = vmatpush1.msra.mxu0 0.0
        %2678 = vmatprep.subr.mxu0 0.0
        %2679 = vmatpush1.msra.mxu0 0.0
        %2680 = vmatprep.subr.mxu0 0.0
        %2681 = vmatpush1.msra.mxu0 0.0
        %2682 = vmatprep.subr.mxu0 0.0
        %2683 = vmatpush1.msra.mxu0 0.0
        %2684 = vmatprep.subr.mxu0 0.0
        %2685 = vmatpush1.msra.mxu0 0.0
        %2686 = vmatprep.subr.mxu0 0.0
        %2687 = vmatpush1.msra.mxu0 0.0
        %2688 = vmatprep.subr.mxu0 0.0
        %2689 = vmatpush1.msra.mxu0 0.0
        %2690 = vmatprep.subr.mxu0 0.0
        %2691 = vmatpush1.msra.mxu0 0.0
        %2692 = vmatprep.subr.mxu0 0.0
        %2693 = vmatpush1.msra.mxu0 0.0
        %2694 = vmatprep.subr.mxu0 0.0
        %2695 = vmatpush1.msra.mxu0 0.0
        %2696 = vmatprep.subr.mxu0 0.0
        %2697 = vmatpush1.msra.mxu0 0.0
        %2698 = vmatprep.subr.mxu0 0.0
        %2699 = vmatpush1.msra.mxu0 0.0
        %2700 = vmatprep.subr.mxu0 0.0
        %2701 = vmatpush1.msra.mxu0 0.0
        %2702 = vmatprep.subr.mxu0 0.0
        %2703 = vmatpush1.msra.mxu0 0.0
        %2704 = vmatprep.subr.mxu0 0.0
        %2705 = vmatpush1.msra.mxu0 0.0
        %2706 = vmatprep.subr.mxu0 0.0
        %2707 = vmatpush1.msra.mxu0 0.0
        %2708 = vmatprep.subr.mxu0 0.0
        %2709 = vmatpush1.msra.mxu0 0.0
        %2710 = vmatprep.mubr.f32.mxu0 0.0
        %v2711 = vand.u32 %v2178, 4294901760
        %2712 = vmatmul.mubr.f32.gmra.mrb[0].mxu0 %v2711
        %v2713 = vpop.f32.mrb[0].mxu0
        %v2714 = vadd.f32 %v2635, %v2713
        %v2715 = vpop.f32.mrb[0].mxu0
        %2716 = vdwg.mxu0
        %v2717 = vtanh.pop %v2714
        %s2718 = scalar_lea.vmem %s5, 2
        %v2719 = vld [vmem:[%s2718] sm:$0x1]
        %s2720 = scalar_lea.vmem %s6, 2
        %v2721 = vld [vmem:[%s2720] sm:$0x1]
        %v2722 = vsel %vm962, %v2717, 0.0
        %2723 = vadd.xlane.f32.xlu0 %v2722
        %v2724 = vpop.xlane.xlu0 %2723
        %v2725 = vmul.f32 %v2724, %v1509
        %v2726 = vmul.f32 %v2717, %v2717
        %v2727 = vsel %vm962, %v2726, 0.0
        %2728 = vadd.xlane.f32.xlu0 %v2727
        %v2729 = vpop.xlane.xlu0 %2728
        %v2730 = vmul.f32 %v2729, %v1509
        %v2731 = vmul.f32 %v2725, %v2725
        %v2732 = vsub.f32 %v2730, %v2731
        %v2733 = vadd.f32 %v2732, 1e-05
        %v2734 = vrsqrt.pop %v2733
        %v2735 = vsub.f32 %v2717, %v2725
        %v2736 = vmul.f32 %v2735, %v2734
        %v2738 = vlaneseq
        %v2739 = vshrl.u32 %v2738, 7
        %v2740 = vsub.s32 0, %v2739
        %v2741 = vrot.slane %v2719, %v2740
        %v2743 = vmul.f32 %v2736, %v2741
        %v2745 = vlaneseq
        %v2746 = vshrl.u32 %v2745, 7
        %v2747 = vsub.s32 0, %v2746
        %v2748 = vrot.slane %v2721, %v2747
        %v2750 = vadd.f32 %v2743, %v2748
        %s2751 = scalar_lea.vmem [#allocation7], 192
        %v2752 = vld [vmem:[%s2751] sm:$0xff]
        %v2753 = vld [vmem:[%s2751 + $0x8] sm:$0xff]
        %v2754 = vld [vmem:[%s2751 + $0x10] sm:$0xff]
        %v2755 = vld [vmem:[%s2751 + $0x18] sm:$0xff]
        %v2756 = vld [vmem:[%s2751 + $0x20] sm:$0xff]
        %v2757 = vld [vmem:[%s2751 + $0x28] sm:$0xff]
        %v2758 = vld [vmem:[%s2751 + $0x30] sm:$0xff]
        %v2759 = vld [vmem:[%s2751 + $0x38] sm:$0xff]
        %s2760 = scalar_lea.vmem %s4, 3
        %v2761 = vld [vmem:[%s2760] sm:$0x1]
        %v2763 = vlaneseq
        %v2764 = vshrl.u32 %v2763, 7
        %v2765 = vsub.s32 0, %v2764
        %v2766 = vrot.slane %v2761, %v2765
        %v2769 = vsel %vm962, %v2750, 0
        %2771 = vmatprep.subr.mxu0 0.0
        %v2772 = vand.u32 %v2752, 4294901760
        %2773 = vmatpush1.msra.mxu0 %v2772
        %2774 = vmatprep.subr.mxu0 0.0
        %v2775 = vand.u32 %v2753, 4294901760
        %2776 = vmatpush1.msra.mxu0 %v2775
        %2777 = vmatprep.subr.mxu0 0.0
        %v2778 = vand.u32 %v2754, 4294901760
        %2779 = vmatpush1.msra.mxu0 %v2778
        %2780 = vmatprep.subr.mxu0 0.0
        %v2781 = vand.u32 %v2755, 4294901760
        %2782 = vmatpush1.msra.mxu0 %v2781
        %2783 = vmatprep.subr.mxu0 0.0
        %v2784 = vand.u32 %v2756, 4294901760
        %2785 = vmatpush1.msra.mxu0 %v2784
        %2786 = vmatprep.subr.mxu0 0.0
        %v2787 = vand.u32 %v2757, 4294901760
        %2788 = vmatpush1.msra.mxu0 %v2787
        %2789 = vmatprep.subr.mxu0 0.0
        %v2790 = vand.u32 %v2758, 4294901760
        %2791 = vmatpush1.msra.mxu0 %v2790
        %2792 = vmatprep.subr.mxu0 0.0
        %v2793 = vand.u32 %v2759, 4294901760
        %2794 = vmatpush1.msra.mxu0 %v2793
        %2795 = vmatprep.subr.mxu0 0.0
        %2796 = vmatpush1.msra.mxu0 0.0
        %2797 = vmatprep.subr.mxu0 0.0
        %2798 = vmatpush1.msra.mxu0 0.0
        %2799 = vmatprep.subr.mxu0 0.0
        %2800 = vmatpush1.msra.mxu0 0.0
        %2801 = vmatprep.subr.mxu0 0.0
        %2802 = vmatpush1.msra.mxu0 0.0
        %2803 = vmatprep.subr.mxu0 0.0
        %2804 = vmatpush1.msra.mxu0 0.0
        %2805 = vmatprep.subr.mxu0 0.0
        %2806 = vmatpush1.msra.mxu0 0.0
        %2807 = vmatprep.subr.mxu0 0.0
        %2808 = vmatpush1.msra.mxu0 0.0
        %2809 = vmatprep.subr.mxu0 0.0
        %2810 = vmatpush1.msra.mxu0 0.0
        %2811 = vmatprep.subr.mxu0 0.0
        %2812 = vmatpush1.msra.mxu0 0.0
        %2813 = vmatprep.subr.mxu0 0.0
        %2814 = vmatpush1.msra.mxu0 0.0
        %2815 = vmatprep.subr.mxu0 0.0
        %2816 = vmatpush1.msra.mxu0 0.0
        %2817 = vmatprep.subr.mxu0 0.0
        %2818 = vmatpush1.msra.mxu0 0.0
        %2819 = vmatprep.subr.mxu0 0.0
        %2820 = vmatpush1.msra.mxu0 0.0
        %2821 = vmatprep.subr.mxu0 0.0
        %2822 = vmatpush1.msra.mxu0 0.0
        %2823 = vmatprep.subr.mxu0 0.0
        %2824 = vmatpush1.msra.mxu0 0.0
        %2825 = vmatprep.subr.mxu0 0.0
        %2826 = vmatpush1.msra.mxu0 0.0
        %2827 = vmatprep.subr.mxu0 0.0
        %2828 = vmatpush1.msra.mxu0 0.0
        %2829 = vmatprep.subr.mxu0 0.0
        %2830 = vmatpush1.msra.mxu0 0.0
        %2831 = vmatprep.subr.mxu0 0.0
        %2832 = vmatpush1.msra.mxu0 0.0
        %2833 = vmatprep.subr.mxu0 0.0
        %2834 = vmatpush1.msra.mxu0 0.0
        %2835 = vmatprep.subr.mxu0 0.0
        %2836 = vmatpush1.msra.mxu0 0.0
        %2837 = vmatprep.subr.mxu0 0.0
        %2838 = vmatpush1.msra.mxu0 0.0
        %2839 = vmatprep.subr.mxu0 0.0
        %2840 = vmatpush1.msra.mxu0 0.0
        %2841 = vmatprep.subr.mxu0 0.0
        %2842 = vmatpush1.msra.mxu0 0.0
        %2843 = vmatprep.mubr.f32.mxu0 0.0
        %v2844 = vand.u32 %v2769, 4294901760
        %v2845 = vsub.f32 %v2769, %v2844
        %v2846 = vand.u32 %v2845, 4294901760
        %v2847 = vsub.f32 %v2845, %v2846
        %v2848 = vand.u32 %v2847, 4294901760
        %2849 = vmatmul.mubr.f32.gmra.mrb[0].mxu0 %v2848
        %v2850 = vpop.f32.mrb[0].mxu0
        %v2851 = vadd.f32 %v2766, %v2850
        %v2852 = vpop.f32.mrb[0].mxu0
        %2853 = vdwg.mxu0
        %2854 = vmatprep.subr.mxu0 0.0
        %v2855 = vand.u32 %v2752, 4294901760
        %v2856 = vsub.f32 %v2752, %v2855
        %v2857 = vand.u32 %v2856, 4294901760
        %v2858 = vsub.f32 %v2856, %v2857
        %v2859 = vand.u32 %v2858, 4294901760
        %2860 = vmatpush1.msra.mxu0 %v2859
        %2861 = vmatprep.subr.mxu0 0.0
        %v2862 = vand.u32 %v2753, 4294901760
        %v2863 = vsub.f32 %v2753, %v2862
        %v2864 = vand.u32 %v2863, 4294901760
        %v2865 = vsub.f32 %v2863, %v2864
        %v2866 = vand.u32 %v2865, 4294901760
        %2867 = vmatpush1.msra.mxu0 %v2866
        %2868 = vmatprep.subr.mxu0 0.0
        %v2869 = vand.u32 %v2754, 4294901760
        %v2870 = vsub.f32 %v2754, %v2869
        %v2871 = vand.u32 %v2870, 4294901760
        %v2872 = vsub.f32 %v2870, %v2871
        %v2873 = vand.u32 %v2872, 4294901760
        %2874 = vmatpush1.msra.mxu0 %v2873
        %2875 = vmatprep.subr.mxu0 0.0
        %v2876 = vand.u32 %v2755, 4294901760
        %v2877 = vsub.f32 %v2755, %v2876
        %v2878 = vand.u32 %v2877, 4294901760
        %v2879 = vsub.f32 %v2877, %v2878
        %v2880 = vand.u32 %v2879, 4294901760
        %2881 = vmatpush1.msra.mxu0 %v2880
        %2882 = vmatprep.subr.mxu0 0.0
        %v2883 = vand.u32 %v2756, 4294901760
        %v2884 = vsub.f32 %v2756, %v2883
        %v2885 = vand.u32 %v2884, 4294901760
        %v2886 = vsub.f32 %v2884, %v2885
        %v2887 = vand.u32 %v2886, 4294901760
        %2888 = vmatpush1.msra.mxu0 %v2887
        %2889 = vmatprep.subr.mxu0 0.0
        %v2890 = vand.u32 %v2757, 4294901760
        %v2891 = vsub.f32 %v2757, %v2890
        %v2892 = vand.u32 %v2891, 4294901760
        %v2893 = vsub.f32 %v2891, %v2892
        %v2894 = vand.u32 %v2893, 4294901760
        %2895 = vmatpush1.msra.mxu0 %v2894
        %2896 = vmatprep.subr.mxu0 0.0
        %v2897 = vand.u32 %v2758, 4294901760
        %v2898 = vsub.f32 %v2758, %v2897
        %v2899 = vand.u32 %v2898, 4294901760
        %v2900 = vsub.f32 %v2898, %v2899
        %v2901 = vand.u32 %v2900, 4294901760
        %2902 = vmatpush1.msra.mxu0 %v2901
        %2903 = vmatprep.subr.mxu0 0.0
        %v2904 = vand.u32 %v2759, 4294901760
        %v2905 = vsub.f32 %v2759, %v2904
        %v2906 = vand.u32 %v2905, 4294901760
        %v2907 = vsub.f32 %v2905, %v2906
        %v2908 = vand.u32 %v2907, 4294901760
        %2909 = vmatpush1.msra.mxu0 %v2908
        %2910 = vmatprep.subr.mxu0 0.0
        %2911 = vmatpush1.msra.mxu0 0.0
        %2912 = vmatprep.subr.mxu0 0.0
        %2913 = vmatpush1.msra.mxu0 0.0
        %2914 = vmatprep.subr.mxu0 0.0
        %2915 = vmatpush1.msra.mxu0 0.0
        %2916 = vmatprep.subr.mxu0 0.0
        %2917 = vmatpush1.msra.mxu0 0.0
        %2918 = vmatprep.subr.mxu0 0.0
        %2919 = vmatpush1.msra.mxu0 0.0
        %2920 = vmatprep.subr.mxu0 0.0
        %2921 = vmatpush1.msra.mxu0 0.0
        %2922 = vmatprep.subr.mxu0 0.0
        %2923 = vmatpush1.msra.mxu0 0.0
        %2924 = vmatprep.subr.mxu0 0.0
        %2925 = vmatpush1.msra.mxu0 0.0
        %2926 = vmatprep.subr.mxu0 0.0
        %2927 = vmatpush1.msra.mxu0 0.0
        %2928 = vmatprep.subr.mxu0 0.0
        %2929 = vmatpush1.msra.mxu0 0.0
        %2930 = vmatprep.subr.mxu0 0.0
        %2931 = vmatpush1.msra.mxu0 0.0
        %2932 = vmatprep.subr.mxu0 0.0
        %2933 = vmatpush1.msra.mxu0 0.0
        %2934 = vmatprep.subr.mxu0 0.0
        %2935 = vmatpush1.msra.mxu0 0.0
        %2936 = vmatprep.subr.mxu0 0.0
        %2937 = vmatpush1.msra.mxu0 0.0
        %2938 = vmatprep.subr.mxu0 0.0
        %2939 = vmatpush1.msra.mxu0 0.0
        %2940 = vmatprep.subr.mxu0 0.0
        %2941 = vmatpush1.msra.mxu0 0.0
        %2942 = vmatprep.subr.mxu0 0.0
        %2943 = vmatpush1.msra.mxu0 0.0
        %2944 = vmatprep.subr.mxu0 0.0
        %2945 = vmatpush1.msra.mxu0 0.0
        %2946 = vmatprep.subr.mxu0 0.0
        %2947 = vmatpush1.msra.mxu0 0.0
        %2948 = vmatprep.subr.mxu0 0.0
        %2949 = vmatpush1.msra.mxu0 0.0
        %2950 = vmatprep.subr.mxu0 0.0
        %2951 = vmatpush1.msra.mxu0 0.0
        %2952 = vmatprep.subr.mxu0 0.0
        %2953 = vmatpush1.msra.mxu0 0.0
        %2954 = vmatprep.subr.mxu0 0.0
        %2955 = vmatpush1.msra.mxu0 0.0
        %2956 = vmatprep.subr.mxu0 0.0
        %2957 = vmatpush1.msra.mxu0 0.0
        %2958 = vmatprep.mubr.f32.mxu0 0.0
        %v2959 = vand.u32 %v2769, 4294901760
        %2960 = vmatmul.mubr.f32.gmra.mrb[0].mxu0 %v2959
        %v2961 = vpop.f32.mrb[0].mxu0
        %v2962 = vadd.f32 %v2851, %v2961
        %v2963 = vpop.f32.mrb[0].mxu0
        %2964 = vdwg.mxu0
        %2965 = vmatprep.subr.mxu0 0.0
        %v2966 = vand.u32 %v2752, 4294901760
        %v2967 = vsub.f32 %v2752, %v2966
        %2968 = vmatpush1.msra.mxu0 %v2967
        %2969 = vmatprep.subr.mxu0 0.0
        %v2970 = vand.u32 %v2753, 4294901760
        %v2971 = vsub.f32 %v2753, %v2970
        %2972 = vmatpush1.msra.mxu0 %v2971
        %2973 = vmatprep.subr.mxu0 0.0
        %v2974 = vand.u32 %v2754, 4294901760
        %v2975 = vsub.f32 %v2754, %v2974
        %2976 = vmatpush1.msra.mxu0 %v2975
        %2977 = vmatprep.subr.mxu0 0.0
        %v2978 = vand.u32 %v2755, 4294901760
        %v2979 = vsub.f32 %v2755, %v2978
        %2980 = vmatpush1.msra.mxu0 %v2979
        %2981 = vmatprep.subr.mxu0 0.0
        %v2982 = vand.u32 %v2756, 4294901760
        %v2983 = vsub.f32 %v2756, %v2982
        %2984 = vmatpush1.msra.mxu0 %v2983
        %2985 = vmatprep.subr.mxu0 0.0
        %v2986 = vand.u32 %v2757, 4294901760
        %v2987 = vsub.f32 %v2757, %v2986
        %2988 = vmatpush1.msra.mxu0 %v2987
        %2989 = vmatprep.subr.mxu0 0.0
        %v2990 = vand.u32 %v2758, 4294901760
        %v2991 = vsub.f32 %v2758, %v2990
        %2992 = vmatpush1.msra.mxu0 %v2991
        %2993 = vmatprep.subr.mxu0 0.0
        %v2994 = vand.u32 %v2759, 4294901760
        %v2995 = vsub.f32 %v2759, %v2994
        %2996 = vmatpush1.msra.mxu0 %v2995
        %2997 = vmatprep.subr.mxu0 0.0
        %2998 = vmatpush1.msra.mxu0 0.0
        %2999 = vmatprep.subr.mxu0 0.0
        %3000 = vmatpush1.msra.mxu0 0.0
        %3001 = vmatprep.subr.mxu0 0.0
        %3002 = vmatpush1.msra.mxu0 0.0
        %3003 = vmatprep.subr.mxu0 0.0
        %3004 = vmatpush1.msra.mxu0 0.0
        %3005 = vmatprep.subr.mxu0 0.0
        %3006 = vmatpush1.msra.mxu0 0.0
        %3007 = vmatprep.subr.mxu0 0.0
        %3008 = vmatpush1.msra.mxu0 0.0
        %3009 = vmatprep.subr.mxu0 0.0
        %3010 = vmatpush1.msra.mxu0 0.0
        %3011 = vmatprep.subr.mxu0 0.0
        %3012 = vmatpush1.msra.mxu0 0.0
        %3013 = vmatprep.subr.mxu0 0.0
        %3014 = vmatpush1.msra.mxu0 0.0
        %3015 = vmatprep.subr.mxu0 0.0
        %3016 = vmatpush1.msra.mxu0 0.0
        %3017 = vmatprep.subr.mxu0 0.0
        %3018 = vmatpush1.msra.mxu0 0.0
        %3019 = vmatprep.subr.mxu0 0.0
        %3020 = vmatpush1.msra.mxu0 0.0
        %3021 = vmatprep.subr.mxu0 0.0
        %3022 = vmatpush1.msra.mxu0 0.0
        %3023 = vmatprep.subr.mxu0 0.0
        %3024 = vmatpush1.msra.mxu0 0.0
        %3025 = vmatprep.subr.mxu0 0.0
        %3026 = vmatpush1.msra.mxu0 0.0
        %3027 = vmatprep.subr.mxu0 0.0
        %3028 = vmatpush1.msra.mxu0 0.0
        %3029 = vmatprep.subr.mxu0 0.0
        %3030 = vmatpush1.msra.mxu0 0.0
        %3031 = vmatprep.subr.mxu0 0.0
        %3032 = vmatpush1.msra.mxu0 0.0
        %3033 = vmatprep.subr.mxu0 0.0
        %3034 = vmatpush1.msra.mxu0 0.0
        %3035 = vmatprep.subr.mxu0 0.0
        %3036 = vmatpush1.msra.mxu0 0.0
        %3037 = vmatprep.subr.mxu0 0.0
        %3038 = vmatpush1.msra.mxu0 0.0
        %3039 = vmatprep.subr.mxu0 0.0
        %3040 = vmatpush1.msra.mxu0 0.0
        %3041 = vmatprep.subr.mxu0 0.0
        %3042 = vmatpush1.msra.mxu0 0.0
        %3043 = vmatprep.subr.mxu0 0.0
        %3044 = vmatpush1.msra.mxu0 0.0
        %3045 = vmatprep.mubr.f32.mxu0 0.0
        %v3046 = vand.u32 %v2769, 4294901760
        %v3047 = vsub.f32 %v2769, %v3046
        %3048 = vmatmul.mubr.f32.gmra.mrb[0].mxu0 %v3047
        %v3049 = vpop.f32.mrb[0].mxu0
        %v3050 = vadd.f32 %v2962, %v3049
        %v3051 = vpop.f32.mrb[0].mxu0
        %3052 = vdwg.mxu0
        %3053 = vmatprep.subr.mxu0 0.0
        %v3054 = vand.u32 %v2752, 4294901760
        %3055 = vmatpush1.msra.mxu0 %v3054
        %3056 = vmatprep.subr.mxu0 0.0
        %v3057 = vand.u32 %v2753, 4294901760
        %3058 = vmatpush1.msra.mxu0 %v3057
        %3059 = vmatprep.subr.mxu0 0.0
        %v3060 = vand.u32 %v2754, 4294901760
        %3061 = vmatpush1.msra.mxu0 %v3060
        %3062 = vmatprep.subr.mxu0 0.0
        %v3063 = vand.u32 %v2755, 4294901760
        %3064 = vmatpush1.msra.mxu0 %v3063
        %3065 = vmatprep.subr.mxu0 0.0
        %v3066 = vand.u32 %v2756, 4294901760
        %3067 = vmatpush1.msra.mxu0 %v3066
        %3068 = vmatprep.subr.mxu0 0.0
        %v3069 = vand.u32 %v2757, 4294901760
        %3070 = vmatpush1.msra.mxu0 %v3069
        %3071 = vmatprep.subr.mxu0 0.0
        %v3072 = vand.u32 %v2758, 4294901760
        %3073 = vmatpush1.msra.mxu0 %v3072
        %3074 = vmatprep.subr.mxu0 0.0
        %v3075 = vand.u32 %v2759, 4294901760
        %3076 = vmatpush1.msra.mxu0 %v3075
        %3077 = vmatprep.subr.mxu0 0.0
        %3078 = vmatpush1.msra.mxu0 0.0
        %3079 = vmatprep.subr.mxu0 0.0
        %3080 = vmatpush1.msra.mxu0 0.0
        %3081 = vmatprep.subr.mxu0 0.0
        %3082 = vmatpush1.msra.mxu0 0.0
        %3083 = vmatprep.subr.mxu0 0.0
        %3084 = vmatpush1.msra.mxu0 0.0
        %3085 = vmatprep.subr.mxu0 0.0
        %3086 = vmatpush1.msra.mxu0 0.0
        %3087 = vmatprep.subr.mxu0 0.0
        %3088 = vmatpush1.msra.mxu0 0.0
        %3089 = vmatprep.subr.mxu0 0.0
        %3090 = vmatpush1.msra.mxu0 0.0
        %3091 = vmatprep.subr.mxu0 0.0
        %3092 = vmatpush1.msra.mxu0 0.0
        %3093 = vmatprep.subr.mxu0 0.0
        %3094 = vmatpush1.msra.mxu0 0.0
        %3095 = vmatprep.subr.mxu0 0.0
        %3096 = vmatpush1.msra.mxu0 0.0
        %3097 = vmatprep.subr.mxu0 0.0
        %3098 = vmatpush1.msra.mxu0 0.0
        %3099 = vmatprep.subr.mxu0 0.0
        %3100 = vmatpush1.msra.mxu0 0.0
        %3101 = vmatprep.subr.mxu0 0.0
        %3102 = vmatpush1.msra.mxu0 0.0
        %3103 = vmatprep.subr.mxu0 0.0
        %3104 = vmatpush1.msra.mxu0 0.0
        %3105 = vmatprep.subr.mxu0 0.0
        %3106 = vmatpush1.msra.mxu0 0.0
        %3107 = vmatprep.subr.mxu0 0.0
        %3108 = vmatpush1.msra.mxu0 0.0
        %3109 = vmatprep.subr.mxu0 0.0
        %3110 = vmatpush1.msra.mxu0 0.0
        %3111 = vmatprep.subr.mxu0 0.0
        %3112 = vmatpush1.msra.mxu0 0.0
        %3113 = vmatprep.subr.mxu0 0.0
        %3114 = vmatpush1.msra.mxu0 0.0
        %3115 = vmatprep.subr.mxu0 0.0
        %3116 = vmatpush1.msra.mxu0 0.0
        %3117 = vmatprep.subr.mxu0 0.0
        %3118 = vmatpush1.msra.mxu0 0.0
        %3119 = vmatprep.subr.mxu0 0.0
        %3120 = vmatpush1.msra.mxu0 0.0
        %3121 = vmatprep.subr.mxu0 0.0
        %3122 = vmatpush1.msra.mxu0 0.0
        %3123 = vmatprep.subr.mxu0 0.0
        %3124 = vmatpush1.msra.mxu0 0.0
        %3125 = vmatprep.mubr.f32.mxu0 0.0
        %v3126 = vand.u32 %v2769, 4294901760
        %v3127 = vsub.f32 %v2769, %v3126
        %v3128 = vand.u32 %v3127, 4294901760
        %3129 = vmatmul.mubr.f32.gmra.mrb[0].mxu0 %v3128
        %v3130 = vpop.f32.mrb[0].mxu0
        %v3131 = vadd.f32 %v3050, %v3130
        %v3132 = vpop.f32.mrb[0].mxu0
        %3133 = vdwg.mxu0
        %3134 = vmatprep.subr.mxu0 0.0
        %v3135 = vand.u32 %v2752, 4294901760
        %v3136 = vsub.f32 %v2752, %v3135
        %v3137 = vand.u32 %v3136, 4294901760
        %3138 = vmatpush1.msra.mxu0 %v3137
        %3139 = vmatprep.subr.mxu0 0.0
        %v3140 = vand.u32 %v2753, 4294901760
        %v3141 = vsub.f32 %v2753, %v3140
        %v3142 = vand.u32 %v3141, 4294901760
        %3143 = vmatpush1.msra.mxu0 %v3142
        %3144 = vmatprep.subr.mxu0 0.0
        %v3145 = vand.u32 %v2754, 4294901760
        %v3146 = vsub.f32 %v2754, %v3145
        %v3147 = vand.u32 %v3146, 4294901760
        %3148 = vmatpush1.msra.mxu0 %v3147
        %3149 = vmatprep.subr.mxu0 0.0
        %v3150 = vand.u32 %v2755, 4294901760
        %v3151 = vsub.f32 %v2755, %v3150
        %v3152 = vand.u32 %v3151, 4294901760
        %3153 = vmatpush1.msra.mxu0 %v3152
        %3154 = vmatprep.subr.mxu0 0.0
        %v3155 = vand.u32 %v2756, 4294901760
        %v3156 = vsub.f32 %v2756, %v3155
        %v3157 = vand.u32 %v3156, 4294901760
        %3158 = vmatpush1.msra.mxu0 %v3157
        %3159 = vmatprep.subr.mxu0 0.0
        %v3160 = vand.u32 %v2757, 4294901760
        %v3161 = vsub.f32 %v2757, %v3160
        %v3162 = vand.u32 %v3161, 4294901760
        %3163 = vmatpush1.msra.mxu0 %v3162
        %3164 = vmatprep.subr.mxu0 0.0
        %v3165 = vand.u32 %v2758, 4294901760
        %v3166 = vsub.f32 %v2758, %v3165
        %v3167 = vand.u32 %v3166, 4294901760
        %3168 = vmatpush1.msra.mxu0 %v3167
        %3169 = vmatprep.subr.mxu0 0.0
        %v3170 = vand.u32 %v2759, 4294901760
        %v3171 = vsub.f32 %v2759, %v3170
        %v3172 = vand.u32 %v3171, 4294901760
        %3173 = vmatpush1.msra.mxu0 %v3172
        %3174 = vmatprep.subr.mxu0 0.0
        %3175 = vmatpush1.msra.mxu0 0.0
        %3176 = vmatprep.subr.mxu0 0.0
        %3177 = vmatpush1.msra.mxu0 0.0
        %3178 = vmatprep.subr.mxu0 0.0
        %3179 = vmatpush1.msra.mxu0 0.0
        %3180 = vmatprep.subr.mxu0 0.0
        %3181 = vmatpush1.msra.mxu0 0.0
        %3182 = vmatprep.subr.mxu0 0.0
        %3183 = vmatpush1.msra.mxu0 0.0
        %3184 = vmatprep.subr.mxu0 0.0
        %3185 = vmatpush1.msra.mxu0 0.0
        %3186 = vmatprep.subr.mxu0 0.0
        %3187 = vmatpush1.msra.mxu0 0.0
        %3188 = vmatprep.subr.mxu0 0.0
        %3189 = vmatpush1.msra.mxu0 0.0
        %3190 = vmatprep.subr.mxu0 0.0
        %3191 = vmatpush1.msra.mxu0 0.0
        %3192 = vmatprep.subr.mxu0 0.0
        %3193 = vmatpush1.msra.mxu0 0.0
        %3194 = vmatprep.subr.mxu0 0.0
        %3195 = vmatpush1.msra.mxu0 0.0
        %3196 = vmatprep.subr.mxu0 0.0
        %3197 = vmatpush1.msra.mxu0 0.0
        %3198 = vmatprep.subr.mxu0 0.0
        %3199 = vmatpush1.msra.mxu0 0.0
        %3200 = vmatprep.subr.mxu0 0.0
        %3201 = vmatpush1.msra.mxu0 0.0
        %3202 = vmatprep.subr.mxu0 0.0
        %3203 = vmatpush1.msra.mxu0 0.0
        %3204 = vmatprep.subr.mxu0 0.0
        %3205 = vmatpush1.msra.mxu0 0.0
        %3206 = vmatprep.subr.mxu0 0.0
        %3207 = vmatpush1.msra.mxu0 0.0
        %3208 = vmatprep.subr.mxu0 0.0
        %3209 = vmatpush1.msra.mxu0 0.0
        %3210 = vmatprep.subr.mxu0 0.0
        %3211 = vmatpush1.msra.mxu0 0.0
        %3212 = vmatprep.subr.mxu0 0.0
        %3213 = vmatpush1.msra.mxu0 0.0
        %3214 = vmatprep.subr.mxu0 0.0
        %3215 = vmatpush1.msra.mxu0 0.0
        %3216 = vmatprep.subr.mxu0 0.0
        %3217 = vmatpush1.msra.mxu0 0.0
        %3218 = vmatprep.subr.mxu0 0.0
        %3219 = vmatpush1.msra.mxu0 0.0
        %3220 = vmatprep.subr.mxu0 0.0
        %3221 = vmatpush1.msra.mxu0 0.0
        %3222 = vmatprep.mubr.f32.mxu0 0.0
        %v3223 = vand.u32 %v2769, 4294901760
        %3224 = vmatmul.mubr.f32.gmra.mrb[0].mxu0 %v3223
        %v3225 = vpop.f32.mrb[0].mxu0
        %v3226 = vadd.f32 %v3131, %v3225
        %v3227 = vpop.f32.mrb[0].mxu0
        %3228 = vdwg.mxu0
        %3229 = vmatprep.subr.mxu0 0.0
        %v3230 = vand.u32 %v2752, 4294901760
        %3231 = vmatpush1.msra.mxu0 %v3230
        %3232 = vmatprep.subr.mxu0 0.0
        %v3233 = vand.u32 %v2753, 4294901760
        %3234 = vmatpush1.msra.mxu0 %v3233
        %3235 = vmatprep.subr.mxu0 0.0
        %v3236 = vand.u32 %v2754, 4294901760
        %3237 = vmatpush1.msra.mxu0 %v3236
        %3238 = vmatprep.subr.mxu0 0.0
        %v3239 = vand.u32 %v2755, 4294901760
        %3240 = vmatpush1.msra.mxu0 %v3239
        %3241 = vmatprep.subr.mxu0 0.0
        %v3242 = vand.u32 %v2756, 4294901760
        %3243 = vmatpush1.msra.mxu0 %v3242
        %3244 = vmatprep.subr.mxu0 0.0
        %v3245 = vand.u32 %v2757, 4294901760
        %3246 = vmatpush1.msra.mxu0 %v3245
        %3247 = vmatprep.subr.mxu0 0.0
        %v3248 = vand.u32 %v2758, 4294901760
        %3249 = vmatpush1.msra.mxu0 %v3248
        %3250 = vmatprep.subr.mxu0 0.0
        %v3251 = vand.u32 %v2759, 4294901760
        %3252 = vmatpush1.msra.mxu0 %v3251
        %3253 = vmatprep.subr.mxu0 0.0
        %3254 = vmatpush1.msra.mxu0 0.0
        %3255 = vmatprep.subr.mxu0 0.0
        %3256 = vmatpush1.msra.mxu0 0.0
        %3257 = vmatprep.subr.mxu0 0.0
        %3258 = vmatpush1.msra.mxu0 0.0
        %3259 = vmatprep.subr.mxu0 0.0
        %3260 = vmatpush1.msra.mxu0 0.0
        %3261 = vmatprep.subr.mxu0 0.0
        %3262 = vmatpush1.msra.mxu0 0.0
        %3263 = vmatprep.subr.mxu0 0.0
        %3264 = vmatpush1.msra.mxu0 0.0
        %3265 = vmatprep.subr.mxu0 0.0
        %3266 = vmatpush1.msra.mxu0 0.0
        %3267 = vmatprep.subr.mxu0 0.0
        %3268 = vmatpush1.msra.mxu0 0.0
        %3269 = vmatprep.subr.mxu0 0.0
        %3270 = vmatpush1.msra.mxu0 0.0
        %3271 = vmatprep.subr.mxu0 0.0
        %3272 = vmatpush1.msra.mxu0 0.0
        %3273 = vmatprep.subr.mxu0 0.0
        %3274 = vmatpush1.msra.mxu0 0.0
        %3275 = vmatprep.subr.mxu0 0.0
        %3276 = vmatpush1.msra.mxu0 0.0
        %3277 = vmatprep.subr.mxu0 0.0
        %3278 = vmatpush1.msra.mxu0 0.0
        %3279 = vmatprep.subr.mxu0 0.0
        %3280 = vmatpush1.msra.mxu0 0.0
        %3281 = vmatprep.subr.mxu0 0.0
        %3282 = vmatpush1.msra.mxu0 0.0
        %3283 = vmatprep.subr.mxu0 0.0
        %3284 = vmatpush1.msra.mxu0 0.0
        %3285 = vmatprep.subr.mxu0 0.0
        %3286 = vmatpush1.msra.mxu0 0.0
        %3287 = vmatprep.subr.mxu0 0.0
        %3288 = vmatpush1.msra.mxu0 0.0
        %3289 = vmatprep.subr.mxu0 0.0
        %3290 = vmatpush1.msra.mxu0 0.0
        %3291 = vmatprep.subr.mxu0 0.0
        %3292 = vmatpush1.msra.mxu0 0.0
        %3293 = vmatprep.subr.mxu0 0.0
        %3294 = vmatpush1.msra.mxu0 0.0
        %3295 = vmatprep.subr.mxu0 0.0
        %3296 = vmatpush1.msra.mxu0 0.0
        %3297 = vmatprep.subr.mxu0 0.0
        %3298 = vmatpush1.msra.mxu0 0.0
        %3299 = vmatprep.subr.mxu0 0.0
        %3300 = vmatpush1.msra.mxu0 0.0
        %3301 = vmatprep.mubr.f32.mxu0 0.0
        %v3302 = vand.u32 %v2769, 4294901760
        %3303 = vmatmul.mubr.f32.gmra.mrb[0].mxu0 %v3302
        %v3304 = vpop.f32.mrb[0].mxu0
        %v3305 = vadd.f32 %v3226, %v3304
        %v3306 = vpop.f32.mrb[0].mxu0
        %3307 = vdwg.mxu0
        %v3308 = vtanh.pop %v3305
        %s3309 = scalar_lea.vmem %s5, 3
        %v3310 = vld [vmem:[%s3309] sm:$0x1]
        %s3311 = scalar_lea.vmem %s6, 3
        %v3312 = vld [vmem:[%s3311] sm:$0x1]
        %v3313 = vsel %vm962, %v3308, 0.0
        %3314 = vadd.xlane.f32.xlu0 %v3313
        %v3315 = vpop.xlane.xlu0 %3314
        %v3316 = vmul.f32 %v3315, %v1509
        %v3317 = vmul.f32 %v3308, %v3308
        %v3318 = vsel %vm962, %v3317, 0.0
        %3319 = vadd.xlane.f32.xlu0 %v3318
        %v3320 = vpop.xlane.xlu0 %3319
        %v3321 = vmul.f32 %v3320, %v1509
        %v3322 = vmul.f32 %v3316, %v3316
        %v3323 = vsub.f32 %v3321, %v3322
        %v3324 = vadd.f32 %v3323, 1e-05
        %v3325 = vrsqrt.pop %v3324
        %v3326 = vsub.f32 %v3308, %v3316
        %v3327 = vmul.f32 %v3326, %v3325
        %v3329 = vlaneseq
        %v3330 = vshrl.u32 %v3329, 7
        %v3331 = vsub.s32 0, %v3330
        %v3332 = vrot.slane %v3310, %v3331
        %v3334 = vmul.f32 %v3327, %v3332
        %v3336 = vlaneseq
        %v3337 = vshrl.u32 %v3336, 7
        %v3338 = vsub.s32 0, %v3337
        %v3339 = vrot.slane %v3312, %v3338
        %v3341 = vadd.f32 %v3334, %v3339
        %v3342 = vadd.f32 %v2159, %v3341
        %v3343 = vtanh.pop %v3342
        %s3344 = scalar_lea.vmem %s7, 1
        %v3345 = vld [vmem:[%s3344] sm:$0x1]
        %s3346 = scalar_lea.vmem %s8, 1
        %v3347 = vld [vmem:[%s3346] sm:$0x1]
        %v3348 = vsel %vm962, %v3343, 0.0
        %3349 = vadd.xlane.f32.xlu0 %v3348
        %v3350 = vpop.xlane.xlu0 %3349
        %v3351 = vmul.f32 %v3350, %v1509
        %v3352 = vmul.f32 %v3343, %v3343
        %v3353 = vsel %vm962, %v3352, 0.0
        %3354 = vadd.xlane.f32.xlu0 %v3353
        %v3355 = vpop.xlane.xlu0 %3354
        %v3356 = vmul.f32 %v3355, %v1509
        %v3357 = vmul.f32 %v3351, %v3351
        %v3358 = vsub.f32 %v3356, %v3357
        %v3359 = vadd.f32 %v3358, 1e-05
        %v3360 = vrsqrt.pop %v3359
        %v3361 = vsub.f32 %v3343, %v3351
        %v3362 = vmul.f32 %v3361, %v3360
        %v3364 = vlaneseq
        %v3365 = vshrl.u32 %v3364, 7
        %v3366 = vsub.s32 0, %v3365
        %v3367 = vrot.slane %v3345, %v3366
        %v3369 = vmul.f32 %v3362, %v3367
        %v3371 = vlaneseq
        %v3372 = vshrl.u32 %v3371, 7
        %v3373 = vsub.s32 0, %v3372
        %v3374 = vrot.slane %v3347, %v3373
        %v3376 = vadd.f32 %v3369, %v3374
        %v3377 = vld [vmem:[#allocation8] sm:$0xff]
        %v3378 = vld [vmem:[#allocation8 + $0x8] sm:$0xff]
        %v3379 = vld [vmem:[#allocation8 + $0x10] sm:$0xff]
        %v3380 = vld [vmem:[#allocation8 + $0x18] sm:$0xff]
        %v3381 = vld [vmem:[#allocation8 + $0x20] sm:$0xff]
        %v3382 = vld [vmem:[#allocation8 + $0x28] sm:$0xff]
        %v3383 = vld [vmem:[#allocation8 + $0x30] sm:$0xff]
        %v3384 = vld [vmem:[#allocation8 + $0x38] sm:$0xff]
        %v3385 = vld [vmem:[%s10] sm:$0x1]
        %v3387 = vlaneseq
        %v3388 = vshrl.u32 %v3387, 7
        %v3389 = vsub.s32 0, %v3388
        %v3390 = vrot.slane %v3385, %v3389
        %v3393 = vsel %vm962, %v3376, 0
        %3395 = vmatprep.subr.mxu0 0.0
        %v3396 = vand.u32 %v3377, 4294901760
        %3397 = vmatpush1.msra.mxu0 %v3396
        %3398 = vmatprep.subr.mxu0 0.0
        %v3399 = vand.u32 %v3378, 4294901760
        %3400 = vmatpush1.msra.mxu0 %v3399
        %3401 = vmatprep.subr.mxu0 0.0
        %v3402 = vand.u32 %v3379, 4294901760
        %3403 = vmatpush1.msra.mxu0 %v3402
        %3404 = vmatprep.subr.mxu0 0.0
        %v3405 = vand.u32 %v3380, 4294901760
        %3406 = vmatpush1.msra.mxu0 %v3405
        %3407 = vmatprep.subr.mxu0 0.0
        %v3408 = vand.u32 %v3381, 4294901760
        %3409 = vmatpush1.msra.mxu0 %v3408
        %3410 = vmatprep.subr.mxu0 0.0
        %v3411 = vand.u32 %v3382, 4294901760
        %3412 = vmatpush1.msra.mxu0 %v3411
        %3413 = vmatprep.subr.mxu0 0.0
        %v3414 = vand.u32 %v3383, 4294901760
        %3415 = vmatpush1.msra.mxu0 %v3414
        %3416 = vmatprep.subr.mxu0 0.0
        %v3417 = vand.u32 %v3384, 4294901760
        %3418 = vmatpush1.msra.mxu0 %v3417
        %3419 = vmatprep.subr.mxu0 0.0
        %3420 = vmatpush1.msra.mxu0 0.0
        %3421 = vmatprep.subr.mxu0 0.0
        %3422 = vmatpush1.msra.mxu0 0.0
        %3423 = vmatprep.subr.mxu0 0.0
        %3424 = vmatpush1.msra.mxu0 0.0
        %3425 = vmatprep.subr.mxu0 0.0
        %3426 = vmatpush1.msra.mxu0 0.0
        %3427 = vmatprep.subr.mxu0 0.0
        %3428 = vmatpush1.msra.mxu0 0.0
        %3429 = vmatprep.subr.mxu0 0.0
        %3430 = vmatpush1.msra.mxu0 0.0
        %3431 = vmatprep.subr.mxu0 0.0
        %3432 = vmatpush1.msra.mxu0 0.0
        %3433 = vmatprep.subr.mxu0 0.0
        %3434 = vmatpush1.msra.mxu0 0.0
        %3435 = vmatprep.subr.mxu0 0.0
        %3436 = vmatpush1.msra.mxu0 0.0
        %3437 = vmatprep.subr.mxu0 0.0
        %3438 = vmatpush1.msra.mxu0 0.0
        %3439 = vmatprep.subr.mxu0 0.0
        %3440 = vmatpush1.msra.mxu0 0.0
        %3441 = vmatprep.subr.mxu0 0.0
        %3442 = vmatpush1.msra.mxu0 0.0
        %3443 = vmatprep.subr.mxu0 0.0
        %3444 = vmatpush1.msra.mxu0 0.0
        %3445 = vmatprep.subr.mxu0 0.0
        %3446 = vmatpush1.msra.mxu0 0.0
        %3447 = vmatprep.subr.mxu0 0.0
        %3448 = vmatpush1.msra.mxu0 0.0
        %3449 = vmatprep.subr.mxu0 0.0
        %3450 = vmatpush1.msra.mxu0 0.0
        %3451 = vmatprep.subr.mxu0 0.0
        %3452 = vmatpush1.msra.mxu0 0.0
        %3453 = vmatprep.subr.mxu0 0.0
        %3454 = vmatpush1.msra.mxu0 0.0
        %3455 = vmatprep.subr.mxu0 0.0
        %3456 = vmatpush1.msra.mxu0 0.0
        %3457 = vmatprep.subr.mxu0 0.0
        %3458 = vmatpush1.msra.mxu0 0.0
        %3459 = vmatprep.subr.mxu0 0.0
        %3460 = vmatpush1.msra.mxu0 0.0
        %3461 = vmatprep.subr.mxu0 0.0
        %3462 = vmatpush1.msra.mxu0 0.0
        %3463 = vmatprep.subr.mxu0 0.0
        %3464 = vmatpush1.msra.mxu0 0.0
        %3465 = vmatprep.subr.mxu0 0.0
        %3466 = vmatpush1.msra.mxu0 0.0
        %3467 = vmatprep.mubr.f32.mxu0 0.0
        %v3468 = vand.u32 %v3393, 4294901760
        %v3469 = vsub.f32 %v3393, %v3468
        %v3470 = vand.u32 %v3469, 4294901760
        %v3471 = vsub.f32 %v3469, %v3470
        %v3472 = vand.u32 %v3471, 4294901760
        %3473 = vmatmul.mubr.f32.gmra.mrb[0].mxu0 %v3472
        %v3474 = vpop.f32.mrb[0].mxu0
        %v3475 = vadd.f32 %v3390, %v3474
        %v3476 = vpop.f32.mrb[0].mxu0
        %3477 = vdwg.mxu0
        %3478 = vmatprep.subr.mxu0 0.0
        %v3479 = vand.u32 %v3377, 4294901760
        %v3480 = vsub.f32 %v3377, %v3479
        %v3481 = vand.u32 %v3480, 4294901760
        %v3482 = vsub.f32 %v3480, %v3481
        %v3483 = vand.u32 %v3482, 4294901760
        %3484 = vmatpush1.msra.mxu0 %v3483
        %3485 = vmatprep.subr.mxu0 0.0
        %v3486 = vand.u32 %v3378, 4294901760
        %v3487 = vsub.f32 %v3378, %v3486
        %v3488 = vand.u32 %v3487, 4294901760
        %v3489 = vsub.f32 %v3487, %v3488
        %v3490 = vand.u32 %v3489, 4294901760
        %3491 = vmatpush1.msra.mxu0 %v3490
        %3492 = vmatprep.subr.mxu0 0.0
        %v3493 = vand.u32 %v3379, 4294901760
        %v3494 = vsub.f32 %v3379, %v3493
        %v3495 = vand.u32 %v3494, 4294901760
        %v3496 = vsub.f32 %v3494, %v3495
        %v3497 = vand.u32 %v3496, 4294901760
        %3498 = vmatpush1.msra.mxu0 %v3497
        %3499 = vmatprep.subr.mxu0 0.0
        %v3500 = vand.u32 %v3380, 4294901760
        %v3501 = vsub.f32 %v3380, %v3500
        %v3502 = vand.u32 %v3501, 4294901760
        %v3503 = vsub.f32 %v3501, %v3502
        %v3504 = vand.u32 %v3503, 4294901760
        %3505 = vmatpush1.msra.mxu0 %v3504
        %3506 = vmatprep.subr.mxu0 0.0
        %v3507 = vand.u32 %v3381, 4294901760
        %v3508 = vsub.f32 %v3381, %v3507
        %v3509 = vand.u32 %v3508, 4294901760
        %v3510 = vsub.f32 %v3508, %v3509
        %v3511 = vand.u32 %v3510, 4294901760
        %3512 = vmatpush1.msra.mxu0 %v3511
        %3513 = vmatprep.subr.mxu0 0.0
        %v3514 = vand.u32 %v3382, 4294901760
        %v3515 = vsub.f32 %v3382, %v3514
        %v3516 = vand.u32 %v3515, 4294901760
        %v3517 = vsub.f32 %v3515, %v3516
        %v3518 = vand.u32 %v3517, 4294901760
        %3519 = vmatpush1.msra.mxu0 %v3518
        %3520 = vmatprep.subr.mxu0 0.0
        %v3521 = vand.u32 %v3383, 4294901760
        %v3522 = vsub.f32 %v3383, %v3521
        %v3523 = vand.u32 %v3522, 4294901760
        %v3524 = vsub.f32 %v3522, %v3523
        %v3525 = vand.u32 %v3524, 4294901760
        %3526 = vmatpush1.msra.mxu0 %v3525
        %3527 = vmatprep.subr.mxu0 0.0
        %v3528 = vand.u32 %v3384, 4294901760
        %v3529 = vsub.f32 %v3384, %v3528
        %v3530 = vand.u32 %v3529, 4294901760
        %v3531 = vsub.f32 %v3529, %v3530
        %v3532 = vand.u32 %v3531, 4294901760
        %3533 = vmatpush1.msra.mxu0 %v3532
        %3534 = vmatprep.subr.mxu0 0.0
        %3535 = vmatpush1.msra.mxu0 0.0
        %3536 = vmatprep.subr.mxu0 0.0
        %3537 = vmatpush1.msra.mxu0 0.0
        %3538 = vmatprep.subr.mxu0 0.0
        %3539 = vmatpush1.msra.mxu0 0.0
        %3540 = vmatprep.subr.mxu0 0.0
        %3541 = vmatpush1.msra.mxu0 0.0
        %3542 = vmatprep.subr.mxu0 0.0
        %3543 = vmatpush1.msra.mxu0 0.0
        %3544 = vmatprep.subr.mxu0 0.0
        %3545 = vmatpush1.msra.mxu0 0.0
        %3546 = vmatprep.subr.mxu0 0.0
        %3547 = vmatpush1.msra.mxu0 0.0
        %3548 = vmatprep.subr.mxu0 0.0
        %3549 = vmatpush1.msra.mxu0 0.0
        %3550 = vmatprep.subr.mxu0 0.0
        %3551 = vmatpush1.msra.mxu0 0.0
        %3552 = vmatprep.subr.mxu0 0.0
        %3553 = vmatpush1.msra.mxu0 0.0
        %3554 = vmatprep.subr.mxu0 0.0
        %3555 = vmatpush1.msra.mxu0 0.0
        %3556 = vmatprep.subr.mxu0 0.0
        %3557 = vmatpush1.msra.mxu0 0.0
        %3558 = vmatprep.subr.mxu0 0.0
        %3559 = vmatpush1.msra.mxu0 0.0
        %3560 = vmatprep.subr.mxu0 0.0
        %3561 = vmatpush1.msra.mxu0 0.0
        %3562 = vmatprep.subr.mxu0 0.0
        %3563 = vmatpush1.msra.mxu0 0.0
        %3564 = vmatprep.subr.mxu0 0.0
        %3565 = vmatpush1.msra.mxu0 0.0
        %3566 = vmatprep.subr.mxu0 0.0
        %3567 = vmatpush1.msra.mxu0 0.0
        %3568 = vmatprep.subr.mxu0 0.0
        %3569 = vmatpush1.msra.mxu0 0.0
        %3570 = vmatprep.subr.mxu0 0.0
        %3571 = vmatpush1.msra.mxu0 0.0
        %3572 = vmatprep.subr.mxu0 0.0
        %3573 = vmatpush1.msra.mxu0 0.0
        %3574 = vmatprep.subr.mxu0 0.0
        %3575 = vmatpush1.msra.mxu0 0.0
        %3576 = vmatprep.subr.mxu0 0.0
        %3577 = vmatpush1.msra.mxu0 0.0
        %3578 = vmatprep.subr.mxu0 0.0
        %3579 = vmatpush1.msra.mxu0 0.0
        %3580 = vmatprep.subr.mxu0 0.0
        %3581 = vmatpush1.msra.mxu0 0.0
        %3582 = vmatprep.mubr.f32.mxu0 0.0
        %v3583 = vand.u32 %v3393, 4294901760
        %3584 = vmatmul.mubr.f32.gmra.mrb[0].mxu0 %v3583
        %v3585 = vpop.f32.mrb[0].mxu0
        %v3586 = vadd.f32 %v3475, %v3585
        %v3587 = vpop.f32.mrb[0].mxu0
        %3588 = vdwg.mxu0
        %3589 = vmatprep.subr.mxu0 0.0
        %v3590 = vand.u32 %v3377, 4294901760
        %v3591 = vsub.f32 %v3377, %v3590
        %3592 = vmatpush1.msra.mxu0 %v3591
        %3593 = vmatprep.subr.mxu0 0.0
        %v3594 = vand.u32 %v3378, 4294901760
        %v3595 = vsub.f32 %v3378, %v3594
        %3596 = vmatpush1.msra.mxu0 %v3595
        %3597 = vmatprep.subr.mxu0 0.0
        %v3598 = vand.u32 %v3379, 4294901760
        %v3599 = vsub.f32 %v3379, %v3598
        %3600 = vmatpush1.msra.mxu0 %v3599
        %3601 = vmatprep.subr.mxu0 0.0
        %v3602 = vand.u32 %v3380, 4294901760
        %v3603 = vsub.f32 %v3380, %v3602
        %3604 = vmatpush1.msra.mxu0 %v3603
        %3605 = vmatprep.subr.mxu0 0.0
        %v3606 = vand.u32 %v3381, 4294901760
        %v3607 = vsub.f32 %v3381, %v3606
        %3608 = vmatpush1.msra.mxu0 %v3607
        %3609 = vmatprep.subr.mxu0 0.0
        %v3610 = vand.u32 %v3382, 4294901760
        %v3611 = vsub.f32 %v3382, %v3610
        %3612 = vmatpush1.msra.mxu0 %v3611
        %3613 = vmatprep.subr.mxu0 0.0
        %v3614 = vand.u32 %v3383, 4294901760
        %v3615 = vsub.f32 %v3383, %v3614
        %3616 = vmatpush1.msra.mxu0 %v3615
        %3617 = vmatprep.subr.mxu0 0.0
        %v3618 = vand.u32 %v3384, 4294901760
        %v3619 = vsub.f32 %v3384, %v3618
        %3620 = vmatpush1.msra.mxu0 %v3619
        %3621 = vmatprep.subr.mxu0 0.0
        %3622 = vmatpush1.msra.mxu0 0.0
        %3623 = vmatprep.subr.mxu0 0.0
        %3624 = vmatpush1.msra.mxu0 0.0
        %3625 = vmatprep.subr.mxu0 0.0
        %3626 = vmatpush1.msra.mxu0 0.0
        %3627 = vmatprep.subr.mxu0 0.0
        %3628 = vmatpush1.msra.mxu0 0.0
        %3629 = vmatprep.subr.mxu0 0.0
        %3630 = vmatpush1.msra.mxu0 0.0
        %3631 = vmatprep.subr.mxu0 0.0
        %3632 = vmatpush1.msra.mxu0 0.0
        %3633 = vmatprep.subr.mxu0 0.0
        %3634 = vmatpush1.msra.mxu0 0.0
        %3635 = vmatprep.subr.mxu0 0.0
        %3636 = vmatpush1.msra.mxu0 0.0
        %3637 = vmatprep.subr.mxu0 0.0
        %3638 = vmatpush1.msra.mxu0 0.0
        %3639 = vmatprep.subr.mxu0 0.0
        %3640 = vmatpush1.msra.mxu0 0.0
        %3641 = vmatprep.subr.mxu0 0.0
        %3642 = vmatpush1.msra.mxu0 0.0
        %3643 = vmatprep.subr.mxu0 0.0
        %3644 = vmatpush1.msra.mxu0 0.0
        %3645 = vmatprep.subr.mxu0 0.0
        %3646 = vmatpush1.msra.mxu0 0.0
        %3647 = vmatprep.subr.mxu0 0.0
        %3648 = vmatpush1.msra.mxu0 0.0
        %3649 = vmatprep.subr.mxu0 0.0
        %3650 = vmatpush1.msra.mxu0 0.0
        %3651 = vmatprep.subr.mxu0 0.0
        %3652 = vmatpush1.msra.mxu0 0.0
        %3653 = vmatprep.subr.mxu0 0.0
        %3654 = vmatpush1.msra.mxu0 0.0
        %3655 = vmatprep.subr.mxu0 0.0
        %3656 = vmatpush1.msra.mxu0 0.0
        %3657 = vmatprep.subr.mxu0 0.0
        %3658 = vmatpush1.msra.mxu0 0.0
        %3659 = vmatprep.subr.mxu0 0.0
        %3660 = vmatpush1.msra.mxu0 0.0
        %3661 = vmatprep.subr.mxu0 0.0
        %3662 = vmatpush1.msra.mxu0 0.0
        %3663 = vmatprep.subr.mxu0 0.0
        %3664 = vmatpush1.msra.mxu0 0.0
        %3665 = vmatprep.subr.mxu0 0.0
        %3666 = vmatpush1.msra.mxu0 0.0
        %3667 = vmatprep.subr.mxu0 0.0
        %3668 = vmatpush1.msra.mxu0 0.0
        %3669 = vmatprep.mubr.f32.mxu0 0.0
        %v3670 = vand.u32 %v3393, 4294901760
        %v3671 = vsub.f32 %v3393, %v3670
        %3672 = vmatmul.mubr.f32.gmra.mrb[0].mxu0 %v3671
        %v3673 = vpop.f32.mrb[0].mxu0
        %v3674 = vadd.f32 %v3586, %v3673
        %v3675 = vpop.f32.mrb[0].mxu0
        %3676 = vdwg.mxu0
        %3677 = vmatprep.subr.mxu0 0.0
        %v3678 = vand.u32 %v3377, 4294901760
        %3679 = vmatpush1.msra.mxu0 %v3678
        %3680 = vmatprep.subr.mxu0 0.0
        %v3681 = vand.u32 %v3378, 4294901760
        %3682 = vmatpush1.msra.mxu0 %v3681
        %3683 = vmatprep.subr.mxu0 0.0
        %v3684 = vand.u32 %v3379, 4294901760
        %3685 = vmatpush1.msra.mxu0 %v3684
        %3686 = vmatprep.subr.mxu0 0.0
        %v3687 = vand.u32 %v3380, 4294901760
        %3688 = vmatpush1.msra.mxu0 %v3687
        %3689 = vmatprep.subr.mxu0 0.0
        %v3690 = vand.u32 %v3381, 4294901760
        %3691 = vmatpush1.msra.mxu0 %v3690
        %3692 = vmatprep.subr.mxu0 0.0
        %v3693 = vand.u32 %v3382, 4294901760
        %3694 = vmatpush1.msra.mxu0 %v3693
        %3695 = vmatprep.subr.mxu0 0.0
        %v3696 = vand.u32 %v3383, 4294901760
        %3697 = vmatpush1.msra.mxu0 %v3696
        %3698 = vmatprep.subr.mxu0 0.0
        %v3699 = vand.u32 %v3384, 4294901760
        %3700 = vmatpush1.msra.mxu0 %v3699
        %3701 = vmatprep.subr.mxu0 0.0
        %3702 = vmatpush1.msra.mxu0 0.0
        %3703 = vmatprep.subr.mxu0 0.0
        %3704 = vmatpush1.msra.mxu0 0.0
        %3705 = vmatprep.subr.mxu0 0.0
        %3706 = vmatpush1.msra.mxu0 0.0
        %3707 = vmatprep.subr.mxu0 0.0
        %3708 = vmatpush1.msra.mxu0 0.0
        %3709 = vmatprep.subr.mxu0 0.0
        %3710 = vmatpush1.msra.mxu0 0.0
        %3711 = vmatprep.subr.mxu0 0.0
        %3712 = vmatpush1.msra.mxu0 0.0
        %3713 = vmatprep.subr.mxu0 0.0
        %3714 = vmatpush1.msra.mxu0 0.0
        %3715 = vmatprep.subr.mxu0 0.0
        %3716 = vmatpush1.msra.mxu0 0.0
        %3717 = vmatprep.subr.mxu0 0.0
        %3718 = vmatpush1.msra.mxu0 0.0
        %3719 = vmatprep.subr.mxu0 0.0
        %3720 = vmatpush1.msra.mxu0 0.0
        %3721 = vmatprep.subr.mxu0 0.0
        %3722 = vmatpush1.msra.mxu0 0.0
        %3723 = vmatprep.subr.mxu0 0.0
        %3724 = vmatpush1.msra.mxu0 0.0
        %3725 = vmatprep.subr.mxu0 0.0
        %3726 = vmatpush1.msra.mxu0 0.0
        %3727 = vmatprep.subr.mxu0 0.0
        %3728 = vmatpush1.msra.mxu0 0.0
        %3729 = vmatprep.subr.mxu0 0.0
        %3730 = vmatpush1.msra.mxu0 0.0
        %3731 = vmatprep.subr.mxu0 0.0
        %3732 = vmatpush1.msra.mxu0 0.0
        %3733 = vmatprep.subr.mxu0 0.0
        %3734 = vmatpush1.msra.mxu0 0.0
        %3735 = vmatprep.subr.mxu0 0.0
        %3736 = vmatpush1.msra.mxu0 0.0
        %3737 = vmatprep.subr.mxu0 0.0
        %3738 = vmatpush1.msra.mxu0 0.0
        %3739 = vmatprep.subr.mxu0 0.0
        %3740 = vmatpush1.msra.mxu0 0.0
        %3741 = vmatprep.subr.mxu0 0.0
        %3742 = vmatpush1.msra.mxu0 0.0
        %3743 = vmatprep.subr.mxu0 0.0
        %3744 = vmatpush1.msra.mxu0 0.0
        %3745 = vmatprep.subr.mxu0 0.0
        %3746 = vmatpush1.msra.mxu0 0.0
        %3747 = vmatprep.subr.mxu0 0.0
        %3748 = vmatpush1.msra.mxu0 0.0
        %3749 = vmatprep.mubr.f32.mxu0 0.0
        %v3750 = vand.u32 %v3393, 4294901760
        %v3751 = vsub.f32 %v3393, %v3750
        %v3752 = vand.u32 %v3751, 4294901760
        %3753 = vmatmul.mubr.f32.gmra.mrb[0].mxu0 %v3752
        %v3754 = vpop.f32.mrb[0].mxu0
        %v3755 = vadd.f32 %v3674, %v3754
        %v3756 = vpop.f32.mrb[0].mxu0
        %3757 = vdwg.mxu0
        %3758 = vmatprep.subr.mxu0 0.0
        %v3759 = vand.u32 %v3377, 4294901760
        %v3760 = vsub.f32 %v3377, %v3759
        %v3761 = vand.u32 %v3760, 4294901760
        %3762 = vmatpush1.msra.mxu0 %v3761
        %3763 = vmatprep.subr.mxu0 0.0
        %v3764 = vand.u32 %v3378, 4294901760
        %v3765 = vsub.f32 %v3378, %v3764
        %v3766 = vand.u32 %v3765, 4294901760
        %3767 = vmatpush1.msra.mxu0 %v3766
        %3768 = vmatprep.subr.mxu0 0.0
        %v3769 = vand.u32 %v3379, 4294901760
        %v3770 = vsub.f32 %v3379, %v3769
        %v3771 = vand.u32 %v3770, 4294901760
        %3772 = vmatpush1.msra.mxu0 %v3771
        %3773 = vmatprep.subr.mxu0 0.0
        %v3774 = vand.u32 %v3380, 4294901760
        %v3775 = vsub.f32 %v3380, %v3774
        %v3776 = vand.u32 %v3775, 4294901760
        %3777 = vmatpush1.msra.mxu0 %v3776
        %3778 = vmatprep.subr.mxu0 0.0
        %v3779 = vand.u32 %v3381, 4294901760
        %v3780 = vsub.f32 %v3381, %v3779
        %v3781 = vand.u32 %v3780, 4294901760
        %3782 = vmatpush1.msra.mxu0 %v3781
        %3783 = vmatprep.subr.mxu0 0.0
        %v3784 = vand.u32 %v3382, 4294901760
        %v3785 = vsub.f32 %v3382, %v3784
        %v3786 = vand.u32 %v3785, 4294901760
        %3787 = vmatpush1.msra.mxu0 %v3786
        %3788 = vmatprep.subr.mxu0 0.0
        %v3789 = vand.u32 %v3383, 4294901760
        %v3790 = vsub.f32 %v3383, %v3789
        %v3791 = vand.u32 %v3790, 4294901760
        %3792 = vmatpush1.msra.mxu0 %v3791
        %3793 = vmatprep.subr.mxu0 0.0
        %v3794 = vand.u32 %v3384, 4294901760
        %v3795 = vsub.f32 %v3384, %v3794
        %v3796 = vand.u32 %v3795, 4294901760
        %3797 = vmatpush1.msra.mxu0 %v3796
        %3798 = vmatprep.subr.mxu0 0.0
        %3799 = vmatpush1.msra.mxu0 0.0
        %3800 = vmatprep.subr.mxu0 0.0
        %3801 = vmatpush1.msra.mxu0 0.0
        %3802 = vmatprep.subr.mxu0 0.0
        %3803 = vmatpush1.msra.mxu0 0.0
        %3804 = vmatprep.subr.mxu0 0.0
        %3805 = vmatpush1.msra.mxu0 0.0
        %3806 = vmatprep.subr.mxu0 0.0
        %3807 = vmatpush1.msra.mxu0 0.0
        %3808 = vmatprep.subr.mxu0 0.0
        %3809 = vmatpush1.msra.mxu0 0.0
        %3810 = vmatprep.subr.mxu0 0.0
        %3811 = vmatpush1.msra.mxu0 0.0
        %3812 = vmatprep.subr.mxu0 0.0
        %3813 = vmatpush1.msra.mxu0 0.0
        %3814 = vmatprep.subr.mxu0 0.0
        %3815 = vmatpush1.msra.mxu0 0.0
        %3816 = vmatprep.subr.mxu0 0.0
        %3817 = vmatpush1.msra.mxu0 0.0
        %3818 = vmatprep.subr.mxu0 0.0
        %3819 = vmatpush1.msra.mxu0 0.0
        %3820 = vmatprep.subr.mxu0 0.0
        %3821 = vmatpush1.msra.mxu0 0.0
        %3822 = vmatprep.subr.mxu0 0.0
        %3823 = vmatpush1.msra.mxu0 0.0
        %3824 = vmatprep.subr.mxu0 0.0
        %3825 = vmatpush1.msra.mxu0 0.0
        %3826 = vmatprep.subr.mxu0 0.0
        %3827 = vmatpush1.msra.mxu0 0.0
        %3828 = vmatprep.subr.mxu0 0.0
        %3829 = vmatpush1.msra.mxu0 0.0
        %3830 = vmatprep.subr.mxu0 0.0
        %3831 = vmatpush1.msra.mxu0 0.0
        %3832 = vmatprep.subr.mxu0 0.0
        %3833 = vmatpush1.msra.mxu0 0.0
        %3834 = vmatprep.subr.mxu0 0.0
        %3835 = vmatpush1.msra.mxu0 0.0
        %3836 = vmatprep.subr.mxu0 0.0
        %3837 = vmatpush1.msra.mxu0 0.0
        %3838 = vmatprep.subr.mxu0 0.0
        %3839 = vmatpush1.msra.mxu0 0.0
        %3840 = vmatprep.subr.mxu0 0.0
        %3841 = vmatpush1.msra.mxu0 0.0
        %3842 = vmatprep.subr.mxu0 0.0
        %3843 = vmatpush1.msra.mxu0 0.0
        %3844 = vmatprep.subr.mxu0 0.0
        %3845 = vmatpush1.msra.mxu0 0.0
        %3846 = vmatprep.mubr.f32.mxu0 0.0
        %v3847 = vand.u32 %v3393, 4294901760
        %3848 = vmatmul.mubr.f32.gmra.mrb[0].mxu0 %v3847
        %v3849 = vpop.f32.mrb[0].mxu0
        %v3850 = vadd.f32 %v3755, %v3849
        %v3851 = vpop.f32.mrb[0].mxu0
        %3852 = vdwg.mxu0
        %3853 = vmatprep.subr.mxu0 0.0
        %v3854 = vand.u32 %v3377, 4294901760
        %3855 = vmatpush1.msra.mxu0 %v3854
        %3856 = vmatprep.subr.mxu0 0.0
        %v3857 = vand.u32 %v3378, 4294901760
        %3858 = vmatpush1.msra.mxu0 %v3857
        %3859 = vmatprep.subr.mxu0 0.0
        %v3860 = vand.u32 %v3379, 4294901760
        %3861 = vmatpush1.msra.mxu0 %v3860
        %3862 = vmatprep.subr.mxu0 0.0
        %v3863 = vand.u32 %v3380, 4294901760
        %3864 = vmatpush1.msra.mxu0 %v3863
        %3865 = vmatprep.subr.mxu0 0.0
        %v3866 = vand.u32 %v3381, 4294901760
        %3867 = vmatpush1.msra.mxu0 %v3866
        %3868 = vmatprep.subr.mxu0 0.0
        %v3869 = vand.u32 %v3382, 4294901760
        %3870 = vmatpush1.msra.mxu0 %v3869
        %3871 = vmatprep.subr.mxu0 0.0
        %v3872 = vand.u32 %v3383, 4294901760
        %3873 = vmatpush1.msra.mxu0 %v3872
        %3874 = vmatprep.subr.mxu0 0.0
        %v3875 = vand.u32 %v3384, 4294901760
        %3876 = vmatpush1.msra.mxu0 %v3875
        %3877 = vmatprep.subr.mxu0 0.0
        %3878 = vmatpush1.msra.mxu0 0.0
        %3879 = vmatprep.subr.mxu0 0.0
        %3880 = vmatpush1.msra.mxu0 0.0
        %3881 = vmatprep.subr.mxu0 0.0
        %3882 = vmatpush1.msra.mxu0 0.0
        %3883 = vmatprep.subr.mxu0 0.0
        %3884 = vmatpush1.msra.mxu0 0.0
        %3885 = vmatprep.subr.mxu0 0.0
        %3886 = vmatpush1.msra.mxu0 0.0
        %3887 = vmatprep.subr.mxu0 0.0
        %3888 = vmatpush1.msra.mxu0 0.0
        %3889 = vmatprep.subr.mxu0 0.0
        %3890 = vmatpush1.msra.mxu0 0.0
        %3891 = vmatprep.subr.mxu0 0.0
        %3892 = vmatpush1.msra.mxu0 0.0
        %3893 = vmatprep.subr.mxu0 0.0
        %3894 = vmatpush1.msra.mxu0 0.0
        %3895 = vmatprep.subr.mxu0 0.0
        %3896 = vmatpush1.msra.mxu0 0.0
        %3897 = vmatprep.subr.mxu0 0.0
        %3898 = vmatpush1.msra.mxu0 0.0
        %3899 = vmatprep.subr.mxu0 0.0
        %3900 = vmatpush1.msra.mxu0 0.0
        %3901 = vmatprep.subr.mxu0 0.0
        %3902 = vmatpush1.msra.mxu0 0.0
        %3903 = vmatprep.subr.mxu0 0.0
        %3904 = vmatpush1.msra.mxu0 0.0
        %3905 = vmatprep.subr.mxu0 0.0
        %3906 = vmatpush1.msra.mxu0 0.0
        %3907 = vmatprep.subr.mxu0 0.0
        %3908 = vmatpush1.msra.mxu0 0.0
        %3909 = vmatprep.subr.mxu0 0.0
        %3910 = vmatpush1.msra.mxu0 0.0
        %3911 = vmatprep.subr.mxu0 0.0
        %3912 = vmatpush1.msra.mxu0 0.0
        %3913 = vmatprep.subr.mxu0 0.0
        %3914 = vmatpush1.msra.mxu0 0.0
        %3915 = vmatprep.subr.mxu0 0.0
        %3916 = vmatpush1.msra.mxu0 0.0
        %3917 = vmatprep.subr.mxu0 0.0
        %3918 = vmatpush1.msra.mxu0 0.0
        %3919 = vmatprep.subr.mxu0 0.0
        %3920 = vmatpush1.msra.mxu0 0.0
        %3921 = vmatprep.subr.mxu0 0.0
        %3922 = vmatpush1.msra.mxu0 0.0
        %3923 = vmatprep.subr.mxu0 0.0
        %3924 = vmatpush1.msra.mxu0 0.0
        %3925 = vmatprep.mubr.f32.mxu0 0.0
        %v3926 = vand.u32 %v3393, 4294901760
        %3927 = vmatmul.mubr.f32.gmra.mrb[0].mxu0 %v3926
        %v3928 = vpop.f32.mrb[0].mxu0
        %v3929 = vadd.f32 %v3850, %v3928
        %v3930 = vpop.f32.mrb[0].mxu0
        %3931 = vdwg.mxu0
        %3932 = vst [vmem:[%s445] sm:$0xff] %v3929
        %s3933 = sand.u32 %s274, 1
        %s3934 = scalar_lea.sflag [#allocation4], %s3933
        %s3935 = sand.u32 %s274, 1
        %s3936 = smul.addr %s3935, 8
        %s3937 = scalar_lea.vmem [#allocation10], %s3936
        // Predicated region
        $region81: #{tpu_custom_call.1} parent=63 // pred_check
          %p3938 = pneg %p284
        $region82: #{tpu_custom_call.1} parent=63 // pred_check_branch
          %3940 = sbr.rel (%p3938) target = $region84
        $region83: #{tpu_custom_call.1} parent=63 // pred_region
          %s3942 = ssub.s32 128, 128
          %3943 = vsyncadd %s3934, %s3942
          %s3944 = smul.addr %s30, 128
          %s3945 = scalar_lea.hbm %s11, %s3944
          %s3947 = sshll.u32 %s3937, 4
          %s3948 = int_to_ptr.vmem [resolvable:$true] %s3947
          %3950 = dma.vmem_to_hbm [thread:$0]  %s3948, 128, %s3945, %s3934
        $region84: #{tpu_custom_call.1} parent=63 // pred_fallthru
          _
      $region64: #{tpu_custom_call.1} parent=5 // pred_fallthru
        _
      %p3951 = scmp.le.s32.totalorder 2, %s25
      // Predicated region
      $region85: #{tpu_custom_call.1} parent=5 // pred_check
        %p3952 = pneg %p3951
      $region86: #{tpu_custom_call.1} parent=5 // pred_check_branch
        %3954 = sbr.rel (%p3952) target = $region88
      $region87: #{tpu_custom_call.1} parent=5 // pred_region
        %s3955 = ssub.s32 %s25, 2
        // Predicated region
        $region89: #{tpu_custom_call.1} parent=87 // pred_check
          %p3956 = pneg %p290
        $region90: #{tpu_custom_call.1} parent=87 // pred_check_branch
          %3958 = sbr.rel (%p3956) target = $region92
        $region91: #{tpu_custom_call.1} parent=87 // pred_region
          %s3959 = sand.u32 %s275, 1
          %s3960 = scalar_lea.sflag [#allocation4], %s3959
          %s3961 = sand.u32 %s275, 1
          %s3962 = smul.addr %s3961, 8
          %s3963 = scalar_lea.vmem [#allocation10], %s3962
          %3964 = dma.done %s3960, 128
        $region92: #{tpu_custom_call.1} parent=87 // pred_fallthru
          _
      $region88: #{tpu_custom_call.1} parent=5 // pred_fallthru
        _
    $region6: #{tpu_custom_call.1} parent=1 // loop_footer
      %s29 = sadd.s32 1, %s25
    $region7: #{tpu_custom_call.1} parent=1 // loop_footer_branch
      %24 = sbr.rel target = $region3
    $region8: #{tpu_custom_call.1} parent=1 // loop_exit
      _
    %3965 = vsyncpa [#allocation3], 1
    %s3966 = scalar_lea.sflag [#allocation3], 1
    %3967 = vsyncpa %s3966, 1
    %3968 = vsyncpa [#allocation6], 1
    %3969 = vsyncpa [#allocation9], 1
    %3970 = vsyncpa [#allocation4], 1
    %s3971 = scalar_lea.sflag [#allocation4], 1
    %3972 = vsyncpa %s3971, 1

// kernel: tpu_custom_call.1
$region0: #{tpu_custom_call.1}
  #allocation0 [shape = 'u32[]', space=smem, size = 0x4, offset = 0x4, fixed_abs, tag = 'smem constant byte address 0x4 - core index']
  #allocation1 [shape = 'u32[144,128]{1,0:T(1,128)}', space=vmem, size = 0x12000, scoped, tag = 'internal scratch']
  %s0 = inlined_call_operand.hbm [shape: f32[16,32], index: 0, kind: input, shape index: {}]
  %s1 = inlined_call_operand.hbm [shape: f32[32,64], index: 1, kind: input, shape index: {}]
  %s2 = inlined_call_operand.vmem [shape: f32[1,64], index: 2, kind: input, shape index: {}]
  %s3 = inlined_call_operand.hbm [shape: f32[4,64,64], index: 3, kind: input, shape index: {}]
  %s4 = inlined_call_operand.vmem [shape: f32[4,1,64], index: 4, kind: input, shape index: {}]
  %s5 = inlined_call_operand.vmem [shape: f32[4,1,64], index: 5, kind: input, shape index: {}]
  %s6 = inlined_call_operand.vmem [shape: f32[4,1,64], index: 6, kind: input, shape index: {}]
  %s7 = inlined_call_operand.vmem [shape: f32[2,1,64], index: 7, kind: input, shape index: {}]
  %s8 = inlined_call_operand.vmem [shape: f32[2,1,64], index: 8, kind: input, shape index: {}]
  %s9 = inlined_call_operand.hbm [shape: f32[64,128], index: 9, kind: input, shape index: {}]
  %s10 = inlined_call_operand.vmem [shape: f32[1,128], index: 10, kind: input, shape index: {}]
  %s11 = inlined_call_operand.hbm [shape: f32[16,128], index: 11, kind: output, shape index: {}]
  %s12 = sld [smem:[#allocation0]]
  $region93: #{tpu_custom_call.1} parent=0
    _
  %s14 = ssub.s32 1, %s12
  %s15 = scalar_select 0, %s14, %s12
  $region1: #{tpu_custom_call.1} parent=0
    #allocation2 [shape = 'u8[8192]{0}', space=vmem, size = 0x2000, scoped, tag = 'input window, operand 0']
    #allocation3 [shape = 's32[2]{0}', space=sflag, size = 0x8, scoped, tag = 'scoped memory for tpu_custom_call.1']
    #allocation4 [shape = 's32[2]{0}', space=sflag, size = 0x8, scoped, tag = 'scoped memory for tpu_custom_call.1']
    #allocation5 [shape = 'u8[16384]{0}', space=vmem, size = 0x4000, scoped, tag = 'input window, operand 1, single buffered']
    #allocation6 [shape = 's32[1]{0}', space=sflag, size = 0x4, scoped, tag = 'scoped memory for tpu_custom_call.1']
    #allocation7 [shape = 'u8[131072]{0}', space=vmem, size = 0x20000, scoped, tag = 'input window, operand 3, single buffered']
    #allocation8 [shape = 'u8[32768]{0}', space=vmem, size = 0x8000, scoped, tag = 'input window, operand 9, single buffered']
    #allocation9 [shape = 's32[1]{0}', space=sflag, size = 0x4, scoped, tag = 'scoped memory for tpu_custom_call.1']
    #allocation10 [shape = 'u8[8192]{0}', space=vmem, size = 0x2000, scoped, tag = 'output window, operand 0']
    %16 = vsyncpa [#allocation3], 0
    %s17 = scalar_lea.sflag [#allocation3], 1
    %18 = vsyncpa %s17, 0
    %19 = vsyncpa [#allocation6], 0
    %20 = vsyncpa [#allocation9], 0
    %21 = vsyncpa [#allocation4], 0
    %s22 = scalar_lea.sflag [#allocation4], 1
    %23 = vsyncpa %s22, 0
    loop: start=0, step=1, limit=4
    $region2: #{tpu_custom_call.1} parent=1 // loop_pre_header
      _
    $region3: #{tpu_custom_call.1} parent=1 // loop_header
      %s25 = sphi 0, %s29
      %p26 = scmp.ge.s32.totalorder %s25, 4
      %s35 = sphi 0, %s37
      %s38 = sphi 0, %s35
      %s39 = sphi 0, %s38
      %s55 = sphi 0, %s39
      %s59 = sphi 0, %s59
      %s61 = sphi 0, %s59
      %s62 = sphi 0, %s61
      %s76 = sphi 0, %s62
      %s80 = sphi 0, %s80
      %s82 = sphi 0, %s80
      %s83 = sphi 0, %s82
      %s97 = sphi 0, %s83
      %s101 = sphi 0, %s101
      %s103 = sphi 0, %s101
      %s104 = sphi 0, %s103
      %s118 = sphi 0, %s104
      %s122 = sphi 0, %s122
      %s124 = sphi 0, %s122
      %s125 = sphi 0, %s124
      %s139 = sphi 0, %s125
      %s143 = sphi 0, %s143
      %s145 = sphi 0, %s143
      %s146 = sphi 0, %s145
      %s160 = sphi 0, %s146
      %s164 = sphi 0, %s164
      %s166 = sphi 0, %s164
      %s167 = sphi 0, %s166
      %s181 = sphi 0, %s167
      %s185 = sphi 0, %s185
      %s187 = sphi 0, %s185
      %s188 = sphi 0, %s187
      %s202 = sphi 0, %s188
      %s206 = sphi 0, %s206
      %s208 = sphi 0, %s206
      %s209 = sphi 0, %s208
      %s223 = sphi 0, %s209
      %s227 = sphi 0, %s227
      %s229 = sphi 0, %s227
      %s230 = sphi 0, %s229
      %s244 = sphi 0, %s230
      %s248 = sphi 0, %s248
      %s250 = sphi 0, %s248
      %s251 = sphi 0, %s250
      %s265 = sphi 0, %s251
      %s271 = sphi 0, %s273
      %s274 = sphi 0, %s271
      %s275 = sphi 0, %s274
      %s291 = sphi 0, %s275
    $region4: #{tpu_custom_call.1} parent=1 // loop_header_branch
      %28 = sbr.rel (%p26) target = $region8
    $region5: #{tpu_custom_call.1} parent=1 // loop_body
      %s30 = ssub.s32 %s25, 1
      %s31 = ssub.s32 %s25, 2
      %s32 = sadd.s32 %s25, 1
      %s33 = ssub.s32 %s25, %s32
      %p34 = scmp.eq.s32.totalorder %s33, 0
      %s36 = sadd.s32 %s35, 1
      %s37 = scalar_select %p34, %s35, %s36
      %p40 = pneg %p34
      %p41 = scmp.eq.s32.totalorder %s25, 1
      %p42 = por %p40, %p41
      %p43 = scmp.ne.s32.totalorder %s35, %s38
      %p44 = scmp.eq.s32.totalorder %s25, 0
      %p45 = por %p43, %p44
      %p46 = scmp.ne.s32.totalorder %s35, %s38
      %p47 = scmp.eq.s32.totalorder %s30, 1
      %p48 = por %p46, %p47
      %p49 = scmp.ne.s32.totalorder %s38, %s39
      %p50 = scmp.eq.s32.totalorder %s30, 0
      %p51 = por %p49, %p50
      %p52 = scmp.ne.s32.totalorder %s38, %s39
      %p53 = scmp.eq.s32.totalorder %s31, 1
      %p54 = por %p52, %p53
      %p56 = scmp.ne.s32.totalorder %s39, %s55
      %p57 = scmp.eq.s32.totalorder %s31, 0
      %p58 = por %p56, %p57
      %s60 = sadd.s32 %s59, 1
      %p63 = scmp.eq.s32.totalorder %s25, 1
      %p64 = scmp.ne.s32.totalorder %s59, %s61
      %p65 = scmp.eq.s32.totalorder %s25, 0
      %p66 = por %p64, %p65
      %p67 = scmp.ne.s32.totalorder %s59, %s61
      %p68 = scmp.eq.s32.totalorder %s30, 1
      %p69 = por %p67, %p68
      %p70 = scmp.ne.s32.totalorder %s61, %s62
      %p71 = scmp.eq.s32.totalorder %s30, 0
      %p72 = por %p70, %p71
      %p73 = scmp.ne.s32.totalorder %s61, %s62
      %p74 = scmp.eq.s32.totalorder %s31, 1
      %p75 = por %p73, %p74
      %p77 = scmp.ne.s32.totalorder %s62, %s76
      %p78 = scmp.eq.s32.totalorder %s31, 0
      %p79 = por %p77, %p78
      %s81 = sadd.s32 %s80, 1
      %p84 = scmp.eq.s32.totalorder %s25, 1
      %p85 = scmp.ne.s32.totalorder %s80, %s82
      %p86 = scmp.eq.s32.totalorder %s25, 0
      %p87 = por %p85, %p86
      %p88 = scmp.ne.s32.totalorder %s80, %s82
      %p89 = scmp.eq.s32.totalorder %s30, 1
      %p90 = por %p88, %p89
      %p91 = scmp.ne.s32.totalorder %s82, %s83
      %p92 = scmp.eq.s32.totalorder %s30, 0
      %p93 = por %p91, %p92
      %p94 = scmp.ne.s32.totalorder %s82, %s83
      %p95 = scmp.eq.s32.totalorder %s31, 1
      %p96 = por %p94, %p95
      %p98 = scmp.ne.s32.totalorder %s83, %s97
      %p99 = scmp.eq.s32.totalorder %s31, 0
      %p100 = por %p98, %p99
      %s102 = sadd.s32 %s101, 1
      %p105 = scmp.eq.s32.totalorder %s25, 1
      %p106 = scmp.ne.s32.totalorder %s101, %s103
      %p107 = scmp.eq.s32.totalorder %s25, 0
      %p108 = por %p106, %p107
      %p109 = scmp.ne.s32.totalorder %s101, %s103
      %p110 = scmp.eq.s32.totalorder %s30, 1
      %p111 = por %p109, %p110
      %p112 = scmp.ne.s32.totalorder %s103, %s104
      %p113 = scmp.eq.s32.totalorder %s30, 0
      %p114 = por %p112, %p113
      %p115 = scmp.ne.s32.totalorder %s103, %s104
      %p116 = scmp.eq.s32.totalorder %s31, 1
      %p117 = por %p115, %p116
      %p119 = scmp.ne.s32.totalorder %s104, %s118
      %p120 = scmp.eq.s32.totalorder %s31, 0
      %p121 = por %p119, %p120
      %s123 = sadd.s32 %s122, 1
      %p126 = scmp.eq.s32.totalorder %s25, 1
      %p127 = scmp.ne.s32.totalorder %s122, %s124
      %p128 = scmp.eq.s32.totalorder %s25, 0
      %p129 = por %p127, %p128
      %p130 = scmp.ne.s32.totalorder %s122, %s124
      %p131 = scmp.eq.s32.totalorder %s30, 1
      %p132 = por %p130, %p131
      %p133 = scmp.ne.s32.totalorder %s124, %s125
      %p134 = scmp.eq.s32.totalorder %s30, 0
      %p135 = por %p133, %p134
      %p136 = scmp.ne.s32.totalorder %s124, %s125
      %p137 = scmp.eq.s32.totalorder %s31, 1
      %p138 = por %p136, %p137
      %p140 = scmp.ne.s32.totalorder %s125, %s139
      %p141 = scmp.eq.s32.totalorder %s31, 0
      %p142 = por %p140, %p141
      %s144 = sadd.s32 %s143, 1
      %p147 = scmp.eq.s32.totalorder %s25, 1
      %p148 = scmp.ne.s32.totalorder %s143, %s145
      %p149 = scmp.eq.s32.totalorder %s25, 0
      %p150 = por %p148, %p149
      %p151 = scmp.ne.s32.totalorder %s143, %s145
      %p152 = scmp.eq.s32.totalorder %s30, 1
      %p153 = por %p151, %p152
      %p154 = scmp.ne.s32.totalorder %s145, %s146
      %p155 = scmp.eq.s32.totalorder %s30, 0
      %p156 = por %p154, %p155
      %p157 = scmp.ne.s32.totalorder %s145, %s146
      %p158 = scmp.eq.s32.totalorder %s31, 1
      %p159 = por %p157, %p158
      %p161 = scmp.ne.s32.totalorder %s146, %s160
      %p162 = scmp.eq.s32.totalorder %s31, 0
      %p163 = por %p161, %p162
      %s165 = sadd.s32 %s164, 1
      %p168 = scmp.eq.s32.totalorder %s25, 1
      %p169 = scmp.ne.s32.totalorder %s164, %s166
      %p170 = scmp.eq.s32.totalorder %s25, 0
      %p171 = por %p169, %p170
      %p172 = scmp.ne.s32.totalorder %s164, %s166
      %p173 = scmp.eq.s32.totalorder %s30, 1
      %p174 = por %p172, %p173
      %p175 = scmp.ne.s32.totalorder %s166, %s167
      %p176 = scmp.eq.s32.totalorder %s30, 0
      %p177 = por %p175, %p176
      %p178 = scmp.ne.s32.totalorder %s166, %s167
      %p179 = scmp.eq.s32.totalorder %s31, 1
      %p180 = por %p178, %p179
      %p182 = scmp.ne.s32.totalorder %s167, %s181
      %p183 = scmp.eq.s32.totalorder %s31, 0
      %p184 = por %p182, %p183
      %s186 = sadd.s32 %s185, 1
      %p189 = scmp.eq.s32.totalorder %s25, 1
      %p190 = scmp.ne.s32.totalorder %s185, %s187
      %p191 = scmp.eq.s32.totalorder %s25, 0
      %p192 = por %p190, %p191
      %p193 = scmp.ne.s32.totalorder %s185, %s187
      %p194 = scmp.eq.s32.totalorder %s30, 1
      %p195 = por %p193, %p194
      %p196 = scmp.ne.s32.totalorder %s187, %s188
      %p197 = scmp.eq.s32.totalorder %s30, 0
      %p198 = por %p196, %p197
      %p199 = scmp.ne.s32.totalorder %s187, %s188
      %p200 = scmp.eq.s32.totalorder %s31, 1
      %p201 = por %p199, %p200
      %p203 = scmp.ne.s32.totalorder %s188, %s202
      %p204 = scmp.eq.s32.totalorder %s31, 0
      %p205 = por %p203, %p204
      %s207 = sadd.s32 %s206, 1
      %p210 = scmp.eq.s32.totalorder %s25, 1
      %p211 = scmp.ne.s32.totalorder %s206, %s208
      %p212 = scmp.eq.s32.totalorder %s25, 0
      %p213 = por %p211, %p212
      %p214 = scmp.ne.s32.totalorder %s206, %s208
      %p215 = scmp.eq.s32.totalorder %s30, 1
      %p216 = por %p214, %p215
      %p217 = scmp.ne.s32.totalorder %s208, %s209
      %p218 = scmp.eq.s32.totalorder %s30, 0
      %p219 = por %p217, %p218
      %p220 = scmp.ne.s32.totalorder %s208, %s209
      %p221 = scmp.eq.s32.totalorder %s31, 1
      %p222 = por %p220, %p221
      %p224 = scmp.ne.s32.totalorder %s209, %s223
      %p225 = scmp.eq.s32.totalorder %s31, 0
      %p226 = por %p224, %p225
      %s228 = sadd.s32 %s227, 1
      %p231 = scmp.eq.s32.totalorder %s25, 1
      %p232 = scmp.ne.s32.totalorder %s227, %s229
      %p233 = scmp.eq.s32.totalorder %s25, 0
      %p234 = por %p232, %p233
      %p235 = scmp.ne.s32.totalorder %s227, %s229
      %p236 = scmp.eq.s32.totalorder %s30, 1
      %p237 = por %p235, %p236
      %p238 = scmp.ne.s32.totalorder %s229, %s230
      %p239 = scmp.eq.s32.totalorder %s30, 0
      %p240 = por %p238, %p239
      %p241 = scmp.ne.s32.totalorder %s229, %s230
      %p242 = scmp.eq.s32.totalorder %s31, 1
      %p243 = por %p241, %p242
      %p245 = scmp.ne.s32.totalorder %s230, %s244
      %p246 = scmp.eq.s32.totalorder %s31, 0
      %p247 = por %p245, %p246
      %s249 = sadd.s32 %s248, 1
      %p252 = scmp.eq.s32.totalorder %s25, 1
      %p253 = scmp.ne.s32.totalorder %s248, %s250
      %p254 = scmp.eq.s32.totalorder %s25, 0
      %p255 = por %p253, %p254
      %p256 = scmp.ne.s32.totalorder %s248, %s250
      %p257 = scmp.eq.s32.totalorder %s30, 1
      %p258 = por %p256, %p257
      %p259 = scmp.ne.s32.totalorder %s250, %s251
      %p260 = scmp.eq.s32.totalorder %s30, 0
      %p261 = por %p259, %p260
      %p262 = scmp.ne.s32.totalorder %s250, %s251
      %p263 = scmp.eq.s32.totalorder %s31, 1
      %p264 = por %p262, %p263
      %p266 = scmp.ne.s32.totalorder %s251, %s265
      %p267 = scmp.eq.s32.totalorder %s31, 0
      %p268 = por %p266, %p267
      %s269 = ssub.s32 %s25, %s32
      %p270 = scmp.eq.s32.totalorder %s269, 0
      %s272 = sadd.s32 %s271, 1
      %s273 = scalar_select %p270, %s271, %s272
      %p276 = pneg %p270
      %p277 = scmp.eq.s32.totalorder %s25, 1
      %p278 = por %p276, %p277
      %p279 = scmp.ne.s32.totalorder %s271, %s274
      %p280 = scmp.eq.s32.totalorder %s25, 0
      %p281 = por %p279, %p280
      %p282 = scmp.ne.s32.totalorder %s271, %s274
      %p283 = scmp.eq.s32.totalorder %s30, 1
      %p284 = por %p282, %p283
      %p285 = scmp.ne.s32.totalorder %s274, %s275
      %p286 = scmp.eq.s32.totalorder %s30, 0
      %p287 = por %p285, %p286
      %p288 = scmp.ne.s32.totalorder %s274, %s275
      %p289 = scmp.eq.s32.totalorder %s31, 1
      %p290 = por %p288, %p289
      %p292 = scmp.ne.s32.totalorder %s275, %s291
      %p293 = scmp.eq.s32.totalorder %s31, 0
      %p294 = por %p292, %p293
      %p295 = scmp.le.s32.totalorder 1, %s25
      %p296 = scmp.lt.s32.totalorder %s25, 3
      %p297 = pnand %p295, %p296
      %p298 = pneg %p297
      // Predicated region
      $region9: #{tpu_custom_call.1} parent=5 // pred_check
        _
      $region10: #{tpu_custom_call.1} parent=5 // pred_check_branch
        %300 = sbr.rel (%p297) target = $region12
      $region11: #{tpu_custom_call.1} parent=5 // pred_region
        %s301 = ssub.s32 %s25, 1
        // Predicated region
        $region13: #{tpu_custom_call.1} parent=11 // pred_check
          %p302 = pneg %p72
        $region14: #{tpu_custom_call.1} parent=11 // pred_check_branch
          %304 = sbr.rel (%p302) target = $region16
        $region15: #{tpu_custom_call.1} parent=11 // pred_region
          %s306 = ssub.s32 512, 512
          %307 = vsyncadd [#allocation6], %s306
          %s308 = sshll.u32 [#allocation5], 4
          %s309 = int_to_ptr.vmem [resolvable:$true] %s308
          %314 = dma.hbm_to_vmem [thread:$0]  %s1, 512, %s309, [#allocation6], 128, 128, 8
        $region16: #{tpu_custom_call.1} parent=11 // pred_fallthru
          _
        // Predicated region
        $region17: #{tpu_custom_call.1} parent=11 // pred_check
          %p315 = pneg %p93
        $region18: #{tpu_custom_call.1} parent=11 // pred_check_branch
          %317 = sbr.rel (%p315) target = $region20
        $region19: #{tpu_custom_call.1} parent=11 // pred_region
          _
        $region20: #{tpu_custom_call.1} parent=11 // pred_fallthru
          _
        // Predicated region
        $region21: #{tpu_custom_call.1} parent=11 // pred_check
          %p318 = pneg %p114
        $region22: #{tpu_custom_call.1} parent=11 // pred_check_branch
          %320 = sbr.rel (%p318) target = $region24
        $region23: #{tpu_custom_call.1} parent=11 // pred_region
          %s322 = ssub.s32 4096, 4096
          %323 = vsyncadd [#allocation6], %s322
          %s324 = sshll.u32 [#allocation7], 4
          %s325 = int_to_ptr.vmem [resolvable:$true] %s324
          %330 = dma.hbm_to_vmem [thread:$0]  %s3, 4096, %s325, [#allocation6], 128, 128, 8
        $region24: #{tpu_custom_call.1} parent=11 // pred_fallthru
          _
        // Predicated region
        $region25: #{tpu_custom_call.1} parent=11 // pred_check
          %p331 = pneg %p135
        $region26: #{tpu_custom_call.1} parent=11 // pred_check_branch
          %333 = sbr.rel (%p331) target = $region28
        $region27: #{tpu_custom_call.1} parent=11 // pred_region
          _
        $region28: #{tpu_custom_call.1} parent=11 // pred_fallthru
          _
        // Predicated region
        $region29: #{tpu_custom_call.1} parent=11 // pred_check
          %p334 = pneg %p156
        $region30: #{tpu_custom_call.1} parent=11 // pred_check_branch
          %336 = sbr.rel (%p334) target = $region32
        $region31: #{tpu_custom_call.1} parent=11 // pred_region
          _
        $region32: #{tpu_custom_call.1} parent=11 // pred_fallthru
          _
        // Predicated region
        $region33: #{tpu_custom_call.1} parent=11 // pred_check
          %p337 = pneg %p177
        $region34: #{tpu_custom_call.1} parent=11 // pred_check_branch
          %339 = sbr.rel (%p337) target = $region36
        $region35: #{tpu_custom_call.1} parent=11 // pred_region
          _
        $region36: #{tpu_custom_call.1} parent=11 // pred_fallthru
          _
        // Predicated region
        $region37: #{tpu_custom_call.1} parent=11 // pred_check
          %p340 = pneg %p198
        $region38: #{tpu_custom_call.1} parent=11 // pred_check_branch
          %342 = sbr.rel (%p340) target = $region40
        $region39: #{tpu_custom_call.1} parent=11 // pred_region
          _
        $region40: #{tpu_custom_call.1} parent=11 // pred_fallthru
          _
        // Predicated region
        $region41: #{tpu_custom_call.1} parent=11 // pred_check
          %p343 = pneg %p219
        $region42: #{tpu_custom_call.1} parent=11 // pred_check_branch
          %345 = sbr.rel (%p343) target = $region44
        $region43: #{tpu_custom_call.1} parent=11 // pred_region
          _
        $region44: #{tpu_custom_call.1} parent=11 // pred_fallthru
          _
        // Predicated region
        $region45: #{tpu_custom_call.1} parent=11 // pred_check
          %p346 = pneg %p240
        $region46: #{tpu_custom_call.1} parent=11 // pred_check_branch
          %348 = sbr.rel (%p346) target = $region48
        $region47: #{tpu_custom_call.1} parent=11 // pred_region
          %s350 = ssub.s32 1024, 1024
          %351 = vsyncadd [#allocation9], %s350
          %s352 = sshll.u32 [#allocation8], 4
          %s353 = int_to_ptr.vmem [resolvable:$true] %s352
          %358 = dma.hbm_to_vmem [thread:$0]  %s9, 1024, %s353, [#allocation9], 128, 128, 8
        $region48: #{tpu_custom_call.1} parent=11 // pred_fallthru
          _
        // Predicated region
        $region49: #{tpu_custom_call.1} parent=11 // pred_check
          %p359 = pneg %p261
        $region50: #{tpu_custom_call.1} parent=11 // pred_check_branch
          %361 = sbr.rel (%p359) target = $region52
        $region51: #{tpu_custom_call.1} parent=11 // pred_region
          _
        $region52: #{tpu_custom_call.1} parent=11 // pred_fallthru
          _
      $region12: #{tpu_custom_call.1} parent=5 // pred_fallthru
        _
      %p362 = scmp.lt.s32.totalorder %s25, 2
      // Predicated region
      $region53: #{tpu_custom_call.1} parent=5 // pred_check
        %p363 = pneg %p362
      $region54: #{tpu_custom_call.1} parent=5 // pred_check_branch
        %365 = sbr.rel (%p363) target = $region56
      $region55: #{tpu_custom_call.1} parent=5 // pred_region
        // Predicated region
        $region57: #{tpu_custom_call.1} parent=55 // pred_check
          %p366 = pneg %p45
        $region58: #{tpu_custom_call.1} parent=55 // pred_check_branch
          %368 = sbr.rel (%p366) target = $region60
        $region59: #{tpu_custom_call.1} parent=55 // pred_region
          %s369 = sand.u32 %s35, 1
          %s370 = scalar_lea.sflag [#allocation3], %s369
          %s371 = sand.u32 %s35, 1
          %s372 = smul.addr %s371, 8
          %s373 = scalar_lea.vmem [#allocation2], %s372
          %s375 = ssub.s32 128, 128
          %376 = vsyncadd %s370, %s375
          %s377 = smul.addr %s25, 128
          %s378 = scalar_lea.hbm %s0, %s377
          %s380 = sshll.u32 %s373, 4
          %s381 = int_to_ptr.vmem [resolvable:$true] %s380
          %383 = dma.hbm_to_vmem [thread:$0]  %s378, 128, %s381, %s370
        $region60: #{tpu_custom_call.1} parent=55 // pred_fallthru
          _
      $region56: #{tpu_custom_call.1} parent=5 // pred_fallthru
        _
      %p384 = scmp.le.s32.totalorder 1, %s25
      %p385 = scmp.lt.s32.totalorder %s25, 3
      %p386 = pnand %p384, %p385
      %p387 = pneg %p386
      // Predicated region
      $region61: #{tpu_custom_call.1} parent=5 // pred_check
        _
      $region62: #{tpu_custom_call.1} parent=5 // pred_check_branch
        %389 = sbr.rel (%p386) target = $region64
      $region63: #{tpu_custom_call.1} parent=5 // pred_region
        %s390 = ssub.s32 %s25, 1
        %s391 = sand.u32 %s38, 1
        %s392 = scalar_lea.sflag [#allocation3], %s391
        %s393 = sand.u32 %s38, 1
        %s394 = smul.addr %s393, 8
        %s395 = scalar_lea.vmem [#allocation2], %s394
        // Predicated region
        $region65: #{tpu_custom_call.1} parent=63 // pred_check
          %p396 = pneg %p51
        $region66: #{tpu_custom_call.1} parent=63 // pred_check_branch
          %398 = sbr.rel (%p396) target = $region68
        $region67: #{tpu_custom_call.1} parent=63 // pred_region
          %399 = dma.done %s392, 128
        $region68: #{tpu_custom_call.1} parent=63 // pred_fallthru
          _
        // Predicated region
        $region69: #{tpu_custom_call.1} parent=63 // pred_check
          %p400 = pneg %p72
        $region70: #{tpu_custom_call.1} parent=63 // pred_check_branch
          %402 = sbr.rel (%p400) target = $region72
        $region71: #{tpu_custom_call.1} parent=63 // pred_region
          %403 = dma.done [#allocation6], 512
        $region72: #{tpu_custom_call.1} parent=63 // pred_fallthru
          _
        // Predicated region
        $region73: #{tpu_custom_call.1} parent=63 // pred_check
          %p404 = pneg %p114
        $region74: #{tpu_custom_call.1} parent=63 // pred_check_branch
          %406 = sbr.rel (%p404) target = $region76
        $region75: #{tpu_custom_call.1} parent=63 // pred_region
          %407 = dma.done [#allocation6], 4096
        $region76: #{tpu_custom_call.1} parent=63 // pred_fallthru
          _
        // Predicated region
        $region77: #{tpu_custom_call.1} parent=63 // pred_check
          %p408 = pneg %p240
        $region78: #{tpu_custom_call.1} parent=63 // pred_check_branch
          %410 = sbr.rel (%p408) target = $region80
        $region79: #{tpu_custom_call.1} parent=63 // pred_region
          %411 = dma.done [#allocation9], 1024
        $region80: #{tpu_custom_call.1} parent=63 // pred_fallthru
          _
        %s412 = sand.u32 %s38, 1
        %s413 = scalar_lea.sflag [#allocation3], %s412
        %s414 = sand.u32 %s38, 1
        %s415 = smul.addr %s414, 8
        %s416 = scalar_lea.vmem [#allocation2], %s415
        %p417 = pneg %p51
        %p418 = pneg %p48
        %p419 = pneg %p72
        %p420 = pneg %p69
        %p421 = pneg %p93
        %p422 = pneg %p90
        %p423 = pneg %p114
        %p424 = pneg %p111
        %p425 = pneg %p135
        %p426 = pneg %p132
        %p427 = pneg %p156
        %p428 = pneg %p153
        %p429 = pneg %p177
        %p430 = pneg %p174
        %p431 = pneg %p198
        %p432 = pneg %p195
        %p433 = pneg %p219
        %p434 = pneg %p216
        %p435 = pneg %p240
        %p436 = pneg %p237
        %p437 = pneg %p261
        %p438 = pneg %p258
        %p439 = pneg %p287
        %p440 = pneg %p284
        %s441 = sand.u32 %s274, 1
        %s442 = scalar_lea.sflag [#allocation4], %s441
        %s443 = sand.u32 %s274, 1
        %s444 = smul.addr %s443, 8
        %s445 = scalar_lea.vmem [#allocation10], %s444
        %v446 = vld [vmem:[%s395] sm:$0xff]
        %v447 = vld [vmem:[#allocation5] sm:$0xff]
        %v448 = vld [vmem:[#allocation5 + $0x8] sm:$0xff]
        %v449 = vld [vmem:[#allocation5 + $0x10] sm:$0xff]
        %v450 = vld [vmem:[#allocation5 + $0x18] sm:$0xff]
        %v451 = vld [vmem:[%s2] sm:$0x1]
        %v453 = vlaneseq
        %v454 = vshrl.u32 %v453, 7
        %v455 = vsub.s32 0, %v454
        %v456 = vrot.slane %v451, %v455
        %vm458 = vcmask 261120
        %v460 = vsel %vm458, %v446, 0
        %462 = vmatprep.subr.mxu0 0.0
        %v463 = vand.u32 %v447, 4294901760
        %464 = vmatpush1.msra.mxu0 %v463
        %465 = vmatprep.subr.mxu0 0.0
        %v466 = vand.u32 %v448, 4294901760
        %467 = vmatpush1.msra.mxu0 %v466
        %468 = vmatprep.subr.mxu0 0.0
        %v469 = vand.u32 %v449, 4294901760
        %470 = vmatpush1.msra.mxu0 %v469
        %471 = vmatprep.subr.mxu0 0.0
        %v472 = vand.u32 %v450, 4294901760
        %473 = vmatpush1.msra.mxu0 %v472
        %474 = vmatprep.subr.mxu0 0.0
        %475 = vmatpush1.msra.mxu0 0.0
        %476 = vmatprep.subr.mxu0 0.0
        %477 = vmatpush1.msra.mxu0 0.0
        %478 = vmatprep.subr.mxu0 0.0
        %479 = vmatpush1.msra.mxu0 0.0
        %480 = vmatprep.subr.mxu0 0.0
        %481 = vmatpush1.msra.mxu0 0.0
        %482 = vmatprep.subr.mxu0 0.0
        %483 = vmatpush1.msra.mxu0 0.0
        %484 = vmatprep.subr.mxu0 0.0
        %485 = vmatpush1.msra.mxu0 0.0
        %486 = vmatprep.subr.mxu0 0.0
        %487 = vmatpush1.msra.mxu0 0.0
        %488 = vmatprep.subr.mxu0 0.0
        %489 = vmatpush1.msra.mxu0 0.0
        %490 = vmatprep.subr.mxu0 0.0
        %491 = vmatpush1.msra.mxu0 0.0
        %492 = vmatprep.subr.mxu0 0.0
        %493 = vmatpush1.msra.mxu0 0.0
        %494 = vmatprep.subr.mxu0 0.0
        %495 = vmatpush1.msra.mxu0 0.0
        %496 = vmatprep.subr.mxu0 0.0
        %497 = vmatpush1.msra.mxu0 0.0
        %498 = vmatprep.subr.mxu0 0.0
        %499 = vmatpush1.msra.mxu0 0.0
        %500 = vmatprep.subr.mxu0 0.0
        %501 = vmatpush1.msra.mxu0 0.0
        %502 = vmatprep.subr.mxu0 0.0
        %503 = vmatpush1.msra.mxu0 0.0
        %504 = vmatprep.subr.mxu0 0.0
        %505 = vmatpush1.msra.mxu0 0.0
        %506 = vmatprep.subr.mxu0 0.0
        %507 = vmatpush1.msra.mxu0 0.0
        %508 = vmatprep.subr.mxu0 0.0
        %509 = vmatpush1.msra.mxu0 0.0
        %510 = vmatprep.subr.mxu0 0.0
        %511 = vmatpush1.msra.mxu0 0.0
        %512 = vmatprep.subr.mxu0 0.0
        %513 = vmatpush1.msra.mxu0 0.0
        %514 = vmatprep.subr.mxu0 0.0
        %515 = vmatpush1.msra.mxu0 0.0
        %516 = vmatprep.subr.mxu0 0.0
        %517 = vmatpush1.msra.mxu0 0.0
        %518 = vmatprep.subr.mxu0 0.0
        %519 = vmatpush1.msra.mxu0 0.0
        %520 = vmatprep.subr.mxu0 0.0
        %521 = vmatpush1.msra.mxu0 0.0
        %522 = vmatprep.subr.mxu0 0.0
        %523 = vmatpush1.msra.mxu0 0.0
        %524 = vmatprep.subr.mxu0 0.0
        %525 = vmatpush1.msra.mxu0 0.0
        %526 = vmatprep.subr.mxu0 0.0
        %527 = vmatpush1.msra.mxu0 0.0
        %528 = vmatprep.subr.mxu0 0.0
        %529 = vmatpush1.msra.mxu0 0.0
        %530 = vmatprep.mubr.f32.mxu0 0.0
        %v531 = vand.u32 %v460, 4294901760
        %v532 = vsub.f32 %v460, %v531
        %v533 = vand.u32 %v532, 4294901760
        %v534 = vsub.f32 %v532, %v533
        %v535 = vand.u32 %v534, 4294901760
        %536 = vmatmul.mubr.f32.gmra.mrb[0].mxu0 %v535
        %v537 = vpop.f32.mrb[0].mxu0
        %v538 = vadd.f32 %v456, %v537
        %v539 = vpop.f32.mrb[0].mxu0
        %540 = vdwg.mxu0
        %541 = vmatprep.subr.mxu0 0.0
        %v542 = vand.u32 %v447, 4294901760
        %v543 = vsub.f32 %v447, %v542
        %v544 = vand.u32 %v543, 4294901760
        %v545 = vsub.f32 %v543, %v544
        %v546 = vand.u32 %v545, 4294901760
        %547 = vmatpush1.msra.mxu0 %v546
        %548 = vmatprep.subr.mxu0 0.0
        %v549 = vand.u32 %v448, 4294901760
        %v550 = vsub.f32 %v448, %v549
        %v551 = vand.u32 %v550, 4294901760
        %v552 = vsub.f32 %v550, %v551
        %v553 = vand.u32 %v552, 4294901760
        %554 = vmatpush1.msra.mxu0 %v553
        %555 = vmatprep.subr.mxu0 0.0
        %v556 = vand.u32 %v449, 4294901760
        %v557 = vsub.f32 %v449, %v556
        %v558 = vand.u32 %v557, 4294901760
        %v559 = vsub.f32 %v557, %v558
        %v560 = vand.u32 %v559, 4294901760
        %561 = vmatpush1.msra.mxu0 %v560
        %562 = vmatprep.subr.mxu0 0.0
        %v563 = vand.u32 %v450, 4294901760
        %v564 = vsub.f32 %v450, %v563
        %v565 = vand.u32 %v564, 4294901760
        %v566 = vsub.f32 %v564, %v565
        %v567 = vand.u32 %v566, 4294901760
        %568 = vmatpush1.msra.mxu0 %v567
        %569 = vmatprep.subr.mxu0 0.0
        %570 = vmatpush1.msra.mxu0 0.0
        %571 = vmatprep.subr.mxu0 0.0
        %572 = vmatpush1.msra.mxu0 0.0
        %573 = vmatprep.subr.mxu0 0.0
        %574 = vmatpush1.msra.mxu0 0.0
        %575 = vmatprep.subr.mxu0 0.0
        %576 = vmatpush1.msra.mxu0 0.0
        %577 = vmatprep.subr.mxu0 0.0
        %578 = vmatpush1.msra.mxu0 0.0
        %579 = vmatprep.subr.mxu0 0.0
        %580 = vmatpush1.msra.mxu0 0.0
        %581 = vmatprep.subr.mxu0 0.0
        %582 = vmatpush1.msra.mxu0 0.0
        %583 = vmatprep.subr.mxu0 0.0
        %584 = vmatpush1.msra.mxu0 0.0
        %585 = vmatprep.subr.mxu0 0.0
        %586 = vmatpush1.msra.mxu0 0.0
        %587 = vmatprep.subr.mxu0 0.0
        %588 = vmatpush1.msra.mxu0 0.0
        %589 = vmatprep.subr.mxu0 0.0
        %590 = vmatpush1.msra.mxu0 0.0
        %591 = vmatprep.subr.mxu0 0.0
        %592 = vmatpush1.msra.mxu0 0.0
        %593 = vmatprep.subr.mxu0 0.0
        %594 = vmatpush1.msra.mxu0 0.0
        %595 = vmatprep.subr.mxu0 0.0
        %596 = vmatpush1.msra.mxu0 0.0
        %597 = vmatprep.subr.mxu0 0.0
        %598 = vmatpush1.msra.mxu0 0.0
        %599 = vmatprep.subr.mxu0 0.0
        %600 = vmatpush1.msra.mxu0 0.0
        %601 = vmatprep.subr.mxu0 0.0
        %602 = vmatpush1.msra.mxu0 0.0
        %603 = vmatprep.subr.mxu0 0.0
        %604 = vmatpush1.msra.mxu0 0.0
        %605 = vmatprep.subr.mxu0 0.0
        %606 = vmatpush1.msra.mxu0 0.0
        %607 = vmatprep.subr.mxu0 0.0
        %608 = vmatpush1.msra.mxu0 0.0
        %609 = vmatprep.subr.mxu0 0.0
        %610 = vmatpush1.msra.mxu0 0.0
        %611 = vmatprep.subr.mxu0 0.0
        %612 = vmatpush1.msra.mxu0 0.0
        %613 = vmatprep.subr.mxu0 0.0
        %614 = vmatpush1.msra.mxu0 0.0
        %615 = vmatprep.subr.mxu0 0.0
        %616 = vmatpush1.msra.mxu0 0.0
        %617 = vmatprep.subr.mxu0 0.0
        %618 = vmatpush1.msra.mxu0 0.0
        %619 = vmatprep.subr.mxu0 0.0
        %620 = vmatpush1.msra.mxu0 0.0
        %621 = vmatprep.subr.mxu0 0.0
        %622 = vmatpush1.msra.mxu0 0.0
        %623 = vmatprep.subr.mxu0 0.0
        %624 = vmatpush1.msra.mxu0 0.0
        %625 = vmatprep.mubr.f32.mxu0 0.0
        %v626 = vand.u32 %v460, 4294901760
        %627 = vmatmul.mubr.f32.gmra.mrb[0].mxu0 %v626
        %v628 = vpop.f32.mrb[0].mxu0
        %v629 = vadd.f32 %v538, %v628
        %v630 = vpop.f32.mrb[0].mxu0
        %631 = vdwg.mxu0
        %632 = vmatprep.subr.mxu0 0.0
        %v633 = vand.u32 %v447, 4294901760
        %v634 = vsub.f32 %v447, %v633
        %635 = vmatpush1.msra.mxu0 %v634
        %636 = vmatprep.subr.mxu0 0.0
        %v637 = vand.u32 %v448, 4294901760
        %v638 = vsub.f32 %v448, %v637
        %639 = vmatpush1.msra.mxu0 %v638
        %640 = vmatprep.subr.mxu0 0.0
        %v641 = vand.u32 %v449, 4294901760
        %v642 = vsub.f32 %v449, %v641
        %643 = vmatpush1.msra.mxu0 %v642
        %644 = vmatprep.subr.mxu0 0.0
        %v645 = vand.u32 %v450, 4294901760
        %v646 = vsub.f32 %v450, %v645
        %647 = vmatpush1.msra.mxu0 %v646
        %648 = vmatprep.subr.mxu0 0.0
        %649 = vmatpush1.msra.mxu0 0.0
        %650 = vmatprep.subr.mxu0 0.0
        %651 = vmatpush1.msra.mxu0 0.0
        %652 = vmatprep.subr.mxu0 0.0
        %653 = vmatpush1.msra.mxu0 0.0
        %654 = vmatprep.subr.mxu0 0.0
        %655 = vmatpush1.msra.mxu0 0.0
        %656 = vmatprep.subr.mxu0 0.0
        %657 = vmatpush1.msra.mxu0 0.0
        %658 = vmatprep.subr.mxu0 0.0
        %659 = vmatpush1.msra.mxu0 0.0
        %660 = vmatprep.subr.mxu0 0.0
        %661 = vmatpush1.msra.mxu0 0.0
        %662 = vmatprep.subr.mxu0 0.0
        %663 = vmatpush1.msra.mxu0 0.0
        %664 = vmatprep.subr.mxu0 0.0
        %665 = vmatpush1.msra.mxu0 0.0
        %666 = vmatprep.subr.mxu0 0.0
        %667 = vmatpush1.msra.mxu0 0.0
        %668 = vmatprep.subr.mxu0 0.0
        %669 = vmatpush1.msra.mxu0 0.0
        %670 = vmatprep.subr.mxu0 0.0
        %671 = vmatpush1.msra.mxu0 0.0
        %672 = vmatprep.subr.mxu0 0.0
        %673 = vmatpush1.msra.mxu0 0.0
        %674 = vmatprep.subr.mxu0 0.0
        %675 = vmatpush1.msra.mxu0 0.0
        %676 = vmatprep.subr.mxu0 0.0
        %677 = vmatpush1.msra.mxu0 0.0
        %678 = vmatprep.subr.mxu0 0.0
        %679 = vmatpush1.msra.mxu0 0.0
        %680 = vmatprep.subr.mxu0 0.0
        %681 = vmatpush1.msra.mxu0 0.0
        %682 = vmatprep.subr.mxu0 0.0
        %683 = vmatpush1.msra.mxu0 0.0
        %684 = vmatprep.subr.mxu0 0.0
        %685 = vmatpush1.msra.mxu0 0.0
        %686 = vmatprep.subr.mxu0 0.0
        %687 = vmatpush1.msra.mxu0 0.0
        %688 = vmatprep.subr.mxu0 0.0
        %689 = vmatpush1.msra.mxu0 0.0
        %690 = vmatprep.subr.mxu0 0.0
        %691 = vmatpush1.msra.mxu0 0.0
        %692 = vmatprep.subr.mxu0 0.0
        %693 = vmatpush1.msra.mxu0 0.0
        %694 = vmatprep.subr.mxu0 0.0
        %695 = vmatpush1.msra.mxu0 0.0
        %696 = vmatprep.subr.mxu0 0.0
        %697 = vmatpush1.msra.mxu0 0.0
        %698 = vmatprep.subr.mxu0 0.0
        %699 = vmatpush1.msra.mxu0 0.0
        %700 = vmatprep.subr.mxu0 0.0
        %701 = vmatpush1.msra.mxu0 0.0
        %702 = vmatprep.subr.mxu0 0.0
        %703 = vmatpush1.msra.mxu0 0.0
        %704 = vmatprep.mubr.f32.mxu0 0.0
        %v705 = vand.u32 %v460, 4294901760
        %v706 = vsub.f32 %v460, %v705
        %707 = vmatmul.mubr.f32.gmra.mrb[0].mxu0 %v706
        %v708 = vpop.f32.mrb[0].mxu0
        %v709 = vadd.f32 %v629, %v708
        %v710 = vpop.f32.mrb[0].mxu0
        %711 = vdwg.mxu0
        %712 = vmatprep.subr.mxu0 0.0
        %v713 = vand.u32 %v447, 4294901760
        %714 = vmatpush1.msra.mxu0 %v713
        %715 = vmatprep.subr.mxu0 0.0
        %v716 = vand.u32 %v448, 4294901760
        %717 = vmatpush1.msra.mxu0 %v716
        %718 = vmatprep.subr.mxu0 0.0
        %v719 = vand.u32 %v449, 4294901760
        %720 = vmatpush1.msra.mxu0 %v719
        %721 = vmatprep.subr.mxu0 0.0
        %v722 = vand.u32 %v450, 4294901760
        %723 = vmatpush1.msra.mxu0 %v722
        %724 = vmatprep.subr.mxu0 0.0
        %725 = vmatpush1.msra.mxu0 0.0
        %726 = vmatprep.subr.mxu0 0.0
        %727 = vmatpush1.msra.mxu0 0.0
        %728 = vmatprep.subr.mxu0 0.0
        %729 = vmatpush1.msra.mxu0 0.0
        %730 = vmatprep.subr.mxu0 0.0
        %731 = vmatpush1.msra.mxu0 0.0
        %732 = vmatprep.subr.mxu0 0.0
        %733 = vmatpush1.msra.mxu0 0.0
        %734 = vmatprep.subr.mxu0 0.0
        %735 = vmatpush1.msra.mxu0 0.0
        %736 = vmatprep.subr.mxu0 0.0
        %737 = vmatpush1.msra.mxu0 0.0
        %738 = vmatprep.subr.mxu0 0.0
        %739 = vmatpush1.msra.mxu0 0.0
        %740 = vmatprep.subr.mxu0 0.0
        %741 = vmatpush1.msra.mxu0 0.0
        %742 = vmatprep.subr.mxu0 0.0
        %743 = vmatpush1.msra.mxu0 0.0
        %744 = vmatprep.subr.mxu0 0.0
        %745 = vmatpush1.msra.mxu0 0.0
        %746 = vmatprep.subr.mxu0 0.0
        %747 = vmatpush1.msra.mxu0 0.0
        %748 = vmatprep.subr.mxu0 0.0
        %749 = vmatpush1.msra.mxu0 0.0
        %750 = vmatprep.subr.mxu0 0.0
        %751 = vmatpush1.msra.mxu0 0.0
        %752 = vmatprep.subr.mxu0 0.0
        %753 = vmatpush1.msra.mxu0 0.0
        %754 = vmatprep.subr.mxu0 0.0
        %755 = vmatpush1.msra.mxu0 0.0
        %756 = vmatprep.subr.mxu0 0.0
        %757 = vmatpush1.msra.mxu0 0.0
        %758 = vmatprep.subr.mxu0 0.0
        %759 = vmatpush1.msra.mxu0 0.0
        %760 = vmatprep.subr.mxu0 0.0
        %761 = vmatpush1.msra.mxu0 0.0
        %762 = vmatprep.subr.mxu0 0.0
        %763 = vmatpush1.msra.mxu0 0.0
        %764 = vmatprep.subr.mxu0 0.0
        %765 = vmatpush1.msra.mxu0 0.0
        %766 = vmatprep.subr.mxu0 0.0
        %767 = vmatpush1.msra.mxu0 0.0
        %768 = vmatprep.subr.mxu0 0.0
        %769 = vmatpush1.msra.mxu0 0.0
        %770 = vmatprep.subr.mxu0 0.0
        %771 = vmatpush1.msra.mxu0 0.0
        %772 = vmatprep.subr.mxu0 0.0
        %773 = vmatpush1.msra.mxu0 0.0
        %774 = vmatprep.subr.mxu0 0.0
        %775 = vmatpush1.msra.mxu0 0.0
        %776 = vmatprep.subr.mxu0 0.0
        %777 = vmatpush1.msra.mxu0 0.0
        %778 = vmatprep.subr.mxu0 0.0
        %779 = vmatpush1.msra.mxu0 0.0
        %780 = vmatprep.mubr.f32.mxu0 0.0
        %v781 = vand.u32 %v460, 4294901760
        %v782 = vsub.f32 %v460, %v781
        %v783 = vand.u32 %v782, 4294901760
        %784 = vmatmul.mubr.f32.gmra.mrb[0].mxu0 %v783
        %v785 = vpop.f32.mrb[0].mxu0
        %v786 = vadd.f32 %v709, %v785
        %v787 = vpop.f32.mrb[0].mxu0
        %788 = vdwg.mxu0
        %789 = vmatprep.subr.mxu0 0.0
        %v790 = vand.u32 %v447, 4294901760
        %v791 = vsub.f32 %v447, %v790
        %v792 = vand.u32 %v791, 4294901760
        %793 = vmatpush1.msra.mxu0 %v792
        %794 = vmatprep.subr.mxu0 0.0
        %v795 = vand.u32 %v448, 4294901760
        %v796 = vsub.f32 %v448, %v795
        %v797 = vand.u32 %v796, 4294901760
        %798 = vmatpush1.msra.mxu0 %v797
        %799 = vmatprep.subr.mxu0 0.0
        %v800 = vand.u32 %v449, 4294901760
        %v801 = vsub.f32 %v449, %v800
        %v802 = vand.u32 %v801, 4294901760
        %803 = vmatpush1.msra.mxu0 %v802
        %804 = vmatprep.subr.mxu0 0.0
        %v805 = vand.u32 %v450, 4294901760
        %v806 = vsub.f32 %v450, %v805
        %v807 = vand.u32 %v806, 4294901760
        %808 = vmatpush1.msra.mxu0 %v807
        %809 = vmatprep.subr.mxu0 0.0
        %810 = vmatpush1.msra.mxu0 0.0
        %811 = vmatprep.subr.mxu0 0.0
        %812 = vmatpush1.msra.mxu0 0.0
        %813 = vmatprep.subr.mxu0 0.0
        %814 = vmatpush1.msra.mxu0 0.0
        %815 = vmatprep.subr.mxu0 0.0
        %816 = vmatpush1.msra.mxu0 0.0
        %817 = vmatprep.subr.mxu0 0.0
        %818 = vmatpush1.msra.mxu0 0.0
        %819 = vmatprep.subr.mxu0 0.0
        %820 = vmatpush1.msra.mxu0 0.0
        %821 = vmatprep.subr.mxu0 0.0
        %822 = vmatpush1.msra.mxu0 0.0
        %823 = vmatprep.subr.mxu0 0.0
        %824 = vmatpush1.msra.mxu0 0.0
        %825 = vmatprep.subr.mxu0 0.0
        %826 = vmatpush1.msra.mxu0 0.0
        %827 = vmatprep.subr.mxu0 0.0
        %828 = vmatpush1.msra.mxu0 0.0
        %829 = vmatprep.subr.mxu0 0.0
        %830 = vmatpush1.msra.mxu0 0.0
        %831 = vmatprep.subr.mxu0 0.0
        %832 = vmatpush1.msra.mxu0 0.0
        %833 = vmatprep.subr.mxu0 0.0
        %834 = vmatpush1.msra.mxu0 0.0
        %835 = vmatprep.subr.mxu0 0.0
        %836 = vmatpush1.msra.mxu0 0.0
        %837 = vmatprep.subr.mxu0 0.0
        %838 = vmatpush1.msra.mxu0 0.0
        %839 = vmatprep.subr.mxu0 0.0
        %840 = vmatpush1.msra.mxu0 0.0
        %841 = vmatprep.subr.mxu0 0.0
        %842 = vmatpush1.msra.mxu0 0.0
        %843 = vmatprep.subr.mxu0 0.0
        %844 = vmatpush1.msra.mxu0 0.0
        %845 = vmatprep.subr.mxu0 0.0
        %846 = vmatpush1.msra.mxu0 0.0
        %847 = vmatprep.subr.mxu0 0.0
        %848 = vmatpush1.msra.mxu0 0.0
        %849 = vmatprep.subr.mxu0 0.0
        %850 = vmatpush1.msra.mxu0 0.0
        %851 = vmatprep.subr.mxu0 0.0
        %852 = vmatpush1.msra.mxu0 0.0
        %853 = vmatprep.subr.mxu0 0.0
        %854 = vmatpush1.msra.mxu0 0.0
        %855 = vmatprep.subr.mxu0 0.0
        %856 = vmatpush1.msra.mxu0 0.0
        %857 = vmatprep.subr.mxu0 0.0
        %858 = vmatpush1.msra.mxu0 0.0
        %859 = vmatprep.subr.mxu0 0.0
        %860 = vmatpush1.msra.mxu0 0.0
        %861 = vmatprep.subr.mxu0 0.0
        %862 = vmatpush1.msra.mxu0 0.0
        %863 = vmatprep.subr.mxu0 0.0
        %864 = vmatpush1.msra.mxu0 0.0
        %865 = vmatprep.mubr.f32.mxu0 0.0
        %v866 = vand.u32 %v460, 4294901760
        %867 = vmatmul.mubr.f32.gmra.mrb[0].mxu0 %v866
        %v868 = vpop.f32.mrb[0].mxu0
        %v869 = vadd.f32 %v786, %v868
        %v870 = vpop.f32.mrb[0].mxu0
        %871 = vdwg.mxu0
        %872 = vmatprep.subr.mxu0 0.0
        %v873 = vand.u32 %v447, 4294901760
        %874 = vmatpush1.msra.mxu0 %v873
        %875 = vmatprep.subr.mxu0 0.0
        %v876 = vand.u32 %v448, 4294901760
        %877 = vmatpush1.msra.mxu0 %v876
        %878 = vmatprep.subr.mxu0 0.0
        %v879 = vand.u32 %v449, 4294901760
        %880 = vmatpush1.msra.mxu0 %v879
        %881 = vmatprep.subr.mxu0 0.0
        %v882 = vand.u32 %v450, 4294901760
        %883 = vmatpush1.msra.mxu0 %v882
        %884 = vmatprep.subr.mxu0 0.0
        %885 = vmatpush1.msra.mxu0 0.0
        %886 = vmatprep.subr.mxu0 0.0
        %887 = vmatpush1.msra.mxu0 0.0
        %888 = vmatprep.subr.mxu0 0.0
        %889 = vmatpush1.msra.mxu0 0.0
        %890 = vmatprep.subr.mxu0 0.0
        %891 = vmatpush1.msra.mxu0 0.0
        %892 = vmatprep.subr.mxu0 0.0
        %893 = vmatpush1.msra.mxu0 0.0
        %894 = vmatprep.subr.mxu0 0.0
        %895 = vmatpush1.msra.mxu0 0.0
        %896 = vmatprep.subr.mxu0 0.0
        %897 = vmatpush1.msra.mxu0 0.0
        %898 = vmatprep.subr.mxu0 0.0
        %899 = vmatpush1.msra.mxu0 0.0
        %900 = vmatprep.subr.mxu0 0.0
        %901 = vmatpush1.msra.mxu0 0.0
        %902 = vmatprep.subr.mxu0 0.0
        %903 = vmatpush1.msra.mxu0 0.0
        %904 = vmatprep.subr.mxu0 0.0
        %905 = vmatpush1.msra.mxu0 0.0
        %906 = vmatprep.subr.mxu0 0.0
        %907 = vmatpush1.msra.mxu0 0.0
        %908 = vmatprep.subr.mxu0 0.0
        %909 = vmatpush1.msra.mxu0 0.0
        %910 = vmatprep.subr.mxu0 0.0
        %911 = vmatpush1.msra.mxu0 0.0
        %912 = vmatprep.subr.mxu0 0.0
        %913 = vmatpush1.msra.mxu0 0.0
        %914 = vmatprep.subr.mxu0 0.0
        %915 = vmatpush1.msra.mxu0 0.0
        %916 = vmatprep.subr.mxu0 0.0
        %917 = vmatpush1.msra.mxu0 0.0
        %918 = vmatprep.subr.mxu0 0.0
        %919 = vmatpush1.msra.mxu0 0.0
        %920 = vmatprep.subr.mxu0 0.0
        %921 = vmatpush1.msra.mxu0 0.0
        %922 = vmatprep.subr.mxu0 0.0
        %923 = vmatpush1.msra.mxu0 0.0
        %924 = vmatprep.subr.mxu0 0.0
        %925 = vmatpush1.msra.mxu0 0.0
        %926 = vmatprep.subr.mxu0 0.0
        %927 = vmatpush1.msra.mxu0 0.0
        %928 = vmatprep.subr.mxu0 0.0
        %929 = vmatpush1.msra.mxu0 0.0
        %930 = vmatprep.subr.mxu0 0.0
        %931 = vmatpush1.msra.mxu0 0.0
        %932 = vmatprep.subr.mxu0 0.0
        %933 = vmatpush1.msra.mxu0 0.0
        %934 = vmatprep.subr.mxu0 0.0
        %935 = vmatpush1.msra.mxu0 0.0
        %936 = vmatprep.subr.mxu0 0.0
        %937 = vmatpush1.msra.mxu0 0.0
        %938 = vmatprep.subr.mxu0 0.0
        %939 = vmatpush1.msra.mxu0 0.0
        %940 = vmatprep.mubr.f32.mxu0 0.0
        %v941 = vand.u32 %v460, 4294901760
        %942 = vmatmul.mubr.f32.gmra.mrb[0].mxu0 %v941
        %v943 = vpop.f32.mrb[0].mxu0
        %v944 = vadd.f32 %v869, %v943
        %v945 = vpop.f32.mrb[0].mxu0
        %946 = vdwg.mxu0
        %v947 = vld [vmem:[#allocation7] sm:$0xff]
        %v948 = vld [vmem:[#allocation7 + $0x8] sm:$0xff]
        %v949 = vld [vmem:[#allocation7 + $0x10] sm:$0xff]
        %v950 = vld [vmem:[#allocation7 + $0x18] sm:$0xff]
        %v951 = vld [vmem:[#allocation7 + $0x20] sm:$0xff]
        %v952 = vld [vmem:[#allocation7 + $0x28] sm:$0xff]
        %v953 = vld [vmem:[#allocation7 + $0x30] sm:$0xff]
        %v954 = vld [vmem:[#allocation7 + $0x38] sm:$0xff]
        %v955 = vld [vmem:[%s4] sm:$0x1]
        %v957 = vlaneseq
        %v958 = vshrl.u32 %v957, 7
        %v959 = vsub.s32 0, %v958
        %v960 = vrot.slane %v955, %v959
        %vm962 = vcmask 523264
        %v964 = vsel %vm962, %v944, 0
        %966 = vmatprep.subr.mxu0 0.0
        %v967 = vand.u32 %v947, 4294901760
        %968 = vmatpush1.msra.mxu0 %v967
        %969 = vmatprep.subr.mxu0 0.0
        %v970 = vand.u32 %v948, 4294901760
        %971 = vmatpush1.msra.mxu0 %v970
        %972 = vmatprep.subr.mxu0 0.0
        %v973 = vand.u32 %v949, 4294901760
        %974 = vmatpush1.msra.mxu0 %v973
        %975 = vmatprep.subr.mxu0 0.0
        %v976 = vand.u32 %v950, 4294901760
        %977 = vmatpush1.msra.mxu0 %v976
        %978 = vmatprep.subr.mxu0 0.0
        %v979 = vand.u32 %v951, 4294901760
        %980 = vmatpush1.msra.mxu0 %v979
        %981 = vmatprep.subr.mxu0 0.0
        %v982 = vand.u32 %v952, 4294901760
        %983 = vmatpush1.msra.mxu0 %v982
        %984 = vmatprep.subr.mxu0 0.0
        %v985 = vand.u32 %v953, 4294901760
        %986 = vmatpush1.msra.mxu0 %v985
        %987 = vmatprep.subr.mxu0 0.0
        %v988 = vand.u32 %v954, 4294901760
        %989 = vmatpush1.msra.mxu0 %v988
        %990 = vmatprep.subr.mxu0 0.0
        %991 = vmatpush1.msra.mxu0 0.0
        %992 = vmatprep.subr.mxu0 0.0
        %993 = vmatpush1.msra.mxu0 0.0
        %994 = vmatprep.subr.mxu0 0.0
        %995 = vmatpush1.msra.mxu0 0.0
        %996 = vmatprep.subr.mxu0 0.0
        %997 = vmatpush1.msra.mxu0 0.0
        %998 = vmatprep.subr.mxu0 0.0
        %999 = vmatpush1.msra.mxu0 0.0
        %1000 = vmatprep.subr.mxu0 0.0
        %1001 = vmatpush1.msra.mxu0 0.0
        %1002 = vmatprep.subr.mxu0 0.0
        %1003 = vmatpush1.msra.mxu0 0.0
        %1004 = vmatprep.subr.mxu0 0.0
        %1005 = vmatpush1.msra.mxu0 0.0
        %1006 = vmatprep.subr.mxu0 0.0
        %1007 = vmatpush1.msra.mxu0 0.0
        %1008 = vmatprep.subr.mxu0 0.0
        %1009 = vmatpush1.msra.mxu0 0.0
        %1010 = vmatprep.subr.mxu0 0.0
        %1011 = vmatpush1.msra.mxu0 0.0
        %1012 = vmatprep.subr.mxu0 0.0
        %1013 = vmatpush1.msra.mxu0 0.0
        %1014 = vmatprep.subr.mxu0 0.0
        %1015 = vmatpush1.msra.mxu0 0.0
        %1016 = vmatprep.subr.mxu0 0.0
        %1017 = vmatpush1.msra.mxu0 0.0
        %1018 = vmatprep.subr.mxu0 0.0
        %1019 = vmatpush1.msra.mxu0 0.0
        %1020 = vmatprep.subr.mxu0 0.0
        %1021 = vmatpush1.msra.mxu0 0.0
        %1022 = vmatprep.subr.mxu0 0.0
        %1023 = vmatpush1.msra.mxu0 0.0
        %1024 = vmatprep.subr.mxu0 0.0
        %1025 = vmatpush1.msra.mxu0 0.0
        %1026 = vmatprep.subr.mxu0 0.0
        %1027 = vmatpush1.msra.mxu0 0.0
        %1028 = vmatprep.subr.mxu0 0.0
        %1029 = vmatpush1.msra.mxu0 0.0
        %1030 = vmatprep.subr.mxu0 0.0
        %1031 = vmatpush1.msra.mxu0 0.0
        %1032 = vmatprep.subr.mxu0 0.0
        %1033 = vmatpush1.msra.mxu0 0.0
        %1034 = vmatprep.subr.mxu0 0.0
        %1035 = vmatpush1.msra.mxu0 0.0
        %1036 = vmatprep.subr.mxu0 0.0
        %1037 = vmatpush1.msra.mxu0 0.0
        %1038 = vmatprep.mubr.f32.mxu0 0.0
        %v1039 = vand.u32 %v964, 4294901760
        %v1040 = vsub.f32 %v964, %v1039
        %v1041 = vand.u32 %v1040, 4294901760
        %v1042 = vsub.f32 %v1040, %v1041
        %v1043 = vand.u32 %v1042, 4294901760
        %1044 = vmatmul.mubr.f32.gmra.mrb[0].mxu0 %v1043
        %v1045 = vpop.f32.mrb[0].mxu0
        %v1046 = vadd.f32 %v960, %v1045
        %v1047 = vpop.f32.mrb[0].mxu0
        %1048 = vdwg.mxu0
        %1049 = vmatprep.subr.mxu0 0.0
        %v1050 = vand.u32 %v947, 4294901760
        %v1051 = vsub.f32 %v947, %v1050
        %v1052 = vand.u32 %v1051, 4294901760
        %v1053 = vsub.f32 %v1051, %v1052
        %v1054 = vand.u32 %v1053, 4294901760
        %1055 = vmatpush1.msra.mxu0 %v1054
        %1056 = vmatprep.subr.mxu0 0.0
        %v1057 = vand.u32 %v948, 4294901760
        %v1058 = vsub.f32 %v948, %v1057
        %v1059 = vand.u32 %v1058, 4294901760
        %v1060 = vsub.f32 %v1058, %v1059
        %v1061 = vand.u32 %v1060, 4294901760
        %1062 = vmatpush1.msra.mxu0 %v1061
        %1063 = vmatprep.subr.mxu0 0.0
        %v1064 = vand.u32 %v949, 4294901760
        %v1065 = vsub.f32 %v949, %v1064
        %v1066 = vand.u32 %v1065, 4294901760
        %v1067 = vsub.f32 %v1065, %v1066
        %v1068 = vand.u32 %v1067, 4294901760
        %1069 = vmatpush1.msra.mxu0 %v1068
        %1070 = vmatprep.subr.mxu0 0.0
        %v1071 = vand.u32 %v950, 4294901760
        %v1072 = vsub.f32 %v950, %v1071
        %v1073 = vand.u32 %v1072, 4294901760
        %v1074 = vsub.f32 %v1072, %v1073
        %v1075 = vand.u32 %v1074, 4294901760
        %1076 = vmatpush1.msra.mxu0 %v1075
        %1077 = vmatprep.subr.mxu0 0.0
        %v1078 = vand.u32 %v951, 4294901760
        %v1079 = vsub.f32 %v951, %v1078
        %v1080 = vand.u32 %v1079, 4294901760
        %v1081 = vsub.f32 %v1079, %v1080
        %v1082 = vand.u32 %v1081, 4294901760
        %1083 = vmatpush1.msra.mxu0 %v1082
        %1084 = vmatprep.subr.mxu0 0.0
        %v1085 = vand.u32 %v952, 4294901760
        %v1086 = vsub.f32 %v952, %v1085
        %v1087 = vand.u32 %v1086, 4294901760
        %v1088 = vsub.f32 %v1086, %v1087
        %v1089 = vand.u32 %v1088, 4294901760
        %1090 = vmatpush1.msra.mxu0 %v1089
        %1091 = vmatprep.subr.mxu0 0.0
        %v1092 = vand.u32 %v953, 4294901760
        %v1093 = vsub.f32 %v953, %v1092
        %v1094 = vand.u32 %v1093, 4294901760
        %v1095 = vsub.f32 %v1093, %v1094
        %v1096 = vand.u32 %v1095, 4294901760
        %1097 = vmatpush1.msra.mxu0 %v1096
        %1098 = vmatprep.subr.mxu0 0.0
        %v1099 = vand.u32 %v954, 4294901760
        %v1100 = vsub.f32 %v954, %v1099
        %v1101 = vand.u32 %v1100, 4294901760
        %v1102 = vsub.f32 %v1100, %v1101
        %v1103 = vand.u32 %v1102, 4294901760
        %1104 = vmatpush1.msra.mxu0 %v1103
        %1105 = vmatprep.subr.mxu0 0.0
        %1106 = vmatpush1.msra.mxu0 0.0
        %1107 = vmatprep.subr.mxu0 0.0
        %1108 = vmatpush1.msra.mxu0 0.0
        %1109 = vmatprep.subr.mxu0 0.0
        %1110 = vmatpush1.msra.mxu0 0.0
        %1111 = vmatprep.subr.mxu0 0.0
        %1112 = vmatpush1.msra.mxu0 0.0
        %1113 = vmatprep.subr.mxu0 0.0
        %1114 = vmatpush1.msra.mxu0 0.0
        %1115 = vmatprep.subr.mxu0 0.0
        %1116 = vmatpush1.msra.mxu0 0.0
        %1117 = vmatprep.subr.mxu0 0.0
        %1118 = vmatpush1.msra.mxu0 0.0
        %1119 = vmatprep.subr.mxu0 0.0
        %1120 = vmatpush1.msra.mxu0 0.0
        %1121 = vmatprep.subr.mxu0 0.0
        %1122 = vmatpush1.msra.mxu0 0.0
        %1123 = vmatprep.subr.mxu0 0.0
        %1124 = vmatpush1.msra.mxu0 0.0
        %1125 = vmatprep.subr.mxu0 0.0
        %1126 = vmatpush1.msra.mxu0 0.0
        %1127 = vmatprep.subr.mxu0 0.0
        %1128 = vmatpush1.msra.mxu0 0.0
        %1129 = vmatprep.subr.mxu0 0.0
        %1130 = vmatpush1.msra.mxu0 0.0
        %1131 = vmatprep.subr.mxu0 0.0
        %1132 = vmatpush1.msra.mxu0 0.0
        %1133 = vmatprep.subr.mxu0 0.0
        %1134 = vmatpush1.msra.mxu0 0.0
        %1135 = vmatprep.subr.mxu0 0.0
        %1136 = vmatpush1.msra.mxu0 0.0
        %1137 = vmatprep.subr.mxu0 0.0
        %1138 = vmatpush1.msra.mxu0 0.0
        %1139 = vmatprep.subr.mxu0 0.0
        %1140 = vmatpush1.msra.mxu0 0.0
        %1141 = vmatprep.subr.mxu0 0.0
        %1142 = vmatpush1.msra.mxu0 0.0
        %1143 = vmatprep.subr.mxu0 0.0
        %1144 = vmatpush1.msra.mxu0 0.0
        %1145 = vmatprep.subr.mxu0 0.0
        %1146 = vmatpush1.msra.mxu0 0.0
        %1147 = vmatprep.subr.mxu0 0.0
        %1148 = vmatpush1.msra.mxu0 0.0
        %1149 = vmatprep.subr.mxu0 0.0
        %1150 = vmatpush1.msra.mxu0 0.0
        %1151 = vmatprep.subr.mxu0 0.0
        %1152 = vmatpush1.msra.mxu0 0.0
        %1153 = vmatprep.mubr.f32.mxu0 0.0
        %v1154 = vand.u32 %v964, 4294901760
        %1155 = vmatmul.mubr.f32.gmra.mrb[0].mxu0 %v1154
        %v1156 = vpop.f32.mrb[0].mxu0
        %v1157 = vadd.f32 %v1046, %v1156
        %v1158 = vpop.f32.mrb[0].mxu0
        %1159 = vdwg.mxu0
        %1160 = vmatprep.subr.mxu0 0.0
        %v1161 = vand.u32 %v947, 4294901760
        %v1162 = vsub.f32 %v947, %v1161
        %1163 = vmatpush1.msra.mxu0 %v1162
        %1164 = vmatprep.subr.mxu0 0.0
        %v1165 = vand.u32 %v948, 4294901760
        %v1166 = vsub.f32 %v948, %v1165
        %1167 = vmatpush1.msra.mxu0 %v1166
        %1168 = vmatprep.subr.mxu0 0.0
        %v1169 = vand.u32 %v949, 4294901760
        %v1170 = vsub.f32 %v949, %v1169
        %1171 = vmatpush1.msra.mxu0 %v1170
        %1172 = vmatprep.subr.mxu0 0.0
        %v1173 = vand.u32 %v950, 4294901760
        %v1174 = vsub.f32 %v950, %v1173
        %1175 = vmatpush1.msra.mxu0 %v1174
        %1176 = vmatprep.subr.mxu0 0.0
        %v1177 = vand.u32 %v951, 4294901760
        %v1178 = vsub.f32 %v951, %v1177
        %1179 = vmatpush1.msra.mxu0 %v1178
        %1180 = vmatprep.subr.mxu0 0.0
        %v1181 = vand.u32 %v952, 4294901760
        %v1182 = vsub.f32 %v952, %v1181
        %1183 = vmatpush1.msra.mxu0 %v1182
        %1184 = vmatprep.subr.mxu0 0.0
        %v1185 = vand.u32 %v953, 4294901760
        %v1186 = vsub.f32 %v953, %v1185
        %1187 = vmatpush1.msra.mxu0 %v1186
        %1188 = vmatprep.subr.mxu0 0.0
        %v1189 = vand.u32 %v954, 4294901760
        %v1190 = vsub.f32 %v954, %v1189
        %1191 = vmatpush1.msra.mxu0 %v1190
        %1192 = vmatprep.subr.mxu0 0.0
        %1193 = vmatpush1.msra.mxu0 0.0
        %1194 = vmatprep.subr.mxu0 0.0
        %1195 = vmatpush1.msra.mxu0 0.0
        %1196 = vmatprep.subr.mxu0 0.0
        %1197 = vmatpush1.msra.mxu0 0.0
        %1198 = vmatprep.subr.mxu0 0.0
        %1199 = vmatpush1.msra.mxu0 0.0
        %1200 = vmatprep.subr.mxu0 0.0
        %1201 = vmatpush1.msra.mxu0 0.0
        %1202 = vmatprep.subr.mxu0 0.0
        %1203 = vmatpush1.msra.mxu0 0.0
        %1204 = vmatprep.subr.mxu0 0.0
        %1205 = vmatpush1.msra.mxu0 0.0
        %1206 = vmatprep.subr.mxu0 0.0
        %1207 = vmatpush1.msra.mxu0 0.0
        %1208 = vmatprep.subr.mxu0 0.0
        %1209 = vmatpush1.msra.mxu0 0.0
        %1210 = vmatprep.subr.mxu0 0.0
        %1211 = vmatpush1.msra.mxu0 0.0
        %1212 = vmatprep.subr.mxu0 0.0
        %1213 = vmatpush1.msra.mxu0 0.0
        %1214 = vmatprep.subr.mxu0 0.0
        %1215 = vmatpush1.msra.mxu0 0.0
        %1216 = vmatprep.subr.mxu0 0.0
        %1217 = vmatpush1.msra.mxu0 0.0
        %1218 = vmatprep.subr.mxu0 0.0
        %1219 = vmatpush1.msra.mxu0 0.0
        %1220 = vmatprep.subr.mxu0 0.0
        %1221 = vmatpush1.msra.mxu0 0.0
        %1222 = vmatprep.subr.mxu0 0.0
        %1223 = vmatpush1.msra.mxu0 0.0
        %1224 = vmatprep.subr.mxu0 0.0
        %1225 = vmatpush1.msra.mxu0 0.0
        %1226 = vmatprep.subr.mxu0 0.0
        %1227 = vmatpush1.msra.mxu0 0.0
        %1228 = vmatprep.subr.mxu0 0.0
        %1229 = vmatpush1.msra.mxu0 0.0
        %1230 = vmatprep.subr.mxu0 0.0
        %1231 = vmatpush1.msra.mxu0 0.0
        %1232 = vmatprep.subr.mxu0 0.0
        %1233 = vmatpush1.msra.mxu0 0.0
        %1234 = vmatprep.subr.mxu0 0.0
        %1235 = vmatpush1.msra.mxu0 0.0
        %1236 = vmatprep.subr.mxu0 0.0
        %1237 = vmatpush1.msra.mxu0 0.0
        %1238 = vmatprep.subr.mxu0 0.0
        %1239 = vmatpush1.msra.mxu0 0.0
        %1240 = vmatprep.mubr.f32.mxu0 0.0
        %v1241 = vand.u32 %v964, 4294901760
        %v1242 = vsub.f32 %v964, %v1241
        %1243 = vmatmul.mubr.f32.gmra.mrb[0].mxu0 %v1242
        %v1244 = vpop.f32.mrb[0].mxu0
        %v1245 = vadd.f32 %v1157, %v1244
        %v1246 = vpop.f32.mrb[0].mxu0
        %1247 = vdwg.mxu0
        %1248 = vmatprep.subr.mxu0 0.0
        %v1249 = vand.u32 %v947, 4294901760
        %1250 = vmatpush1.msra.mxu0 %v1249
        %1251 = vmatprep.subr.mxu0 0.0
        %v1252 = vand.u32 %v948, 4294901760
        %1253 = vmatpush1.msra.mxu0 %v1252
        %1254 = vmatprep.subr.mxu0 0.0
        %v1255 = vand.u32 %v949, 4294901760
        %1256 = vmatpush1.msra.mxu0 %v1255
        %1257 = vmatprep.subr.mxu0 0.0
        %v1258 = vand.u32 %v950, 4294901760
        %1259 = vmatpush1.msra.mxu0 %v1258
        %1260 = vmatprep.subr.mxu0 0.0
        %v1261 = vand.u32 %v951, 4294901760
        %1262 = vmatpush1.msra.mxu0 %v1261
        %1263 = vmatprep.subr.mxu0 0.0
        %v1264 = vand.u32 %v952, 4294901760
        %1265 = vmatpush1.msra.mxu0 %v1264
        %1266 = vmatprep.subr.mxu0 0.0
        %v1267 = vand.u32 %v953, 4294901760
        %1268 = vmatpush1.msra.mxu0 %v1267
        %1269 = vmatprep.subr.mxu0 0.0
        %v1270 = vand.u32 %v954, 4294901760
        %1271 = vmatpush1.msra.mxu0 %v1270
        %1272 = vmatprep.subr.mxu0 0.0
        %1273 = vmatpush1.msra.mxu0 0.0
        %1274 = vmatprep.subr.mxu0 0.0
        %1275 = vmatpush1.msra.mxu0 0.0
        %1276 = vmatprep.subr.mxu0 0.0
        %1277 = vmatpush1.msra.mxu0 0.0
        %1278 = vmatprep.subr.mxu0 0.0
        %1279 = vmatpush1.msra.mxu0 0.0
        %1280 = vmatprep.subr.mxu0 0.0
        %1281 = vmatpush1.msra.mxu0 0.0
        %1282 = vmatprep.subr.mxu0 0.0
        %1283 = vmatpush1.msra.mxu0 0.0
        %1284 = vmatprep.subr.mxu0 0.0
        %1285 = vmatpush1.msra.mxu0 0.0
        %1286 = vmatprep.subr.mxu0 0.0
        %1287 = vmatpush1.msra.mxu0 0.0
        %1288 = vmatprep.subr.mxu0 0.0
        %1289 = vmatpush1.msra.mxu0 0.0
        %1290 = vmatprep.subr.mxu0 0.0
        %1291 = vmatpush1.msra.mxu0 0.0
        %1292 = vmatprep.subr.mxu0 0.0
        %1293 = vmatpush1.msra.mxu0 0.0
        %1294 = vmatprep.subr.mxu0 0.0
        %1295 = vmatpush1.msra.mxu0 0.0
        %1296 = vmatprep.subr.mxu0 0.0
        %1297 = vmatpush1.msra.mxu0 0.0
        %1298 = vmatprep.subr.mxu0 0.0
        %1299 = vmatpush1.msra.mxu0 0.0
        %1300 = vmatprep.subr.mxu0 0.0
        %1301 = vmatpush1.msra.mxu0 0.0
        %1302 = vmatprep.subr.mxu0 0.0
        %1303 = vmatpush1.msra.mxu0 0.0
        %1304 = vmatprep.subr.mxu0 0.0
        %1305 = vmatpush1.msra.mxu0 0.0
        %1306 = vmatprep.subr.mxu0 0.0
        %1307 = vmatpush1.msra.mxu0 0.0
        %1308 = vmatprep.subr.mxu0 0.0
        %1309 = vmatpush1.msra.mxu0 0.0
        %1310 = vmatprep.subr.mxu0 0.0
        %1311 = vmatpush1.msra.mxu0 0.0
        %1312 = vmatprep.subr.mxu0 0.0
        %1313 = vmatpush1.msra.mxu0 0.0
        %1314 = vmatprep.subr.mxu0 0.0
        %1315 = vmatpush1.msra.mxu0 0.0
        %1316 = vmatprep.subr.mxu0 0.0
        %1317 = vmatpush1.msra.mxu0 0.0
        %1318 = vmatprep.subr.mxu0 0.0
        %1319 = vmatpush1.msra.mxu0 0.0
        %1320 = vmatprep.mubr.f32.mxu0 0.0
        %v1321 = vand.u32 %v964, 4294901760
        %v1322 = vsub.f32 %v964, %v1321
        %v1323 = vand.u32 %v1322, 4294901760
        %1324 = vmatmul.mubr.f32.gmra.mrb[0].mxu0 %v1323
        %v1325 = vpop.f32.mrb[0].mxu0
        %v1326 = vadd.f32 %v1245, %v1325
        %v1327 = vpop.f32.mrb[0].mxu0
        %1328 = vdwg.mxu0
        %1329 = vmatprep.subr.mxu0 0.0
        %v1330 = vand.u32 %v947, 4294901760
        %v1331 = vsub.f32 %v947, %v1330
        %v1332 = vand.u32 %v1331, 4294901760
        %1333 = vmatpush1.msra.mxu0 %v1332
        %1334 = vmatprep.subr.mxu0 0.0
        %v1335 = vand.u32 %v948, 4294901760
        %v1336 = vsub.f32 %v948, %v1335
        %v1337 = vand.u32 %v1336, 4294901760
        %1338 = vmatpush1.msra.mxu0 %v1337
        %1339 = vmatprep.subr.mxu0 0.0
        %v1340 = vand.u32 %v949, 4294901760
        %v1341 = vsub.f32 %v949, %v1340
        %v1342 = vand.u32 %v1341, 4294901760
        %1343 = vmatpush1.msra.mxu0 %v1342
        %1344 = vmatprep.subr.mxu0 0.0
        %v1345 = vand.u32 %v950, 4294901760
        %v1346 = vsub.f32 %v950, %v1345
        %v1347 = vand.u32 %v1346, 4294901760
        %1348 = vmatpush1.msra.mxu0 %v1347
        %1349 = vmatprep.subr.mxu0 0.0
        %v1350 = vand.u32 %v951, 4294901760
        %v1351 = vsub.f32 %v951, %v1350
        %v1352 = vand.u32 %v1351, 4294901760
        %1353 = vmatpush1.msra.mxu0 %v1352
        %1354 = vmatprep.subr.mxu0 0.0
        %v1355 = vand.u32 %v952, 4294901760
        %v1356 = vsub.f32 %v952, %v1355
        %v1357 = vand.u32 %v1356, 4294901760
        %1358 = vmatpush1.msra.mxu0 %v1357
        %1359 = vmatprep.subr.mxu0 0.0
        %v1360 = vand.u32 %v953, 4294901760
        %v1361 = vsub.f32 %v953, %v1360
        %v1362 = vand.u32 %v1361, 4294901760
        %1363 = vmatpush1.msra.mxu0 %v1362
        %1364 = vmatprep.subr.mxu0 0.0
        %v1365 = vand.u32 %v954, 4294901760
        %v1366 = vsub.f32 %v954, %v1365
        %v1367 = vand.u32 %v1366, 4294901760
        %1368 = vmatpush1.msra.mxu0 %v1367
        %1369 = vmatprep.subr.mxu0 0.0
        %1370 = vmatpush1.msra.mxu0 0.0
        %1371 = vmatprep.subr.mxu0 0.0
        %1372 = vmatpush1.msra.mxu0 0.0
        %1373 = vmatprep.subr.mxu0 0.0
        %1374 = vmatpush1.msra.mxu0 0.0
        %1375 = vmatprep.subr.mxu0 0.0
        %1376 = vmatpush1.msra.mxu0 0.0
        %1377 = vmatprep.subr.mxu0 0.0
        %1378 = vmatpush1.msra.mxu0 0.0
        %1379 = vmatprep.subr.mxu0 0.0
        %1380 = vmatpush1.msra.mxu0 0.0
        %1381 = vmatprep.subr.mxu0 0.0
        %1382 = vmatpush1.msra.mxu0 0.0
        %1383 = vmatprep.subr.mxu0 0.0
        %1384 = vmatpush1.msra.mxu0 0.0
        %1385 = vmatprep.subr.mxu0 0.0
        %1386 = vmatpush1.msra.mxu0 0.0
        %1387 = vmatprep.subr.mxu0 0.0
        %1388 = vmatpush1.msra.mxu0 0.0
        %1389 = vmatprep.subr.mxu0 0.0
        %1390 = vmatpush1.msra.mxu0 0.0
        %1391 = vmatprep.subr.mxu0 0.0
        %1392 = vmatpush1.msra.mxu0 0.0
        %1393 = vmatprep.subr.mxu0 0.0
        %1394 = vmatpush1.msra.mxu0 0.0
        %1395 = vmatprep.subr.mxu0 0.0
        %1396 = vmatpush1.msra.mxu0 0.0
        %1397 = vmatprep.subr.mxu0 0.0
        %1398 = vmatpush1.msra.mxu0 0.0
        %1399 = vmatprep.subr.mxu0 0.0
        %1400 = vmatpush1.msra.mxu0 0.0
        %1401 = vmatprep.subr.mxu0 0.0
        %1402 = vmatpush1.msra.mxu0 0.0
        %1403 = vmatprep.subr.mxu0 0.0
        %1404 = vmatpush1.msra.mxu0 0.0
        %1405 = vmatprep.subr.mxu0 0.0
        %1406 = vmatpush1.msra.mxu0 0.0
        %1407 = vmatprep.subr.mxu0 0.0
        %1408 = vmatpush1.msra.mxu0 0.0
        %1409 = vmatprep.subr.mxu0 0.0
        %1410 = vmatpush1.msra.mxu0 0.0
        %1411 = vmatprep.subr.mxu0 0.0
        %1412 = vmatpush1.msra.mxu0 0.0
        %1413 = vmatprep.subr.mxu0 0.0
        %1414 = vmatpush1.msra.mxu0 0.0
        %1415 = vmatprep.subr.mxu0 0.0
        %1416 = vmatpush1.msra.mxu0 0.0
        %1417 = vmatprep.mubr.f32.mxu0 0.0
        %v1418 = vand.u32 %v964, 4294901760
        %1419 = vmatmul.mubr.f32.gmra.mrb[0].mxu0 %v1418
        %v1420 = vpop.f32.mrb[0].mxu0
        %v1421 = vadd.f32 %v1326, %v1420
        %v1422 = vpop.f32.mrb[0].mxu0
        %1423 = vdwg.mxu0
        %1424 = vmatprep.subr.mxu0 0.0
        %v1425 = vand.u32 %v947, 4294901760
        %1426 = vmatpush1.msra.mxu0 %v1425
        %1427 = vmatprep.subr.mxu0 0.0
        %v1428 = vand.u32 %v948, 4294901760
        %1429 = vmatpush1.msra.mxu0 %v1428
        %1430 = vmatprep.subr.mxu0 0.0
        %v1431 = vand.u32 %v949, 4294901760
        %1432 = vmatpush1.msra.mxu0 %v1431
        %1433 = vmatprep.subr.mxu0 0.0
        %v1434 = vand.u32 %v950, 4294901760
        %1435 = vmatpush1.msra.mxu0 %v1434
        %1436 = vmatprep.subr.mxu0 0.0
        %v1437 = vand.u32 %v951, 4294901760
        %1438 = vmatpush1.msra.mxu0 %v1437
        %1439 = vmatprep.subr.mxu0 0.0
        %v1440 = vand.u32 %v952, 4294901760
        %1441 = vmatpush1.msra.mxu0 %v1440
        %1442 = vmatprep.subr.mxu0 0.0
        %v1443 = vand.u32 %v953, 4294901760
        %1444 = vmatpush1.msra.mxu0 %v1443
        %1445 = vmatprep.subr.mxu0 0.0
        %v1446 = vand.u32 %v954, 4294901760
        %1447 = vmatpush1.msra.mxu0 %v1446
        %1448 = vmatprep.subr.mxu0 0.0
        %1449 = vmatpush1.msra.mxu0 0.0
        %1450 = vmatprep.subr.mxu0 0.0
        %1451 = vmatpush1.msra.mxu0 0.0
        %1452 = vmatprep.subr.mxu0 0.0
        %1453 = vmatpush1.msra.mxu0 0.0
        %1454 = vmatprep.subr.mxu0 0.0
        %1455 = vmatpush1.msra.mxu0 0.0
        %1456 = vmatprep.subr.mxu0 0.0
        %1457 = vmatpush1.msra.mxu0 0.0
        %1458 = vmatprep.subr.mxu0 0.0
        %1459 = vmatpush1.msra.mxu0 0.0
        %1460 = vmatprep.subr.mxu0 0.0
        %1461 = vmatpush1.msra.mxu0 0.0
        %1462 = vmatprep.subr.mxu0 0.0
        %1463 = vmatpush1.msra.mxu0 0.0
        %1464 = vmatprep.subr.mxu0 0.0
        %1465 = vmatpush1.msra.mxu0 0.0
        %1466 = vmatprep.subr.mxu0 0.0
        %1467 = vmatpush1.msra.mxu0 0.0
        %1468 = vmatprep.subr.mxu0 0.0
        %1469 = vmatpush1.msra.mxu0 0.0
        %1470 = vmatprep.subr.mxu0 0.0
        %1471 = vmatpush1.msra.mxu0 0.0
        %1472 = vmatprep.subr.mxu0 0.0
        %1473 = vmatpush1.msra.mxu0 0.0
        %1474 = vmatprep.subr.mxu0 0.0
        %1475 = vmatpush1.msra.mxu0 0.0
        %1476 = vmatprep.subr.mxu0 0.0
        %1477 = vmatpush1.msra.mxu0 0.0
        %1478 = vmatprep.subr.mxu0 0.0
        %1479 = vmatpush1.msra.mxu0 0.0
        %1480 = vmatprep.subr.mxu0 0.0
        %1481 = vmatpush1.msra.mxu0 0.0
        %1482 = vmatprep.subr.mxu0 0.0
        %1483 = vmatpush1.msra.mxu0 0.0
        %1484 = vmatprep.subr.mxu0 0.0
        %1485 = vmatpush1.msra.mxu0 0.0
        %1486 = vmatprep.subr.mxu0 0.0
        %1487 = vmatpush1.msra.mxu0 0.0
        %1488 = vmatprep.subr.mxu0 0.0
        %1489 = vmatpush1.msra.mxu0 0.0
        %1490 = vmatprep.subr.mxu0 0.0
        %1491 = vmatpush1.msra.mxu0 0.0
        %1492 = vmatprep.subr.mxu0 0.0
        %1493 = vmatpush1.msra.mxu0 0.0
        %1494 = vmatprep.subr.mxu0 0.0
        %1495 = vmatpush1.msra.mxu0 0.0
        %1496 = vmatprep.mubr.f32.mxu0 0.0
        %v1497 = vand.u32 %v964, 4294901760
        %1498 = vmatmul.mubr.f32.gmra.mrb[0].mxu0 %v1497
        %v1499 = vpop.f32.mrb[0].mxu0
        %v1500 = vadd.f32 %v1421, %v1499
        %v1501 = vpop.f32.mrb[0].mxu0
        %1502 = vdwg.mxu0
        %v1503 = vtanh.pop %v1500
        %v1504 = vld [vmem:[%s5] sm:$0x1]
        %v1505 = vld [vmem:[%s6] sm:$0x1]
        %v1506 = vsel %vm962, %v1503, 0.0
        %1507 = vadd.xlane.f32.xlu0 %v1506
        %v1508 = vpop.xlane.xlu0 %1507
        %v1509 = vrcp.pop 64.0
        %v1510 = vmul.f32 %v1508, %v1509
        %v1511 = vmul.f32 %v1503, %v1503
        %v1512 = vsel %vm962, %v1511, 0.0
        %1513 = vadd.xlane.f32.xlu0 %v1512
        %v1514 = vpop.xlane.xlu0 %1513
        %v1515 = vmul.f32 %v1514, %v1509
        %v1516 = vmul.f32 %v1510, %v1510
        %v1517 = vsub.f32 %v1515, %v1516
        %v1518 = vadd.f32 %v1517, 1e-05
        %v1519 = vrsqrt.pop %v1518
        %v1520 = vsub.f32 %v1503, %v1510
        %v1521 = vmul.f32 %v1520, %v1519
        %v1523 = vlaneseq
        %v1524 = vshrl.u32 %v1523, 7
        %v1525 = vsub.s32 0, %v1524
        %v1526 = vrot.slane %v1504, %v1525
        %v1528 = vmul.f32 %v1521, %v1526
        %v1530 = vlaneseq
        %v1531 = vshrl.u32 %v1530, 7
        %v1532 = vsub.s32 0, %v1531
        %v1533 = vrot.slane %v1505, %v1532
        %v1535 = vadd.f32 %v1528, %v1533
        %s1536 = scalar_lea.vmem [#allocation7], 64
        %v1537 = vld [vmem:[%s1536] sm:$0xff]
        %v1538 = vld [vmem:[%s1536 + $0x8] sm:$0xff]
        %v1539 = vld [vmem:[%s1536 + $0x10] sm:$0xff]
        %v1540 = vld [vmem:[%s1536 + $0x18] sm:$0xff]
        %v1541 = vld [vmem:[%s1536 + $0x20] sm:$0xff]
        %v1542 = vld [vmem:[%s1536 + $0x28] sm:$0xff]
        %v1543 = vld [vmem:[%s1536 + $0x30] sm:$0xff]
        %v1544 = vld [vmem:[%s1536 + $0x38] sm:$0xff]
        %s1545 = scalar_lea.vmem %s4, 1
        %v1546 = vld [vmem:[%s1545] sm:$0x1]
        %v1548 = vlaneseq
        %v1549 = vshrl.u32 %v1548, 7
        %v1550 = vsub.s32 0, %v1549
        %v1551 = vrot.slane %v1546, %v1550
        %v1554 = vsel %vm962, %v1535, 0
        %1556 = vmatprep.subr.mxu0 0.0
        %v1557 = vand.u32 %v1537, 4294901760
        %1558 = vmatpush1.msra.mxu0 %v1557
        %1559 = vmatprep.subr.mxu0 0.0
        %v1560 = vand.u32 %v1538, 4294901760
        %1561 = vmatpush1.msra.mxu0 %v1560
        %1562 = vmatprep.subr.mxu0 0.0
        %v1563 = vand.u32 %v1539, 4294901760
        %1564 = vmatpush1.msra.mxu0 %v1563
        %1565 = vmatprep.subr.mxu0 0.0
        %v1566 = vand.u32 %v1540, 4294901760
        %1567 = vmatpush1.msra.mxu0 %v1566
        %1568 = vmatprep.subr.mxu0 0.0
        %v1569 = vand.u32 %v1541, 4294901760
        %1570 = vmatpush1.msra.mxu0 %v1569
        %1571 = vmatprep.subr.mxu0 0.0
        %v1572 = vand.u32 %v1542, 4294901760
        %1573 = vmatpush1.msra.mxu0 %v1572
        %1574 = vmatprep.subr.mxu0 0.0
        %v1575 = vand.u32 %v1543, 4294901760
        %1576 = vmatpush1.msra.mxu0 %v1575
        %1577 = vmatprep.subr.mxu0 0.0
        %v1578 = vand.u32 %v1544, 4294901760
        %1579 = vmatpush1.msra.mxu0 %v1578
        %1580 = vmatprep.subr.mxu0 0.0
        %1581 = vmatpush1.msra.mxu0 0.0
        %1582 = vmatprep.subr.mxu0 0.0
        %1583 = vmatpush1.msra.mxu0 0.0
        %1584 = vmatprep.subr.mxu0 0.0
        %1585 = vmatpush1.msra.mxu0 0.0
        %1586 = vmatprep.subr.mxu0 0.0
        %1587 = vmatpush1.msra.mxu0 0.0
        %1588 = vmatprep.subr.mxu0 0.0
        %1589 = vmatpush1.msra.mxu0 0.0
        %1590 = vmatprep.subr.mxu0 0.0
        %1591 = vmatpush1.msra.mxu0 0.0
        %1592 = vmatprep.subr.mxu0 0.0
        %1593 = vmatpush1.msra.mxu0 0.0
        %1594 = vmatprep.subr.mxu0 0.0
        %1595 = vmatpush1.msra.mxu0 0.0
        %1596 = vmatprep.subr.mxu0 0.0
        %1597 = vmatpush1.msra.mxu0 0.0
        %1598 = vmatprep.subr.mxu0 0.0
        %1599 = vmatpush1.msra.mxu0 0.0
        %1600 = vmatprep.subr.mxu0 0.0
        %1601 = vmatpush1.msra.mxu0 0.0
        %1602 = vmatprep.subr.mxu0 0.0
        %1603 = vmatpush1.msra.mxu0 0.0
        %1604 = vmatprep.subr.mxu0 0.0
        %1605 = vmatpush1.msra.mxu0 0.0
        %1606 = vmatprep.subr.mxu0 0.0
        %1607 = vmatpush1.msra.mxu0 0.0
        %1608 = vmatprep.subr.mxu0 0.0
        %1609 = vmatpush1.msra.mxu0 0.0
        %1610 = vmatprep.subr.mxu0 0.0
        %1611 = vmatpush1.msra.mxu0 0.0
        %1612 = vmatprep.subr.mxu0 0.0
        %1613 = vmatpush1.msra.mxu0 0.0
        %1614 = vmatprep.subr.mxu0 0.0
        %1615 = vmatpush1.msra.mxu0 0.0
        %1616 = vmatprep.subr.mxu0 0.0
        %1617 = vmatpush1.msra.mxu0 0.0
        %1618 = vmatprep.subr.mxu0 0.0
        %1619 = vmatpush1.msra.mxu0 0.0
        %1620 = vmatprep.subr.mxu0 0.0
        %1621 = vmatpush1.msra.mxu0 0.0
        %1622 = vmatprep.subr.mxu0 0.0
        %1623 = vmatpush1.msra.mxu0 0.0
        %1624 = vmatprep.subr.mxu0 0.0
        %1625 = vmatpush1.msra.mxu0 0.0
        %1626 = vmatprep.subr.mxu0 0.0
        %1627 = vmatpush1.msra.mxu0 0.0
        %1628 = vmatprep.mubr.f32.mxu0 0.0
        %v1629 = vand.u32 %v1554, 4294901760
        %v1630 = vsub.f32 %v1554, %v1629
        %v1631 = vand.u32 %v1630, 4294901760
        %v1632 = vsub.f32 %v1630, %v1631
        %v1633 = vand.u32 %v1632, 4294901760
        %1634 = vmatmul.mubr.f32.gmra.mrb[0].mxu0 %v1633
        %v1635 = vpop.f32.mrb[0].mxu0
        %v1636 = vadd.f32 %v1551, %v1635
        %v1637 = vpop.f32.mrb[0].mxu0
        %1638 = vdwg.mxu0
        %1639 = vmatprep.subr.mxu0 0.0
        %v1640 = vand.u32 %v1537, 4294901760
        %v1641 = vsub.f32 %v1537, %v1640
        %v1642 = vand.u32 %v1641, 4294901760
        %v1643 = vsub.f32 %v1641, %v1642
        %v1644 = vand.u32 %v1643, 4294901760
        %1645 = vmatpush1.msra.mxu0 %v1644
        %1646 = vmatprep.subr.mxu0 0.0
        %v1647 = vand.u32 %v1538, 4294901760
        %v1648 = vsub.f32 %v1538, %v1647
        %v1649 = vand.u32 %v1648, 4294901760
        %v1650 = vsub.f32 %v1648, %v1649
        %v1651 = vand.u32 %v1650, 4294901760
        %1652 = vmatpush1.msra.mxu0 %v1651
        %1653 = vmatprep.subr.mxu0 0.0
        %v1654 = vand.u32 %v1539, 4294901760
        %v1655 = vsub.f32 %v1539, %v1654
        %v1656 = vand.u32 %v1655, 4294901760
        %v1657 = vsub.f32 %v1655, %v1656
        %v1658 = vand.u32 %v1657, 4294901760
        %1659 = vmatpush1.msra.mxu0 %v1658
        %1660 = vmatprep.subr.mxu0 0.0
        %v1661 = vand.u32 %v1540, 4294901760
        %v1662 = vsub.f32 %v1540, %v1661
        %v1663 = vand.u32 %v1662, 4294901760
        %v1664 = vsub.f32 %v1662, %v1663
        %v1665 = vand.u32 %v1664, 4294901760
        %1666 = vmatpush1.msra.mxu0 %v1665
        %1667 = vmatprep.subr.mxu0 0.0
        %v1668 = vand.u32 %v1541, 4294901760
        %v1669 = vsub.f32 %v1541, %v1668
        %v1670 = vand.u32 %v1669, 4294901760
        %v1671 = vsub.f32 %v1669, %v1670
        %v1672 = vand.u32 %v1671, 4294901760
        %1673 = vmatpush1.msra.mxu0 %v1672
        %1674 = vmatprep.subr.mxu0 0.0
        %v1675 = vand.u32 %v1542, 4294901760
        %v1676 = vsub.f32 %v1542, %v1675
        %v1677 = vand.u32 %v1676, 4294901760
        %v1678 = vsub.f32 %v1676, %v1677
        %v1679 = vand.u32 %v1678, 4294901760
        %1680 = vmatpush1.msra.mxu0 %v1679
        %1681 = vmatprep.subr.mxu0 0.0
        %v1682 = vand.u32 %v1543, 4294901760
        %v1683 = vsub.f32 %v1543, %v1682
        %v1684 = vand.u32 %v1683, 4294901760
        %v1685 = vsub.f32 %v1683, %v1684
        %v1686 = vand.u32 %v1685, 4294901760
        %1687 = vmatpush1.msra.mxu0 %v1686
        %1688 = vmatprep.subr.mxu0 0.0
        %v1689 = vand.u32 %v1544, 4294901760
        %v1690 = vsub.f32 %v1544, %v1689
        %v1691 = vand.u32 %v1690, 4294901760
        %v1692 = vsub.f32 %v1690, %v1691
        %v1693 = vand.u32 %v1692, 4294901760
        %1694 = vmatpush1.msra.mxu0 %v1693
        %1695 = vmatprep.subr.mxu0 0.0
        %1696 = vmatpush1.msra.mxu0 0.0
        %1697 = vmatprep.subr.mxu0 0.0
        %1698 = vmatpush1.msra.mxu0 0.0
        %1699 = vmatprep.subr.mxu0 0.0
        %1700 = vmatpush1.msra.mxu0 0.0
        %1701 = vmatprep.subr.mxu0 0.0
        %1702 = vmatpush1.msra.mxu0 0.0
        %1703 = vmatprep.subr.mxu0 0.0
        %1704 = vmatpush1.msra.mxu0 0.0
        %1705 = vmatprep.subr.mxu0 0.0
        %1706 = vmatpush1.msra.mxu0 0.0
        %1707 = vmatprep.subr.mxu0 0.0
        %1708 = vmatpush1.msra.mxu0 0.0
        %1709 = vmatprep.subr.mxu0 0.0
        %1710 = vmatpush1.msra.mxu0 0.0
        %1711 = vmatprep.subr.mxu0 0.0
        %1712 = vmatpush1.msra.mxu0 0.0
        %1713 = vmatprep.subr.mxu0 0.0
        %1714 = vmatpush1.msra.mxu0 0.0
        %1715 = vmatprep.subr.mxu0 0.0
        %1716 = vmatpush1.msra.mxu0 0.0
        %1717 = vmatprep.subr.mxu0 0.0
        %1718 = vmatpush1.msra.mxu0 0.0
        %1719 = vmatprep.subr.mxu0 0.0
        %1720 = vmatpush1.msra.mxu0 0.0
        %1721 = vmatprep.subr.mxu0 0.0
        %1722 = vmatpush1.msra.mxu0 0.0
        %1723 = vmatprep.subr.mxu0 0.0
        %1724 = vmatpush1.msra.mxu0 0.0
        %1725 = vmatprep.subr.mxu0 0.0
        %1726 = vmatpush1.msra.mxu0 0.0
        %1727 = vmatprep.subr.mxu0 0.0
        %1728 = vmatpush1.msra.mxu0 0.0
        %1729 = vmatprep.subr.mxu0 0.0
        %1730 = vmatpush1.msra.mxu0 0.0
        %1731 = vmatprep.subr.mxu0 0.0
        %1732 = vmatpush1.msra.mxu0 0.0
        %1733 = vmatprep.subr.mxu0 0.0
        %1734 = vmatpush1.msra.mxu0 0.0
        %1735 = vmatprep.subr.mxu0 0.0
        %1736 = vmatpush1.msra.mxu0 0.0
        %1737 = vmatprep.subr.mxu0 0.0
        %1738 = vmatpush1.msra.mxu0 0.0
        %1739 = vmatprep.subr.mxu0 0.0
        %1740 = vmatpush1.msra.mxu0 0.0
        %1741 = vmatprep.subr.mxu0 0.0
        %1742 = vmatpush1.msra.mxu0 0.0
        %1743 = vmatprep.mubr.f32.mxu0 0.0
        %v1744 = vand.u32 %v1554, 4294901760
        %1745 = vmatmul.mubr.f32.gmra.mrb[0].mxu0 %v1744
        %v1746 = vpop.f32.mrb[0].mxu0
        %v1747 = vadd.f32 %v1636, %v1746
        %v1748 = vpop.f32.mrb[0].mxu0
        %1749 = vdwg.mxu0
        %1750 = vmatprep.subr.mxu0 0.0
        %v1751 = vand.u32 %v1537, 4294901760
        %v1752 = vsub.f32 %v1537, %v1751
        %1753 = vmatpush1.msra.mxu0 %v1752
        %1754 = vmatprep.subr.mxu0 0.0
        %v1755 = vand.u32 %v1538, 4294901760
        %v1756 = vsub.f32 %v1538, %v1755
        %1757 = vmatpush1.msra.mxu0 %v1756
        %1758 = vmatprep.subr.mxu0 0.0
        %v1759 = vand.u32 %v1539, 4294901760
        %v1760 = vsub.f32 %v1539, %v1759
        %1761 = vmatpush1.msra.mxu0 %v1760
        %1762 = vmatprep.subr.mxu0 0.0
        %v1763 = vand.u32 %v1540, 4294901760
        %v1764 = vsub.f32 %v1540, %v1763
        %1765 = vmatpush1.msra.mxu0 %v1764
        %1766 = vmatprep.subr.mxu0 0.0
        %v1767 = vand.u32 %v1541, 4294901760
        %v1768 = vsub.f32 %v1541, %v1767
        %1769 = vmatpush1.msra.mxu0 %v1768
        %1770 = vmatprep.subr.mxu0 0.0
        %v1771 = vand.u32 %v1542, 4294901760
        %v1772 = vsub.f32 %v1542, %v1771
        %1773 = vmatpush1.msra.mxu0 %v1772
        %1774 = vmatprep.subr.mxu0 0.0
        %v1775 = vand.u32 %v1543, 4294901760
        %v1776 = vsub.f32 %v1543, %v1775
        %1777 = vmatpush1.msra.mxu0 %v1776
        %1778 = vmatprep.subr.mxu0 0.0
        %v1779 = vand.u32 %v1544, 4294901760
        %v1780 = vsub.f32 %v1544, %v1779
        %1781 = vmatpush1.msra.mxu0 %v1780
        %1782 = vmatprep.subr.mxu0 0.0
        %1783 = vmatpush1.msra.mxu0 0.0
        %1784 = vmatprep.subr.mxu0 0.0
        %1785 = vmatpush1.msra.mxu0 0.0
        %1786 = vmatprep.subr.mxu0 0.0
        %1787 = vmatpush1.msra.mxu0 0.0
        %1788 = vmatprep.subr.mxu0 0.0
        %1789 = vmatpush1.msra.mxu0 0.0
        %1790 = vmatprep.subr.mxu0 0.0
        %1791 = vmatpush1.msra.mxu0 0.0
        %1792 = vmatprep.subr.mxu0 0.0
        %1793 = vmatpush1.msra.mxu0 0.0
        %1794 = vmatprep.subr.mxu0 0.0
        %1795 = vmatpush1.msra.mxu0 0.0
        %1796 = vmatprep.subr.mxu0 0.0
        %1797 = vmatpush1.msra.mxu0 0.0
        %1798 = vmatprep.subr.mxu0 0.0
        %1799 = vmatpush1.msra.mxu0 0.0
        %1800 = vmatprep.subr.mxu0 0.0
        %1801 = vmatpush1.msra.mxu0 0.0
        %1802 = vmatprep.subr.mxu0 0.0
        %1803 = vmatpush1.msra.mxu0 0.0
        %1804 = vmatprep.subr.mxu0 0.0
        %1805 = vmatpush1.msra.mxu0 0.0
        %1806 = vmatprep.subr.mxu0 0.0
        %1807 = vmatpush1.msra.mxu0 0.0
        %1808 = vmatprep.subr.mxu0 0.0
        %1809 = vmatpush1.msra.mxu0 0.0
        %1810 = vmatprep.subr.mxu0 0.0
        %1811 = vmatpush1.msra.mxu0 0.0
        %1812 = vmatprep.subr.mxu0 0.0
        %1813 = vmatpush1.msra.mxu0 0.0
        %1814 = vmatprep.subr.mxu0 0.0
        %1815 = vmatpush1.msra.mxu0 0.0
        %1816 = vmatprep.subr.mxu0 0.0
        %1817 = vmatpush1.msra.mxu0 0.0
        %1818 = vmatprep.subr.mxu0 0.0
        %1819 = vmatpush1.msra.mxu0 0.0
        %1820 = vmatprep.subr.mxu0 0.0
        %1821 = vmatpush1.msra.mxu0 0.0
        %1822 = vmatprep.subr.mxu0 0.0
        %1823 = vmatpush1.msra.mxu0 0.0
        %1824 = vmatprep.subr.mxu0 0.0
        %1825 = vmatpush1.msra.mxu0 0.0
        %1826 = vmatprep.subr.mxu0 0.0
        %1827 = vmatpush1.msra.mxu0 0.0
        %1828 = vmatprep.subr.mxu0 0.0
        %1829 = vmatpush1.msra.mxu0 0.0
        %1830 = vmatprep.mubr.f32.mxu0 0.0
        %v1831 = vand.u32 %v1554, 4294901760
        %v1832 = vsub.f32 %v1554, %v1831
        %1833 = vmatmul.mubr.f32.gmra.mrb[0].mxu0 %v1832
        %v1834 = vpop.f32.mrb[0].mxu0
        %v1835 = vadd.f32 %v1747, %v1834
        %v1836 = vpop.f32.mrb[0].mxu0
        %1837 = vdwg.mxu0
        %1838 = vmatprep.subr.mxu0 0.0
        %v1839 = vand.u32 %v1537, 4294901760
        %1840 = vmatpush1.msra.mxu0 %v1839
        %1841 = vmatprep.subr.mxu0 0.0
        %v1842 = vand.u32 %v1538, 4294901760
        %1843 = vmatpush1.msra.mxu0 %v1842
        %1844 = vmatprep.subr.mxu0 0.0
        %v1845 = vand.u32 %v1539, 4294901760
        %1846 = vmatpush1.msra.mxu0 %v1845
        %1847 = vmatprep.subr.mxu0 0.0
        %v1848 = vand.u32 %v1540, 4294901760
        %1849 = vmatpush1.msra.mxu0 %v1848
        %1850 = vmatprep.subr.mxu0 0.0
        %v1851 = vand.u32 %v1541, 4294901760
        %1852 = vmatpush1.msra.mxu0 %v1851
        %1853 = vmatprep.subr.mxu0 0.0
        %v1854 = vand.u32 %v1542, 4294901760
        %1855 = vmatpush1.msra.mxu0 %v1854
        %1856 = vmatprep.subr.mxu0 0.0
        %v1857 = vand.u32 %v1543, 4294901760
        %1858 = vmatpush1.msra.mxu0 %v1857
        %1859 = vmatprep.subr.mxu0 0.0
        %v1860 = vand.u32 %v1544, 4294901760
        %1861 = vmatpush1.msra.mxu0 %v1860
        %1862 = vmatprep.subr.mxu0 0.0
        %1863 = vmatpush1.msra.mxu0 0.0
        %1864 = vmatprep.subr.mxu0 0.0
        %1865 = vmatpush1.msra.mxu0 0.0
        %1866 = vmatprep.subr.mxu0 0.0
        %1867 = vmatpush1.msra.mxu0 0.0
        %1868 = vmatprep.subr.mxu0 0.0
        %1869 = vmatpush1.msra.mxu0 0.0
        %1870 = vmatprep.subr.mxu0 0.0
        %1871 = vmatpush1.msra.mxu0 0.0
        %1872 = vmatprep.subr.mxu0 0.0
        %1873 = vmatpush1.msra.mxu0 0.0
        %1874 = vmatprep.subr.mxu0 0.0
        %1875 = vmatpush1.msra.mxu0 0.0
        %1876 = vmatprep.subr.mxu0 0.0
        %1877 = vmatpush1.msra.mxu0 0.0
        %1878 = vmatprep.subr.mxu0 0.0
        %1879 = vmatpush1.msra.mxu0 0.0
        %1880 = vmatprep.subr.mxu0 0.0
        %1881 = vmatpush1.msra.mxu0 0.0
        %1882 = vmatprep.subr.mxu0 0.0
        %1883 = vmatpush1.msra.mxu0 0.0
        %1884 = vmatprep.subr.mxu0 0.0
        %1885 = vmatpush1.msra.mxu0 0.0
        %1886 = vmatprep.subr.mxu0 0.0
        %1887 = vmatpush1.msra.mxu0 0.0
        %1888 = vmatprep.subr.mxu0 0.0
        %1889 = vmatpush1.msra.mxu0 0.0
        %1890 = vmatprep.subr.mxu0 0.0
        %1891 = vmatpush1.msra.mxu0 0.0
        %1892 = vmatprep.subr.mxu0 0.0
        %1893 = vmatpush1.msra.mxu0 0.0
        %1894 = vmatprep.subr.mxu0 0.0
        %1895 = vmatpush1.msra.mxu0 0.0
        %1896 = vmatprep.subr.mxu0 0.0
        %1897 = vmatpush1.msra.mxu0 0.0
        %1898 = vmatprep.subr.mxu0 0.0
        %1899 = vmatpush1.msra.mxu0 0.0
        %1900 = vmatprep.subr.mxu0 0.0
        %1901 = vmatpush1.msra.mxu0 0.0
        %1902 = vmatprep.subr.mxu0 0.0
        %1903 = vmatpush1.msra.mxu0 0.0
        %1904 = vmatprep.subr.mxu0 0.0
        %1905 = vmatpush1.msra.mxu0 0.0
        %1906 = vmatprep.subr.mxu0 0.0
        %1907 = vmatpush1.msra.mxu0 0.0
        %1908 = vmatprep.subr.mxu0 0.0
        %1909 = vmatpush1.msra.mxu0 0.0
        %1910 = vmatprep.mubr.f32.mxu0 0.0
        %v1911 = vand.u32 %v1554, 4294901760
        %v1912 = vsub.f32 %v1554, %v1911
        %v1913 = vand.u32 %v1912, 4294901760
        %1914 = vmatmul.mubr.f32.gmra.mrb[0].mxu0 %v1913
        %v1915 = vpop.f32.mrb[0].mxu0
        %v1916 = vadd.f32 %v1835, %v1915
        %v1917 = vpop.f32.mrb[0].mxu0
        %1918 = vdwg.mxu0
        %1919 = vmatprep.subr.mxu0 0.0
        %v1920 = vand.u32 %v1537, 4294901760
        %v1921 = vsub.f32 %v1537, %v1920
        %v1922 = vand.u32 %v1921, 4294901760
        %1923 = vmatpush1.msra.mxu0 %v1922
        %1924 = vmatprep.subr.mxu0 0.0
        %v1925 = vand.u32 %v1538, 4294901760
        %v1926 = vsub.f32 %v1538, %v1925
        %v1927 = vand.u32 %v1926, 4294901760
        %1928 = vmatpush1.msra.mxu0 %v1927
        %1929 = vmatprep.subr.mxu0 0.0
        %v1930 = vand.u32 %v1539, 4294901760
        %v1931 = vsub.f32 %v1539, %v1930
        %v1932 = vand.u32 %v1931, 4294901760
        %1933 = vmatpush1.msra.mxu0 %v1932
        %1934 = vmatprep.subr.mxu0 0.0
        %v1935 = vand.u32 %v1540, 4294901760
        %v1936 = vsub.f32 %v1540, %v1935
        %v1937 = vand.u32 %v1936, 4294901760
        %1938 = vmatpush1.msra.mxu0 %v1937
        %1939 = vmatprep.subr.mxu0 0.0
        %v1940 = vand.u32 %v1541, 4294901760
        %v1941 = vsub.f32 %v1541, %v1940
        %v1942 = vand.u32 %v1941, 4294901760
        %1943 = vmatpush1.msra.mxu0 %v1942
        %1944 = vmatprep.subr.mxu0 0.0
        %v1945 = vand.u32 %v1542, 4294901760
        %v1946 = vsub.f32 %v1542, %v1945
        %v1947 = vand.u32 %v1946, 4294901760
        %1948 = vmatpush1.msra.mxu0 %v1947
        %1949 = vmatprep.subr.mxu0 0.0
        %v1950 = vand.u32 %v1543, 4294901760
        %v1951 = vsub.f32 %v1543, %v1950
        %v1952 = vand.u32 %v1951, 4294901760
        %1953 = vmatpush1.msra.mxu0 %v1952
        %1954 = vmatprep.subr.mxu0 0.0
        %v1955 = vand.u32 %v1544, 4294901760
        %v1956 = vsub.f32 %v1544, %v1955
        %v1957 = vand.u32 %v1956, 4294901760
        %1958 = vmatpush1.msra.mxu0 %v1957
        %1959 = vmatprep.subr.mxu0 0.0
        %1960 = vmatpush1.msra.mxu0 0.0
        %1961 = vmatprep.subr.mxu0 0.0
        %1962 = vmatpush1.msra.mxu0 0.0
        %1963 = vmatprep.subr.mxu0 0.0
        %1964 = vmatpush1.msra.mxu0 0.0
        %1965 = vmatprep.subr.mxu0 0.0
        %1966 = vmatpush1.msra.mxu0 0.0
        %1967 = vmatprep.subr.mxu0 0.0
        %1968 = vmatpush1.msra.mxu0 0.0
        %1969 = vmatprep.subr.mxu0 0.0
        %1970 = vmatpush1.msra.mxu0 0.0
        %1971 = vmatprep.subr.mxu0 0.0
        %1972 = vmatpush1.msra.mxu0 0.0
        %1973 = vmatprep.subr.mxu0 0.0
        %1974 = vmatpush1.msra.mxu0 0.0
        %1975 = vmatprep.subr.mxu0 0.0
        %1976 = vmatpush1.msra.mxu0 0.0
        %1977 = vmatprep.subr.mxu0 0.0
        %1978 = vmatpush1.msra.mxu0 0.0
        %1979 = vmatprep.subr.mxu0 0.0
        %1980 = vmatpush1.msra.mxu0 0.0
        %1981 = vmatprep.subr.mxu0 0.0
        %1982 = vmatpush1.msra.mxu0 0.0
        %1983 = vmatprep.subr.mxu0 0.0
        %1984 = vmatpush1.msra.mxu0 0.0
        %1985 = vmatprep.subr.mxu0 0.0
        %1986 = vmatpush1.msra.mxu0 0.0
        %1987 = vmatprep.subr.mxu0 0.0
        %1988 = vmatpush1.msra.mxu0 0.0
        %1989 = vmatprep.subr.mxu0 0.0
        %1990 = vmatpush1.msra.mxu0 0.0
        %1991 = vmatprep.subr.mxu0 0.0
        %1992 = vmatpush1.msra.mxu0 0.0
        %1993 = vmatprep.subr.mxu0 0.0
        %1994 = vmatpush1.msra.mxu0 0.0
        %1995 = vmatprep.subr.mxu0 0.0
        %1996 = vmatpush1.msra.mxu0 0.0
        %1997 = vmatprep.subr.mxu0 0.0
        %1998 = vmatpush1.msra.mxu0 0.0
        %1999 = vmatprep.subr.mxu0 0.0
        %2000 = vmatpush1.msra.mxu0 0.0
        %2001 = vmatprep.subr.mxu0 0.0
        %2002 = vmatpush1.msra.mxu0 0.0
        %2003 = vmatprep.subr.mxu0 0.0
        %2004 = vmatpush1.msra.mxu0 0.0
        %2005 = vmatprep.subr.mxu0 0.0
        %2006 = vmatpush1.msra.mxu0 0.0
        %2007 = vmatprep.mubr.f32.mxu0 0.0
        %v2008 = vand.u32 %v1554, 4294901760
        %2009 = vmatmul.mubr.f32.gmra.mrb[0].mxu0 %v2008
        %v2010 = vpop.f32.mrb[0].mxu0
        %v2011 = vadd.f32 %v1916, %v2010
        %v2012 = vpop.f32.mrb[0].mxu0
        %2013 = vdwg.mxu0
        %2014 = vmatprep.subr.mxu0 0.0
        %v2015 = vand.u32 %v1537, 4294901760
        %2016 = vmatpush1.msra.mxu0 %v2015
        %2017 = vmatprep.subr.mxu0 0.0
        %v2018 = vand.u32 %v1538, 4294901760
        %2019 = vmatpush1.msra.mxu0 %v2018
        %2020 = vmatprep.subr.mxu0 0.0
        %v2021 = vand.u32 %v1539, 4294901760
        %2022 = vmatpush1.msra.mxu0 %v2021
        %2023 = vmatprep.subr.mxu0 0.0
        %v2024 = vand.u32 %v1540, 4294901760
        %2025 = vmatpush1.msra.mxu0 %v2024
        %2026 = vmatprep.subr.mxu0 0.0
        %v2027 = vand.u32 %v1541, 4294901760
        %2028 = vmatpush1.msra.mxu0 %v2027
        %2029 = vmatprep.subr.mxu0 0.0
        %v2030 = vand.u32 %v1542, 4294901760
        %2031 = vmatpush1.msra.mxu0 %v2030
        %2032 = vmatprep.subr.mxu0 0.0
        %v2033 = vand.u32 %v1543, 4294901760
        %2034 = vmatpush1.msra.mxu0 %v2033
        %2035 = vmatprep.subr.mxu0 0.0
        %v2036 = vand.u32 %v1544, 4294901760
        %2037 = vmatpush1.msra.mxu0 %v2036
        %2038 = vmatprep.subr.mxu0 0.0
        %2039 = vmatpush1.msra.mxu0 0.0
        %2040 = vmatprep.subr.mxu0 0.0
        %2041 = vmatpush1.msra.mxu0 0.0
        %2042 = vmatprep.subr.mxu0 0.0
        %2043 = vmatpush1.msra.mxu0 0.0
        %2044 = vmatprep.subr.mxu0 0.0
        %2045 = vmatpush1.msra.mxu0 0.0
        %2046 = vmatprep.subr.mxu0 0.0
        %2047 = vmatpush1.msra.mxu0 0.0
        %2048 = vmatprep.subr.mxu0 0.0
        %2049 = vmatpush1.msra.mxu0 0.0
        %2050 = vmatprep.subr.mxu0 0.0
        %2051 = vmatpush1.msra.mxu0 0.0
        %2052 = vmatprep.subr.mxu0 0.0
        %2053 = vmatpush1.msra.mxu0 0.0
        %2054 = vmatprep.subr.mxu0 0.0
        %2055 = vmatpush1.msra.mxu0 0.0
        %2056 = vmatprep.subr.mxu0 0.0
        %2057 = vmatpush1.msra.mxu0 0.0
        %2058 = vmatprep.subr.mxu0 0.0
        %2059 = vmatpush1.msra.mxu0 0.0
        %2060 = vmatprep.subr.mxu0 0.0
        %2061 = vmatpush1.msra.mxu0 0.0
        %2062 = vmatprep.subr.mxu0 0.0
        %2063 = vmatpush1.msra.mxu0 0.0
        %2064 = vmatprep.subr.mxu0 0.0
        %2065 = vmatpush1.msra.mxu0 0.0
        %2066 = vmatprep.subr.mxu0 0.0
        %2067 = vmatpush1.msra.mxu0 0.0
        %2068 = vmatprep.subr.mxu0 0.0
        %2069 = vmatpush1.msra.mxu0 0.0
        %2070 = vmatprep.subr.mxu0 0.0
        %2071 = vmatpush1.msra.mxu0 0.0
        %2072 = vmatprep.subr.mxu0 0.0
        %2073 = vmatpush1.msra.mxu0 0.0
        %2074 = vmatprep.subr.mxu0 0.0
        %2075 = vmatpush1.msra.mxu0 0.0
        %2076 = vmatprep.subr.mxu0 0.0
        %2077 = vmatpush1.msra.mxu0 0.0
        %2078 = vmatprep.subr.mxu0 0.0
        %2079 = vmatpush1.msra.mxu0 0.0
        %2080 = vmatprep.subr.mxu0 0.0
        %2081 = vmatpush1.msra.mxu0 0.0
        %2082 = vmatprep.subr.mxu0 0.0
        %2083 = vmatpush1.msra.mxu0 0.0
        %2084 = vmatprep.subr.mxu0 0.0
        %2085 = vmatpush1.msra.mxu0 0.0
        %2086 = vmatprep.mubr.f32.mxu0 0.0
        %v2087 = vand.u32 %v1554, 4294901760
        %2088 = vmatmul.mubr.f32.gmra.mrb[0].mxu0 %v2087
        %v2089 = vpop.f32.mrb[0].mxu0
        %v2090 = vadd.f32 %v2011, %v2089
        %v2091 = vpop.f32.mrb[0].mxu0
        %2092 = vdwg.mxu0
        %v2093 = vtanh.pop %v2090
        %s2094 = scalar_lea.vmem %s5, 1
        %v2095 = vld [vmem:[%s2094] sm:$0x1]
        %s2096 = scalar_lea.vmem %s6, 1
        %v2097 = vld [vmem:[%s2096] sm:$0x1]
        %v2098 = vsel %vm962, %v2093, 0.0
        %2099 = vadd.xlane.f32.xlu0 %v2098
        %v2100 = vpop.xlane.xlu0 %2099
        %v2101 = vmul.f32 %v2100, %v1509
        %v2102 = vmul.f32 %v2093, %v2093
        %v2103 = vsel %vm962, %v2102, 0.0
        %2104 = vadd.xlane.f32.xlu0 %v2103
        %v2105 = vpop.xlane.xlu0 %2104
        %v2106 = vmul.f32 %v2105, %v1509
        %v2107 = vmul.f32 %v2101, %v2101
        %v2108 = vsub.f32 %v2106, %v2107
        %v2109 = vadd.f32 %v2108, 1e-05
        %v2110 = vrsqrt.pop %v2109
        %v2111 = vsub.f32 %v2093, %v2101
        %v2112 = vmul.f32 %v2111, %v2110
        %v2114 = vlaneseq
        %v2115 = vshrl.u32 %v2114, 7
        %v2116 = vsub.s32 0, %v2115
        %v2117 = vrot.slane %v2095, %v2116
        %v2119 = vmul.f32 %v2112, %v2117
        %v2121 = vlaneseq
        %v2122 = vshrl.u32 %v2121, 7
        %v2123 = vsub.s32 0, %v2122
        %v2124 = vrot.slane %v2097, %v2123
        %v2126 = vadd.f32 %v2119, %v2124
        %v2127 = vadd.f32 %v944, %v2126
        %v2128 = vtanh.pop %v2127
        %v2129 = vld [vmem:[%s7] sm:$0x1]
        %v2130 = vld [vmem:[%s8] sm:$0x1]
        %v2131 = vsel %vm962, %v2128, 0.0
        %2132 = vadd.xlane.f32.xlu0 %v2131
        %v2133 = vpop.xlane.xlu0 %2132
        %v2134 = vmul.f32 %v2133, %v1509
        %v2135 = vmul.f32 %v2128, %v2128
        %v2136 = vsel %vm962, %v2135, 0.0
        %2137 = vadd.xlane.f32.xlu0 %v2136
        %v2138 = vpop.xlane.xlu0 %2137
        %v2139 = vmul.f32 %v2138, %v1509
        %v2140 = vmul.f32 %v2134, %v2134
        %v2141 = vsub.f32 %v2139, %v2140
        %v2142 = vadd.f32 %v2141, 1e-05
        %v2143 = vrsqrt.pop %v2142
        %v2144 = vsub.f32 %v2128, %v2134
        %v2145 = vmul.f32 %v2144, %v2143
        %v2147 = vlaneseq
        %v2148 = vshrl.u32 %v2147, 7
        %v2149 = vsub.s32 0, %v2148
        %v2150 = vrot.slane %v2129, %v2149
        %v2152 = vmul.f32 %v2145, %v2150
        %v2154 = vlaneseq
        %v2155 = vshrl.u32 %v2154, 7
        %v2156 = vsub.s32 0, %v2155
        %v2157 = vrot.slane %v2130, %v2156
        %v2159 = vadd.f32 %v2152, %v2157
        %s2160 = scalar_lea.vmem [#allocation7], 128
        %v2161 = vld [vmem:[%s2160] sm:$0xff]
        %v2162 = vld [vmem:[%s2160 + $0x8] sm:$0xff]
        %v2163 = vld [vmem:[%s2160 + $0x10] sm:$0xff]
        %v2164 = vld [vmem:[%s2160 + $0x18] sm:$0xff]
        %v2165 = vld [vmem:[%s2160 + $0x20] sm:$0xff]
        %v2166 = vld [vmem:[%s2160 + $0x28] sm:$0xff]
        %v2167 = vld [vmem:[%s2160 + $0x30] sm:$0xff]
        %v2168 = vld [vmem:[%s2160 + $0x38] sm:$0xff]
        %s2169 = scalar_lea.vmem %s4, 2
        %v2170 = vld [vmem:[%s2169] sm:$0x1]
        %v2172 = vlaneseq
        %v2173 = vshrl.u32 %v2172, 7
        %v2174 = vsub.s32 0, %v2173
        %v2175 = vrot.slane %v2170, %v2174
        %v2178 = vsel %vm962, %v2159, 0
        %2180 = vmatprep.subr.mxu0 0.0
        %v2181 = vand.u32 %v2161, 4294901760
        %2182 = vmatpush1.msra.mxu0 %v2181
        %2183 = vmatprep.subr.mxu0 0.0
        %v2184 = vand.u32 %v2162, 4294901760
        %2185 = vmatpush1.msra.mxu0 %v2184
        %2186 = vmatprep.subr.mxu0 0.0
        %v2187 = vand.u32 %v2163, 4294901760
        %2188 = vmatpush1.msra.mxu0 %v2187
        %2189 = vmatprep.subr.mxu0 0.0
        %v2190 = vand.u32 %v2164, 4294901760
        %2191 = vmatpush1.msra.mxu0 %v2190
        %2192 = vmatprep.subr.mxu0 0.0
        %v2193 = vand.u32 %v2165, 4294901760
        %2194 = vmatpush1.msra.mxu0 %v2193
        %2195 = vmatprep.subr.mxu0 0.0
        %v2196 = vand.u32 %v2166, 4294901760
        %2197 = vmatpush1.msra.mxu0 %v2196
        %2198 = vmatprep.subr.mxu0 0.0
        %v2199 = vand.u32 %v2167, 4294901760
        %2200 = vmatpush1.msra.mxu0 %v2199
        %2201 = vmatprep.subr.mxu0 0.0
        %v2202 = vand.u32 %v2168, 4294901760
        %2203 = vmatpush1.msra.mxu0 %v2202
        %2204 = vmatprep.subr.mxu0 0.0
        %2205 = vmatpush1.msra.mxu0 0.0
        %2206 = vmatprep.subr.mxu0 0.0
        %2207 = vmatpush1.msra.mxu0 0.0
        %2208 = vmatprep.subr.mxu0 0.0
        %2209 = vmatpush1.msra.mxu0 0.0
        %2210 = vmatprep.subr.mxu0 0.0
        %2211 = vmatpush1.msra.mxu0 0.0
        %2212 = vmatprep.subr.mxu0 0.0
        %2213 = vmatpush1.msra.mxu0 0.0
        %2214 = vmatprep.subr.mxu0 0.0
        %2215 = vmatpush1.msra.mxu0 0.0
        %2216 = vmatprep.subr.mxu0 0.0
        %2217 = vmatpush1.msra.mxu0 0.0
        %2218 = vmatprep.subr.mxu0 0.0
        %2219 = vmatpush1.msra.mxu0 0.0
        %2220 = vmatprep.subr.mxu0 0.0
        %2221 = vmatpush1.msra.mxu0 0.0
        %2222 = vmatprep.subr.mxu0 0.0
        %2223 = vmatpush1.msra.mxu0 0.0
        %2224 = vmatprep.subr.mxu0 0.0
        %2225 = vmatpush1.msra.mxu0 0.0
        %2226 = vmatprep.subr.mxu0 0.0
        %2227 = vmatpush1.msra.mxu0 0.0
        %2228 = vmatprep.subr.mxu0 0.0
        %2229 = vmatpush1.msra.mxu0 0.0
        %2230 = vmatprep.subr.mxu0 0.0
        %2231 = vmatpush1.msra.mxu0 0.0
        %2232 = vmatprep.subr.mxu0 0.0
        %2233 = vmatpush1.msra.mxu0 0.0
        %2234 = vmatprep.subr.mxu0 0.0
        %2235 = vmatpush1.msra.mxu0 0.0
        %2236 = vmatprep.subr.mxu0 0.0
        %2237 = vmatpush1.msra.mxu0 0.0
        %2238 = vmatprep.subr.mxu0 0.0
        %2239 = vmatpush1.msra.mxu0 0.0
        %2240 = vmatprep.subr.mxu0 0.0
        %2241 = vmatpush1.msra.mxu0 0.0
        %2242 = vmatprep.subr.mxu0 0.0
        %2243 = vmatpush1.msra.mxu0 0.0
        %2244 = vmatprep.subr.mxu0 0.0
        %2245 = vmatpush1.msra.mxu0 0.0
        %2246 = vmatprep.subr.mxu0 0.0
        %2247 = vmatpush1.msra.mxu0 0.0
        %2248 = vmatprep.subr.mxu0 0.0
        %2249 = vmatpush1.msra.mxu0 0.0
        %2250 = vmatprep.subr.mxu0 0.0
        %2251 = vmatpush1.msra.mxu0 0.0
        %2252 = vmatprep.mubr.f32.mxu0 0.0
        %v2253 = vand.u32 %v2178, 4294901760
        %v2254 = vsub.f32 %v2178, %v2253
        %v2255 = vand.u32 %v2254, 4294901760
        %v2256 = vsub.f32 %v2254, %v2255
        %v2257 = vand.u32 %v2256, 4294901760
        %2258 = vmatmul.mubr.f32.gmra.mrb[0].mxu0 %v2257
        %v2259 = vpop.f32.mrb[0].mxu0
        %v2260 = vadd.f32 %v2175, %v2259
        %v2261 = vpop.f32.mrb[0].mxu0
        %2262 = vdwg.mxu0
        %2263 = vmatprep.subr.mxu0 0.0
        %v2264 = vand.u32 %v2161, 4294901760
        %v2265 = vsub.f32 %v2161, %v2264
        %v2266 = vand.u32 %v2265, 4294901760
        %v2267 = vsub.f32 %v2265, %v2266
        %v2268 = vand.u32 %v2267, 4294901760
        %2269 = vmatpush1.msra.mxu0 %v2268
        %2270 = vmatprep.subr.mxu0 0.0
        %v2271 = vand.u32 %v2162, 4294901760
        %v2272 = vsub.f32 %v2162, %v2271
        %v2273 = vand.u32 %v2272, 4294901760
        %v2274 = vsub.f32 %v2272, %v2273
        %v2275 = vand.u32 %v2274, 4294901760
        %2276 = vmatpush1.msra.mxu0 %v2275
        %2277 = vmatprep.subr.mxu0 0.0
        %v2278 = vand.u32 %v2163, 4294901760
        %v2279 = vsub.f32 %v2163, %v2278
        %v2280 = vand.u32 %v2279, 4294901760
        %v2281 = vsub.f32 %v2279, %v2280
        %v2282 = vand.u32 %v2281, 4294901760
        %2283 = vmatpush1.msra.mxu0 %v2282
        %2284 = vmatprep.subr.mxu0 0.0
        %v2285 = vand.u32 %v2164, 4294901760
        %v2286 = vsub.f32 %v2164, %v2285
        %v2287 = vand.u32 %v2286, 4294901760
        %v2288 = vsub.f32 %v2286, %v2287
        %v2289 = vand.u32 %v2288, 4294901760
        %2290 = vmatpush1.msra.mxu0 %v2289
        %2291 = vmatprep.subr.mxu0 0.0
        %v2292 = vand.u32 %v2165, 4294901760
        %v2293 = vsub.f32 %v2165, %v2292
        %v2294 = vand.u32 %v2293, 4294901760
        %v2295 = vsub.f32 %v2293, %v2294
        %v2296 = vand.u32 %v2295, 4294901760
        %2297 = vmatpush1.msra.mxu0 %v2296
        %2298 = vmatprep.subr.mxu0 0.0
        %v2299 = vand.u32 %v2166, 4294901760
        %v2300 = vsub.f32 %v2166, %v2299
        %v2301 = vand.u32 %v2300, 4294901760
        %v2302 = vsub.f32 %v2300, %v2301
        %v2303 = vand.u32 %v2302, 4294901760
        %2304 = vmatpush1.msra.mxu0 %v2303
        %2305 = vmatprep.subr.mxu0 0.0
        %v2306 = vand.u32 %v2167, 4294901760
        %v2307 = vsub.f32 %v2167, %v2306
        %v2308 = vand.u32 %v2307, 4294901760
        %v2309 = vsub.f32 %v2307, %v2308
        %v2310 = vand.u32 %v2309, 4294901760
        %2311 = vmatpush1.msra.mxu0 %v2310
        %2312 = vmatprep.subr.mxu0 0.0
        %v2313 = vand.u32 %v2168, 4294901760
        %v2314 = vsub.f32 %v2168, %v2313
        %v2315 = vand.u32 %v2314, 4294901760
        %v2316 = vsub.f32 %v2314, %v2315
        %v2317 = vand.u32 %v2316, 4294901760
        %2318 = vmatpush1.msra.mxu0 %v2317
        %2319 = vmatprep.subr.mxu0 0.0
        %2320 = vmatpush1.msra.mxu0 0.0
        %2321 = vmatprep.subr.mxu0 0.0
        %2322 = vmatpush1.msra.mxu0 0.0
        %2323 = vmatprep.subr.mxu0 0.0
        %2324 = vmatpush1.msra.mxu0 0.0
        %2325 = vmatprep.subr.mxu0 0.0
        %2326 = vmatpush1.msra.mxu0 0.0
        %2327 = vmatprep.subr.mxu0 0.0
        %2328 = vmatpush1.msra.mxu0 0.0
        %2329 = vmatprep.subr.mxu0 0.0
        %2330 = vmatpush1.msra.mxu0 0.0
        %2331 = vmatprep.subr.mxu0 0.0
        %2332 = vmatpush1.msra.mxu0 0.0
        %2333 = vmatprep.subr.mxu0 0.0
        %2334 = vmatpush1.msra.mxu0 0.0
        %2335 = vmatprep.subr.mxu0 0.0
        %2336 = vmatpush1.msra.mxu0 0.0
        %2337 = vmatprep.subr.mxu0 0.0
        %2338 = vmatpush1.msra.mxu0 0.0
        %2339 = vmatprep.subr.mxu0 0.0
        %2340 = vmatpush1.msra.mxu0 0.0
        %2341 = vmatprep.subr.mxu0 0.0
        %2342 = vmatpush1.msra.mxu0 0.0
        %2343 = vmatprep.subr.mxu0 0.0
        %2344 = vmatpush1.msra.mxu0 0.0
        %2345 = vmatprep.subr.mxu0 0.0
        %2346 = vmatpush1.msra.mxu0 0.0
        %2347 = vmatprep.subr.mxu0 0.0
        %2348 = vmatpush1.msra.mxu0 0.0
        %2349 = vmatprep.subr.mxu0 0.0
        %2350 = vmatpush1.msra.mxu0 0.0
        %2351 = vmatprep.subr.mxu0 0.0
        %2352 = vmatpush1.msra.mxu0 0.0
        %2353 = vmatprep.subr.mxu0 0.0
        %2354 = vmatpush1.msra.mxu0 0.0
        %2355 = vmatprep.subr.mxu0 0.0
        %2356 = vmatpush1.msra.mxu0 0.0
        %2357 = vmatprep.subr.mxu0 0.0
        %2358 = vmatpush1.msra.mxu0 0.0
        %2359 = vmatprep.subr.mxu0 0.0
        %2360 = vmatpush1.msra.mxu0 0.0
        %2361 = vmatprep.subr.mxu0 0.0
        %2362 = vmatpush1.msra.mxu0 0.0
        %2363 = vmatprep.subr.mxu0 0.0
        %2364 = vmatpush1.msra.mxu0 0.0
        %2365 = vmatprep.subr.mxu0 0.0
        %2366 = vmatpush1.msra.mxu0 0.0
        %2367 = vmatprep.mubr.f32.mxu0 0.0
        %v2368 = vand.u32 %v2178, 4294901760
        %2369 = vmatmul.mubr.f32.gmra.mrb[0].mxu0 %v2368
        %v2370 = vpop.f32.mrb[0].mxu0
        %v2371 = vadd.f32 %v2260, %v2370
        %v2372 = vpop.f32.mrb[0].mxu0
        %2373 = vdwg.mxu0
        %2374 = vmatprep.subr.mxu0 0.0
        %v2375 = vand.u32 %v2161, 4294901760
        %v2376 = vsub.f32 %v2161, %v2375
        %2377 = vmatpush1.msra.mxu0 %v2376
        %2378 = vmatprep.subr.mxu0 0.0
        %v2379 = vand.u32 %v2162, 4294901760
        %v2380 = vsub.f32 %v2162, %v2379
        %2381 = vmatpush1.msra.mxu0 %v2380
        %2382 = vmatprep.subr.mxu0 0.0
        %v2383 = vand.u32 %v2163, 4294901760
        %v2384 = vsub.f32 %v2163, %v2383
        %2385 = vmatpush1.msra.mxu0 %v2384
        %2386 = vmatprep.subr.mxu0 0.0
        %v2387 = vand.u32 %v2164, 4294901760
        %v2388 = vsub.f32 %v2164, %v2387
        %2389 = vmatpush1.msra.mxu0 %v2388
        %2390 = vmatprep.subr.mxu0 0.0
        %v2391 = vand.u32 %v2165, 4294901760
        %v2392 = vsub.f32 %v2165, %v2391
        %2393 = vmatpush1.msra.mxu0 %v2392
        %2394 = vmatprep.subr.mxu0 0.0
        %v2395 = vand.u32 %v2166, 4294901760
        %v2396 = vsub.f32 %v2166, %v2395
        %2397 = vmatpush1.msra.mxu0 %v2396
        %2398 = vmatprep.subr.mxu0 0.0
        %v2399 = vand.u32 %v2167, 4294901760
        %v2400 = vsub.f32 %v2167, %v2399
        %2401 = vmatpush1.msra.mxu0 %v2400
        %2402 = vmatprep.subr.mxu0 0.0
        %v2403 = vand.u32 %v2168, 4294901760
        %v2404 = vsub.f32 %v2168, %v2403
        %2405 = vmatpush1.msra.mxu0 %v2404
        %2406 = vmatprep.subr.mxu0 0.0
        %2407 = vmatpush1.msra.mxu0 0.0
        %2408 = vmatprep.subr.mxu0 0.0
        %2409 = vmatpush1.msra.mxu0 0.0
        %2410 = vmatprep.subr.mxu0 0.0
        %2411 = vmatpush1.msra.mxu0 0.0
        %2412 = vmatprep.subr.mxu0 0.0
        %2413 = vmatpush1.msra.mxu0 0.0
        %2414 = vmatprep.subr.mxu0 0.0
        %2415 = vmatpush1.msra.mxu0 0.0
        %2416 = vmatprep.subr.mxu0 0.0
        %2417 = vmatpush1.msra.mxu0 0.0
        %2418 = vmatprep.subr.mxu0 0.0
        %2419 = vmatpush1.msra.mxu0 0.0
        %2420 = vmatprep.subr.mxu0 0.0
        %2421 = vmatpush1.msra.mxu0 0.0
        %2422 = vmatprep.subr.mxu0 0.0
        %2423 = vmatpush1.msra.mxu0 0.0
        %2424 = vmatprep.subr.mxu0 0.0
        %2425 = vmatpush1.msra.mxu0 0.0
        %2426 = vmatprep.subr.mxu0 0.0
        %2427 = vmatpush1.msra.mxu0 0.0
        %2428 = vmatprep.subr.mxu0 0.0
        %2429 = vmatpush1.msra.mxu0 0.0
        %2430 = vmatprep.subr.mxu0 0.0
        %2431 = vmatpush1.msra.mxu0 0.0
        %2432 = vmatprep.subr.mxu0 0.0
        %2433 = vmatpush1.msra.mxu0 0.0
        %2434 = vmatprep.subr.mxu0 0.0
        %2435 = vmatpush1.msra.mxu0 0.0
        %2436 = vmatprep.subr.mxu0 0.0
        %2437 = vmatpush1.msra.mxu0 0.0
        %2438 = vmatprep.subr.mxu0 0.0
        %2439 = vmatpush1.msra.mxu0 0.0
        %2440 = vmatprep.subr.mxu0 0.0
        %2441 = vmatpush1.msra.mxu0 0.0
        %2442 = vmatprep.subr.mxu0 0.0
        %2443 = vmatpush1.msra.mxu0 0.0
        %2444 = vmatprep.subr.mxu0 0.0
        %2445 = vmatpush1.msra.mxu0 0.0
        %2446 = vmatprep.subr.mxu0 0.0
        %2447 = vmatpush1.msra.mxu0 0.0
        %2448 = vmatprep.subr.mxu0 0.0
        %2449 = vmatpush1.msra.mxu0 0.0
        %2450 = vmatprep.subr.mxu0 0.0
        %2451 = vmatpush1.msra.mxu0 0.0
        %2452 = vmatprep.subr.mxu0 0.0
        %2453 = vmatpush1.msra.mxu0 0.0
        %2454 = vmatprep.mubr.f32.mxu0 0.0
        %v2455 = vand.u32 %v2178, 4294901760
        %v2456 = vsub.f32 %v2178, %v2455
        %2457 = vmatmul.mubr.f32.gmra.mrb[0].mxu0 %v2456
        %v2458 = vpop.f32.mrb[0].mxu0
        %v2459 = vadd.f32 %v2371, %v2458
        %v2460 = vpop.f32.mrb[0].mxu0
        %2461 = vdwg.mxu0
        %2462 = vmatprep.subr.mxu0 0.0
        %v2463 = vand.u32 %v2161, 4294901760
        %2464 = vmatpush1.msra.mxu0 %v2463
        %2465 = vmatprep.subr.mxu0 0.0
        %v2466 = vand.u32 %v2162, 4294901760
        %2467 = vmatpush1.msra.mxu0 %v2466
        %2468 = vmatprep.subr.mxu0 0.0
        %v2469 = vand.u32 %v2163, 4294901760
        %2470 = vmatpush1.msra.mxu0 %v2469
        %2471 = vmatprep.subr.mxu0 0.0
        %v2472 = vand.u32 %v2164, 4294901760
        %2473 = vmatpush1.msra.mxu0 %v2472
        %2474 = vmatprep.subr.mxu0 0.0
        %v2475 = vand.u32 %v2165, 4294901760
        %2476 = vmatpush1.msra.mxu0 %v2475
        %2477 = vmatprep.subr.mxu0 0.0
        %v2478 = vand.u32 %v2166, 4294901760
        %2479 = vmatpush1.msra.mxu0 %v2478
        %2480 = vmatprep.subr.mxu0 0.0
        %v2481 = vand.u32 %v2167, 4294901760
        %2482 = vmatpush1.msra.mxu0 %v2481
        %2483 = vmatprep.subr.mxu0 0.0
        %v2484 = vand.u32 %v2168, 4294901760
        %2485 = vmatpush1.msra.mxu0 %v2484
        %2486 = vmatprep.subr.mxu0 0.0
        %2487 = vmatpush1.msra.mxu0 0.0
        %2488 = vmatprep.subr.mxu0 0.0
        %2489 = vmatpush1.msra.mxu0 0.0
        %2490 = vmatprep.subr.mxu0 0.0
        %2491 = vmatpush1.msra.mxu0 0.0
        %2492 = vmatprep.subr.mxu0 0.0
        %2493 = vmatpush1.msra.mxu0 0.0
        %2494 = vmatprep.subr.mxu0 0.0
        %2495 = vmatpush1.msra.mxu0 0.0
        %2496 = vmatprep.subr.mxu0 0.0
        %2497 = vmatpush1.msra.mxu0 0.0
        %2498 = vmatprep.subr.mxu0 0.0
        %2499 = vmatpush1.msra.mxu0 0.0
        %2500 = vmatprep.subr.mxu0 0.0
        %2501 = vmatpush1.msra.mxu0 0.0
        %2502 = vmatprep.subr.mxu0 0.0
        %2503 = vmatpush1.msra.mxu0 0.0
        %2504 = vmatprep.subr.mxu0 0.0
        %2505 = vmatpush1.msra.mxu0 0.0
        %2506 = vmatprep.subr.mxu0 0.0
        %2507 = vmatpush1.msra.mxu0 0.0
        %2508 = vmatprep.subr.mxu0 0.0
        %2509 = vmatpush1.msra.mxu0 0.0
        %2510 = vmatprep.subr.mxu0 0.0
        %2511 = vmatpush1.msra.mxu0 0.0
        %2512 = vmatprep.subr.mxu0 0.0
        %2513 = vmatpush1.msra.mxu0 0.0
        %2514 = vmatprep.subr.mxu0 0.0
        %2515 = vmatpush1.msra.mxu0 0.0
        %2516 = vmatprep.subr.mxu0 0.0
        %2517 = vmatpush1.msra.mxu0 0.0
        %2518 = vmatprep.subr.mxu0 0.0
        %2519 = vmatpush1.msra.mxu0 0.0
        %2520 = vmatprep.subr.mxu0 0.0
        %2521 = vmatpush1.msra.mxu0 0.0
        %2522 = vmatprep.subr.mxu0 0.0
        %2523 = vmatpush1.msra.mxu0 0.0
        %2524 = vmatprep.subr.mxu0 0.0
        %2525 = vmatpush1.msra.mxu0 0.0
        %2526 = vmatprep.subr.mxu0 0.0
        %2527 = vmatpush1.msra.mxu0 0.0
        %2528 = vmatprep.subr.mxu0 0.0
        %2529 = vmatpush1.msra.mxu0 0.0
        %2530 = vmatprep.subr.mxu0 0.0
        %2531 = vmatpush1.msra.mxu0 0.0
        %2532 = vmatprep.subr.mxu0 0.0
        %2533 = vmatpush1.msra.mxu0 0.0
        %2534 = vmatprep.mubr.f32.mxu0 0.0
        %v2535 = vand.u32 %v2178, 4294901760
        %v2536 = vsub.f32 %v2178, %v2535
        %v2537 = vand.u32 %v2536, 4294901760
        %2538 = vmatmul.mubr.f32.gmra.mrb[0].mxu0 %v2537
        %v2539 = vpop.f32.mrb[0].mxu0
        %v2540 = vadd.f32 %v2459, %v2539
        %v2541 = vpop.f32.mrb[0].mxu0
        %2542 = vdwg.mxu0
        %2543 = vmatprep.subr.mxu0 0.0
        %v2544 = vand.u32 %v2161, 4294901760
        %v2545 = vsub.f32 %v2161, %v2544
        %v2546 = vand.u32 %v2545, 4294901760
        %2547 = vmatpush1.msra.mxu0 %v2546
        %2548 = vmatprep.subr.mxu0 0.0
        %v2549 = vand.u32 %v2162, 4294901760
        %v2550 = vsub.f32 %v2162, %v2549
        %v2551 = vand.u32 %v2550, 4294901760
        %2552 = vmatpush1.msra.mxu0 %v2551
        %2553 = vmatprep.subr.mxu0 0.0
        %v2554 = vand.u32 %v2163, 4294901760
        %v2555 = vsub.f32 %v2163, %v2554
        %v2556 = vand.u32 %v2555, 4294901760
        %2557 = vmatpush1.msra.mxu0 %v2556
        %2558 = vmatprep.subr.mxu0 0.0
        %v2559 = vand.u32 %v2164, 4294901760
        %v2560 = vsub.f32 %v2164, %v2559
        %v2561 = vand.u32 %v2560, 4294901760
        %2562 = vmatpush1.msra.mxu0 %v2561
        %2563 = vmatprep.subr.mxu0 0.0
        %v2564 = vand.u32 %v2165, 4294901760
        %v2565 = vsub.f32 %v2165, %v2564
        %v2566 = vand.u32 %v2565, 4294901760
        %2567 = vmatpush1.msra.mxu0 %v2566
        %2568 = vmatprep.subr.mxu0 0.0
        %v2569 = vand.u32 %v2166, 4294901760
        %v2570 = vsub.f32 %v2166, %v2569
        %v2571 = vand.u32 %v2570, 4294901760
        %2572 = vmatpush1.msra.mxu0 %v2571
        %2573 = vmatprep.subr.mxu0 0.0
        %v2574 = vand.u32 %v2167, 4294901760
        %v2575 = vsub.f32 %v2167, %v2574
        %v2576 = vand.u32 %v2575, 4294901760
        %2577 = vmatpush1.msra.mxu0 %v2576
        %2578 = vmatprep.subr.mxu0 0.0
        %v2579 = vand.u32 %v2168, 4294901760
        %v2580 = vsub.f32 %v2168, %v2579
        %v2581 = vand.u32 %v2580, 4294901760
        %2582 = vmatpush1.msra.mxu0 %v2581
        %2583 = vmatprep.subr.mxu0 0.0
        %2584 = vmatpush1.msra.mxu0 0.0
        %2585 = vmatprep.subr.mxu0 0.0
        %2586 = vmatpush1.msra.mxu0 0.0
        %2587 = vmatprep.subr.mxu0 0.0
        %2588 = vmatpush1.msra.mxu0 0.0
        %2589 = vmatprep.subr.mxu0 0.0
        %2590 = vmatpush1.msra.mxu0 0.0
        %2591 = vmatprep.subr.mxu0 0.0
        %2592 = vmatpush1.msra.mxu0 0.0
        %2593 = vmatprep.subr.mxu0 0.0
        %2594 = vmatpush1.msra.mxu0 0.0
        %2595 = vmatprep.subr.mxu0 0.0
        %2596 = vmatpush1.msra.mxu0 0.0
        %2597 = vmatprep.subr.mxu0 0.0
        %2598 = vmatpush1.msra.mxu0 0.0
        %2599 = vmatprep.subr.mxu0 0.0
        %2600 = vmatpush1.msra.mxu0 0.0
        %2601 = vmatprep.subr.mxu0 0.0
        %2602 = vmatpush1.msra.mxu0 0.0
        %2603 = vmatprep.subr.mxu0 0.0
        %2604 = vmatpush1.msra.mxu0 0.0
        %2605 = vmatprep.subr.mxu0 0.0
        %2606 = vmatpush1.msra.mxu0 0.0
        %2607 = vmatprep.subr.mxu0 0.0
        %2608 = vmatpush1.msra.mxu0 0.0
        %2609 = vmatprep.subr.mxu0 0.0
        %2610 = vmatpush1.msra.mxu0 0.0
        %2611 = vmatprep.subr.mxu0 0.0
        %2612 = vmatpush1.msra.mxu0 0.0
        %2613 = vmatprep.subr.mxu0 0.0
        %2614 = vmatpush1.msra.mxu0 0.0
        %2615 = vmatprep.subr.mxu0 0.0
        %2616 = vmatpush1.msra.mxu0 0.0
        %2617 = vmatprep.subr.mxu0 0.0
        %2618 = vmatpush1.msra.mxu0 0.0
        %2619 = vmatprep.subr.mxu0 0.0
        %2620 = vmatpush1.msra.mxu0 0.0
        %2621 = vmatprep.subr.mxu0 0.0
        %2622 = vmatpush1.msra.mxu0 0.0
        %2623 = vmatprep.subr.mxu0 0.0
        %2624 = vmatpush1.msra.mxu0 0.0
        %2625 = vmatprep.subr.mxu0 0.0
        %2626 = vmatpush1.msra.mxu0 0.0
        %2627 = vmatprep.subr.mxu0 0.0
        %2628 = vmatpush1.msra.mxu0 0.0
        %2629 = vmatprep.subr.mxu0 0.0
        %2630 = vmatpush1.msra.mxu0 0.0
        %2631 = vmatprep.mubr.f32.mxu0 0.0
        %v2632 = vand.u32 %v2178, 4294901760
        %2633 = vmatmul.mubr.f32.gmra.mrb[0].mxu0 %v2632
        %v2634 = vpop.f32.mrb[0].mxu0
        %v2635 = vadd.f32 %v2540, %v2634
        %v2636 = vpop.f32.mrb[0].mxu0
        %2637 = vdwg.mxu0
        %2638 = vmatprep.subr.mxu0 0.0
        %v2639 = vand.u32 %v2161, 4294901760
        %2640 = vmatpush1.msra.mxu0 %v2639
        %2641 = vmatprep.subr.mxu0 0.0
        %v2642 = vand.u32 %v2162, 4294901760
        %2643 = vmatpush1.msra.mxu0 %v2642
        %2644 = vmatprep.subr.mxu0 0.0
        %v2645 = vand.u32 %v2163, 4294901760
        %2646 = vmatpush1.msra.mxu0 %v2645
        %2647 = vmatprep.subr.mxu0 0.0
        %v2648 = vand.u32 %v2164, 4294901760
        %2649 = vmatpush1.msra.mxu0 %v2648
        %2650 = vmatprep.subr.mxu0 0.0
        %v2651 = vand.u32 %v2165, 4294901760
        %2652 = vmatpush1.msra.mxu0 %v2651
        %2653 = vmatprep.subr.mxu0 0.0
        %v2654 = vand.u32 %v2166, 4294901760
        %2655 = vmatpush1.msra.mxu0 %v2654
        %2656 = vmatprep.subr.mxu0 0.0
        %v2657 = vand.u32 %v2167, 4294901760
        %2658 = vmatpush1.msra.mxu0 %v2657
        %2659 = vmatprep.subr.mxu0 0.0
        %v2660 = vand.u32 %v2168, 4294901760
        %2661 = vmatpush1.msra.mxu0 %v2660
        %2662 = vmatprep.subr.mxu0 0.0
        %2663 = vmatpush1.msra.mxu0 0.0
        %2664 = vmatprep.subr.mxu0 0.0
        %2665 = vmatpush1.msra.mxu0 0.0
        %2666 = vmatprep.subr.mxu0 0.0
        %2667 = vmatpush1.msra.mxu0 0.0
        %2668 = vmatprep.subr.mxu0 0.0
        %2669 = vmatpush1.msra.mxu0 0.0
        %2670 = vmatprep.subr.mxu0 0.0
        %2671 = vmatpush1.msra.mxu0 0.0
        %2672 = vmatprep.subr.mxu0 0.0
        %2673 = vmatpush1.msra.mxu0 0.0
        %2674 = vmatprep.subr.mxu0 0.0
        %2675 = vmatpush1.msra.mxu0 0.0
        %2676 = vmatprep.subr.mxu0 0.0
        %2677 = vmatpush1.msra.mxu0 0.0
        %2678 = vmatprep.subr.mxu0 0.0
        %2679 = vmatpush1.msra.mxu0 0.0
        %2680 = vmatprep.subr.mxu0 0.0
        %2681 = vmatpush1.msra.mxu0 0.0
        %2682 = vmatprep.subr.mxu0 0.0
        %2683 = vmatpush1.msra.mxu0 0.0
        %2684 = vmatprep.subr.mxu0 0.0
        %2685 = vmatpush1.msra.mxu0 0.0
        %2686 = vmatprep.subr.mxu0 0.0
        %2687 = vmatpush1.msra.mxu0 0.0
        %2688 = vmatprep.subr.mxu0 0.0
        %2689 = vmatpush1.msra.mxu0 0.0
        %2690 = vmatprep.subr.mxu0 0.0
        %2691 = vmatpush1.msra.mxu0 0.0
        %2692 = vmatprep.subr.mxu0 0.0
        %2693 = vmatpush1.msra.mxu0 0.0
        %2694 = vmatprep.subr.mxu0 0.0
        %2695 = vmatpush1.msra.mxu0 0.0
        %2696 = vmatprep.subr.mxu0 0.0
        %2697 = vmatpush1.msra.mxu0 0.0
        %2698 = vmatprep.subr.mxu0 0.0
        %2699 = vmatpush1.msra.mxu0 0.0
        %2700 = vmatprep.subr.mxu0 0.0
        %2701 = vmatpush1.msra.mxu0 0.0
        %2702 = vmatprep.subr.mxu0 0.0
        %2703 = vmatpush1.msra.mxu0 0.0
        %2704 = vmatprep.subr.mxu0 0.0
        %2705 = vmatpush1.msra.mxu0 0.0
        %2706 = vmatprep.subr.mxu0 0.0
        %2707 = vmatpush1.msra.mxu0 0.0
        %2708 = vmatprep.subr.mxu0 0.0
        %2709 = vmatpush1.msra.mxu0 0.0
        %2710 = vmatprep.mubr.f32.mxu0 0.0
        %v2711 = vand.u32 %v2178, 4294901760
        %2712 = vmatmul.mubr.f32.gmra.mrb[0].mxu0 %v2711
        %v2713 = vpop.f32.mrb[0].mxu0
        %v2714 = vadd.f32 %v2635, %v2713
        %v2715 = vpop.f32.mrb[0].mxu0
        %2716 = vdwg.mxu0
        %v2717 = vtanh.pop %v2714
        %s2718 = scalar_lea.vmem %s5, 2
        %v2719 = vld [vmem:[%s2718] sm:$0x1]
        %s2720 = scalar_lea.vmem %s6, 2
        %v2721 = vld [vmem:[%s2720] sm:$0x1]
        %v2722 = vsel %vm962, %v2717, 0.0
        %2723 = vadd.xlane.f32.xlu0 %v2722
        %v2724 = vpop.xlane.xlu0 %2723
        %v2725 = vmul.f32 %v2724, %v1509
        %v2726 = vmul.f32 %v2717, %v2717
        %v2727 = vsel %vm962, %v2726, 0.0
        %2728 = vadd.xlane.f32.xlu0 %v2727
        %v2729 = vpop.xlane.xlu0 %2728
        %v2730 = vmul.f32 %v2729, %v1509
        %v2731 = vmul.f32 %v2725, %v2725
        %v2732 = vsub.f32 %v2730, %v2731
        %v2733 = vadd.f32 %v2732, 1e-05
        %v2734 = vrsqrt.pop %v2733
        %v2735 = vsub.f32 %v2717, %v2725
        %v2736 = vmul.f32 %v2735, %v2734
        %v2738 = vlaneseq
        %v2739 = vshrl.u32 %v2738, 7
        %v2740 = vsub.s32 0, %v2739
        %v2741 = vrot.slane %v2719, %v2740
        %v2743 = vmul.f32 %v2736, %v2741
        %v2745 = vlaneseq
        %v2746 = vshrl.u32 %v2745, 7
        %v2747 = vsub.s32 0, %v2746
        %v2748 = vrot.slane %v2721, %v2747
        %v2750 = vadd.f32 %v2743, %v2748
        %s2751 = scalar_lea.vmem [#allocation7], 192
        %v2752 = vld [vmem:[%s2751] sm:$0xff]
        %v2753 = vld [vmem:[%s2751 + $0x8] sm:$0xff]
        %v2754 = vld [vmem:[%s2751 + $0x10] sm:$0xff]
        %v2755 = vld [vmem:[%s2751 + $0x18] sm:$0xff]
        %v2756 = vld [vmem:[%s2751 + $0x20] sm:$0xff]
        %v2757 = vld [vmem:[%s2751 + $0x28] sm:$0xff]
        %v2758 = vld [vmem:[%s2751 + $0x30] sm:$0xff]
        %v2759 = vld [vmem:[%s2751 + $0x38] sm:$0xff]
        %s2760 = scalar_lea.vmem %s4, 3
        %v2761 = vld [vmem:[%s2760] sm:$0x1]
        %v2763 = vlaneseq
        %v2764 = vshrl.u32 %v2763, 7
        %v2765 = vsub.s32 0, %v2764
        %v2766 = vrot.slane %v2761, %v2765
        %v2769 = vsel %vm962, %v2750, 0
        %2771 = vmatprep.subr.mxu0 0.0
        %v2772 = vand.u32 %v2752, 4294901760
        %2773 = vmatpush1.msra.mxu0 %v2772
        %2774 = vmatprep.subr.mxu0 0.0
        %v2775 = vand.u32 %v2753, 4294901760
        %2776 = vmatpush1.msra.mxu0 %v2775
        %2777 = vmatprep.subr.mxu0 0.0
        %v2778 = vand.u32 %v2754, 4294901760
        %2779 = vmatpush1.msra.mxu0 %v2778
        %2780 = vmatprep.subr.mxu0 0.0
        %v2781 = vand.u32 %v2755, 4294901760
        %2782 = vmatpush1.msra.mxu0 %v2781
        %2783 = vmatprep.subr.mxu0 0.0
        %v2784 = vand.u32 %v2756, 4294901760
        %2785 = vmatpush1.msra.mxu0 %v2784
        %2786 = vmatprep.subr.mxu0 0.0
        %v2787 = vand.u32 %v2757, 4294901760
        %2788 = vmatpush1.msra.mxu0 %v2787
        %2789 = vmatprep.subr.mxu0 0.0
        %v2790 = vand.u32 %v2758, 4294901760
        %2791 = vmatpush1.msra.mxu0 %v2790
        %2792 = vmatprep.subr.mxu0 0.0
        %v2793 = vand.u32 %v2759, 4294901760
        %2794 = vmatpush1.msra.mxu0 %v2793
        %2795 = vmatprep.subr.mxu0 0.0
        %2796 = vmatpush1.msra.mxu0 0.0
        %2797 = vmatprep.subr.mxu0 0.0
        %2798 = vmatpush1.msra.mxu0 0.0
        %2799 = vmatprep.subr.mxu0 0.0
        %2800 = vmatpush1.msra.mxu0 0.0
        %2801 = vmatprep.subr.mxu0 0.0
        %2802 = vmatpush1.msra.mxu0 0.0
        %2803 = vmatprep.subr.mxu0 0.0
        %2804 = vmatpush1.msra.mxu0 0.0
        %2805 = vmatprep.subr.mxu0 0.0
        %2806 = vmatpush1.msra.mxu0 0.0
        %2807 = vmatprep.subr.mxu0 0.0
        %2808 = vmatpush1.msra.mxu0 0.0
        %2809 = vmatprep.subr.mxu0 0.0
        %2810 = vmatpush1.msra.mxu0 0.0
        %2811 = vmatprep.subr.mxu0 0.0
        %2812 = vmatpush1.msra.mxu0 0.0
        %2813 = vmatprep.subr.mxu0 0.0
        %2814 = vmatpush1.msra.mxu0 0.0
        %2815 = vmatprep.subr.mxu0 0.0
        %2816 = vmatpush1.msra.mxu0 0.0
        %2817 = vmatprep.subr.mxu0 0.0
        %2818 = vmatpush1.msra.mxu0 0.0
        %2819 = vmatprep.subr.mxu0 0.0
        %2820 = vmatpush1.msra.mxu0 0.0
        %2821 = vmatprep.subr.mxu0 0.0
        %2822 = vmatpush1.msra.mxu0 0.0
        %2823 = vmatprep.subr.mxu0 0.0
        %2824 = vmatpush1.msra.mxu0 0.0
        %2825 = vmatprep.subr.mxu0 0.0
        %2826 = vmatpush1.msra.mxu0 0.0
        %2827 = vmatprep.subr.mxu0 0.0
        %2828 = vmatpush1.msra.mxu0 0.0
        %2829 = vmatprep.subr.mxu0 0.0
        %2830 = vmatpush1.msra.mxu0 0.0
        %2831 = vmatprep.subr.mxu0 0.0
        %2832 = vmatpush1.msra.mxu0 0.0
        %2833 = vmatprep.subr.mxu0 0.0
        %2834 = vmatpush1.msra.mxu0 0.0
        %2835 = vmatprep.subr.mxu0 0.0
        %2836 = vmatpush1.msra.mxu0 0.0
        %2837 = vmatprep.subr.mxu0 0.0
        %2838 = vmatpush1.msra.mxu0 0.0
        %2839 = vmatprep.subr.mxu0 0.0
        %2840 = vmatpush1.msra.mxu0 0.0
        %2841 = vmatprep.subr.mxu0 0.0
        %2842 = vmatpush1.msra.mxu0 0.0
        %2843 = vmatprep.mubr.f32.mxu0 0.0
        %v2844 = vand.u32 %v2769, 4294901760
        %v2845 = vsub.f32 %v2769, %v2844
        %v2846 = vand.u32 %v2845, 4294901760
        %v2847 = vsub.f32 %v2845, %v2846
        %v2848 = vand.u32 %v2847, 4294901760
        %2849 = vmatmul.mubr.f32.gmra.mrb[0].mxu0 %v2848
        %v2850 = vpop.f32.mrb[0].mxu0
        %v2851 = vadd.f32 %v2766, %v2850
        %v2852 = vpop.f32.mrb[0].mxu0
        %2853 = vdwg.mxu0
        %2854 = vmatprep.subr.mxu0 0.0
        %v2855 = vand.u32 %v2752, 4294901760
        %v2856 = vsub.f32 %v2752, %v2855
        %v2857 = vand.u32 %v2856, 4294901760
        %v2858 = vsub.f32 %v2856, %v2857
        %v2859 = vand.u32 %v2858, 4294901760
        %2860 = vmatpush1.msra.mxu0 %v2859
        %2861 = vmatprep.subr.mxu0 0.0
        %v2862 = vand.u32 %v2753, 4294901760
        %v2863 = vsub.f32 %v2753, %v2862
        %v2864 = vand.u32 %v2863, 4294901760
        %v2865 = vsub.f32 %v2863, %v2864
        %v2866 = vand.u32 %v2865, 4294901760
        %2867 = vmatpush1.msra.mxu0 %v2866
        %2868 = vmatprep.subr.mxu0 0.0
        %v2869 = vand.u32 %v2754, 4294901760
        %v2870 = vsub.f32 %v2754, %v2869
        %v2871 = vand.u32 %v2870, 4294901760
        %v2872 = vsub.f32 %v2870, %v2871
        %v2873 = vand.u32 %v2872, 4294901760
        %2874 = vmatpush1.msra.mxu0 %v2873
        %2875 = vmatprep.subr.mxu0 0.0
        %v2876 = vand.u32 %v2755, 4294901760
        %v2877 = vsub.f32 %v2755, %v2876
        %v2878 = vand.u32 %v2877, 4294901760
        %v2879 = vsub.f32 %v2877, %v2878
        %v2880 = vand.u32 %v2879, 4294901760
        %2881 = vmatpush1.msra.mxu0 %v2880
        %2882 = vmatprep.subr.mxu0 0.0
        %v2883 = vand.u32 %v2756, 4294901760
        %v2884 = vsub.f32 %v2756, %v2883
        %v2885 = vand.u32 %v2884, 4294901760
        %v2886 = vsub.f32 %v2884, %v2885
        %v2887 = vand.u32 %v2886, 4294901760
        %2888 = vmatpush1.msra.mxu0 %v2887
        %2889 = vmatprep.subr.mxu0 0.0
        %v2890 = vand.u32 %v2757, 4294901760
        %v2891 = vsub.f32 %v2757, %v2890
        %v2892 = vand.u32 %v2891, 4294901760
        %v2893 = vsub.f32 %v2891, %v2892
        %v2894 = vand.u32 %v2893, 4294901760
        %2895 = vmatpush1.msra.mxu0 %v2894
        %2896 = vmatprep.subr.mxu0 0.0
        %v2897 = vand.u32 %v2758, 4294901760
        %v2898 = vsub.f32 %v2758, %v2897
        %v2899 = vand.u32 %v2898, 4294901760
        %v2900 = vsub.f32 %v2898, %v2899
        %v2901 = vand.u32 %v2900, 4294901760
        %2902 = vmatpush1.msra.mxu0 %v2901
        %2903 = vmatprep.subr.mxu0 0.0
        %v2904 = vand.u32 %v2759, 4294901760
        %v2905 = vsub.f32 %v2759, %v2904
        %v2906 = vand.u32 %v2905, 4294901760
        %v2907 = vsub.f32 %v2905, %v2906
        %v2908 = vand.u32 %v2907, 4294901760
        %2909 = vmatpush1.msra.mxu0 %v2908
        %2910 = vmatprep.subr.mxu0 0.0
        %2911 = vmatpush1.msra.mxu0 0.0
        %2912 = vmatprep.subr.mxu0 0.0
        %2913 = vmatpush1.msra.mxu0 0.0
        %2914 = vmatprep.subr.mxu0 0.0
        %2915 = vmatpush1.msra.mxu0 0.0
        %2916 = vmatprep.subr.mxu0 0.0
        %2917 = vmatpush1.msra.mxu0 0.0
        %2918 = vmatprep.subr.mxu0 0.0
        %2919 = vmatpush1.msra.mxu0 0.0
        %2920 = vmatprep.subr.mxu0 0.0
        %2921 = vmatpush1.msra.mxu0 0.0
        %2922 = vmatprep.subr.mxu0 0.0
        %2923 = vmatpush1.msra.mxu0 0.0
        %2924 = vmatprep.subr.mxu0 0.0
        %2925 = vmatpush1.msra.mxu0 0.0
        %2926 = vmatprep.subr.mxu0 0.0
        %2927 = vmatpush1.msra.mxu0 0.0
        %2928 = vmatprep.subr.mxu0 0.0
        %2929 = vmatpush1.msra.mxu0 0.0
        %2930 = vmatprep.subr.mxu0 0.0
        %2931 = vmatpush1.msra.mxu0 0.0
        %2932 = vmatprep.subr.mxu0 0.0
        %2933 = vmatpush1.msra.mxu0 0.0
        %2934 = vmatprep.subr.mxu0 0.0
        %2935 = vmatpush1.msra.mxu0 0.0
        %2936 = vmatprep.subr.mxu0 0.0
        %2937 = vmatpush1.msra.mxu0 0.0
        %2938 = vmatprep.subr.mxu0 0.0
        %2939 = vmatpush1.msra.mxu0 0.0
        %2940 = vmatprep.subr.mxu0 0.0
        %2941 = vmatpush1.msra.mxu0 0.0
        %2942 = vmatprep.subr.mxu0 0.0
        %2943 = vmatpush1.msra.mxu0 0.0
        %2944 = vmatprep.subr.mxu0 0.0
        %2945 = vmatpush1.msra.mxu0 0.0
        %2946 = vmatprep.subr.mxu0 0.0
        %2947 = vmatpush1.msra.mxu0 0.0
        %2948 = vmatprep.subr.mxu0 0.0
        %2949 = vmatpush1.msra.mxu0 0.0
        %2950 = vmatprep.subr.mxu0 0.0
        %2951 = vmatpush1.msra.mxu0 0.0
        %2952 = vmatprep.subr.mxu0 0.0
        %2953 = vmatpush1.msra.mxu0 0.0
        %2954 = vmatprep.subr.mxu0 0.0
        %2955 = vmatpush1.msra.mxu0 0.0
        %2956 = vmatprep.subr.mxu0 0.0
        %2957 = vmatpush1.msra.mxu0 0.0
        %2958 = vmatprep.mubr.f32.mxu0 0.0
        %v2959 = vand.u32 %v2769, 4294901760
        %2960 = vmatmul.mubr.f32.gmra.mrb[0].mxu0 %v2959
        %v2961 = vpop.f32.mrb[0].mxu0
        %v2962 = vadd.f32 %v2851, %v2961
        %v2963 = vpop.f32.mrb[0].mxu0
        %2964 = vdwg.mxu0
        %2965 = vmatprep.subr.mxu0 0.0
        %v2966 = vand.u32 %v2752, 4294901760
        %v2967 = vsub.f32 %v2752, %v2966
        %2968 = vmatpush1.msra.mxu0 %v2967
        %2969 = vmatprep.subr.mxu0 0.0
        %v2970 = vand.u32 %v2753, 4294901760
        %v2971 = vsub.f32 %v2753, %v2970
        %2972 = vmatpush1.msra.mxu0 %v2971
        %2973 = vmatprep.subr.mxu0 0.0
        %v2974 = vand.u32 %v2754, 4294901760
        %v2975 = vsub.f32 %v2754, %v2974
        %2976 = vmatpush1.msra.mxu0 %v2975
        %2977 = vmatprep.subr.mxu0 0.0
        %v2978 = vand.u32 %v2755, 4294901760
        %v2979 = vsub.f32 %v2755, %v2978
        %2980 = vmatpush1.msra.mxu0 %v2979
        %2981 = vmatprep.subr.mxu0 0.0
        %v2982 = vand.u32 %v2756, 4294901760
        %v2983 = vsub.f32 %v2756, %v2982
        %2984 = vmatpush1.msra.mxu0 %v2983
        %2985 = vmatprep.subr.mxu0 0.0
        %v2986 = vand.u32 %v2757, 4294901760
        %v2987 = vsub.f32 %v2757, %v2986
        %2988 = vmatpush1.msra.mxu0 %v2987
        %2989 = vmatprep.subr.mxu0 0.0
        %v2990 = vand.u32 %v2758, 4294901760
        %v2991 = vsub.f32 %v2758, %v2990
        %2992 = vmatpush1.msra.mxu0 %v2991
        %2993 = vmatprep.subr.mxu0 0.0
        %v2994 = vand.u32 %v2759, 4294901760
        %v2995 = vsub.f32 %v2759, %v2994
        %2996 = vmatpush1.msra.mxu0 %v2995
        %2997 = vmatprep.subr.mxu0 0.0
        %2998 = vmatpush1.msra.mxu0 0.0
        %2999 = vmatprep.subr.mxu0 0.0
        %3000 = vmatpush1.msra.mxu0 0.0
        %3001 = vmatprep.subr.mxu0 0.0
        %3002 = vmatpush1.msra.mxu0 0.0
        %3003 = vmatprep.subr.mxu0 0.0
        %3004 = vmatpush1.msra.mxu0 0.0
        %3005 = vmatprep.subr.mxu0 0.0
        %3006 = vmatpush1.msra.mxu0 0.0
        %3007 = vmatprep.subr.mxu0 0.0
        %3008 = vmatpush1.msra.mxu0 0.0
        %3009 = vmatprep.subr.mxu0 0.0
        %3010 = vmatpush1.msra.mxu0 0.0
        %3011 = vmatprep.subr.mxu0 0.0
        %3012 = vmatpush1.msra.mxu0 0.0
        %3013 = vmatprep.subr.mxu0 0.0
        %3014 = vmatpush1.msra.mxu0 0.0
        %3015 = vmatprep.subr.mxu0 0.0
        %3016 = vmatpush1.msra.mxu0 0.0
        %3017 = vmatprep.subr.mxu0 0.0
        %3018 = vmatpush1.msra.mxu0 0.0
        %3019 = vmatprep.subr.mxu0 0.0
        %3020 = vmatpush1.msra.mxu0 0.0
        %3021 = vmatprep.subr.mxu0 0.0
        %3022 = vmatpush1.msra.mxu0 0.0
        %3023 = vmatprep.subr.mxu0 0.0
        %3024 = vmatpush1.msra.mxu0 0.0
        %3025 = vmatprep.subr.mxu0 0.0
        %3026 = vmatpush1.msra.mxu0 0.0
        %3027 = vmatprep.subr.mxu0 0.0
        %3028 = vmatpush1.msra.mxu0 0.0
        %3029 = vmatprep.subr.mxu0 0.0
        %3030 = vmatpush1.msra.mxu0 0.0
        %3031 = vmatprep.subr.mxu0 0.0
        %3032 = vmatpush1.msra.mxu0 0.0
        %3033 = vmatprep.subr.mxu0 0.0
        %3034 = vmatpush1.msra.mxu0 0.0
        %3035 = vmatprep.subr.mxu0 0.0
        %3036 = vmatpush1.msra.mxu0 0.0
        %3037 = vmatprep.subr.mxu0 0.0
        %3038 = vmatpush1.msra.mxu0 0.0
        %3039 = vmatprep.subr.mxu0 0.0
        %3040 = vmatpush1.msra.mxu0 0.0
        %3041 = vmatprep.subr.mxu0 0.0
        %3042 = vmatpush1.msra.mxu0 0.0
        %3043 = vmatprep.subr.mxu0 0.0
        %3044 = vmatpush1.msra.mxu0 0.0
        %3045 = vmatprep.mubr.f32.mxu0 0.0
        %v3046 = vand.u32 %v2769, 4294901760
        %v3047 = vsub.f32 %v2769, %v3046
        %3048 = vmatmul.mubr.f32.gmra.mrb[0].mxu0 %v3047
        %v3049 = vpop.f32.mrb[0].mxu0
        %v3050 = vadd.f32 %v2962, %v3049
        %v3051 = vpop.f32.mrb[0].mxu0
        %3052 = vdwg.mxu0
        %3053 = vmatprep.subr.mxu0 0.0
        %v3054 = vand.u32 %v2752, 4294901760
        %3055 = vmatpush1.msra.mxu0 %v3054
        %3056 = vmatprep.subr.mxu0 0.0
        %v3057 = vand.u32 %v2753, 4294901760
        %3058 = vmatpush1.msra.mxu0 %v3057
        %3059 = vmatprep.subr.mxu0 0.0
        %v3060 = vand.u32 %v2754, 4294901760
        %3061 = vmatpush1.msra.mxu0 %v3060
        %3062 = vmatprep.subr.mxu0 0.0
        %v3063 = vand.u32 %v2755, 4294901760
        %3064 = vmatpush1.msra.mxu0 %v3063
        %3065 = vmatprep.subr.mxu0 0.0
        %v3066 = vand.u32 %v2756, 4294901760
        %3067 = vmatpush1.msra.mxu0 %v3066
        %3068 = vmatprep.subr.mxu0 0.0
        %v3069 = vand.u32 %v2757, 4294901760
        %3070 = vmatpush1.msra.mxu0 %v3069
        %3071 = vmatprep.subr.mxu0 0.0
        %v3072 = vand.u32 %v2758, 4294901760
        %3073 = vmatpush1.msra.mxu0 %v3072
        %3074 = vmatprep.subr.mxu0 0.0
        %v3075 = vand.u32 %v2759, 4294901760
        %3076 = vmatpush1.msra.mxu0 %v3075
        %3077 = vmatprep.subr.mxu0 0.0
        %3078 = vmatpush1.msra.mxu0 0.0
        %3079 = vmatprep.subr.mxu0 0.0
        %3080 = vmatpush1.msra.mxu0 0.0
        %3081 = vmatprep.subr.mxu0 0.0
        %3082 = vmatpush1.msra.mxu0 0.0
        %3083 = vmatprep.subr.mxu0 0.0
        %3084 = vmatpush1.msra.mxu0 0.0
        %3085 = vmatprep.subr.mxu0 0.0
        %3086 = vmatpush1.msra.mxu0 0.0
        %3087 = vmatprep.subr.mxu0 0.0
        %3088 = vmatpush1.msra.mxu0 0.0
        %3089 = vmatprep.subr.mxu0 0.0
        %3090 = vmatpush1.msra.mxu0 0.0
        %3091 = vmatprep.subr.mxu0 0.0
        %3092 = vmatpush1.msra.mxu0 0.0
        %3093 = vmatprep.subr.mxu0 0.0
        %3094 = vmatpush1.msra.mxu0 0.0
        %3095 = vmatprep.subr.mxu0 0.0
        %3096 = vmatpush1.msra.mxu0 0.0
        %3097 = vmatprep.subr.mxu0 0.0
        %3098 = vmatpush1.msra.mxu0 0.0
        %3099 = vmatprep.subr.mxu0 0.0
        %3100 = vmatpush1.msra.mxu0 0.0
        %3101 = vmatprep.subr.mxu0 0.0
        %3102 = vmatpush1.msra.mxu0 0.0
        %3103 = vmatprep.subr.mxu0 0.0
        %3104 = vmatpush1.msra.mxu0 0.0
        %3105 = vmatprep.subr.mxu0 0.0
        %3106 = vmatpush1.msra.mxu0 0.0
        %3107 = vmatprep.subr.mxu0 0.0
        %3108 = vmatpush1.msra.mxu0 0.0
        %3109 = vmatprep.subr.mxu0 0.0
        %3110 = vmatpush1.msra.mxu0 0.0
        %3111 = vmatprep.subr.mxu0 0.0
        %3112 = vmatpush1.msra.mxu0 0.0
        %3113 = vmatprep.subr.mxu0 0.0
        %3114 = vmatpush1.msra.mxu0 0.0
        %3115 = vmatprep.subr.mxu0 0.0
        %3116 = vmatpush1.msra.mxu0 0.0
        %3117 = vmatprep.subr.mxu0 0.0
        %3118 = vmatpush1.msra.mxu0 0.0
        %3119 = vmatprep.subr.mxu0 0.0
        %3120 = vmatpush1.msra.mxu0 0.0
        %3121 = vmatprep.subr.mxu0 0.0
        %3122 = vmatpush1.msra.mxu0 0.0
        %3123 = vmatprep.subr.mxu0 0.0
        %3124 = vmatpush1.msra.mxu0 0.0
        %3125 = vmatprep.mubr.f32.mxu0 0.0
        %v3126 = vand.u32 %v2769, 4294901760
        %v3127 = vsub.f32 %v2769, %v3126
        %v3128 = vand.u32 %v3127, 4294901760
        %3129 = vmatmul.mubr.f32.gmra.mrb[0].mxu0 %v3128
        %v3130 = vpop.f32.mrb[0].mxu0
        %v3131 = vadd.f32 %v3050, %v3130
        %v3132 = vpop.f32.mrb[0].mxu0
        %3133 = vdwg.mxu0
        %3134 = vmatprep.subr.mxu0 0.0
        %v3135 = vand.u32 %v2752, 4294901760
        %v3136 = vsub.f32 %v2752, %v3135
        %v3137 = vand.u32 %v3136, 4294901760
        %3138 = vmatpush1.msra.mxu0 %v3137
        %3139 = vmatprep.subr.mxu0 0.0
        %v3140 = vand.u32 %v2753, 4294901760
        %v3141 = vsub.f32 %v2753, %v3140
        %v3142 = vand.u32 %v3141, 4294901760
        %3143 = vmatpush1.msra.mxu0 %v3142
        %3144 = vmatprep.subr.mxu0 0.0
        %v3145 = vand.u32 %v2754, 4294901760
        %v3146 = vsub.f32 %v2754, %v3145
        %v3147 = vand.u32 %v3146, 4294901760
        %3148 = vmatpush1.msra.mxu0 %v3147
        %3149 = vmatprep.subr.mxu0 0.0
        %v3150 = vand.u32 %v2755, 4294901760
        %v3151 = vsub.f32 %v2755, %v3150
        %v3152 = vand.u32 %v3151, 4294901760
        %3153 = vmatpush1.msra.mxu0 %v3152
        %3154 = vmatprep.subr.mxu0 0.0
        %v3155 = vand.u32 %v2756, 4294901760
        %v3156 = vsub.f32 %v2756, %v3155
        %v3157 = vand.u32 %v3156, 4294901760
        %3158 = vmatpush1.msra.mxu0 %v3157
        %3159 = vmatprep.subr.mxu0 0.0
        %v3160 = vand.u32 %v2757, 4294901760
        %v3161 = vsub.f32 %v2757, %v3160
        %v3162 = vand.u32 %v3161, 4294901760
        %3163 = vmatpush1.msra.mxu0 %v3162
        %3164 = vmatprep.subr.mxu0 0.0
        %v3165 = vand.u32 %v2758, 4294901760
        %v3166 = vsub.f32 %v2758, %v3165
        %v3167 = vand.u32 %v3166, 4294901760
        %3168 = vmatpush1.msra.mxu0 %v3167
        %3169 = vmatprep.subr.mxu0 0.0
        %v3170 = vand.u32 %v2759, 4294901760
        %v3171 = vsub.f32 %v2759, %v3170
        %v3172 = vand.u32 %v3171, 4294901760
        %3173 = vmatpush1.msra.mxu0 %v3172
        %3174 = vmatprep.subr.mxu0 0.0
        %3175 = vmatpush1.msra.mxu0 0.0
        %3176 = vmatprep.subr.mxu0 0.0
        %3177 = vmatpush1.msra.mxu0 0.0
        %3178 = vmatprep.subr.mxu0 0.0
        %3179 = vmatpush1.msra.mxu0 0.0
        %3180 = vmatprep.subr.mxu0 0.0
        %3181 = vmatpush1.msra.mxu0 0.0
        %3182 = vmatprep.subr.mxu0 0.0
        %3183 = vmatpush1.msra.mxu0 0.0
        %3184 = vmatprep.subr.mxu0 0.0
        %3185 = vmatpush1.msra.mxu0 0.0
        %3186 = vmatprep.subr.mxu0 0.0
        %3187 = vmatpush1.msra.mxu0 0.0
        %3188 = vmatprep.subr.mxu0 0.0
        %3189 = vmatpush1.msra.mxu0 0.0
        %3190 = vmatprep.subr.mxu0 0.0
        %3191 = vmatpush1.msra.mxu0 0.0
        %3192 = vmatprep.subr.mxu0 0.0
        %3193 = vmatpush1.msra.mxu0 0.0
        %3194 = vmatprep.subr.mxu0 0.0
        %3195 = vmatpush1.msra.mxu0 0.0
        %3196 = vmatprep.subr.mxu0 0.0
        %3197 = vmatpush1.msra.mxu0 0.0
        %3198 = vmatprep.subr.mxu0 0.0
        %3199 = vmatpush1.msra.mxu0 0.0
        %3200 = vmatprep.subr.mxu0 0.0
        %3201 = vmatpush1.msra.mxu0 0.0
        %3202 = vmatprep.subr.mxu0 0.0
        %3203 = vmatpush1.msra.mxu0 0.0
        %3204 = vmatprep.subr.mxu0 0.0
        %3205 = vmatpush1.msra.mxu0 0.0
        %3206 = vmatprep.subr.mxu0 0.0
        %3207 = vmatpush1.msra.mxu0 0.0
        %3208 = vmatprep.subr.mxu0 0.0
        %3209 = vmatpush1.msra.mxu0 0.0
        %3210 = vmatprep.subr.mxu0 0.0
        %3211 = vmatpush1.msra.mxu0 0.0
        %3212 = vmatprep.subr.mxu0 0.0
        %3213 = vmatpush1.msra.mxu0 0.0
        %3214 = vmatprep.subr.mxu0 0.0
        %3215 = vmatpush1.msra.mxu0 0.0
        %3216 = vmatprep.subr.mxu0 0.0
        %3217 = vmatpush1.msra.mxu0 0.0
        %3218 = vmatprep.subr.mxu0 0.0
        %3219 = vmatpush1.msra.mxu0 0.0
        %3220 = vmatprep.subr.mxu0 0.0
        %3221 = vmatpush1.msra.mxu0 0.0
        %3222 = vmatprep.mubr.f32.mxu0 0.0
        %v3223 = vand.u32 %v2769, 4294901760
        %3224 = vmatmul.mubr.f32.gmra.mrb[0].mxu0 %v3223
        %v3225 = vpop.f32.mrb[0].mxu0
        %v3226 = vadd.f32 %v3131, %v3225
        %v3227 = vpop.f32.mrb[0].mxu0
        %3228 = vdwg.mxu0
        %3229 = vmatprep.subr.mxu0 0.0
        %v3230 = vand.u32 %v2752, 4294901760
        %3231 = vmatpush1.msra.mxu0 %v3230
        %3232 = vmatprep.subr.mxu0 0.0
        %v3233 = vand.u32 %v2753, 4294901760
        %3234 = vmatpush1.msra.mxu0 %v3233
        %3235 = vmatprep.subr.mxu0 0.0
        %v3236 = vand.u32 %v2754, 4294901760
        %3237 = vmatpush1.msra.mxu0 %v3236
        %3238 = vmatprep.subr.mxu0 0.0
        %v3239 = vand.u32 %v2755, 4294901760
        %3240 = vmatpush1.msra.mxu0 %v3239
        %3241 = vmatprep.subr.mxu0 0.0
        %v3242 = vand.u32 %v2756, 4294901760
        %3243 = vmatpush1.msra.mxu0 %v3242
        %3244 = vmatprep.subr.mxu0 0.0
        %v3245 = vand.u32 %v2757, 4294901760
        %3246 = vmatpush1.msra.mxu0 %v3245
        %3247 = vmatprep.subr.mxu0 0.0
        %v3248 = vand.u32 %v2758, 4294901760
        %3249 = vmatpush1.msra.mxu0 %v3248
        %3250 = vmatprep.subr.mxu0 0.0
        %v3251 = vand.u32 %v2759, 4294901760
        %3252 = vmatpush1.msra.mxu0 %v3251
        %3253 = vmatprep.subr.mxu0 0.0
        %3254 = vmatpush1.msra.mxu0 0.0
        %3255 = vmatprep.subr.mxu0 0.0
        %3256 = vmatpush1.msra.mxu0 0.0
        %3257 = vmatprep.subr.mxu0 0.0
        %3258 = vmatpush1.msra.mxu0 0.0
        %3259 = vmatprep.subr.mxu0 0.0
        %3260 = vmatpush1.msra.mxu0 0.0
        %3261 = vmatprep.subr.mxu0 0.0
        %3262 = vmatpush1.msra.mxu0 0.0
        %3263 = vmatprep.subr.mxu0 0.0
        %3264 = vmatpush1.msra.mxu0 0.0
        %3265 = vmatprep.subr.mxu0 0.0
        %3266 = vmatpush1.msra.mxu0 0.0
        %3267 = vmatprep.subr.mxu0 0.0
        %3268 = vmatpush1.msra.mxu0 0.0
        %3269 = vmatprep.subr.mxu0 0.0
        %3270 = vmatpush1.msra.mxu0 0.0
        %3271 = vmatprep.subr.mxu0 0.0
        %3272 = vmatpush1.msra.mxu0 0.0
        %3273 = vmatprep.subr.mxu0 0.0
        %3274 = vmatpush1.msra.mxu0 0.0
        %3275 = vmatprep.subr.mxu0 0.0
        %3276 = vmatpush1.msra.mxu0 0.0
        %3277 = vmatprep.subr.mxu0 0.0
        %3278 = vmatpush1.msra.mxu0 0.0
        %3279 = vmatprep.subr.mxu0 0.0
        %3280 = vmatpush1.msra.mxu0 0.0
        %3281 = vmatprep.subr.mxu0 0.0
        %3282 = vmatpush1.msra.mxu0 0.0
        %3283 = vmatprep.subr.mxu0 0.0
        %3284 = vmatpush1.msra.mxu0 0.0
        %3285 = vmatprep.subr.mxu0 0.0
        %3286 = vmatpush1.msra.mxu0 0.0
        %3287 = vmatprep.subr.mxu0 0.0
        %3288 = vmatpush1.msra.mxu0 0.0
        %3289 = vmatprep.subr.mxu0 0.0
        %3290 = vmatpush1.msra.mxu0 0.0
        %3291 = vmatprep.subr.mxu0 0.0
        %3292 = vmatpush1.msra.mxu0 0.0
        %3293 = vmatprep.subr.mxu0 0.0
        %3294 = vmatpush1.msra.mxu0 0.0
        %3295 = vmatprep.subr.mxu0 0.0
        %3296 = vmatpush1.msra.mxu0 0.0
        %3297 = vmatprep.subr.mxu0 0.0
        %3298 = vmatpush1.msra.mxu0 0.0
        %3299 = vmatprep.subr.mxu0 0.0
        %3300 = vmatpush1.msra.mxu0 0.0
        %3301 = vmatprep.mubr.f32.mxu0 0.0
        %v3302 = vand.u32 %v2769, 4294901760
        %3303 = vmatmul.mubr.f32.gmra.mrb[0].mxu0 %v3302
        %v3304 = vpop.f32.mrb[0].mxu0
        %v3305 = vadd.f32 %v3226, %v3304
        %v3306 = vpop.f32.mrb[0].mxu0
        %3307 = vdwg.mxu0
        %v3308 = vtanh.pop %v3305
        %s3309 = scalar_lea.vmem %s5, 3
        %v3310 = vld [vmem:[%s3309] sm:$0x1]
        %s3311 = scalar_lea.vmem %s6, 3
        %v3312 = vld [vmem:[%s3311] sm:$0x1]
        %v3313 = vsel %vm962, %v3308, 0.0
        %3314 = vadd.xlane.f32.xlu0 %v3313
        %v3315 = vpop.xlane.xlu0 %3314
        %v3316 = vmul.f32 %v3315, %v1509
        %v3317 = vmul.f32 %v3308, %v3308
        %v3318 = vsel %vm962, %v3317, 0.0
        %3319 = vadd.xlane.f32.xlu0 %v3318
        %v3320 = vpop.xlane.xlu0 %3319
        %v3321 = vmul.f32 %v3320, %v1509
        %v3322 = vmul.f32 %v3316, %v3316
        %v3323 = vsub.f32 %v3321, %v3322
        %v3324 = vadd.f32 %v3323, 1e-05
        %v3325 = vrsqrt.pop %v3324
        %v3326 = vsub.f32 %v3308, %v3316
        %v3327 = vmul.f32 %v3326, %v3325
        %v3329 = vlaneseq
        %v3330 = vshrl.u32 %v3329, 7
        %v3331 = vsub.s32 0, %v3330
        %v3332 = vrot.slane %v3310, %v3331
        %v3334 = vmul.f32 %v3327, %v3332
        %v3336 = vlaneseq
        %v3337 = vshrl.u32 %v3336, 7
        %v3338 = vsub.s32 0, %v3337
        %v3339 = vrot.slane %v3312, %v3338
        %v3341 = vadd.f32 %v3334, %v3339
        %v3342 = vadd.f32 %v2159, %v3341
        %v3343 = vtanh.pop %v3342
        %s3344 = scalar_lea.vmem %s7, 1
        %v3345 = vld [vmem:[%s3344] sm:$0x1]
        %s3346 = scalar_lea.vmem %s8, 1
        %v3347 = vld [vmem:[%s3346] sm:$0x1]
        %v3348 = vsel %vm962, %v3343, 0.0
        %3349 = vadd.xlane.f32.xlu0 %v3348
        %v3350 = vpop.xlane.xlu0 %3349
        %v3351 = vmul.f32 %v3350, %v1509
        %v3352 = vmul.f32 %v3343, %v3343
        %v3353 = vsel %vm962, %v3352, 0.0
        %3354 = vadd.xlane.f32.xlu0 %v3353
        %v3355 = vpop.xlane.xlu0 %3354
        %v3356 = vmul.f32 %v3355, %v1509
        %v3357 = vmul.f32 %v3351, %v3351
        %v3358 = vsub.f32 %v3356, %v3357
        %v3359 = vadd.f32 %v3358, 1e-05
        %v3360 = vrsqrt.pop %v3359
        %v3361 = vsub.f32 %v3343, %v3351
        %v3362 = vmul.f32 %v3361, %v3360
        %v3364 = vlaneseq
        %v3365 = vshrl.u32 %v3364, 7
        %v3366 = vsub.s32 0, %v3365
        %v3367 = vrot.slane %v3345, %v3366
        %v3369 = vmul.f32 %v3362, %v3367
        %v3371 = vlaneseq
        %v3372 = vshrl.u32 %v3371, 7
        %v3373 = vsub.s32 0, %v3372
        %v3374 = vrot.slane %v3347, %v3373
        %v3376 = vadd.f32 %v3369, %v3374
        %v3377 = vld [vmem:[#allocation8] sm:$0xff]
        %v3378 = vld [vmem:[#allocation8 + $0x8] sm:$0xff]
        %v3379 = vld [vmem:[#allocation8 + $0x10] sm:$0xff]
        %v3380 = vld [vmem:[#allocation8 + $0x18] sm:$0xff]
        %v3381 = vld [vmem:[#allocation8 + $0x20] sm:$0xff]
        %v3382 = vld [vmem:[#allocation8 + $0x28] sm:$0xff]
        %v3383 = vld [vmem:[#allocation8 + $0x30] sm:$0xff]
        %v3384 = vld [vmem:[#allocation8 + $0x38] sm:$0xff]
        %v3385 = vld [vmem:[%s10] sm:$0x1]
        %v3387 = vlaneseq
        %v3388 = vshrl.u32 %v3387, 7
        %v3389 = vsub.s32 0, %v3388
        %v3390 = vrot.slane %v3385, %v3389
        %v3393 = vsel %vm962, %v3376, 0
        %3395 = vmatprep.subr.mxu0 0.0
        %v3396 = vand.u32 %v3377, 4294901760
        %3397 = vmatpush1.msra.mxu0 %v3396
        %3398 = vmatprep.subr.mxu0 0.0
        %v3399 = vand.u32 %v3378, 4294901760
        %3400 = vmatpush1.msra.mxu0 %v3399
        %3401 = vmatprep.subr.mxu0 0.0
        %v3402 = vand.u32 %v3379, 4294901760
        %3403 = vmatpush1.msra.mxu0 %v3402
        %3404 = vmatprep.subr.mxu0 0.0
        %v3405 = vand.u32 %v3380, 4294901760
        %3406 = vmatpush1.msra.mxu0 %v3405
        %3407 = vmatprep.subr.mxu0 0.0
        %v3408 = vand.u32 %v3381, 4294901760
        %3409 = vmatpush1.msra.mxu0 %v3408
        %3410 = vmatprep.subr.mxu0 0.0
        %v3411 = vand.u32 %v3382, 4294901760
        %3412 = vmatpush1.msra.mxu0 %v3411
        %3413 = vmatprep.subr.mxu0 0.0
        %v3414 = vand.u32 %v3383, 4294901760
        %3415 = vmatpush1.msra.mxu0 %v3414
        %3416 = vmatprep.subr.mxu0 0.0
        %v3417 = vand.u32 %v3384, 4294901760
        %3418 = vmatpush1.msra.mxu0 %v3417
        %3419 = vmatprep.subr.mxu0 0.0
        %3420 = vmatpush1.msra.mxu0 0.0
        %3421 = vmatprep.subr.mxu0 0.0
        %3422 = vmatpush1.msra.mxu0 0.0
        %3423 = vmatprep.subr.mxu0 0.0
        %3424 = vmatpush1.msra.mxu0 0.0
        %3425 = vmatprep.subr.mxu0 0.0
        %3426 = vmatpush1.msra.mxu0 0.0
        %3427 = vmatprep.subr.mxu0 0.0
        %3428 = vmatpush1.msra.mxu0 0.0
        %3429 = vmatprep.subr.mxu0 0.0
        %3430 = vmatpush1.msra.mxu0 0.0
        %3431 = vmatprep.subr.mxu0 0.0
        %3432 = vmatpush1.msra.mxu0 0.0
        %3433 = vmatprep.subr.mxu0 0.0
        %3434 = vmatpush1.msra.mxu0 0.0
        %3435 = vmatprep.subr.mxu0 0.0
        %3436 = vmatpush1.msra.mxu0 0.0
        %3437 = vmatprep.subr.mxu0 0.0
        %3438 = vmatpush1.msra.mxu0 0.0
        %3439 = vmatprep.subr.mxu0 0.0
        %3440 = vmatpush1.msra.mxu0 0.0
        %3441 = vmatprep.subr.mxu0 0.0
        %3442 = vmatpush1.msra.mxu0 0.0
        %3443 = vmatprep.subr.mxu0 0.0
        %3444 = vmatpush1.msra.mxu0 0.0
        %3445 = vmatprep.subr.mxu0 0.0
        %3446 = vmatpush1.msra.mxu0 0.0
        %3447 = vmatprep.subr.mxu0 0.0
        %3448 = vmatpush1.msra.mxu0 0.0
        %3449 = vmatprep.subr.mxu0 0.0
        %3450 = vmatpush1.msra.mxu0 0.0
        %3451 = vmatprep.subr.mxu0 0.0
        %3452 = vmatpush1.msra.mxu0 0.0
        %3453 = vmatprep.subr.mxu0 0.0
        %3454 = vmatpush1.msra.mxu0 0.0
        %3455 = vmatprep.subr.mxu0 0.0
        %3456 = vmatpush1.msra.mxu0 0.0
        %3457 = vmatprep.subr.mxu0 0.0
        %3458 = vmatpush1.msra.mxu0 0.0
        %3459 = vmatprep.subr.mxu0 0.0
        %3460 = vmatpush1.msra.mxu0 0.0
        %3461 = vmatprep.subr.mxu0 0.0
        %3462 = vmatpush1.msra.mxu0 0.0
        %3463 = vmatprep.subr.mxu0 0.0
        %3464 = vmatpush1.msra.mxu0 0.0
        %3465 = vmatprep.subr.mxu0 0.0
        %3466 = vmatpush1.msra.mxu0 0.0
        %3467 = vmatprep.mubr.f32.mxu0 0.0
        %v3468 = vand.u32 %v3393, 4294901760
        %v3469 = vsub.f32 %v3393, %v3468
        %v3470 = vand.u32 %v3469, 4294901760
        %v3471 = vsub.f32 %v3469, %v3470
        %v3472 = vand.u32 %v3471, 4294901760
        %3473 = vmatmul.mubr.f32.gmra.mrb[0].mxu0 %v3472
        %v3474 = vpop.f32.mrb[0].mxu0
        %v3475 = vadd.f32 %v3390, %v3474
        %v3476 = vpop.f32.mrb[0].mxu0
        %3477 = vdwg.mxu0
        %3478 = vmatprep.subr.mxu0 0.0
        %v3479 = vand.u32 %v3377, 4294901760
        %v3480 = vsub.f32 %v3377, %v3479
        %v3481 = vand.u32 %v3480, 4294901760
        %v3482 = vsub.f32 %v3480, %v3481
        %v3483 = vand.u32 %v3482, 4294901760
        %3484 = vmatpush1.msra.mxu0 %v3483
        %3485 = vmatprep.subr.mxu0 0.0
        %v3486 = vand.u32 %v3378, 4294901760
        %v3487 = vsub.f32 %v3378, %v3486
        %v3488 = vand.u32 %v3487, 4294901760
        %v3489 = vsub.f32 %v3487, %v3488
        %v3490 = vand.u32 %v3489, 4294901760
        %3491 = vmatpush1.msra.mxu0 %v3490
        %3492 = vmatprep.subr.mxu0 0.0
        %v3493 = vand.u32 %v3379, 4294901760
        %v3494 = vsub.f32 %v3379, %v3493
        %v3495 = vand.u32 %v3494, 4294901760
        %v3496 = vsub.f32 %v3494, %v3495
        %v3497 = vand.u32 %v3496, 4294901760
        %3498 = vmatpush1.msra.mxu0 %v3497
        %3499 = vmatprep.subr.mxu0 0.0
        %v3500 = vand.u32 %v3380, 4294901760
        %v3501 = vsub.f32 %v3380, %v3500
        %v3502 = vand.u32 %v3501, 4294901760
        %v3503 = vsub.f32 %v3501, %v3502
        %v3504 = vand.u32 %v3503, 4294901760
        %3505 = vmatpush1.msra.mxu0 %v3504
        %3506 = vmatprep.subr.mxu0 0.0
        %v3507 = vand.u32 %v3381, 4294901760
        %v3508 = vsub.f32 %v3381, %v3507
        %v3509 = vand.u32 %v3508, 4294901760
        %v3510 = vsub.f32 %v3508, %v3509
        %v3511 = vand.u32 %v3510, 4294901760
        %3512 = vmatpush1.msra.mxu0 %v3511
        %3513 = vmatprep.subr.mxu0 0.0
        %v3514 = vand.u32 %v3382, 4294901760
        %v3515 = vsub.f32 %v3382, %v3514
        %v3516 = vand.u32 %v3515, 4294901760
        %v3517 = vsub.f32 %v3515, %v3516
        %v3518 = vand.u32 %v3517, 4294901760
        %3519 = vmatpush1.msra.mxu0 %v3518
        %3520 = vmatprep.subr.mxu0 0.0
        %v3521 = vand.u32 %v3383, 4294901760
        %v3522 = vsub.f32 %v3383, %v3521
        %v3523 = vand.u32 %v3522, 4294901760
        %v3524 = vsub.f32 %v3522, %v3523
        %v3525 = vand.u32 %v3524, 4294901760
        %3526 = vmatpush1.msra.mxu0 %v3525
        %3527 = vmatprep.subr.mxu0 0.0
        %v3528 = vand.u32 %v3384, 4294901760
        %v3529 = vsub.f32 %v3384, %v3528
        %v3530 = vand.u32 %v3529, 4294901760
        %v3531 = vsub.f32 %v3529, %v3530
        %v3532 = vand.u32 %v3531, 4294901760
        %3533 = vmatpush1.msra.mxu0 %v3532
        %3534 = vmatprep.subr.mxu0 0.0
        %3535 = vmatpush1.msra.mxu0 0.0
        %3536 = vmatprep.subr.mxu0 0.0
        %3537 = vmatpush1.msra.mxu0 0.0
        %3538 = vmatprep.subr.mxu0 0.0
        %3539 = vmatpush1.msra.mxu0 0.0
        %3540 = vmatprep.subr.mxu0 0.0
        %3541 = vmatpush1.msra.mxu0 0.0
        %3542 = vmatprep.subr.mxu0 0.0
        %3543 = vmatpush1.msra.mxu0 0.0
        %3544 = vmatprep.subr.mxu0 0.0
        %3545 = vmatpush1.msra.mxu0 0.0
        %3546 = vmatprep.subr.mxu0 0.0
        %3547 = vmatpush1.msra.mxu0 0.0
        %3548 = vmatprep.subr.mxu0 0.0
        %3549 = vmatpush1.msra.mxu0 0.0
        %3550 = vmatprep.subr.mxu0 0.0
        %3551 = vmatpush1.msra.mxu0 0.0
        %3552 = vmatprep.subr.mxu0 0.0
        %3553 = vmatpush1.msra.mxu0 0.0
        %3554 = vmatprep.subr.mxu0 0.0
        %3555 = vmatpush1.msra.mxu0 0.0
        %3556 = vmatprep.subr.mxu0 0.0
        %3557 = vmatpush1.msra.mxu0 0.0
        %3558 = vmatprep.subr.mxu0 0.0
        %3559 = vmatpush1.msra.mxu0 0.0
        %3560 = vmatprep.subr.mxu0 0.0
        %3561 = vmatpush1.msra.mxu0 0.0
        %3562 = vmatprep.subr.mxu0 0.0
        %3563 = vmatpush1.msra.mxu0 0.0
        %3564 = vmatprep.subr.mxu0 0.0
        %3565 = vmatpush1.msra.mxu0 0.0
        %3566 = vmatprep.subr.mxu0 0.0
        %3567 = vmatpush1.msra.mxu0 0.0
        %3568 = vmatprep.subr.mxu0 0.0
        %3569 = vmatpush1.msra.mxu0 0.0
        %3570 = vmatprep.subr.mxu0 0.0
        %3571 = vmatpush1.msra.mxu0 0.0
        %3572 = vmatprep.subr.mxu0 0.0
        %3573 = vmatpush1.msra.mxu0 0.0
        %3574 = vmatprep.subr.mxu0 0.0
        %3575 = vmatpush1.msra.mxu0 0.0
        %3576 = vmatprep.subr.mxu0 0.0
        %3577 = vmatpush1.msra.mxu0 0.0
        %3578 = vmatprep.subr.mxu0 0.0
        %3579 = vmatpush1.msra.mxu0 0.0
        %3580 = vmatprep.subr.mxu0 0.0
        %3581 = vmatpush1.msra.mxu0 0.0
        %3582 = vmatprep.mubr.f32.mxu0 0.0
        %v3583 = vand.u32 %v3393, 4294901760
        %3584 = vmatmul.mubr.f32.gmra.mrb[0].mxu0 %v3583
        %v3585 = vpop.f32.mrb[0].mxu0
        %v3586 = vadd.f32 %v3475, %v3585
        %v3587 = vpop.f32.mrb[0].mxu0
        %3588 = vdwg.mxu0
        %3589 = vmatprep.subr.mxu0 0.0
        %v3590 = vand.u32 %v3377, 4294901760
        %v3591 = vsub.f32 %v3377, %v3590
        %3592 = vmatpush1.msra.mxu0 %v3591
        %3593 = vmatprep.subr.mxu0 0.0
        %v3594 = vand.u32 %v3378, 4294901760
        %v3595 = vsub.f32 %v3378, %v3594
        %3596 = vmatpush1.msra.mxu0 %v3595
        %3597 = vmatprep.subr.mxu0 0.0
        %v3598 = vand.u32 %v3379, 4294901760
        %v3599 = vsub.f32 %v3379, %v3598
        %3600 = vmatpush1.msra.mxu0 %v3599
        %3601 = vmatprep.subr.mxu0 0.0
        %v3602 = vand.u32 %v3380, 4294901760
        %v3603 = vsub.f32 %v3380, %v3602
        %3604 = vmatpush1.msra.mxu0 %v3603
        %3605 = vmatprep.subr.mxu0 0.0
        %v3606 = vand.u32 %v3381, 4294901760
        %v3607 = vsub.f32 %v3381, %v3606
        %3608 = vmatpush1.msra.mxu0 %v3607
        %3609 = vmatprep.subr.mxu0 0.0
        %v3610 = vand.u32 %v3382, 4294901760
        %v3611 = vsub.f32 %v3382, %v3610
        %3612 = vmatpush1.msra.mxu0 %v3611
        %3613 = vmatprep.subr.mxu0 0.0
        %v3614 = vand.u32 %v3383, 4294901760
        %v3615 = vsub.f32 %v3383, %v3614
        %3616 = vmatpush1.msra.mxu0 %v3615
        %3617 = vmatprep.subr.mxu0 0.0
        %v3618 = vand.u32 %v3384, 4294901760
        %v3619 = vsub.f32 %v3384, %v3618
        %3620 = vmatpush1.msra.mxu0 %v3619
        %3621 = vmatprep.subr.mxu0 0.0
        %3622 = vmatpush1.msra.mxu0 0.0
        %3623 = vmatprep.subr.mxu0 0.0
        %3624 = vmatpush1.msra.mxu0 0.0
        %3625 = vmatprep.subr.mxu0 0.0
        %3626 = vmatpush1.msra.mxu0 0.0
        %3627 = vmatprep.subr.mxu0 0.0
        %3628 = vmatpush1.msra.mxu0 0.0
        %3629 = vmatprep.subr.mxu0 0.0
        %3630 = vmatpush1.msra.mxu0 0.0
        %3631 = vmatprep.subr.mxu0 0.0
        %3632 = vmatpush1.msra.mxu0 0.0
        %3633 = vmatprep.subr.mxu0 0.0
        %3634 = vmatpush1.msra.mxu0 0.0
        %3635 = vmatprep.subr.mxu0 0.0
        %3636 = vmatpush1.msra.mxu0 0.0
        %3637 = vmatprep.subr.mxu0 0.0
        %3638 = vmatpush1.msra.mxu0 0.0
        %3639 = vmatprep.subr.mxu0 0.0
        %3640 = vmatpush1.msra.mxu0 0.0
        %3641 = vmatprep.subr.mxu0 0.0
        %3642 = vmatpush1.msra.mxu0 0.0
        %3643 = vmatprep.subr.mxu0 0.0
        %3644 = vmatpush1.msra.mxu0 0.0
        %3645 = vmatprep.subr.mxu0 0.0
        %3646 = vmatpush1.msra.mxu0 0.0
        %3647 = vmatprep.subr.mxu0 0.0
        %3648 = vmatpush1.msra.mxu0 0.0
        %3649 = vmatprep.subr.mxu0 0.0
        %3650 = vmatpush1.msra.mxu0 0.0
        %3651 = vmatprep.subr.mxu0 0.0
        %3652 = vmatpush1.msra.mxu0 0.0
        %3653 = vmatprep.subr.mxu0 0.0
        %3654 = vmatpush1.msra.mxu0 0.0
        %3655 = vmatprep.subr.mxu0 0.0
        %3656 = vmatpush1.msra.mxu0 0.0
        %3657 = vmatprep.subr.mxu0 0.0
        %3658 = vmatpush1.msra.mxu0 0.0
        %3659 = vmatprep.subr.mxu0 0.0
        %3660 = vmatpush1.msra.mxu0 0.0
        %3661 = vmatprep.subr.mxu0 0.0
        %3662 = vmatpush1.msra.mxu0 0.0
        %3663 = vmatprep.subr.mxu0 0.0
        %3664 = vmatpush1.msra.mxu0 0.0
        %3665 = vmatprep.subr.mxu0 0.0
        %3666 = vmatpush1.msra.mxu0 0.0
        %3667 = vmatprep.subr.mxu0 0.0
        %3668 = vmatpush1.msra.mxu0 0.0
        %3669 = vmatprep.mubr.f32.mxu0 0.0
        %v3670 = vand.u32 %v3393, 4294901760
        %v3671 = vsub.f32 %v3393, %v3670
        %3672 = vmatmul.mubr.f32.gmra.mrb[0].mxu0 %v3671
        %v3673 = vpop.f32.mrb[0].mxu0
        %v3674 = vadd.f32 %v3586, %v3673
        %v3675 = vpop.f32.mrb[0].mxu0
        %3676 = vdwg.mxu0
        %3677 = vmatprep.subr.mxu0 0.0
        %v3678 = vand.u32 %v3377, 4294901760
        %3679 = vmatpush1.msra.mxu0 %v3678
        %3680 = vmatprep.subr.mxu0 0.0
        %v3681 = vand.u32 %v3378, 4294901760
        %3682 = vmatpush1.msra.mxu0 %v3681
        %3683 = vmatprep.subr.mxu0 0.0
        %v3684 = vand.u32 %v3379, 4294901760
        %3685 = vmatpush1.msra.mxu0 %v3684
        %3686 = vmatprep.subr.mxu0 0.0
        %v3687 = vand.u32 %v3380, 4294901760
        %3688 = vmatpush1.msra.mxu0 %v3687
        %3689 = vmatprep.subr.mxu0 0.0
        %v3690 = vand.u32 %v3381, 4294901760
        %3691 = vmatpush1.msra.mxu0 %v3690
        %3692 = vmatprep.subr.mxu0 0.0
        %v3693 = vand.u32 %v3382, 4294901760
        %3694 = vmatpush1.msra.mxu0 %v3693
        %3695 = vmatprep.subr.mxu0 0.0
        %v3696 = vand.u32 %v3383, 4294901760
        %3697 = vmatpush1.msra.mxu0 %v3696
        %3698 = vmatprep.subr.mxu0 0.0
        %v3699 = vand.u32 %v3384, 4294901760
        %3700 = vmatpush1.msra.mxu0 %v3699
        %3701 = vmatprep.subr.mxu0 0.0
        %3702 = vmatpush1.msra.mxu0 0.0
        %3703 = vmatprep.subr.mxu0 0.0
        %3704 = vmatpush1.msra.mxu0 0.0
        %3705 = vmatprep.subr.mxu0 0.0
        %3706 = vmatpush1.msra.mxu0 0.0
        %3707 = vmatprep.subr.mxu0 0.0
        %3708 = vmatpush1.msra.mxu0 0.0
        %3709 = vmatprep.subr.mxu0 0.0
        %3710 = vmatpush1.msra.mxu0 0.0
        %3711 = vmatprep.subr.mxu0 0.0
        %3712 = vmatpush1.msra.mxu0 0.0
        %3713 = vmatprep.subr.mxu0 0.0
        %3714 = vmatpush1.msra.mxu0 0.0
        %3715 = vmatprep.subr.mxu0 0.0
        %3716 = vmatpush1.msra.mxu0 0.0
        %3717 = vmatprep.subr.mxu0 0.0
        %3718 = vmatpush1.msra.mxu0 0.0
        %3719 = vmatprep.subr.mxu0 0.0
        %3720 = vmatpush1.msra.mxu0 0.0
        %3721 = vmatprep.subr.mxu0 0.0
        %3722 = vmatpush1.msra.mxu0 0.0
        %3723 = vmatprep.subr.mxu0 0.0
        %3724 = vmatpush1.msra.mxu0 0.0
        %3725 = vmatprep.subr.mxu0 0.0
        %3726 = vmatpush1.msra.mxu0 0.0
        %3727 = vmatprep.subr.mxu0 0.0
        %3728 = vmatpush1.msra.mxu0 0.0
        %3729 = vmatprep.subr.mxu0 0.0
        %3730 = vmatpush1.msra.mxu0 0.0
        %3731 = vmatprep.subr.mxu0 0.0
        %3732 = vmatpush1.msra.mxu0 0.0
        %3733 = vmatprep.subr.mxu0 0.0
        %3734 = vmatpush1.msra.mxu0 0.0
        %3735 = vmatprep.subr.mxu0 0.0
        %3736 = vmatpush1.msra.mxu0 0.0
        %3737 = vmatprep.subr.mxu0 0.0
        %3738 = vmatpush1.msra.mxu0 0.0
        %3739 = vmatprep.subr.mxu0 0.0
        %3740 = vmatpush1.msra.mxu0 0.0
        %3741 = vmatprep.subr.mxu0 0.0
        %3742 = vmatpush1.msra.mxu0 0.0
        %3743 = vmatprep.subr.mxu0 0.0
        %3744 = vmatpush1.msra.mxu0 0.0
        %3745 = vmatprep.subr.mxu0 0.0
        %3746 = vmatpush1.msra.mxu0 0.0
        %3747 = vmatprep.subr.mxu0 0.0
        %3748 = vmatpush1.msra.mxu0 0.0
        %3749 = vmatprep.mubr.f32.mxu0 0.0
        %v3750 = vand.u32 %v3393, 4294901760
        %v3751 = vsub.f32 %v3393, %v3750
        %v3752 = vand.u32 %v3751, 4294901760
        %3753 = vmatmul.mubr.f32.gmra.mrb[0].mxu0 %v3752
        %v3754 = vpop.f32.mrb[0].mxu0
        %v3755 = vadd.f32 %v3674, %v3754
        %v3756 = vpop.f32.mrb[0].mxu0
        %3757 = vdwg.mxu0
        %3758 = vmatprep.subr.mxu0 0.0
        %v3759 = vand.u32 %v3377, 4294901760
        %v3760 = vsub.f32 %v3377, %v3759
        %v3761 = vand.u32 %v3760, 4294901760
        %3762 = vmatpush1.msra.mxu0 %v3761
        %3763 = vmatprep.subr.mxu0 0.0
        %v3764 = vand.u32 %v3378, 4294901760
        %v3765 = vsub.f32 %v3378, %v3764
        %v3766 = vand.u32 %v3765, 4294901760
        %3767 = vmatpush1.msra.mxu0 %v3766
        %3768 = vmatprep.subr.mxu0 0.0
        %v3769 = vand.u32 %v3379, 4294901760
        %v3770 = vsub.f32 %v3379, %v3769
        %v3771 = vand.u32 %v3770, 4294901760
        %3772 = vmatpush1.msra.mxu0 %v3771
        %3773 = vmatprep.subr.mxu0 0.0
        %v3774 = vand.u32 %v3380, 4294901760
        %v3775 = vsub.f32 %v3380, %v3774
        %v3776 = vand.u32 %v3775, 4294901760
        %3777 = vmatpush1.msra.mxu0 %v3776
        %3778 = vmatprep.subr.mxu0 0.0
        %v3779 = vand.u32 %v3381, 4294901760
        %v3780 = vsub.f32 %v3381, %v3779
        %v3781 = vand.u32 %v3780, 4294901760
        %3782 = vmatpush1.msra.mxu0 %v3781
        %3783 = vmatprep.subr.mxu0 0.0
        %v3784 = vand.u32 %v3382, 4294901760
        %v3785 = vsub.f32 %v3382, %v3784
        %v3786 = vand.u32 %v3785, 4294901760
        %3787 = vmatpush1.msra.mxu0 %v3786
        %3788 = vmatprep.subr.mxu0 0.0
        %v3789 = vand.u32 %v3383, 4294901760
        %v3790 = vsub.f32 %v3383, %v3789
        %v3791 = vand.u32 %v3790, 4294901760
        %3792 = vmatpush1.msra.mxu0 %v3791
        %3793 = vmatprep.subr.mxu0 0.0
        %v3794 = vand.u32 %v3384, 4294901760
        %v3795 = vsub.f32 %v3384, %v3794
        %v3796 = vand.u32 %v3795, 4294901760
        %3797 = vmatpush1.msra.mxu0 %v3796
        %3798 = vmatprep.subr.mxu0 0.0
        %3799 = vmatpush1.msra.mxu0 0.0
        %3800 = vmatprep.subr.mxu0 0.0
        %3801 = vmatpush1.msra.mxu0 0.0
        %3802 = vmatprep.subr.mxu0 0.0
        %3803 = vmatpush1.msra.mxu0 0.0
        %3804 = vmatprep.subr.mxu0 0.0
        %3805 = vmatpush1.msra.mxu0 0.0
        %3806 = vmatprep.subr.mxu0 0.0
        %3807 = vmatpush1.msra.mxu0 0.0
        %3808 = vmatprep.subr.mxu0 0.0
        %3809 = vmatpush1.msra.mxu0 0.0
        %3810 = vmatprep.subr.mxu0 0.0
        %3811 = vmatpush1.msra.mxu0 0.0
        %3812 = vmatprep.subr.mxu0 0.0
        %3813 = vmatpush1.msra.mxu0 0.0
        %3814 = vmatprep.subr.mxu0 0.0
        %3815 = vmatpush1.msra.mxu0 0.0
        %3816 = vmatprep.subr.mxu0 0.0
        %3817 = vmatpush1.msra.mxu0 0.0
        %3818 = vmatprep.subr.mxu0 0.0
        %3819 = vmatpush1.msra.mxu0 0.0
        %3820 = vmatprep.subr.mxu0 0.0
        %3821 = vmatpush1.msra.mxu0 0.0
        %3822 = vmatprep.subr.mxu0 0.0
        %3823 = vmatpush1.msra.mxu0 0.0
        %3824 = vmatprep.subr.mxu0 0.0
        %3825 = vmatpush1.msra.mxu0 0.0
        %3826 = vmatprep.subr.mxu0 0.0
        %3827 = vmatpush1.msra.mxu0 0.0
        %3828 = vmatprep.subr.mxu0 0.0
        %3829 = vmatpush1.msra.mxu0 0.0
        %3830 = vmatprep.subr.mxu0 0.0
        %3831 = vmatpush1.msra.mxu0 0.0
        %3832 = vmatprep.subr.mxu0 0.0
        %3833 = vmatpush1.msra.mxu0 0.0
        %3834 = vmatprep.subr.mxu0 0.0
        %3835 = vmatpush1.msra.mxu0 0.0
        %3836 = vmatprep.subr.mxu0 0.0
        %3837 = vmatpush1.msra.mxu0 0.0
        %3838 = vmatprep.subr.mxu0 0.0
        %3839 = vmatpush1.msra.mxu0 0.0
        %3840 = vmatprep.subr.mxu0 0.0
        %3841 = vmatpush1.msra.mxu0 0.0
        %3842 = vmatprep.subr.mxu0 0.0
        %3843 = vmatpush1.msra.mxu0 0.0
        %3844 = vmatprep.subr.mxu0 0.0
        %3845 = vmatpush1.msra.mxu0 0.0
        %3846 = vmatprep.mubr.f32.mxu0 0.0
        %v3847 = vand.u32 %v3393, 4294901760
        %3848 = vmatmul.mubr.f32.gmra.mrb[0].mxu0 %v3847
        %v3849 = vpop.f32.mrb[0].mxu0
        %v3850 = vadd.f32 %v3755, %v3849
        %v3851 = vpop.f32.mrb[0].mxu0
        %3852 = vdwg.mxu0
        %3853 = vmatprep.subr.mxu0 0.0
        %v3854 = vand.u32 %v3377, 4294901760
        %3855 = vmatpush1.msra.mxu0 %v3854
        %3856 = vmatprep.subr.mxu0 0.0
        %v3857 = vand.u32 %v3378, 4294901760
        %3858 = vmatpush1.msra.mxu0 %v3857
        %3859 = vmatprep.subr.mxu0 0.0
        %v3860 = vand.u32 %v3379, 4294901760
        %3861 = vmatpush1.msra.mxu0 %v3860
        %3862 = vmatprep.subr.mxu0 0.0
        %v3863 = vand.u32 %v3380, 4294901760
        %3864 = vmatpush1.msra.mxu0 %v3863
        %3865 = vmatprep.subr.mxu0 0.0
        %v3866 = vand.u32 %v3381, 4294901760
        %3867 = vmatpush1.msra.mxu0 %v3866
        %3868 = vmatprep.subr.mxu0 0.0
        %v3869 = vand.u32 %v3382, 4294901760
        %3870 = vmatpush1.msra.mxu0 %v3869
        %3871 = vmatprep.subr.mxu0 0.0
        %v3872 = vand.u32 %v3383, 4294901760
        %3873 = vmatpush1.msra.mxu0 %v3872
        %3874 = vmatprep.subr.mxu0 0.0
        %v3875 = vand.u32 %v3384, 4294901760
        %3876 = vmatpush1.msra.mxu0 %v3875
        %3877 = vmatprep.subr.mxu0 0.0
        %3878 = vmatpush1.msra.mxu0 0.0
        %3879 = vmatprep.subr.mxu0 0.0
        %3880 = vmatpush1.msra.mxu0 0.0
        %3881 = vmatprep.subr.mxu0 0.0
        %3882 = vmatpush1.msra.mxu0 0.0
        %3883 = vmatprep.subr.mxu0 0.0
        %3884 = vmatpush1.msra.mxu0 0.0
        %3885 = vmatprep.subr.mxu0 0.0
        %3886 = vmatpush1.msra.mxu0 0.0
        %3887 = vmatprep.subr.mxu0 0.0
        %3888 = vmatpush1.msra.mxu0 0.0
        %3889 = vmatprep.subr.mxu0 0.0
        %3890 = vmatpush1.msra.mxu0 0.0
        %3891 = vmatprep.subr.mxu0 0.0
        %3892 = vmatpush1.msra.mxu0 0.0
        %3893 = vmatprep.subr.mxu0 0.0
        %3894 = vmatpush1.msra.mxu0 0.0
        %3895 = vmatprep.subr.mxu0 0.0
        %3896 = vmatpush1.msra.mxu0 0.0
        %3897 = vmatprep.subr.mxu0 0.0
        %3898 = vmatpush1.msra.mxu0 0.0
        %3899 = vmatprep.subr.mxu0 0.0
        %3900 = vmatpush1.msra.mxu0 0.0
        %3901 = vmatprep.subr.mxu0 0.0
        %3902 = vmatpush1.msra.mxu0 0.0
        %3903 = vmatprep.subr.mxu0 0.0
        %3904 = vmatpush1.msra.mxu0 0.0
        %3905 = vmatprep.subr.mxu0 0.0
        %3906 = vmatpush1.msra.mxu0 0.0
        %3907 = vmatprep.subr.mxu0 0.0
        %3908 = vmatpush1.msra.mxu0 0.0
        %3909 = vmatprep.subr.mxu0 0.0
        %3910 = vmatpush1.msra.mxu0 0.0
        %3911 = vmatprep.subr.mxu0 0.0
        %3912 = vmatpush1.msra.mxu0 0.0
        %3913 = vmatprep.subr.mxu0 0.0
        %3914 = vmatpush1.msra.mxu0 0.0
        %3915 = vmatprep.subr.mxu0 0.0
        %3916 = vmatpush1.msra.mxu0 0.0
        %3917 = vmatprep.subr.mxu0 0.0
        %3918 = vmatpush1.msra.mxu0 0.0
        %3919 = vmatprep.subr.mxu0 0.0
        %3920 = vmatpush1.msra.mxu0 0.0
        %3921 = vmatprep.subr.mxu0 0.0
        %3922 = vmatpush1.msra.mxu0 0.0
        %3923 = vmatprep.subr.mxu0 0.0
        %3924 = vmatpush1.msra.mxu0 0.0
        %3925 = vmatprep.mubr.f32.mxu0 0.0
        %v3926 = vand.u32 %v3393, 4294901760
        %3927 = vmatmul.mubr.f32.gmra.mrb[0].mxu0 %v3926
        %v3928 = vpop.f32.mrb[0].mxu0
        %v3929 = vadd.f32 %v3850, %v3928
        %v3930 = vpop.f32.mrb[0].mxu0
        %3931 = vdwg.mxu0
        %3932 = vst [vmem:[%s445] sm:$0xff] %v3929
        %s3933 = sand.u32 %s274, 1
        %s3934 = scalar_lea.sflag [#allocation4], %s3933
        %s3935 = sand.u32 %s274, 1
        %s3936 = smul.addr %s3935, 8
        %s3937 = scalar_lea.vmem [#allocation10], %s3936
        // Predicated region
        $region81: #{tpu_custom_call.1} parent=63 // pred_check
          %p3938 = pneg %p284
        $region82: #{tpu_custom_call.1} parent=63 // pred_check_branch
          %3940 = sbr.rel (%p3938) target = $region84
        $region83: #{tpu_custom_call.1} parent=63 // pred_region
          %s3942 = ssub.s32 128, 128
          %3943 = vsyncadd %s3934, %s3942
          %s3944 = smul.addr %s30, 128
          %s3945 = scalar_lea.hbm %s11, %s3944
          %s3947 = sshll.u32 %s3937, 4
          %s3948 = int_to_ptr.vmem [resolvable:$true] %s3947
          %3950 = dma.vmem_to_hbm [thread:$0]  %s3948, 128, %s3945, %s3934
        $region84: #{tpu_custom_call.1} parent=63 // pred_fallthru
          _
      $region64: #{tpu_custom_call.1} parent=5 // pred_fallthru
        _
      %p3951 = scmp.le.s32.totalorder 2, %s25
      // Predicated region
      $region85: #{tpu_custom_call.1} parent=5 // pred_check
        %p3952 = pneg %p3951
      $region86: #{tpu_custom_call.1} parent=5 // pred_check_branch
        %3954 = sbr.rel (%p3952) target = $region88
      $region87: #{tpu_custom_call.1} parent=5 // pred_region
        %s3955 = ssub.s32 %s25, 2
        // Predicated region
        $region89: #{tpu_custom_call.1} parent=87 // pred_check
          %p3956 = pneg %p290
        $region90: #{tpu_custom_call.1} parent=87 // pred_check_branch
          %3958 = sbr.rel (%p3956) target = $region92
        $region91: #{tpu_custom_call.1} parent=87 // pred_region
          %s3959 = sand.u32 %s275, 1
          %s3960 = scalar_lea.sflag [#allocation4], %s3959
          %s3961 = sand.u32 %s275, 1
          %s3962 = smul.addr %s3961, 8
          %s3963 = scalar_lea.vmem [#allocation10], %s3962
          %3964 = dma.done %s3960, 128
        $region92: #{tpu_custom_call.1} parent=87 // pred_fallthru
          _
      $region88: #{tpu_custom_call.1} parent=5 // pred_fallthru
        _
    $region6: #{tpu_custom_call.1} parent=1 // loop_footer
      %s29 = sadd.s32 1, %s25
    $region7: #{tpu_custom_call.1} parent=1 // loop_footer_branch
      %24 = sbr.rel target = $region3
    $region8: #{tpu_custom_call.1} parent=1 // loop_exit
      _
    %3965 = vsyncpa [#allocation3], 1
    %s3966 = scalar_lea.sflag [#allocation3], 1
    %3967 = vsyncpa %s3966, 1
    %3968 = vsyncpa [#allocation6], 1
    %3969 = vsyncpa [#allocation9], 1
    %3970 = vsyncpa [#allocation4], 1
    %s3971 = scalar_lea.sflag [#allocation4], 1
    %3972 = vsyncpa %s3971, 1

</llo_original>
